<compile_context>
chip_gen: v7x
topology: tpu7x:2x2x1
jax: 0.10.0
libtpu: 0.0.40
codegen_flags: <defaults>
</compile_context>

<pallas_src>
import jax
import jax.numpy as jnp
from jax.experimental import pallas as pl
from jax.experimental.pallas import tpu as pltpu

# ----------------------------- configuration --------------------------------
BATCH = 2
NOISE_DIM = 16
EMBEDDING_DIM = 16
COND_DIM = 8                      # raw conditioning-variable width (stand-in)
FINAL_WINDOW_LENGTH = 64          # module arg; internal L0 = // 8
INPUT_DIM = 4
BASE_CHANNELS = 32
L0 = FINAL_WINDOW_LENGTH // 8     # 8
BN_EPS = 1e-5
LRELU_SLOPE = 0.2

VMEM_SPEC = pl.BlockSpec(memory_space=pltpu.MemorySpace.VMEM)


# ------------------------------- fused kernel --------------------------------
def _deconv_block(h, gamma, beta, w_ref, bias, apply_sigmoid):
    """BatchNorm1d (training-mode batch stats) -> LeakyReLU(0.2) ->
    ConvTranspose1d(kernel=4, stride=2, padding=1) with in-kernel even/odd
    phase interleave.

    h:      [B, L, Cin]  channels-last value
    gamma/beta/bias: [1, 1, C] values
    w_ref:  [4, Cin, Cout] Ref (taps-first; PyTorch weight is [Cin, Cout, K])
    returns [B, 2L, Cout]
    """
    B, L, Cin = h.shape
    Cout = w_ref.shape[2]

    # ---- BatchNorm1d over (batch, length) per channel, biased variance ----
    mean = jnp.mean(h, axis=(0, 1), keepdims=True)
    var = jnp.mean((h - mean) ** 2, axis=(0, 1), keepdims=True)
    hn = (h - mean) * jax.lax.rsqrt(var + BN_EPS)
    hn = hn * gamma + beta

    # ---- LeakyReLU(0.2) ----
    hn = jnp.where(hn > 0, hn, LRELU_SLOPE * hn)

    # ---- ConvTranspose1d(k=4, s=2, p=1):
    #   out[t] = sum_k x[i] W[:, :, k],  t = 2*i - 1 + k
    #   even t=2j : k=1 (i=j),  k=3 (i=j-1)
    #   odd  t=2j+1: k=0 (i=j+1), k=2 (i=j)
    hn2 = hn.reshape(B * L, Cin)

    def mm(k):  # tap-k matmul on the MXU, back to [B, L, Cout]
        return jnp.dot(hn2, w_ref[k],
                       preferred_element_type=jnp.float32).reshape(B, L, Cout)

    t0, t1, t2, t3 = mm(0), mm(1), mm(2), mm(3)

    # shift the tap outputs (not the inputs) along L with zero boundaries
    zrow = jnp.zeros((B, 1, Cout), jnp.float32)
    t3_prev = jnp.concatenate([zrow, t3[:, : L - 1, :]], axis=1)   # tap3 at j-1
    t0_next = jnp.concatenate([t0[:, 1:, :], zrow], axis=1)        # tap0 at j+1

    y_even = t1 + t3_prev + bias
    y_odd = t0_next + t2 + bias
    if apply_sigmoid:
        y_even = jax.nn.sigmoid(y_even)
        y_odd = jax.nn.sigmoid(y_odd)

    # ---- in-kernel interleave: out[:, 2j] = even[j], out[:, 2j+1] = odd[j]
    # (lane dim Cout unchanged everywhere; only leading/sublane dims refactor)
    y = jnp.concatenate([y_even.reshape(B * L, 1, Cout),
                         y_odd.reshape(B * L, 1, Cout)], axis=1)   # [B*L, 2, Cout]
    return y.reshape(B, 2 * L, Cout)


def generator_kernel(noise_ref, cond_ref,
                     cond_w_ref, cond_b_ref,
                     fcw_n_ref, fcw_c_ref, fc_b_ref,
                     g1_ref, be1_ref, w1_ref, cb1_ref,
                     g2_ref, be2_ref, w2_ref, cb2_ref,
                     g3_ref, be3_ref, w3_ref, cb3_ref,
                     out_ref):
    noise = noise_ref[...]
    cond = cond_ref[...]
    B = noise.shape[0]

    # conditioning_vector = conditioning_module(conditioning_vars)
    cond_vec = (jnp.dot(cond, cond_w_ref[...],
                        preferred_element_type=jnp.float32) + cond_b_ref[...])

    # fc(cat(noise, cond_vec)) folded as noise @ Wn + cond_vec @ Wc + b, built
    # directly in channels-last [B, L0, C0] form (weights pre-sliced per l).
    rows = []
    for l in range(L0):
        hl = (jnp.dot(noise, fcw_n_ref[l], preferred_element_type=jnp.float32)
              + jnp.dot(cond_vec, fcw_c_ref[l], preferred_element_type=jnp.float32)
              + fc_b_ref[l])                          # [B, C0]
        rows.append(hl.reshape(B, 1, BASE_CHANNELS))
    h = jnp.concatenate(rows, axis=1)                 # [B, L0, C0]

    # (BN -> LeakyReLU -> ConvTranspose1d) x3, last one followed by Sigmoid.
    # TODO(synk): BatchNorm uses training-mode batch statistics (module default);
    # eval-mode running stats are not modeled here.
    h = _deconv_block(h, g1_ref[...], be1_ref[...], w1_ref, cb1_ref[...], False)
    h = _deconv_block(h, g2_ref[...], be2_ref[...], w2_ref, cb2_ref[...], False)
    h = _deconv_block(h, g3_ref[...], be3_ref[...], w3_ref, cb3_ref[...], True)

    # already [B, final_window_length, input_dim] == PyTorch output after permute(0,2,1)
    out_ref[...] = h


# ------------------------------ wrapper ---------------------------------------
def generator_pallas(noise, conditioning_vars, p):
    B = noise.shape[0]
    args = (noise, conditioning_vars,
            p["cond_w"], p["cond_b"],
            p["fcw_noise"], p["fcw_cond"], p["fc_b"],
            p["bn1_g"], p["bn1_b"], p["w1"], p["b1"],
            p["bn2_g"], p["bn2_b"], p["w2"], p["b2"],
            p["bn3_g"], p["bn3_b"], p["w3"], p["b3"])
    return pl.pallas_call(
        generator_kernel,
        out_shape=jax.ShapeDtypeStruct((B, 8 * L0, INPUT_DIM), jnp.float32),
        in_specs=[VMEM_SPEC] * len(args),
        out_specs=VMEM_SPEC,
    )(*args)


generator_forward = jax.jit(generator_pallas)


# ------------------------------ parameters ------------------------------------
def init_params(key):
    """Deterministic parameter init mirroring the module's __init__ shapes;
    stored directly in kernel-ready layouts (all layout work done at init)."""
    ks = jax.random.split(key, 10)

    def unif(k, shape, fan_in):
        bound = 1.0 / jnp.sqrt(jnp.float32(fan_in))
        return jax.random.uniform(k, shape, jnp.float32, -bound, bound)

    C0, C1, C2 = BASE_CHANNELS, BASE_CHANNELS // 2, BASE_CHANNELS // 4
    d_in = NOISE_DIM + EMBEDDING_DIM
    p = {}

    # TODO(synk): conditioning_module is an external module passed to __init__;
    # modeled here as a single Linear(COND_DIM -> EMBEDDING_DIM).
    p["cond_w"] = unif(ks[0], (COND_DIM, EMBEDDING_DIM), COND_DIM)
    p["cond_b"] = unif(ks[1], (1, EMBEDDING_DIM), COND_DIM)

    # fc: Linear(noise_dim + embedding_dim, L0 * C0). Columns are in PyTorch
    # order (c * L0 + l, matching x.view(-1, C0, L0)); pre-slice per output
    # position l -> [L0, d_in, C0] so the kernel gets channels-last rows with
    # no runtime transpose and no lane-splitting reshape.
    fc_w = unif(ks[2], (d_in, L0 * C0), d_in)
    fc_b = unif(ks[3], (L0 * C0,), d_in)
    fcw_l = jnp.transpose(fc_w.reshape(d_in, C0, L0), (2, 0, 1))   # [L0, d_in, C0]
    p["fcw_noise"] = fcw_l[:, :NOISE_DIM, :]                       # [L0, 16, C0]
    p["fcw_cond"] = fcw_l[:, NOISE_DIM:, :]                        # [L0, 16, C0]
    p["fc_b"] = jnp.transpose(fc_b.reshape(C0, L0), (1, 0)).reshape(L0, 1, C0)

    # BatchNorm1d params (PyTorch init: weight=1, bias=0)
    for name, c in (("bn1", C0), ("bn2", C1), ("bn3", C2)):
        p[name + "_g"] = jnp.ones((1, 1, c), jnp.float32)
        p[name + "_b"] = jnp.zeros((1, 1, c), jnp.float32)

    # ConvTranspose1d weights: PyTorch shape [Cin, Cout, K=4]; store taps-first
    # [K, Cin, Cout]. fan_in = Cout*K matches PyTorch's fan_in for ConvTranspose.
    def conv_t(k_w, k_b, cin, cout):
        fan_in = cout * 4
        w = unif(k_w, (cin, cout, 4), fan_in)
        b = unif(k_b, (1, 1, cout), fan_in)
        return jnp.transpose(w, (2, 0, 1)), b

    p["w1"], p["b1"] = conv_t(ks[4], ks[5], C0, C1)
    p["w2"], p["b2"] = conv_t(ks[6], ks[7], C1, C2)
    p["w3"], p["b3"] = conv_t(ks[8], ks[9], C2, INPUT_DIM)
    return p


if __name__ == "__main__":
    key = jax.random.PRNGKey(0)
    k_noise, k_cond, k_params = jax.random.split(key, 3)
    noise = jax.random.normal(k_noise, (BATCH, NOISE_DIM), jnp.float32)
    conditioning_vars = jax.random.normal(k_cond, (BATCH, COND_DIM), jnp.float32)
    params = init_params(k_params)

    out = generator_forward(noise, conditioning_vars, params)
    out = jax.block_until_ready(out)

    assert out.shape == (BATCH, FINAL_WINDOW_LENGTH, INPUT_DIM), out.shape
    assert out.dtype == jnp.float32
    assert bool(jnp.all(jnp.isfinite(out)))
    assert bool(jnp.all((out >= 0.0) & (out <= 1.0)))  # sigmoid output range
    print("KERNEL_OK")
</pallas_src>

<mosaic_0001>
module attributes {stable_mosaic.version = 11 : i64} {
  func.func @generator_kernel(%arg0: memref<2x16xf32, #tpu.memory_space<vmem>>, %arg1: memref<2x8xf32, #tpu.memory_space<vmem>>, %arg2: memref<8x16xf32, #tpu.memory_space<vmem>>, %arg3: memref<1x16xf32, #tpu.memory_space<vmem>>, %arg4: memref<8x16x32xf32, #tpu.memory_space<vmem>>, %arg5: memref<8x16x32xf32, #tpu.memory_space<vmem>>, %arg6: memref<8x1x32xf32, #tpu.memory_space<vmem>>, %arg7: memref<1x1x32xf32, #tpu.memory_space<vmem>>, %arg8: memref<1x1x32xf32, #tpu.memory_space<vmem>>, %arg9: memref<4x32x16xf32, #tpu.memory_space<vmem>>, %arg10: memref<1x1x16xf32, #tpu.memory_space<vmem>>, %arg11: memref<1x1x16xf32, #tpu.memory_space<vmem>>, %arg12: memref<1x1x16xf32, #tpu.memory_space<vmem>>, %arg13: memref<4x16x8xf32, #tpu.memory_space<vmem>>, %arg14: memref<1x1x8xf32, #tpu.memory_space<vmem>>, %arg15: memref<1x1x8xf32, #tpu.memory_space<vmem>>, %arg16: memref<1x1x8xf32, #tpu.memory_space<vmem>>, %arg17: memref<4x8x4xf32, #tpu.memory_space<vmem>>, %arg18: memref<1x1x4xf32, #tpu.memory_space<vmem>>, %arg19: memref<2x64x4xf32, #tpu.memory_space<vmem>>) attributes {dimension_semantics = [], scalar_prefetch = 0 : i64, scratch_operands = 0 : i64, tpu.core_type = #tpu.core_type<tc>} {
    %c0 = arith.constant 0 : index
    %c0_0 = arith.constant 0 : index
    %0 = vector.load %arg0[%c0, %c0_0] : memref<2x16xf32, #tpu.memory_space<vmem>>, vector<2x16xf32>
    %c0_1 = arith.constant 0 : index
    %c0_2 = arith.constant 0 : index
    %1 = vector.load %arg1[%c0_1, %c0_2] : memref<2x8xf32, #tpu.memory_space<vmem>>, vector<2x8xf32>
    %c0_3 = arith.constant 0 : index
    %c0_4 = arith.constant 0 : index
    %2 = vector.load %arg2[%c0_3, %c0_4] : memref<8x16xf32, #tpu.memory_space<vmem>>, vector<8x16xf32>
    %cst = arith.constant dense<0.000000e+00> : vector<2x16xf32>
    %3 = tpu.matmul %1, %2, %cst {dimension_numbers = #tpu.dot_dimension_numbers<[1], [0], [0], [1], [0, 0, 1, 1], [], []>} : vector<2x8xf32>, vector<8x16xf32>, vector<2x16xf32> -> vector<2x16xf32>
    %c0_5 = arith.constant 0 : index
    %c0_6 = arith.constant 0 : index
    %4 = vector.load %arg3[%c0_5, %c0_6] : memref<1x16xf32, #tpu.memory_space<vmem>>, vector<1x16xf32>
    %5 = vector.broadcast %4 : vector<1x16xf32> to vector<2x16xf32>
    %6 = arith.addf %3, %5 : vector<2x16xf32>
    %c0_7 = arith.constant 0 : index
    %c0_8 = arith.constant 0 : index
    %c0_9 = arith.constant 0 : index
    %7 = vector.load %arg4[%c0_7, %c0_8, %c0_9] : memref<8x16x32xf32, #tpu.memory_space<vmem>>, vector<1x16x32xf32>
    %8 = vector.shape_cast %7 : vector<1x16x32xf32> to vector<16x32xf32>
    %cst_10 = arith.constant dense<0.000000e+00> : vector<2x32xf32>
    %9 = tpu.matmul %0, %8, %cst_10 {dimension_numbers = #tpu.dot_dimension_numbers<[1], [0], [0], [1], [0, 0, 1, 1], [], []>} : vector<2x16xf32>, vector<16x32xf32>, vector<2x32xf32> -> vector<2x32xf32>
    %c0_11 = arith.constant 0 : index
    %c0_12 = arith.constant 0 : index
    %c0_13 = arith.constant 0 : index
    %10 = vector.load %arg5[%c0_11, %c0_12, %c0_13] : memref<8x16x32xf32, #tpu.memory_space<vmem>>, vector<1x16x32xf32>
    %11 = vector.shape_cast %10 : vector<1x16x32xf32> to vector<16x32xf32>
    %cst_14 = arith.constant dense<0.000000e+00> : vector<2x32xf32>
    %12 = tpu.matmul %6, %11, %cst_14 {dimension_numbers = #tpu.dot_dimension_numbers<[1], [0], [0], [1], [0, 0, 1, 1], [], []>} : vector<2x16xf32>, vector<16x32xf32>, vector<2x32xf32> -> vector<2x32xf32>
    %13 = arith.addf %9, %12 : vector<2x32xf32>
    %c0_15 = arith.constant 0 : index
    %c0_16 = arith.constant 0 : index
    %c0_17 = arith.constant 0 : index
    %14 = vector.load %arg6[%c0_15, %c0_16, %c0_17] : memref<8x1x32xf32, #tpu.memory_space<vmem>>, vector<1x1x32xf32>
    %15 = vector.shape_cast %14 : vector<1x1x32xf32> to vector<1x32xf32>
    %16 = vector.broadcast %15 : vector<1x32xf32> to vector<2x32xf32>
    %17 = arith.addf %13, %16 : vector<2x32xf32>
    %18 = vector.shape_cast %17 : vector<2x32xf32> to vector<2x1x32xf32>
    %c1 = arith.constant 1 : index
    %c0_18 = arith.constant 0 : index
    %c0_19 = arith.constant 0 : index
    %19 = vector.load %arg4[%c1, %c0_18, %c0_19] : memref<8x16x32xf32, #tpu.memory_space<vmem>>, vector<1x16x32xf32>
    %20 = vector.shape_cast %19 : vector<1x16x32xf32> to vector<16x32xf32>
    %cst_20 = arith.constant dense<0.000000e+00> : vector<2x32xf32>
    %21 = tpu.matmul %0, %20, %cst_20 {dimension_numbers = #tpu.dot_dimension_numbers<[1], [0], [0], [1], [0, 0, 1, 1], [], []>} : vector<2x16xf32>, vector<16x32xf32>, vector<2x32xf32> -> vector<2x32xf32>
    %c1_21 = arith.constant 1 : index
    %c0_22 = arith.constant 0 : index
    %c0_23 = arith.constant 0 : index
    %22 = vector.load %arg5[%c1_21, %c0_22, %c0_23] : memref<8x16x32xf32, #tpu.memory_space<vmem>>, vector<1x16x32xf32>
    %23 = vector.shape_cast %22 : vector<1x16x32xf32> to vector<16x32xf32>
    %cst_24 = arith.constant dense<0.000000e+00> : vector<2x32xf32>
    %24 = tpu.matmul %6, %23, %cst_24 {dimension_numbers = #tpu.dot_dimension_numbers<[1], [0], [0], [1], [0, 0, 1, 1], [], []>} : vector<2x16xf32>, vector<16x32xf32>, vector<2x32xf32> -> vector<2x32xf32>
    %25 = arith.addf %21, %24 : vector<2x32xf32>
    %c1_25 = arith.constant 1 : index
    %c0_26 = arith.constant 0 : index
    %c0_27 = arith.constant 0 : index
    %26 = vector.load %arg6[%c1_25, %c0_26, %c0_27] : memref<8x1x32xf32, #tpu.memory_space<vmem>>, vector<1x1x32xf32>
    %27 = vector.shape_cast %26 : vector<1x1x32xf32> to vector<1x32xf32>
    %28 = vector.broadcast %27 : vector<1x32xf32> to vector<2x32xf32>
    %29 = arith.addf %25, %28 : vector<2x32xf32>
    %30 = vector.shape_cast %29 : vector<2x32xf32> to vector<2x1x32xf32>
    %c2 = arith.constant 2 : index
    %c0_28 = arith.constant 0 : index
    %c0_29 = arith.constant 0 : index
    %31 = vector.load %arg4[%c2, %c0_28, %c0_29] : memref<8x16x32xf32, #tpu.memory_space<vmem>>, vector<1x16x32xf32>
    %32 = vector.shape_cast %31 : vector<1x16x32xf32> to vector<16x32xf32>
    %cst_30 = arith.constant dense<0.000000e+00> : vector<2x32xf32>
    %33 = tpu.matmul %0, %32, %cst_30 {dimension_numbers = #tpu.dot_dimension_numbers<[1], [0], [0], [1], [0, 0, 1, 1], [], []>} : vector<2x16xf32>, vector<16x32xf32>, vector<2x32xf32> -> vector<2x32xf32>
    %c2_31 = arith.constant 2 : index
    %c0_32 = arith.constant 0 : index
    %c0_33 = arith.constant 0 : index
    %34 = vector.load %arg5[%c2_31, %c0_32, %c0_33] : memref<8x16x32xf32, #tpu.memory_space<vmem>>, vector<1x16x32xf32>
    %35 = vector.shape_cast %34 : vector<1x16x32xf32> to vector<16x32xf32>
    %cst_34 = arith.constant dense<0.000000e+00> : vector<2x32xf32>
    %36 = tpu.matmul %6, %35, %cst_34 {dimension_numbers = #tpu.dot_dimension_numbers<[1], [0], [0], [1], [0, 0, 1, 1], [], []>} : vector<2x16xf32>, vector<16x32xf32>, vector<2x32xf32> -> vector<2x32xf32>
    %37 = arith.addf %33, %36 : vector<2x32xf32>
    %c2_35 = arith.constant 2 : index
    %c0_36 = arith.constant 0 : index
    %c0_37 = arith.constant 0 : index
    %38 = vector.load %arg6[%c2_35, %c0_36, %c0_37] : memref<8x1x32xf32, #tpu.memory_space<vmem>>, vector<1x1x32xf32>
    %39 = vector.shape_cast %38 : vector<1x1x32xf32> to vector<1x32xf32>
    %40 = vector.broadcast %39 : vector<1x32xf32> to vector<2x32xf32>
    %41 = arith.addf %37, %40 : vector<2x32xf32>
    %42 = vector.shape_cast %41 : vector<2x32xf32> to vector<2x1x32xf32>
    %c3 = arith.constant 3 : index
    %c0_38 = arith.constant 0 : index
    %c0_39 = arith.constant 0 : index
    %43 = vector.load %arg4[%c3, %c0_38, %c0_39] : memref<8x16x32xf32, #tpu.memory_space<vmem>>, vector<1x16x32xf32>
    %44 = vector.shape_cast %43 : vector<1x16x32xf32> to vector<16x32xf32>
    %cst_40 = arith.constant dense<0.000000e+00> : vector<2x32xf32>
    %45 = tpu.matmul %0, %44, %cst_40 {dimension_numbers = #tpu.dot_dimension_numbers<[1], [0], [0], [1], [0, 0, 1, 1], [], []>} : vector<2x16xf32>, vector<16x32xf32>, vector<2x32xf32> -> vector<2x32xf32>
    %c3_41 = arith.constant 3 : index
    %c0_42 = arith.constant 0 : index
    %c0_43 = arith.constant 0 : index
    %46 = vector.load %arg5[%c3_41, %c0_42, %c0_43] : memref<8x16x32xf32, #tpu.memory_space<vmem>>, vector<1x16x32xf32>
    %47 = vector.shape_cast %46 : vector<1x16x32xf32> to vector<16x32xf32>
    %cst_44 = arith.constant dense<0.000000e+00> : vector<2x32xf32>
    %48 = tpu.matmul %6, %47, %cst_44 {dimension_numbers = #tpu.dot_dimension_numbers<[1], [0], [0], [1], [0, 0, 1, 1], [], []>} : vector<2x16xf32>, vector<16x32xf32>, vector<2x32xf32> -> vector<2x32xf32>
    %49 = arith.addf %45, %48 : vector<2x32xf32>
    %c3_45 = arith.constant 3 : index
    %c0_46 = arith.constant 0 : index
    %c0_47 = arith.constant 0 : index
    %50 = vector.load %arg6[%c3_45, %c0_46, %c0_47] : memref<8x1x32xf32, #tpu.memory_space<vmem>>, vector<1x1x32xf32>
    %51 = vector.shape_cast %50 : vector<1x1x32xf32> to vector<1x32xf32>
    %52 = vector.broadcast %51 : vector<1x32xf32> to vector<2x32xf32>
    %53 = arith.addf %49, %52 : vector<2x32xf32>
    %54 = vector.shape_cast %53 : vector<2x32xf32> to vector<2x1x32xf32>
    %c4 = arith.constant 4 : index
    %c0_48 = arith.constant 0 : index
    %c0_49 = arith.constant 0 : index
    %55 = vector.load %arg4[%c4, %c0_48, %c0_49] : memref<8x16x32xf32, #tpu.memory_space<vmem>>, vector<1x16x32xf32>
    %56 = vector.shape_cast %55 : vector<1x16x32xf32> to vector<16x32xf32>
    %cst_50 = arith.constant dense<0.000000e+00> : vector<2x32xf32>
    %57 = tpu.matmul %0, %56, %cst_50 {dimension_numbers = #tpu.dot_dimension_numbers<[1], [0], [0], [1], [0, 0, 1, 1], [], []>} : vector<2x16xf32>, vector<16x32xf32>, vector<2x32xf32> -> vector<2x32xf32>
    %c4_51 = arith.constant 4 : index
    %c0_52 = arith.constant 0 : index
    %c0_53 = arith.constant 0 : index
    %58 = vector.load %arg5[%c4_51, %c0_52, %c0_53] : memref<8x16x32xf32, #tpu.memory_space<vmem>>, vector<1x16x32xf32>
    %59 = vector.shape_cast %58 : vector<1x16x32xf32> to vector<16x32xf32>
    %cst_54 = arith.constant dense<0.000000e+00> : vector<2x32xf32>
    %60 = tpu.matmul %6, %59, %cst_54 {dimension_numbers = #tpu.dot_dimension_numbers<[1], [0], [0], [1], [0, 0, 1, 1], [], []>} : vector<2x16xf32>, vector<16x32xf32>, vector<2x32xf32> -> vector<2x32xf32>
    %61 = arith.addf %57, %60 : vector<2x32xf32>
    %c4_55 = arith.constant 4 : index
    %c0_56 = arith.constant 0 : index
    %c0_57 = arith.constant 0 : index
    %62 = vector.load %arg6[%c4_55, %c0_56, %c0_57] : memref<8x1x32xf32, #tpu.memory_space<vmem>>, vector<1x1x32xf32>
    %63 = vector.shape_cast %62 : vector<1x1x32xf32> to vector<1x32xf32>
    %64 = vector.broadcast %63 : vector<1x32xf32> to vector<2x32xf32>
    %65 = arith.addf %61, %64 : vector<2x32xf32>
    %66 = vector.shape_cast %65 : vector<2x32xf32> to vector<2x1x32xf32>
    %c5 = arith.constant 5 : index
    %c0_58 = arith.constant 0 : index
    %c0_59 = arith.constant 0 : index
    %67 = vector.load %arg4[%c5, %c0_58, %c0_59] : memref<8x16x32xf32, #tpu.memory_space<vmem>>, vector<1x16x32xf32>
    %68 = vector.shape_cast %67 : vector<1x16x32xf32> to vector<16x32xf32>
    %cst_60 = arith.constant dense<0.000000e+00> : vector<2x32xf32>
    %69 = tpu.matmul %0, %68, %cst_60 {dimension_numbers = #tpu.dot_dimension_numbers<[1], [0], [0], [1], [0, 0, 1, 1], [], []>} : vector<2x16xf32>, vector<16x32xf32>, vector<2x32xf32> -> vector<2x32xf32>
    %c5_61 = arith.constant 5 : index
    %c0_62 = arith.constant 0 : index
    %c0_63 = arith.constant 0 : index
    %70 = vector.load %arg5[%c5_61, %c0_62, %c0_63] : memref<8x16x32xf32, #tpu.memory_space<vmem>>, vector<1x16x32xf32>
    %71 = vector.shape_cast %70 : vector<1x16x32xf32> to vector<16x32xf32>
    %cst_64 = arith.constant dense<0.000000e+00> : vector<2x32xf32>
    %72 = tpu.matmul %6, %71, %cst_64 {dimension_numbers = #tpu.dot_dimension_numbers<[1], [0], [0], [1], [0, 0, 1, 1], [], []>} : vector<2x16xf32>, vector<16x32xf32>, vector<2x32xf32> -> vector<2x32xf32>
    %73 = arith.addf %69, %72 : vector<2x32xf32>
    %c5_65 = arith.constant 5 : index
    %c0_66 = arith.constant 0 : index
    %c0_67 = arith.constant 0 : index
    %74 = vector.load %arg6[%c5_65, %c0_66, %c0_67] : memref<8x1x32xf32, #tpu.memory_space<vmem>>, vector<1x1x32xf32>
    %75 = vector.shape_cast %74 : vector<1x1x32xf32> to vector<1x32xf32>
    %76 = vector.broadcast %75 : vector<1x32xf32> to vector<2x32xf32>
    %77 = arith.addf %73, %76 : vector<2x32xf32>
    %78 = vector.shape_cast %77 : vector<2x32xf32> to vector<2x1x32xf32>
    %c6 = arith.constant 6 : index
    %c0_68 = arith.constant 0 : index
    %c0_69 = arith.constant 0 : index
    %79 = vector.load %arg4[%c6, %c0_68, %c0_69] : memref<8x16x32xf32, #tpu.memory_space<vmem>>, vector<1x16x32xf32>
    %80 = vector.shape_cast %79 : vector<1x16x32xf32> to vector<16x32xf32>
    %cst_70 = arith.constant dense<0.000000e+00> : vector<2x32xf32>
    %81 = tpu.matmul %0, %80, %cst_70 {dimension_numbers = #tpu.dot_dimension_numbers<[1], [0], [0], [1], [0, 0, 1, 1], [], []>} : vector<2x16xf32>, vector<16x32xf32>, vector<2x32xf32> -> vector<2x32xf32>
    %c6_71 = arith.constant 6 : index
    %c0_72 = arith.constant 0 : index
    %c0_73 = arith.constant 0 : index
    %82 = vector.load %arg5[%c6_71, %c0_72, %c0_73] : memref<8x16x32xf32, #tpu.memory_space<vmem>>, vector<1x16x32xf32>
    %83 = vector.shape_cast %82 : vector<1x16x32xf32> to vector<16x32xf32>
    %cst_74 = arith.constant dense<0.000000e+00> : vector<2x32xf32>
    %84 = tpu.matmul %6, %83, %cst_74 {dimension_numbers = #tpu.dot_dimension_numbers<[1], [0], [0], [1], [0, 0, 1, 1], [], []>} : vector<2x16xf32>, vector<16x32xf32>, vector<2x32xf32> -> vector<2x32xf32>
    %85 = arith.addf %81, %84 : vector<2x32xf32>
    %c6_75 = arith.constant 6 : index
    %c0_76 = arith.constant 0 : index
    %c0_77 = arith.constant 0 : index
    %86 = vector.load %arg6[%c6_75, %c0_76, %c0_77] : memref<8x1x32xf32, #tpu.memory_space<vmem>>, vector<1x1x32xf32>
    %87 = vector.shape_cast %86 : vector<1x1x32xf32> to vector<1x32xf32>
    %88 = vector.broadcast %87 : vector<1x32xf32> to vector<2x32xf32>
    %89 = arith.addf %85, %88 : vector<2x32xf32>
    %90 = vector.shape_cast %89 : vector<2x32xf32> to vector<2x1x32xf32>
    %c7 = arith.constant 7 : index
    %c0_78 = arith.constant 0 : index
    %c0_79 = arith.constant 0 : index
    %91 = vector.load %arg4[%c7, %c0_78, %c0_79] : memref<8x16x32xf32, #tpu.memory_space<vmem>>, vector<1x16x32xf32>
    %92 = vector.shape_cast %91 : vector<1x16x32xf32> to vector<16x32xf32>
    %cst_80 = arith.constant dense<0.000000e+00> : vector<2x32xf32>
    %93 = tpu.matmul %0, %92, %cst_80 {dimension_numbers = #tpu.dot_dimension_numbers<[1], [0], [0], [1], [0, 0, 1, 1], [], []>} : vector<2x16xf32>, vector<16x32xf32>, vector<2x32xf32> -> vector<2x32xf32>
    %c7_81 = arith.constant 7 : index
    %c0_82 = arith.constant 0 : index
    %c0_83 = arith.constant 0 : index
    %94 = vector.load %arg5[%c7_81, %c0_82, %c0_83] : memref<8x16x32xf32, #tpu.memory_space<vmem>>, vector<1x16x32xf32>
    %95 = vector.shape_cast %94 : vector<1x16x32xf32> to vector<16x32xf32>
    %cst_84 = arith.constant dense<0.000000e+00> : vector<2x32xf32>
    %96 = tpu.matmul %6, %95, %cst_84 {dimension_numbers = #tpu.dot_dimension_numbers<[1], [0], [0], [1], [0, 0, 1, 1], [], []>} : vector<2x16xf32>, vector<16x32xf32>, vector<2x32xf32> -> vector<2x32xf32>
    %97 = arith.addf %93, %96 : vector<2x32xf32>
    %c7_85 = arith.constant 7 : index
    %c0_86 = arith.constant 0 : index
    %c0_87 = arith.constant 0 : index
    %98 = vector.load %arg6[%c7_85, %c0_86, %c0_87] : memref<8x1x32xf32, #tpu.memory_space<vmem>>, vector<1x1x32xf32>
    %99 = vector.shape_cast %98 : vector<1x1x32xf32> to vector<1x32xf32>
    %100 = vector.broadcast %99 : vector<1x32xf32> to vector<2x32xf32>
    %101 = arith.addf %97, %100 : vector<2x32xf32>
    %102 = vector.shape_cast %101 : vector<2x32xf32> to vector<2x1x32xf32>
    %103 = tpu.concatenate %18, %30, %42, %54, %66, %78, %90, %102 in 1 : vector<2x1x32xf32>, vector<2x1x32xf32>, vector<2x1x32xf32>, vector<2x1x32xf32>, vector<2x1x32xf32>, vector<2x1x32xf32>, vector<2x1x32xf32>, vector<2x1x32xf32> -> vector<2x8x32xf32>
    %c0_88 = arith.constant 0 : index
    %c0_89 = arith.constant 0 : index
    %c0_90 = arith.constant 0 : index
    %104 = vector.load %arg7[%c0_88, %c0_89, %c0_90] : memref<1x1x32xf32, #tpu.memory_space<vmem>>, vector<1x1x32xf32>
    %c0_91 = arith.constant 0 : index
    %c0_92 = arith.constant 0 : index
    %c0_93 = arith.constant 0 : index
    %105 = vector.load %arg8[%c0_91, %c0_92, %c0_93] : memref<1x1x32xf32, #tpu.memory_space<vmem>>, vector<1x1x32xf32>
    %c0_94 = arith.constant 0 : index
    %c0_95 = arith.constant 0 : index
    %c0_96 = arith.constant 0 : index
    %106 = vector.load %arg10[%c0_94, %c0_95, %c0_96] : memref<1x1x16xf32, #tpu.memory_space<vmem>>, vector<1x1x16xf32>
    %cst_97 = arith.constant dense<0.000000e+00> : vector<32xf32>
    %107 = vector.multi_reduction <add>, %103, %cst_97 [0, 1] : vector<2x8x32xf32> to vector<32xf32>
    %108 = vector.shape_cast %107 : vector<32xf32> to vector<1x1x32xf32>
    %cst_98 = arith.constant 1.600000e+01 : f32
    %109 = vector.broadcast %cst_98 : f32 to vector<1x1x32xf32>
    %110 = arith.divf %108, %109 : vector<1x1x32xf32>
    %111 = vector.broadcast %110 : vector<1x1x32xf32> to vector<2x8x32xf32>
    %112 = arith.subf %103, %111 : vector<2x8x32xf32>
    %113 = arith.mulf %112, %112 : vector<2x8x32xf32>
    %cst_99 = arith.constant dense<0.000000e+00> : vector<32xf32>
    %114 = vector.multi_reduction <add>, %113, %cst_99 [0, 1] : vector<2x8x32xf32> to vector<32xf32>
    %115 = vector.shape_cast %114 : vector<32xf32> to vector<1x1x32xf32>
    %cst_100 = arith.constant 1.600000e+01 : f32
    %116 = vector.broadcast %cst_100 : f32 to vector<1x1x32xf32>
    %117 = arith.divf %115, %116 : vector<1x1x32xf32>
    %118 = vector.broadcast %110 : vector<1x1x32xf32> to vector<2x8x32xf32>
    %119 = arith.subf %103, %118 : vector<2x8x32xf32>
    %cst_101 = arith.constant 9.99999974E-6 : f32
    %120 = vector.broadcast %cst_101 : f32 to vector<1x1x32xf32>
    %121 = arith.addf %117, %120 : vector<1x1x32xf32>
    %122 = math.rsqrt %121 : vector<1x1x32xf32>
    %123 = vector.broadcast %122 : vector<1x1x32xf32> to vector<2x8x32xf32>
    %124 = arith.mulf %119, %123 : vector<2x8x32xf32>
    %125 = vector.broadcast %104 : vector<1x1x32xf32> to vector<2x8x32xf32>
    %126 = arith.mulf %124, %125 : vector<2x8x32xf32>
    %127 = vector.broadcast %105 : vector<1x1x32xf32> to vector<2x8x32xf32>
    %128 = arith.addf %126, %127 : vector<2x8x32xf32>
    %cst_102 = arith.constant 0.000000e+00 : f32
    %129 = vector.broadcast %cst_102 : f32 to vector<2x8x32xf32>
    %130 = arith.cmpf ogt, %128, %129 : vector<2x8x32xf32>
    %cst_103 = arith.constant 2.000000e-01 : f32
    %131 = vector.broadcast %cst_103 : f32 to vector<2x8x32xf32>
    %132 = arith.mulf %131, %128 : vector<2x8x32xf32>
    %133 = arith.select %130, %128, %132 : vector<2x8x32xi1>, vector<2x8x32xf32>
    %134 = vector.shape_cast %133 : vector<2x8x32xf32> to vector<16x32xf32>
    %c0_104 = arith.constant 0 : index
    %c0_105 = arith.constant 0 : index
    %c0_106 = arith.constant 0 : index
    %135 = vector.load %arg9[%c0_104, %c0_105, %c0_106] : memref<4x32x16xf32, #tpu.memory_space<vmem>>, vector<1x32x16xf32>
    %136 = vector.shape_cast %135 : vector<1x32x16xf32> to vector<32x16xf32>
    %cst_107 = arith.constant dense<0.000000e+00> : vector<16x16xf32>
    %137 = tpu.matmul %134, %136, %cst_107 {dimension_numbers = #tpu.dot_dimension_numbers<[1], [0], [0], [1], [0, 0, 1, 1], [], []>} : vector<16x32xf32>, vector<32x16xf32>, vector<16x16xf32> -> vector<16x16xf32>
    %138 = vector.shape_cast %137 : vector<16x16xf32> to vector<2x8x16xf32>
    %c1_108 = arith.constant 1 : index
    %c0_109 = arith.constant 0 : index
    %c0_110 = arith.constant 0 : index
    %139 = vector.load %arg9[%c1_108, %c0_109, %c0_110] : memref<4x32x16xf32, #tpu.memory_space<vmem>>, vector<1x32x16xf32>
    %140 = vector.shape_cast %139 : vector<1x32x16xf32> to vector<32x16xf32>
    %cst_111 = arith.constant dense<0.000000e+00> : vector<16x16xf32>
    %141 = tpu.matmul %134, %140, %cst_111 {dimension_numbers = #tpu.dot_dimension_numbers<[1], [0], [0], [1], [0, 0, 1, 1], [], []>} : vector<16x32xf32>, vector<32x16xf32>, vector<16x16xf32> -> vector<16x16xf32>
    %142 = vector.shape_cast %141 : vector<16x16xf32> to vector<2x8x16xf32>
    %c2_112 = arith.constant 2 : index
    %c0_113 = arith.constant 0 : index
    %c0_114 = arith.constant 0 : index
    %143 = vector.load %arg9[%c2_112, %c0_113, %c0_114] : memref<4x32x16xf32, #tpu.memory_space<vmem>>, vector<1x32x16xf32>
    %144 = vector.shape_cast %143 : vector<1x32x16xf32> to vector<32x16xf32>
    %cst_115 = arith.constant dense<0.000000e+00> : vector<16x16xf32>
    %145 = tpu.matmul %134, %144, %cst_115 {dimension_numbers = #tpu.dot_dimension_numbers<[1], [0], [0], [1], [0, 0, 1, 1], [], []>} : vector<16x32xf32>, vector<32x16xf32>, vector<16x16xf32> -> vector<16x16xf32>
    %146 = vector.shape_cast %145 : vector<16x16xf32> to vector<2x8x16xf32>
    %c3_116 = arith.constant 3 : index
    %c0_117 = arith.constant 0 : index
    %c0_118 = arith.constant 0 : index
    %147 = vector.load %arg9[%c3_116, %c0_117, %c0_118] : memref<4x32x16xf32, #tpu.memory_space<vmem>>, vector<1x32x16xf32>
    %148 = vector.shape_cast %147 : vector<1x32x16xf32> to vector<32x16xf32>
    %cst_119 = arith.constant dense<0.000000e+00> : vector<16x16xf32>
    %149 = tpu.matmul %134, %148, %cst_119 {dimension_numbers = #tpu.dot_dimension_numbers<[1], [0], [0], [1], [0, 0, 1, 1], [], []>} : vector<16x32xf32>, vector<32x16xf32>, vector<16x16xf32> -> vector<16x16xf32>
    %150 = vector.shape_cast %149 : vector<16x16xf32> to vector<2x8x16xf32>
    %cst_120 = arith.constant 0.000000e+00 : f32
    %151 = vector.broadcast %cst_120 : f32 to vector<2x1x16xf32>
    %152 = vector.extract_strided_slice %150 {offsets = [0, 0, 0], sizes = [2, 7, 16], strides = [1, 1, 1]} : vector<2x8x16xf32> to vector<2x7x16xf32>
    %153 = tpu.concatenate %151, %152 in 1 : vector<2x1x16xf32>, vector<2x7x16xf32> -> vector<2x8x16xf32>
    %154 = vector.extract_strided_slice %138 {offsets = [0, 1, 0], sizes = [2, 7, 16], strides = [1, 1, 1]} : vector<2x8x16xf32> to vector<2x7x16xf32>
    %155 = tpu.concatenate %154, %151 in 1 : vector<2x7x16xf32>, vector<2x1x16xf32> -> vector<2x8x16xf32>
    %156 = arith.addf %142, %153 : vector<2x8x16xf32>
    %157 = vector.broadcast %106 : vector<1x1x16xf32> to vector<2x8x16xf32>
    %158 = arith.addf %156, %157 : vector<2x8x16xf32>
    %159 = arith.addf %155, %146 : vector<2x8x16xf32>
    %160 = vector.broadcast %106 : vector<1x1x16xf32> to vector<2x8x16xf32>
    %161 = arith.addf %159, %160 : vector<2x8x16xf32>
    %162 = vector.shape_cast %158 : vector<2x8x16xf32> to vector<16x1x16xf32>
    %163 = vector.shape_cast %161 : vector<2x8x16xf32> to vector<16x1x16xf32>
    %164 = tpu.concatenate %162, %163 in 1 : vector<16x1x16xf32>, vector<16x1x16xf32> -> vector<16x2x16xf32>
    %165 = vector.shape_cast %164 : vector<16x2x16xf32> to vector<2x16x16xf32>
    %c0_121 = arith.constant 0 : index
    %c0_122 = arith.constant 0 : index
    %c0_123 = arith.constant 0 : index
    %166 = vector.load %arg11[%c0_121, %c0_122, %c0_123] : memref<1x1x16xf32, #tpu.memory_space<vmem>>, vector<1x1x16xf32>
    %c0_124 = arith.constant 0 : index
    %c0_125 = arith.constant 0 : index
    %c0_126 = arith.constant 0 : index
    %167 = vector.load %arg12[%c0_124, %c0_125, %c0_126] : memref<1x1x16xf32, #tpu.memory_space<vmem>>, vector<1x1x16xf32>
    %c0_127 = arith.constant 0 : index
    %c0_128 = arith.constant 0 : index
    %c0_129 = arith.constant 0 : index
    %168 = vector.load %arg14[%c0_127, %c0_128, %c0_129] : memref<1x1x8xf32, #tpu.memory_space<vmem>>, vector<1x1x8xf32>
    %cst_130 = arith.constant dense<0.000000e+00> : vector<16xf32>
    %169 = vector.multi_reduction <add>, %165, %cst_130 [0, 1] : vector<2x16x16xf32> to vector<16xf32>
    %170 = vector.shape_cast %169 : vector<16xf32> to vector<1x1x16xf32>
    %cst_131 = arith.constant 3.200000e+01 : f32
    %171 = vector.broadcast %cst_131 : f32 to vector<1x1x16xf32>
    %172 = arith.divf %170, %171 : vector<1x1x16xf32>
    %173 = vector.broadcast %172 : vector<1x1x16xf32> to vector<2x16x16xf32>
    %174 = arith.subf %165, %173 : vector<2x16x16xf32>
    %175 = arith.mulf %174, %174 : vector<2x16x16xf32>
    %cst_132 = arith.constant dense<0.000000e+00> : vector<16xf32>
    %176 = vector.multi_reduction <add>, %175, %cst_132 [0, 1] : vector<2x16x16xf32> to vector<16xf32>
    %177 = vector.shape_cast %176 : vector<16xf32> to vector<1x1x16xf32>
    %cst_133 = arith.constant 3.200000e+01 : f32
    %178 = vector.broadcast %cst_133 : f32 to vector<1x1x16xf32>
    %179 = arith.divf %177, %178 : vector<1x1x16xf32>
    %180 = vector.broadcast %172 : vector<1x1x16xf32> to vector<2x16x16xf32>
    %181 = arith.subf %165, %180 : vector<2x16x16xf32>
    %cst_134 = arith.constant 9.99999974E-6 : f32
    %182 = vector.broadcast %cst_134 : f32 to vector<1x1x16xf32>
    %183 = arith.addf %179, %182 : vector<1x1x16xf32>
    %184 = math.rsqrt %183 : vector<1x1x16xf32>
    %185 = vector.broadcast %184 : vector<1x1x16xf32> to vector<2x16x16xf32>
    %186 = arith.mulf %181, %185 : vector<2x16x16xf32>
    %187 = vector.broadcast %166 : vector<1x1x16xf32> to vector<2x16x16xf32>
    %188 = arith.mulf %186, %187 : vector<2x16x16xf32>
    %189 = vector.broadcast %167 : vector<1x1x16xf32> to vector<2x16x16xf32>
    %190 = arith.addf %188, %189 : vector<2x16x16xf32>
    %cst_135 = arith.constant 0.000000e+00 : f32
    %191 = vector.broadcast %cst_135 : f32 to vector<2x16x16xf32>
    %192 = arith.cmpf ogt, %190, %191 : vector<2x16x16xf32>
    %cst_136 = arith.constant 2.000000e-01 : f32
    %193 = vector.broadcast %cst_136 : f32 to vector<2x16x16xf32>
    %194 = arith.mulf %193, %190 : vector<2x16x16xf32>
    %195 = arith.select %192, %190, %194 : vector<2x16x16xi1>, vector<2x16x16xf32>
    %196 = vector.shape_cast %195 : vector<2x16x16xf32> to vector<32x16xf32>
    %c0_137 = arith.constant 0 : index
    %c0_138 = arith.constant 0 : index
    %c0_139 = arith.constant 0 : index
    %197 = vector.load %arg13[%c0_137, %c0_138, %c0_139] : memref<4x16x8xf32, #tpu.memory_space<vmem>>, vector<1x16x8xf32>
    %198 = vector.shape_cast %197 : vector<1x16x8xf32> to vector<16x8xf32>
    %cst_140 = arith.constant dense<0.000000e+00> : vector<32x8xf32>
    %199 = tpu.matmul %196, %198, %cst_140 {dimension_numbers = #tpu.dot_dimension_numbers<[1], [0], [0], [1], [0, 0, 1, 1], [], []>} : vector<32x16xf32>, vector<16x8xf32>, vector<32x8xf32> -> vector<32x8xf32>
    %200 = vector.shape_cast %199 : vector<32x8xf32> to vector<2x16x8xf32>
    %c1_141 = arith.constant 1 : index
    %c0_142 = arith.constant 0 : index
    %c0_143 = arith.constant 0 : index
    %201 = vector.load %arg13[%c1_141, %c0_142, %c0_143] : memref<4x16x8xf32, #tpu.memory_space<vmem>>, vector<1x16x8xf32>
    %202 = vector.shape_cast %201 : vector<1x16x8xf32> to vector<16x8xf32>
    %cst_144 = arith.constant dense<0.000000e+00> : vector<32x8xf32>
    %203 = tpu.matmul %196, %202, %cst_144 {dimension_numbers = #tpu.dot_dimension_numbers<[1], [0], [0], [1], [0, 0, 1, 1], [], []>} : vector<32x16xf32>, vector<16x8xf32>, vector<32x8xf32> -> vector<32x8xf32>
    %204 = vector.shape_cast %203 : vector<32x8xf32> to vector<2x16x8xf32>
    %c2_145 = arith.constant 2 : index
    %c0_146 = arith.constant 0 : index
    %c0_147 = arith.constant 0 : index
    %205 = vector.load %arg13[%c2_145, %c0_146, %c0_147] : memref<4x16x8xf32, #tpu.memory_space<vmem>>, vector<1x16x8xf32>
    %206 = vector.shape_cast %205 : vector<1x16x8xf32> to vector<16x8xf32>
    %cst_148 = arith.constant dense<0.000000e+00> : vector<32x8xf32>
    %207 = tpu.matmul %196, %206, %cst_148 {dimension_numbers = #tpu.dot_dimension_numbers<[1], [0], [0], [1], [0, 0, 1, 1], [], []>} : vector<32x16xf32>, vector<16x8xf32>, vector<32x8xf32> -> vector<32x8xf32>
    %208 = vector.shape_cast %207 : vector<32x8xf32> to vector<2x16x8xf32>
    %c3_149 = arith.constant 3 : index
    %c0_150 = arith.constant 0 : index
    %c0_151 = arith.constant 0 : index
    %209 = vector.load %arg13[%c3_149, %c0_150, %c0_151] : memref<4x16x8xf32, #tpu.memory_space<vmem>>, vector<1x16x8xf32>
    %210 = vector.shape_cast %209 : vector<1x16x8xf32> to vector<16x8xf32>
    %cst_152 = arith.constant dense<0.000000e+00> : vector<32x8xf32>
    %211 = tpu.matmul %196, %210, %cst_152 {dimension_numbers = #tpu.dot_dimension_numbers<[1], [0], [0], [1], [0, 0, 1, 1], [], []>} : vector<32x16xf32>, vector<16x8xf32>, vector<32x8xf32> -> vector<32x8xf32>
    %212 = vector.shape_cast %211 : vector<32x8xf32> to vector<2x16x8xf32>
    %cst_153 = arith.constant 0.000000e+00 : f32
    %213 = vector.broadcast %cst_153 : f32 to vector<2x1x8xf32>
    %214 = vector.extract_strided_slice %212 {offsets = [0, 0, 0], sizes = [2, 15, 8], strides = [1, 1, 1]} : vector<2x16x8xf32> to vector<2x15x8xf32>
    %215 = tpu.concatenate %213, %214 in 1 : vector<2x1x8xf32>, vector<2x15x8xf32> -> vector<2x16x8xf32>
    %216 = vector.extract_strided_slice %200 {offsets = [0, 1, 0], sizes = [2, 15, 8], strides = [1, 1, 1]} : vector<2x16x8xf32> to vector<2x15x8xf32>
    %217 = tpu.concatenate %216, %213 in 1 : vector<2x15x8xf32>, vector<2x1x8xf32> -> vector<2x16x8xf32>
    %218 = arith.addf %204, %215 : vector<2x16x8xf32>
    %219 = vector.broadcast %168 : vector<1x1x8xf32> to vector<2x16x8xf32>
    %220 = arith.addf %218, %219 : vector<2x16x8xf32>
    %221 = arith.addf %217, %208 : vector<2x16x8xf32>
    %222 = vector.broadcast %168 : vector<1x1x8xf32> to vector<2x16x8xf32>
    %223 = arith.addf %221, %222 : vector<2x16x8xf32>
    %224 = vector.shape_cast %220 : vector<2x16x8xf32> to vector<32x1x8xf32>
    %225 = vector.shape_cast %223 : vector<2x16x8xf32> to vector<32x1x8xf32>
    %226 = tpu.concatenate %224, %225 in 1 : vector<32x1x8xf32>, vector<32x1x8xf32> -> vector<32x2x8xf32>
    %227 = vector.shape_cast %226 : vector<32x2x8xf32> to vector<2x32x8xf32>
    %c0_154 = arith.constant 0 : index
    %c0_155 = arith.constant 0 : index
    %c0_156 = arith.constant 0 : index
    %228 = vector.load %arg15[%c0_154, %c0_155, %c0_156] : memref<1x1x8xf32, #tpu.memory_space<vmem>>, vector<1x1x8xf32>
    %c0_157 = arith.constant 0 : index
    %c0_158 = arith.constant 0 : index
    %c0_159 = arith.constant 0 : index
    %229 = vector.load %arg16[%c0_157, %c0_158, %c0_159] : memref<1x1x8xf32, #tpu.memory_space<vmem>>, vector<1x1x8xf32>
    %c0_160 = arith.constant 0 : index
    %c0_161 = arith.constant 0 : index
    %c0_162 = arith.constant 0 : index
    %230 = vector.load %arg18[%c0_160, %c0_161, %c0_162] : memref<1x1x4xf32, #tpu.memory_space<vmem>>, vector<1x1x4xf32>
    %cst_163 = arith.constant dense<0.000000e+00> : vector<8xf32>
    %231 = vector.multi_reduction <add>, %227, %cst_163 [0, 1] : vector<2x32x8xf32> to vector<8xf32>
    %232 = vector.shape_cast %231 : vector<8xf32> to vector<1x1x8xf32>
    %cst_164 = arith.constant 6.400000e+01 : f32
    %233 = vector.broadcast %cst_164 : f32 to vector<1x1x8xf32>
    %234 = arith.divf %232, %233 : vector<1x1x8xf32>
    %235 = vector.broadcast %234 : vector<1x1x8xf32> to vector<2x32x8xf32>
    %236 = arith.subf %227, %235 : vector<2x32x8xf32>
    %237 = arith.mulf %236, %236 : vector<2x32x8xf32>
    %cst_165 = arith.constant dense<0.000000e+00> : vector<8xf32>
    %238 = vector.multi_reduction <add>, %237, %cst_165 [0, 1] : vector<2x32x8xf32> to vector<8xf32>
    %239 = vector.shape_cast %238 : vector<8xf32> to vector<1x1x8xf32>
    %cst_166 = arith.constant 6.400000e+01 : f32
    %240 = vector.broadcast %cst_166 : f32 to vector<1x1x8xf32>
    %241 = arith.divf %239, %240 : vector<1x1x8xf32>
    %242 = vector.broadcast %234 : vector<1x1x8xf32> to vector<2x32x8xf32>
    %243 = arith.subf %227, %242 : vector<2x32x8xf32>
    %cst_167 = arith.constant 9.99999974E-6 : f32
    %244 = vector.broadcast %cst_167 : f32 to vector<1x1x8xf32>
    %245 = arith.addf %241, %244 : vector<1x1x8xf32>
    %246 = math.rsqrt %245 : vector<1x1x8xf32>
    %247 = vector.broadcast %246 : vector<1x1x8xf32> to vector<2x32x8xf32>
    %248 = arith.mulf %243, %247 : vector<2x32x8xf32>
    %249 = vector.broadcast %228 : vector<1x1x8xf32> to vector<2x32x8xf32>
    %250 = arith.mulf %248, %249 : vector<2x32x8xf32>
    %251 = vector.broadcast %229 : vector<1x1x8xf32> to vector<2x32x8xf32>
    %252 = arith.addf %250, %251 : vector<2x32x8xf32>
    %cst_168 = arith.constant 0.000000e+00 : f32
    %253 = vector.broadcast %cst_168 : f32 to vector<2x32x8xf32>
    %254 = arith.cmpf ogt, %252, %253 : vector<2x32x8xf32>
    %cst_169 = arith.constant 2.000000e-01 : f32
    %255 = vector.broadcast %cst_169 : f32 to vector<2x32x8xf32>
    %256 = arith.mulf %255, %252 : vector<2x32x8xf32>
    %257 = arith.select %254, %252, %256 : vector<2x32x8xi1>, vector<2x32x8xf32>
    %258 = vector.shape_cast %257 : vector<2x32x8xf32> to vector<64x8xf32>
    %c0_170 = arith.constant 0 : index
    %c0_171 = arith.constant 0 : index
    %c0_172 = arith.constant 0 : index
    %259 = vector.load %arg17[%c0_170, %c0_171, %c0_172] : memref<4x8x4xf32, #tpu.memory_space<vmem>>, vector<1x8x4xf32>
    %260 = vector.shape_cast %259 : vector<1x8x4xf32> to vector<8x4xf32>
    %cst_173 = arith.constant dense<0.000000e+00> : vector<64x4xf32>
    %261 = tpu.matmul %258, %260, %cst_173 {dimension_numbers = #tpu.dot_dimension_numbers<[1], [0], [0], [1], [0, 0, 1, 1], [], []>} : vector<64x8xf32>, vector<8x4xf32>, vector<64x4xf32> -> vector<64x4xf32>
    %262 = vector.shape_cast %261 : vector<64x4xf32> to vector<2x32x4xf32>
    %c1_174 = arith.constant 1 : index
    %c0_175 = arith.constant 0 : index
    %c0_176 = arith.constant 0 : index
    %263 = vector.load %arg17[%c1_174, %c0_175, %c0_176] : memref<4x8x4xf32, #tpu.memory_space<vmem>>, vector<1x8x4xf32>
    %264 = vector.shape_cast %263 : vector<1x8x4xf32> to vector<8x4xf32>
    %cst_177 = arith.constant dense<0.000000e+00> : vector<64x4xf32>
    %265 = tpu.matmul %258, %264, %cst_177 {dimension_numbers = #tpu.dot_dimension_numbers<[1], [0], [0], [1], [0, 0, 1, 1], [], []>} : vector<64x8xf32>, vector<8x4xf32>, vector<64x4xf32> -> vector<64x4xf32>
    %266 = vector.shape_cast %265 : vector<64x4xf32> to vector<2x32x4xf32>
    %c2_178 = arith.constant 2 : index
    %c0_179 = arith.constant 0 : index
    %c0_180 = arith.constant 0 : index
    %267 = vector.load %arg17[%c2_178, %c0_179, %c0_180] : memref<4x8x4xf32, #tpu.memory_space<vmem>>, vector<1x8x4xf32>
    %268 = vector.shape_cast %267 : vector<1x8x4xf32> to vector<8x4xf32>
    %cst_181 = arith.constant dense<0.000000e+00> : vector<64x4xf32>
    %269 = tpu.matmul %258, %268, %cst_181 {dimension_numbers = #tpu.dot_dimension_numbers<[1], [0], [0], [1], [0, 0, 1, 1], [], []>} : vector<64x8xf32>, vector<8x4xf32>, vector<64x4xf32> -> vector<64x4xf32>
    %270 = vector.shape_cast %269 : vector<64x4xf32> to vector<2x32x4xf32>
    %c3_182 = arith.constant 3 : index
    %c0_183 = arith.constant 0 : index
    %c0_184 = arith.constant 0 : index
    %271 = vector.load %arg17[%c3_182, %c0_183, %c0_184] : memref<4x8x4xf32, #tpu.memory_space<vmem>>, vector<1x8x4xf32>
    %272 = vector.shape_cast %271 : vector<1x8x4xf32> to vector<8x4xf32>
    %cst_185 = arith.constant dense<0.000000e+00> : vector<64x4xf32>
    %273 = tpu.matmul %258, %272, %cst_185 {dimension_numbers = #tpu.dot_dimension_numbers<[1], [0], [0], [1], [0, 0, 1, 1], [], []>} : vector<64x8xf32>, vector<8x4xf32>, vector<64x4xf32> -> vector<64x4xf32>
    %274 = vector.shape_cast %273 : vector<64x4xf32> to vector<2x32x4xf32>
    %cst_186 = arith.constant 0.000000e+00 : f32
    %275 = vector.broadcast %cst_186 : f32 to vector<2x1x4xf32>
    %276 = vector.extract_strided_slice %274 {offsets = [0, 0, 0], sizes = [2, 31, 4], strides = [1, 1, 1]} : vector<2x32x4xf32> to vector<2x31x4xf32>
    %277 = tpu.concatenate %275, %276 in 1 : vector<2x1x4xf32>, vector<2x31x4xf32> -> vector<2x32x4xf32>
    %278 = vector.extract_strided_slice %262 {offsets = [0, 1, 0], sizes = [2, 31, 4], strides = [1, 1, 1]} : vector<2x32x4xf32> to vector<2x31x4xf32>
    %279 = tpu.concatenate %278, %275 in 1 : vector<2x31x4xf32>, vector<2x1x4xf32> -> vector<2x32x4xf32>
    %280 = arith.addf %266, %277 : vector<2x32x4xf32>
    %281 = vector.broadcast %230 : vector<1x1x4xf32> to vector<2x32x4xf32>
    %282 = arith.addf %280, %281 : vector<2x32x4xf32>
    %283 = arith.addf %279, %270 : vector<2x32x4xf32>
    %284 = vector.broadcast %230 : vector<1x1x4xf32> to vector<2x32x4xf32>
    %285 = arith.addf %283, %284 : vector<2x32x4xf32>
    %286 = arith.negf %282 : vector<2x32x4xf32>
    %287 = math.exp %286 : vector<2x32x4xf32>
    %cst_187 = arith.constant 1.000000e+00 : f32
    %288 = vector.broadcast %cst_187 : f32 to vector<2x32x4xf32>
    %289 = arith.addf %288, %287 : vector<2x32x4xf32>
    %290 = arith.divf %288, %289 : vector<2x32x4xf32>
    %291 = arith.negf %285 : vector<2x32x4xf32>
    %292 = math.exp %291 : vector<2x32x4xf32>
    %cst_188 = arith.constant 1.000000e+00 : f32
    %293 = vector.broadcast %cst_188 : f32 to vector<2x32x4xf32>
    %294 = arith.addf %293, %292 : vector<2x32x4xf32>
    %295 = arith.divf %293, %294 : vector<2x32x4xf32>
    %296 = vector.shape_cast %290 : vector<2x32x4xf32> to vector<64x1x4xf32>
    %297 = vector.shape_cast %295 : vector<2x32x4xf32> to vector<64x1x4xf32>
    %298 = tpu.concatenate %296, %297 in 1 : vector<64x1x4xf32>, vector<64x1x4xf32> -> vector<64x2x4xf32>
    %299 = vector.shape_cast %298 : vector<64x2x4xf32> to vector<2x64x4xf32>
    %c0_189 = arith.constant 0 : index
    %c0_190 = arith.constant 0 : index
    %c0_191 = arith.constant 0 : index
    %300 = vector.load %arg19[%c0_189, %c0_190, %c0_191] : memref<2x64x4xf32, #tpu.memory_space<vmem>>, vector<2x64x4xf32>
    tpu.vector_store %arg19[%c0_189, %c0_190, %c0_191], %299 {strides = array<i32>} : memref<2x64x4xf32, #tpu.memory_space<vmem>>, vector<2x64x4xf32>,
    return
  }
}

</mosaic_0001>

<llo_original>
// kernel: generator_pallas.1
$region0: #{generator_pallas.1}
  #allocation0 [shape = 'u32[]', space=smem, size = 0x4, offset = 0x4, fixed_abs, tag = 'smem constant byte address 0x4 - core index']
  #allocation1 [shape = 'u32[144,128]{1,0:T(1,128)}', space=vmem, size = 0x12000, scoped, tag = 'internal scratch']
  %s0 = inlined_call_operand.vmem [shape: f32[2,16], index: 0, kind: input, shape index: {}]
  %s1 = inlined_call_operand.hbm [shape: f32[2,8], index: 1, kind: input, shape index: {}]
  %s2 = inlined_call_operand.vmem [shape: f32[8,16], index: 2, kind: input, shape index: {}]
  %s3 = inlined_call_operand.vmem [shape: f32[1,16], index: 3, kind: input, shape index: {}]
  %s4 = inlined_call_operand.vmem [shape: f32[8,16,32], index: 4, kind: input, shape index: {}]
  %s5 = inlined_call_operand.vmem [shape: f32[8,16,32], index: 5, kind: input, shape index: {}]
  %s6 = inlined_call_operand.hbm [shape: f32[8,1,32], index: 6, kind: input, shape index: {}]
  %s7 = inlined_call_operand.hbm [shape: f32[1,1,32], index: 7, kind: input, shape index: {}]
  %s8 = inlined_call_operand.hbm [shape: f32[1,1,32], index: 8, kind: input, shape index: {}]
  %s9 = inlined_call_operand.vmem [shape: f32[4,32,16], index: 9, kind: input, shape index: {}]
  %s10 = inlined_call_operand.hbm [shape: f32[1,1,16], index: 10, kind: input, shape index: {}]
  %s11 = inlined_call_operand.hbm [shape: f32[1,1,16], index: 11, kind: input, shape index: {}]
  %s12 = inlined_call_operand.hbm [shape: f32[1,1,16], index: 12, kind: input, shape index: {}]
  %s13 = inlined_call_operand.vmem [shape: f32[4,16,8], index: 13, kind: input, shape index: {}]
  %s14 = inlined_call_operand.hbm [shape: f32[1,1,8], index: 14, kind: input, shape index: {}]
  %s15 = inlined_call_operand.vmem [shape: f32[1,1,8], index: 15, kind: input, shape index: {}]
  %s16 = inlined_call_operand.hbm [shape: f32[1,1,8], index: 16, kind: input, shape index: {}]
  %s17 = inlined_call_operand.vmem [shape: f32[4,8,4], index: 17, kind: input, shape index: {}]
  %s18 = inlined_call_operand.hbm [shape: f32[1,1,4], index: 18, kind: input, shape index: {}]
  %s19 = inlined_call_operand.vmem [shape: f32[2,64,4], index: 19, kind: output, shape index: {}]
  %s20 = sld [smem:[#allocation0]]
  $region126: #{generator_pallas.1} parent=0
    _
  %s22 = ssub.s32 1, %s20
  %s23 = scalar_select 0, %s22, %s20
  $region1: #{generator_pallas.1} parent=0
    #allocation2 [shape = 'u8[1024]{0}', space=vmem, size = 0x400, scoped, tag = 'input window, operand 1, single buffered']
    #allocation3 [shape = 's32[1]{0}', space=sflag, size = 0x4, scoped, tag = 'scoped memory for generator_pallas.1']
    #allocation4 [shape = 'u8[4096]{0}', space=vmem, size = 0x1000, scoped, tag = 'input window, operand 6, single buffered']
    #allocation5 [shape = 's32[1]{0}', space=sflag, size = 0x4, scoped, tag = 'scoped memory for generator_pallas.1']
    #allocation6 [shape = 'u8[512]{0}', space=vmem, size = 0x400, scoped, tag = 'input window, operand 7, single buffered']
    #allocation7 [shape = 'u8[512]{0}', space=vmem, size = 0x400, scoped, tag = 'input window, operand 8, single buffered']
    #allocation8 [shape = 's32[1]{0}', space=sflag, size = 0x4, scoped, tag = 'scoped memory for generator_pallas.1']
    #allocation9 [shape = 'u8[512]{0}', space=vmem, size = 0x400, scoped, tag = 'input window, operand 10, single buffered']
    #allocation10 [shape = 'u8[512]{0}', space=vmem, size = 0x400, scoped, tag = 'input window, operand 11, single buffered']
    #allocation11 [shape = 's32[1]{0}', space=sflag, size = 0x4, scoped, tag = 'scoped memory for generator_pallas.1']
    #allocation12 [shape = 'u8[512]{0}', space=vmem, size = 0x400, scoped, tag = 'input window, operand 12, single buffered']
    #allocation13 [shape = 'u8[512]{0}', space=vmem, size = 0x400, scoped, tag = 'input window, operand 14, single buffered']
    #allocation14 [shape = 's32[1]{0}', space=sflag, size = 0x4, scoped, tag = 'scoped memory for generator_pallas.1']
    #allocation15 [shape = 'u8[512]{0}', space=vmem, size = 0x400, scoped, tag = 'input window, operand 16, single buffered']
    #allocation16 [shape = 'u8[512]{0}', space=vmem, size = 0x400, scoped, tag = 'input window, operand 18, single buffered']
    #allocation17 [shape = 's32[1]{0}', space=sflag, size = 0x4, scoped, tag = 'scoped memory for generator_pallas.1']
    %24 = vsyncpa [#allocation3], 0
    %25 = vsyncpa [#allocation5], 0
    %26 = vsyncpa [#allocation8], 0
    %27 = vsyncpa [#allocation11], 0
    %28 = vsyncpa [#allocation14], 0
    %29 = vsyncpa [#allocation17], 0
    // Predicated region
    $region2: #{generator_pallas.1} parent=1 // pred_check
      _
    $region3: #{generator_pallas.1} parent=1 // pred_check_branch
      %31 = sbr.rel (0) target = $region5
    $region4: #{generator_pallas.1} parent=1 // pred_region
      _
    $region5: #{generator_pallas.1} parent=1 // pred_fallthru
      _
    // Predicated region
    $region6: #{generator_pallas.1} parent=1 // pred_check
      _
    $region7: #{generator_pallas.1} parent=1 // pred_check_branch
      %33 = sbr.rel (0) target = $region9
    $region8: #{generator_pallas.1} parent=1 // pred_region
      %s35 = ssub.s32 32, 32
      %36 = vsyncadd [#allocation3], %s35
      %s38 = sshll.u32 [#allocation2], 4
      %s39 = int_to_ptr.vmem [resolvable:$true] %s38
      %41 = dma.hbm_to_vmem [thread:$0]  %s1, 32, %s39, [#allocation3]
    $region9: #{generator_pallas.1} parent=1 // pred_fallthru
      _
    // Predicated region
    $region10: #{generator_pallas.1} parent=1 // pred_check
      _
    $region11: #{generator_pallas.1} parent=1 // pred_check_branch
      %43 = sbr.rel (0) target = $region13
    $region12: #{generator_pallas.1} parent=1 // pred_region
      _
    $region13: #{generator_pallas.1} parent=1 // pred_fallthru
      _
    // Predicated region
    $region14: #{generator_pallas.1} parent=1 // pred_check
      _
    $region15: #{generator_pallas.1} parent=1 // pred_check_branch
      %45 = sbr.rel (0) target = $region17
    $region16: #{generator_pallas.1} parent=1 // pred_region
      _
    $region17: #{generator_pallas.1} parent=1 // pred_fallthru
      _
    // Predicated region
    $region18: #{generator_pallas.1} parent=1 // pred_check
      _
    $region19: #{generator_pallas.1} parent=1 // pred_check_branch
      %47 = sbr.rel (0) target = $region21
    $region20: #{generator_pallas.1} parent=1 // pred_region
      _
    $region21: #{generator_pallas.1} parent=1 // pred_fallthru
      _
    // Predicated region
    $region22: #{generator_pallas.1} parent=1 // pred_check
      _
    $region23: #{generator_pallas.1} parent=1 // pred_check_branch
      %49 = sbr.rel (0) target = $region25
    $region24: #{generator_pallas.1} parent=1 // pred_region
      _
    $region25: #{generator_pallas.1} parent=1 // pred_fallthru
      _
    // Predicated region
    $region26: #{generator_pallas.1} parent=1 // pred_check
      _
    $region27: #{generator_pallas.1} parent=1 // pred_check_branch
      %51 = sbr.rel (0) target = $region29
    $region28: #{generator_pallas.1} parent=1 // pred_region
      %s53 = ssub.s32 128, 128
      %54 = vsyncadd [#allocation5], %s53
      %s55 = sshll.u32 [#allocation4], 4
      %s56 = int_to_ptr.vmem [resolvable:$true] %s55
      %61 = dma.hbm_to_vmem [thread:$0]  %s6, 128, %s56, [#allocation5], 16, 16, 1
    $region29: #{generator_pallas.1} parent=1 // pred_fallthru
      _
    // Predicated region
    $region30: #{generator_pallas.1} parent=1 // pred_check
      _
    $region31: #{generator_pallas.1} parent=1 // pred_check_branch
      %63 = sbr.rel (0) target = $region33
    $region32: #{generator_pallas.1} parent=1 // pred_region
      %s65 = ssub.s32 16, 16
      %66 = vsyncadd [#allocation5], %s65
      %s68 = sshll.u32 [#allocation6], 4
      %s69 = int_to_ptr.vmem [resolvable:$true] %s68
      %71 = dma.hbm_to_vmem [thread:$0]  %s7, 16, %s69, [#allocation5]
    $region33: #{generator_pallas.1} parent=1 // pred_fallthru
      _
    // Predicated region
    $region34: #{generator_pallas.1} parent=1 // pred_check
      _
    $region35: #{generator_pallas.1} parent=1 // pred_check_branch
      %73 = sbr.rel (0) target = $region37
    $region36: #{generator_pallas.1} parent=1 // pred_region
      %s75 = ssub.s32 16, 16
      %76 = vsyncadd [#allocation8], %s75
      %s78 = sshll.u32 [#allocation7], 4
      %s79 = int_to_ptr.vmem [resolvable:$true] %s78
      %81 = dma.hbm_to_vmem [thread:$0]  %s8, 16, %s79, [#allocation8]
    $region37: #{generator_pallas.1} parent=1 // pred_fallthru
      _
    // Predicated region
    $region38: #{generator_pallas.1} parent=1 // pred_check
      _
    $region39: #{generator_pallas.1} parent=1 // pred_check_branch
      %83 = sbr.rel (0) target = $region41
    $region40: #{generator_pallas.1} parent=1 // pred_region
      _
    $region41: #{generator_pallas.1} parent=1 // pred_fallthru
      _
    // Predicated region
    $region42: #{generator_pallas.1} parent=1 // pred_check
      _
    $region43: #{generator_pallas.1} parent=1 // pred_check_branch
      %85 = sbr.rel (0) target = $region45
    $region44: #{generator_pallas.1} parent=1 // pred_region
      %s87 = ssub.s32 16, 16
      %88 = vsyncadd [#allocation8], %s87
      %s90 = sshll.u32 [#allocation9], 4
      %s91 = int_to_ptr.vmem [resolvable:$true] %s90
      %93 = dma.hbm_to_vmem [thread:$0]  %s10, 16, %s91, [#allocation8]
    $region45: #{generator_pallas.1} parent=1 // pred_fallthru
      _
    // Predicated region
    $region46: #{generator_pallas.1} parent=1 // pred_check
      _
    $region47: #{generator_pallas.1} parent=1 // pred_check_branch
      %95 = sbr.rel (0) target = $region49
    $region48: #{generator_pallas.1} parent=1 // pred_region
      %s97 = ssub.s32 16, 16
      %98 = vsyncadd [#allocation11], %s97
      %s100 = sshll.u32 [#allocation10], 4
      %s101 = int_to_ptr.vmem [resolvable:$true] %s100
      %103 = dma.hbm_to_vmem [thread:$0]  %s11, 16, %s101, [#allocation11]
    $region49: #{generator_pallas.1} parent=1 // pred_fallthru
      _
    // Predicated region
    $region50: #{generator_pallas.1} parent=1 // pred_check
      _
    $region51: #{generator_pallas.1} parent=1 // pred_check_branch
      %105 = sbr.rel (0) target = $region53
    $region52: #{generator_pallas.1} parent=1 // pred_region
      %s107 = ssub.s32 16, 16
      %108 = vsyncadd [#allocation11], %s107
      %s110 = sshll.u32 [#allocation12], 4
      %s111 = int_to_ptr.vmem [resolvable:$true] %s110
      %113 = dma.hbm_to_vmem [thread:$0]  %s12, 16, %s111, [#allocation11]
    $region53: #{generator_pallas.1} parent=1 // pred_fallthru
      _
    // Predicated region
    $region54: #{generator_pallas.1} parent=1 // pred_check
      _
    $region55: #{generator_pallas.1} parent=1 // pred_check_branch
      %115 = sbr.rel (0) target = $region57
    $region56: #{generator_pallas.1} parent=1 // pred_region
      _
    $region57: #{generator_pallas.1} parent=1 // pred_fallthru
      _
    // Predicated region
    $region58: #{generator_pallas.1} parent=1 // pred_check
      _
    $region59: #{generator_pallas.1} parent=1 // pred_check_branch
      %117 = sbr.rel (0) target = $region61
    $region60: #{generator_pallas.1} parent=1 // pred_region
      %s119 = ssub.s32 16, 16
      %120 = vsyncadd [#allocation14], %s119
      %s122 = sshll.u32 [#allocation13], 4
      %s123 = int_to_ptr.vmem [resolvable:$true] %s122
      %125 = dma.hbm_to_vmem [thread:$0]  %s14, 16, %s123, [#allocation14]
    $region61: #{generator_pallas.1} parent=1 // pred_fallthru
      _
    // Predicated region
    $region62: #{generator_pallas.1} parent=1 // pred_check
      _
    $region63: #{generator_pallas.1} parent=1 // pred_check_branch
      %127 = sbr.rel (0) target = $region65
    $region64: #{generator_pallas.1} parent=1 // pred_region
      _
    $region65: #{generator_pallas.1} parent=1 // pred_fallthru
      _
    // Predicated region
    $region66: #{generator_pallas.1} parent=1 // pred_check
      _
    $region67: #{generator_pallas.1} parent=1 // pred_check_branch
      %129 = sbr.rel (0) target = $region69
    $region68: #{generator_pallas.1} parent=1 // pred_region
      %s131 = ssub.s32 16, 16
      %132 = vsyncadd [#allocation14], %s131
      %s134 = sshll.u32 [#allocation15], 4
      %s135 = int_to_ptr.vmem [resolvable:$true] %s134
      %137 = dma.hbm_to_vmem [thread:$0]  %s16, 16, %s135, [#allocation14]
    $region69: #{generator_pallas.1} parent=1 // pred_fallthru
      _
    // Predicated region
    $region70: #{generator_pallas.1} parent=1 // pred_check
      _
    $region71: #{generator_pallas.1} parent=1 // pred_check_branch
      %139 = sbr.rel (0) target = $region73
    $region72: #{generator_pallas.1} parent=1 // pred_region
      _
    $region73: #{generator_pallas.1} parent=1 // pred_fallthru
      _
    // Predicated region
    $region74: #{generator_pallas.1} parent=1 // pred_check
      _
    $region75: #{generator_pallas.1} parent=1 // pred_check_branch
      %141 = sbr.rel (0) target = $region77
    $region76: #{generator_pallas.1} parent=1 // pred_region
      %s143 = ssub.s32 16, 16
      %144 = vsyncadd [#allocation17], %s143
      %s146 = sshll.u32 [#allocation16], 4
      %s147 = int_to_ptr.vmem [resolvable:$true] %s146
      %149 = dma.hbm_to_vmem [thread:$0]  %s18, 16, %s147, [#allocation17]
    $region77: #{generator_pallas.1} parent=1 // pred_fallthru
      _
    // Predicated region
    $region78: #{generator_pallas.1} parent=1 // pred_check
      _
    $region79: #{generator_pallas.1} parent=1 // pred_check_branch
      %151 = sbr.rel (0) target = $region81
    $region80: #{generator_pallas.1} parent=1 // pred_region
      %152 = dma.done [#allocation3], 32
    $region81: #{generator_pallas.1} parent=1 // pred_fallthru
      _
    // Predicated region
    $region82: #{generator_pallas.1} parent=1 // pred_check
      _
    $region83: #{generator_pallas.1} parent=1 // pred_check_branch
      %154 = sbr.rel (0) target = $region85
    $region84: #{generator_pallas.1} parent=1 // pred_region
      %155 = dma.done [#allocation5], 128
    $region85: #{generator_pallas.1} parent=1 // pred_fallthru
      _
    // Predicated region
    $region86: #{generator_pallas.1} parent=1 // pred_check
      _
    $region87: #{generator_pallas.1} parent=1 // pred_check_branch
      %157 = sbr.rel (0) target = $region89
    $region88: #{generator_pallas.1} parent=1 // pred_region
      %158 = dma.done [#allocation5], 16
    $region89: #{generator_pallas.1} parent=1 // pred_fallthru
      _
    // Predicated region
    $region90: #{generator_pallas.1} parent=1 // pred_check
      _
    $region91: #{generator_pallas.1} parent=1 // pred_check_branch
      %160 = sbr.rel (0) target = $region93
    $region92: #{generator_pallas.1} parent=1 // pred_region
      %161 = dma.done [#allocation8], 16
    $region93: #{generator_pallas.1} parent=1 // pred_fallthru
      _
    // Predicated region
    $region94: #{generator_pallas.1} parent=1 // pred_check
      _
    $region95: #{generator_pallas.1} parent=1 // pred_check_branch
      %163 = sbr.rel (0) target = $region97
    $region96: #{generator_pallas.1} parent=1 // pred_region
      %164 = dma.done [#allocation8], 16
    $region97: #{generator_pallas.1} parent=1 // pred_fallthru
      _
    // Predicated region
    $region98: #{generator_pallas.1} parent=1 // pred_check
      _
    $region99: #{generator_pallas.1} parent=1 // pred_check_branch
      %166 = sbr.rel (0) target = $region101
    $region100: #{generator_pallas.1} parent=1 // pred_region
      %167 = dma.done [#allocation11], 16
    $region101: #{generator_pallas.1} parent=1 // pred_fallthru
      _
    // Predicated region
    $region102: #{generator_pallas.1} parent=1 // pred_check
      _
    $region103: #{generator_pallas.1} parent=1 // pred_check_branch
      %169 = sbr.rel (0) target = $region105
    $region104: #{generator_pallas.1} parent=1 // pred_region
      %170 = dma.done [#allocation11], 16
    $region105: #{generator_pallas.1} parent=1 // pred_fallthru
      _
    // Predicated region
    $region106: #{generator_pallas.1} parent=1 // pred_check
      _
    $region107: #{generator_pallas.1} parent=1 // pred_check_branch
      %172 = sbr.rel (0) target = $region109
    $region108: #{generator_pallas.1} parent=1 // pred_region
      %173 = dma.done [#allocation14], 16
    $region109: #{generator_pallas.1} parent=1 // pred_fallthru
      _
    // Predicated region
    $region110: #{generator_pallas.1} parent=1 // pred_check
      _
    $region111: #{generator_pallas.1} parent=1 // pred_check_branch
      %175 = sbr.rel (0) target = $region113
    $region112: #{generator_pallas.1} parent=1 // pred_region
      %176 = dma.done [#allocation14], 16
    $region113: #{generator_pallas.1} parent=1 // pred_fallthru
      _
    // Predicated region
    $region114: #{generator_pallas.1} parent=1 // pred_check
      _
    $region115: #{generator_pallas.1} parent=1 // pred_check_branch
      %178 = sbr.rel (0) target = $region117
    $region116: #{generator_pallas.1} parent=1 // pred_region
      %179 = dma.done [#allocation17], 16
    $region117: #{generator_pallas.1} parent=1 // pred_fallthru
      _
    %v180 = vld [vmem:[%s0] sm:$0x3]
    %v181 = vld [vmem:[#allocation2] sm:$0x3]
    %v182 = vld [vmem:[%s2] sm:$0xff]
    %v183 = vld [vmem:[%s3] sm:$0x1]
    %v185 = vlaneseq
    %v186 = vshrl.u32 %v185, 7
    %v187 = vsub.s32 0, %v186
    %v188 = vrot.slane %v183, %v187
    %vm190 = vcmask 64512
    %v192 = vsel %vm190, %v181, 0
    %194 = vmatprep.subr.mxu0 0.0
    %195 = vmatpush1.msra.mxu0 %v182
    %196 = vmatprep.subr.mxu0 0.0
    %197 = vmatpush1.msra.mxu0 0.0
    %198 = vmatprep.subr.mxu0 0.0
    %199 = vmatpush1.msra.mxu0 0.0
    %200 = vmatprep.subr.mxu0 0.0
    %201 = vmatpush1.msra.mxu0 0.0
    %202 = vmatprep.subr.mxu0 0.0
    %203 = vmatpush1.msra.mxu0 0.0
    %204 = vmatprep.subr.mxu0 0.0
    %205 = vmatpush1.msra.mxu0 0.0
    %206 = vmatprep.subr.mxu0 0.0
    %207 = vmatpush1.msra.mxu0 0.0
    %208 = vmatprep.subr.mxu0 0.0
    %209 = vmatpush1.msra.mxu0 0.0
    %210 = vmatprep.subr.mxu0 0.0
    %211 = vmatpush1.msra.mxu0 0.0
    %212 = vmatprep.subr.mxu0 0.0
    %213 = vmatpush1.msra.mxu0 0.0
    %214 = vmatprep.subr.mxu0 0.0
    %215 = vmatpush1.msra.mxu0 0.0
    %216 = vmatprep.subr.mxu0 0.0
    %217 = vmatpush1.msra.mxu0 0.0
    %218 = vmatprep.subr.mxu0 0.0
    %219 = vmatpush1.msra.mxu0 0.0
    %220 = vmatprep.subr.mxu0 0.0
    %221 = vmatpush1.msra.mxu0 0.0
    %222 = vmatprep.subr.mxu0 0.0
    %223 = vmatpush1.msra.mxu0 0.0
    %224 = vmatprep.subr.mxu0 0.0
    %225 = vmatpush1.msra.mxu0 0.0
    %226 = vmatprep.subr.mxu0 0.0
    %227 = vmatpush1.msra.mxu0 0.0
    %228 = vmatprep.subr.mxu0 0.0
    %229 = vmatpush1.msra.mxu0 0.0
    %230 = vmatprep.subr.mxu0 0.0
    %231 = vmatpush1.msra.mxu0 0.0
    %232 = vmatprep.subr.mxu0 0.0
    %233 = vmatpush1.msra.mxu0 0.0
    %234 = vmatprep.subr.mxu0 0.0
    %235 = vmatpush1.msra.mxu0 0.0
    %236 = vmatprep.subr.mxu0 0.0
    %237 = vmatpush1.msra.mxu0 0.0
    %238 = vmatprep.subr.mxu0 0.0
    %239 = vmatpush1.msra.mxu0 0.0
    %240 = vmatprep.subr.mxu0 0.0
    %241 = vmatpush1.msra.mxu0 0.0
    %242 = vmatprep.subr.mxu0 0.0
    %243 = vmatpush1.msra.mxu0 0.0
    %244 = vmatprep.subr.mxu0 0.0
    %245 = vmatpush1.msra.mxu0 0.0
    %246 = vmatprep.subr.mxu0 0.0
    %247 = vmatpush1.msra.mxu0 0.0
    %248 = vmatprep.subr.mxu0 0.0
    %249 = vmatpush1.msra.mxu0 0.0
    %250 = vmatprep.subr.mxu0 0.0
    %251 = vmatpush1.msra.mxu0 0.0
    %252 = vmatprep.subr.mxu0 0.0
    %253 = vmatpush1.msra.mxu0 0.0
    %254 = vmatprep.subr.mxu0 0.0
    %255 = vmatpush1.msra.mxu0 0.0
    %256 = vmatprep.subr.mxu0 0.0
    %257 = vmatpush1.msra.mxu0 0.0
    %258 = vmatprep.mubr.f32.mxu0 0.0
    %259 = vmatmul.mubr.f32.gmra.mrb[0].mxu0 %v192
    %v260 = vpop.f32.mrb[0].mxu0
    %v261 = vadd.f32 %v188, %v260
    %v262 = vpop.f32.mrb[0].mxu0
    %263 = vdwg.mxu0
    %v264 = vld [vmem:[%s4] sm:$0xff]
    %v265 = vld [vmem:[%s4 + $0x8] sm:$0xff]
    %v266 = vld [vmem:[%s5] sm:$0xff]
    %v267 = vld [vmem:[%s5 + $0x8] sm:$0xff]
    %vm268 = vcmask 130048
    %v270 = vsel %vm268, %v261, 0
    %272 = vmatprep.subr.mxu0 0.0
    %273 = vmatpush1.msra.mxu0 %v266
    %274 = vmatprep.subr.mxu0 0.0
    %275 = vmatpush1.msra.mxu0 %v267
    %276 = vmatprep.subr.mxu0 0.0
    %277 = vmatpush1.msra.mxu0 0.0
    %278 = vmatprep.subr.mxu0 0.0
    %279 = vmatpush1.msra.mxu0 0.0
    %280 = vmatprep.subr.mxu0 0.0
    %281 = vmatpush1.msra.mxu0 0.0
    %282 = vmatprep.subr.mxu0 0.0
    %283 = vmatpush1.msra.mxu0 0.0
    %284 = vmatprep.subr.mxu0 0.0
    %285 = vmatpush1.msra.mxu0 0.0
    %286 = vmatprep.subr.mxu0 0.0
    %287 = vmatpush1.msra.mxu0 0.0
    %288 = vmatprep.subr.mxu0 0.0
    %289 = vmatpush1.msra.mxu0 0.0
    %290 = vmatprep.subr.mxu0 0.0
    %291 = vmatpush1.msra.mxu0 0.0
    %292 = vmatprep.subr.mxu0 0.0
    %293 = vmatpush1.msra.mxu0 0.0
    %294 = vmatprep.subr.mxu0 0.0
    %295 = vmatpush1.msra.mxu0 0.0
    %296 = vmatprep.subr.mxu0 0.0
    %297 = vmatpush1.msra.mxu0 0.0
    %298 = vmatprep.subr.mxu0 0.0
    %299 = vmatpush1.msra.mxu0 0.0
    %300 = vmatprep.subr.mxu0 0.0
    %301 = vmatpush1.msra.mxu0 0.0
    %302 = vmatprep.subr.mxu0 0.0
    %303 = vmatpush1.msra.mxu0 0.0
    %304 = vmatprep.subr.mxu0 0.0
    %305 = vmatpush1.msra.mxu0 0.0
    %306 = vmatprep.subr.mxu0 0.0
    %307 = vmatpush1.msra.mxu0 0.0
    %308 = vmatprep.subr.mxu0 0.0
    %309 = vmatpush1.msra.mxu0 0.0
    %310 = vmatprep.subr.mxu0 0.0
    %311 = vmatpush1.msra.mxu0 0.0
    %312 = vmatprep.subr.mxu0 0.0
    %313 = vmatpush1.msra.mxu0 0.0
    %314 = vmatprep.subr.mxu0 0.0
    %315 = vmatpush1.msra.mxu0 0.0
    %316 = vmatprep.subr.mxu0 0.0
    %317 = vmatpush1.msra.mxu0 0.0
    %318 = vmatprep.subr.mxu0 0.0
    %319 = vmatpush1.msra.mxu0 0.0
    %320 = vmatprep.subr.mxu0 0.0
    %321 = vmatpush1.msra.mxu0 0.0
    %322 = vmatprep.subr.mxu0 0.0
    %323 = vmatpush1.msra.mxu0 0.0
    %324 = vmatprep.subr.mxu0 0.0
    %325 = vmatpush1.msra.mxu0 0.0
    %326 = vmatprep.subr.mxu0 0.0
    %327 = vmatpush1.msra.mxu0 0.0
    %328 = vmatprep.subr.mxu0 0.0
    %329 = vmatpush1.msra.mxu0 0.0
    %330 = vmatprep.subr.mxu0 0.0
    %331 = vmatpush1.msra.mxu0 0.0
    %332 = vmatprep.subr.mxu0 0.0
    %333 = vmatpush1.msra.mxu0 0.0
    %334 = vmatprep.subr.mxu0 0.0
    %335 = vmatpush1.msra.mxu0 0.0
    %336 = vmatprep.mubr.f32.mxu0 0.0
    %337 = vmatmul.mubr.f32.gmra.mrb[0].mxu0 %v270
    %v338 = vpop.f32.mrb[0].mxu0
    %v339 = vadd.f32 0.0, %v338
    %v340 = vpop.f32.mrb[0].mxu0
    %341 = vdwg.mxu0
    %v343 = vsel %vm268, %v180, 0
    %345 = vmatprep.subr.mxu0 0.0
    %346 = vmatpush1.msra.mxu0 %v264
    %347 = vmatprep.subr.mxu0 0.0
    %348 = vmatpush1.msra.mxu0 %v265
    %349 = vmatprep.subr.mxu0 0.0
    %350 = vmatpush1.msra.mxu0 0.0
    %351 = vmatprep.subr.mxu0 0.0
    %352 = vmatpush1.msra.mxu0 0.0
    %353 = vmatprep.subr.mxu0 0.0
    %354 = vmatpush1.msra.mxu0 0.0
    %355 = vmatprep.subr.mxu0 0.0
    %356 = vmatpush1.msra.mxu0 0.0
    %357 = vmatprep.subr.mxu0 0.0
    %358 = vmatpush1.msra.mxu0 0.0
    %359 = vmatprep.subr.mxu0 0.0
    %360 = vmatpush1.msra.mxu0 0.0
    %361 = vmatprep.subr.mxu0 0.0
    %362 = vmatpush1.msra.mxu0 0.0
    %363 = vmatprep.subr.mxu0 0.0
    %364 = vmatpush1.msra.mxu0 0.0
    %365 = vmatprep.subr.mxu0 0.0
    %366 = vmatpush1.msra.mxu0 0.0
    %367 = vmatprep.subr.mxu0 0.0
    %368 = vmatpush1.msra.mxu0 0.0
    %369 = vmatprep.subr.mxu0 0.0
    %370 = vmatpush1.msra.mxu0 0.0
    %371 = vmatprep.subr.mxu0 0.0
    %372 = vmatpush1.msra.mxu0 0.0
    %373 = vmatprep.subr.mxu0 0.0
    %374 = vmatpush1.msra.mxu0 0.0
    %375 = vmatprep.subr.mxu0 0.0
    %376 = vmatpush1.msra.mxu0 0.0
    %377 = vmatprep.subr.mxu0 0.0
    %378 = vmatpush1.msra.mxu0 0.0
    %379 = vmatprep.subr.mxu0 0.0
    %380 = vmatpush1.msra.mxu0 0.0
    %381 = vmatprep.subr.mxu0 0.0
    %382 = vmatpush1.msra.mxu0 0.0
    %383 = vmatprep.subr.mxu0 0.0
    %384 = vmatpush1.msra.mxu0 0.0
    %385 = vmatprep.subr.mxu0 0.0
    %386 = vmatpush1.msra.mxu0 0.0
    %387 = vmatprep.subr.mxu0 0.0
    %388 = vmatpush1.msra.mxu0 0.0
    %389 = vmatprep.subr.mxu0 0.0
    %390 = vmatpush1.msra.mxu0 0.0
    %391 = vmatprep.subr.mxu0 0.0
    %392 = vmatpush1.msra.mxu0 0.0
    %393 = vmatprep.subr.mxu0 0.0
    %394 = vmatpush1.msra.mxu0 0.0
    %395 = vmatprep.subr.mxu0 0.0
    %396 = vmatpush1.msra.mxu0 0.0
    %397 = vmatprep.subr.mxu0 0.0
    %398 = vmatpush1.msra.mxu0 0.0
    %399 = vmatprep.subr.mxu0 0.0
    %400 = vmatpush1.msra.mxu0 0.0
    %401 = vmatprep.subr.mxu0 0.0
    %402 = vmatpush1.msra.mxu0 0.0
    %403 = vmatprep.subr.mxu0 0.0
    %404 = vmatpush1.msra.mxu0 0.0
    %405 = vmatprep.subr.mxu0 0.0
    %406 = vmatpush1.msra.mxu0 0.0
    %407 = vmatprep.subr.mxu0 0.0
    %408 = vmatpush1.msra.mxu0 0.0
    %409 = vmatprep.mubr.f32.mxu0 0.0
    %410 = vmatmul.mubr.f32.gmra.mrb[0].mxu0 %v343
    %v411 = vpop.f32.mrb[0].mxu0
    %v412 = vadd.f32 %v339, %v411
    %v413 = vpop.f32.mrb[0].mxu0
    %414 = vdwg.mxu0
    %v415 = vld [vmem:[#allocation4] sm:$0x1]
    %v417 = vlaneseq
    %v418 = vshrl.u32 %v417, 7
    %v419 = vsub.s32 0, %v418
    %v420 = vrot.slane %v415, %v419
    %v422 = vadd.f32 %v412, %v420
    %v425 = vunpack.c.l.s4 1966171168
    %v426 = vunpack.c.0.s8 %v425
    %v427 = vlaneseq
    %v428 = vshrl.u32 %v427, 7
    %v429 = vsub.s32 %v426, %v428
    %v430 = vrot.slane %v422, %v429
    %v431 = vcombine.high %v430, %v430
    %v433 = vunpack.c.l.s4 1966171168
    %v434 = vunpack.c.0.s8 %v433
    %v435 = vlaneseq
    %v436 = vshrl.u32 %v435, 7
    %v437 = vsub.s32 %v434, %v436
    %v438 = vrot.slane %v430, %v437
    %v440 = vunpack.c.l.s4 1966171168
    %v441 = vunpack.c.0.s8 %v440
    %v442 = vlaneseq
    %v443 = vshrl.u32 %v442, 7
    %v444 = vsub.s32 %v441, %v443
    %v445 = vrot.slane %v431, %v444
    %s448 = scalar_lea.vmem %s4, 16
    %v449 = vld [vmem:[%s448] sm:$0xff]
    %v450 = vld [vmem:[%s448 + $0x8] sm:$0xff]
    %s451 = scalar_lea.vmem %s5, 16
    %v452 = vld [vmem:[%s451] sm:$0xff]
    %v453 = vld [vmem:[%s451 + $0x8] sm:$0xff]
    %454 = vmatprep.subr.mxu0 0.0
    %455 = vmatpush1.msra.mxu0 %v452
    %456 = vmatprep.subr.mxu0 0.0
    %457 = vmatpush1.msra.mxu0 %v453
    %458 = vmatprep.subr.mxu0 0.0
    %459 = vmatpush1.msra.mxu0 0.0
    %460 = vmatprep.subr.mxu0 0.0
    %461 = vmatpush1.msra.mxu0 0.0
    %462 = vmatprep.subr.mxu0 0.0
    %463 = vmatpush1.msra.mxu0 0.0
    %464 = vmatprep.subr.mxu0 0.0
    %465 = vmatpush1.msra.mxu0 0.0
    %466 = vmatprep.subr.mxu0 0.0
    %467 = vmatpush1.msra.mxu0 0.0
    %468 = vmatprep.subr.mxu0 0.0
    %469 = vmatpush1.msra.mxu0 0.0
    %470 = vmatprep.subr.mxu0 0.0
    %471 = vmatpush1.msra.mxu0 0.0
    %472 = vmatprep.subr.mxu0 0.0
    %473 = vmatpush1.msra.mxu0 0.0
    %474 = vmatprep.subr.mxu0 0.0
    %475 = vmatpush1.msra.mxu0 0.0
    %476 = vmatprep.subr.mxu0 0.0
    %477 = vmatpush1.msra.mxu0 0.0
    %478 = vmatprep.subr.mxu0 0.0
    %479 = vmatpush1.msra.mxu0 0.0
    %480 = vmatprep.subr.mxu0 0.0
    %481 = vmatpush1.msra.mxu0 0.0
    %482 = vmatprep.subr.mxu0 0.0
    %483 = vmatpush1.msra.mxu0 0.0
    %484 = vmatprep.subr.mxu0 0.0
    %485 = vmatpush1.msra.mxu0 0.0
    %486 = vmatprep.subr.mxu0 0.0
    %487 = vmatpush1.msra.mxu0 0.0
    %488 = vmatprep.subr.mxu0 0.0
    %489 = vmatpush1.msra.mxu0 0.0
    %490 = vmatprep.subr.mxu0 0.0
    %491 = vmatpush1.msra.mxu0 0.0
    %492 = vmatprep.subr.mxu0 0.0
    %493 = vmatpush1.msra.mxu0 0.0
    %494 = vmatprep.subr.mxu0 0.0
    %495 = vmatpush1.msra.mxu0 0.0
    %496 = vmatprep.subr.mxu0 0.0
    %497 = vmatpush1.msra.mxu0 0.0
    %498 = vmatprep.subr.mxu0 0.0
    %499 = vmatpush1.msra.mxu0 0.0
    %500 = vmatprep.subr.mxu0 0.0
    %501 = vmatpush1.msra.mxu0 0.0
    %502 = vmatprep.subr.mxu0 0.0
    %503 = vmatpush1.msra.mxu0 0.0
    %504 = vmatprep.subr.mxu0 0.0
    %505 = vmatpush1.msra.mxu0 0.0
    %506 = vmatprep.subr.mxu0 0.0
    %507 = vmatpush1.msra.mxu0 0.0
    %508 = vmatprep.subr.mxu0 0.0
    %509 = vmatpush1.msra.mxu0 0.0
    %510 = vmatprep.subr.mxu0 0.0
    %511 = vmatpush1.msra.mxu0 0.0
    %512 = vmatprep.subr.mxu0 0.0
    %513 = vmatpush1.msra.mxu0 0.0
    %514 = vmatprep.subr.mxu0 0.0
    %515 = vmatpush1.msra.mxu0 0.0
    %516 = vmatprep.subr.mxu0 0.0
    %517 = vmatpush1.msra.mxu0 0.0
    %518 = vmatprep.mubr.f32.mxu0 0.0
    %519 = vmatmul.mubr.f32.gmra.mrb[0].mxu0 %v270
    %v520 = vpop.f32.mrb[0].mxu0
    %v521 = vadd.f32 0.0, %v520
    %v522 = vpop.f32.mrb[0].mxu0
    %523 = vdwg.mxu0
    %524 = vmatprep.subr.mxu0 0.0
    %525 = vmatpush1.msra.mxu0 %v449
    %526 = vmatprep.subr.mxu0 0.0
    %527 = vmatpush1.msra.mxu0 %v450
    %528 = vmatprep.subr.mxu0 0.0
    %529 = vmatpush1.msra.mxu0 0.0
    %530 = vmatprep.subr.mxu0 0.0
    %531 = vmatpush1.msra.mxu0 0.0
    %532 = vmatprep.subr.mxu0 0.0
    %533 = vmatpush1.msra.mxu0 0.0
    %534 = vmatprep.subr.mxu0 0.0
    %535 = vmatpush1.msra.mxu0 0.0
    %536 = vmatprep.subr.mxu0 0.0
    %537 = vmatpush1.msra.mxu0 0.0
    %538 = vmatprep.subr.mxu0 0.0
    %539 = vmatpush1.msra.mxu0 0.0
    %540 = vmatprep.subr.mxu0 0.0
    %541 = vmatpush1.msra.mxu0 0.0
    %542 = vmatprep.subr.mxu0 0.0
    %543 = vmatpush1.msra.mxu0 0.0
    %544 = vmatprep.subr.mxu0 0.0
    %545 = vmatpush1.msra.mxu0 0.0
    %546 = vmatprep.subr.mxu0 0.0
    %547 = vmatpush1.msra.mxu0 0.0
    %548 = vmatprep.subr.mxu0 0.0
    %549 = vmatpush1.msra.mxu0 0.0
    %550 = vmatprep.subr.mxu0 0.0
    %551 = vmatpush1.msra.mxu0 0.0
    %552 = vmatprep.subr.mxu0 0.0
    %553 = vmatpush1.msra.mxu0 0.0
    %554 = vmatprep.subr.mxu0 0.0
    %555 = vmatpush1.msra.mxu0 0.0
    %556 = vmatprep.subr.mxu0 0.0
    %557 = vmatpush1.msra.mxu0 0.0
    %558 = vmatprep.subr.mxu0 0.0
    %559 = vmatpush1.msra.mxu0 0.0
    %560 = vmatprep.subr.mxu0 0.0
    %561 = vmatpush1.msra.mxu0 0.0
    %562 = vmatprep.subr.mxu0 0.0
    %563 = vmatpush1.msra.mxu0 0.0
    %564 = vmatprep.subr.mxu0 0.0
    %565 = vmatpush1.msra.mxu0 0.0
    %566 = vmatprep.subr.mxu0 0.0
    %567 = vmatpush1.msra.mxu0 0.0
    %568 = vmatprep.subr.mxu0 0.0
    %569 = vmatpush1.msra.mxu0 0.0
    %570 = vmatprep.subr.mxu0 0.0
    %571 = vmatpush1.msra.mxu0 0.0
    %572 = vmatprep.subr.mxu0 0.0
    %573 = vmatpush1.msra.mxu0 0.0
    %574 = vmatprep.subr.mxu0 0.0
    %575 = vmatpush1.msra.mxu0 0.0
    %576 = vmatprep.subr.mxu0 0.0
    %577 = vmatpush1.msra.mxu0 0.0
    %578 = vmatprep.subr.mxu0 0.0
    %579 = vmatpush1.msra.mxu0 0.0
    %580 = vmatprep.subr.mxu0 0.0
    %581 = vmatpush1.msra.mxu0 0.0
    %582 = vmatprep.subr.mxu0 0.0
    %583 = vmatpush1.msra.mxu0 0.0
    %584 = vmatprep.subr.mxu0 0.0
    %585 = vmatpush1.msra.mxu0 0.0
    %586 = vmatprep.subr.mxu0 0.0
    %587 = vmatpush1.msra.mxu0 0.0
    %588 = vmatprep.mubr.f32.mxu0 0.0
    %589 = vmatmul.mubr.f32.gmra.mrb[0].mxu0 %v343
    %v590 = vpop.f32.mrb[0].mxu0
    %v591 = vadd.f32 %v521, %v590
    %v592 = vpop.f32.mrb[0].mxu0
    %593 = vdwg.mxu0
    %s594 = scalar_lea.vmem [#allocation4], 1
    %v595 = vld [vmem:[%s594] sm:$0x1]
    %v597 = vlaneseq
    %v598 = vshrl.u32 %v597, 7
    %v599 = vsub.s32 0, %v598
    %v600 = vrot.slane %v595, %v599
    %v602 = vadd.f32 %v591, %v600
    %v605 = vunpack.c.l.s4 1966171168
    %v606 = vunpack.c.0.s8 %v605
    %v607 = vlaneseq
    %v608 = vshrl.u32 %v607, 7
    %v609 = vsub.s32 %v606, %v608
    %v610 = vrot.slane %v602, %v609
    %v611 = vcombine.high %v610, %v610
    %v613 = vunpack.c.l.s4 1966171168
    %v614 = vunpack.c.0.s8 %v613
    %v615 = vlaneseq
    %v616 = vshrl.u32 %v615, 7
    %v617 = vsub.s32 %v614, %v616
    %v618 = vrot.slane %v610, %v617
    %v620 = vunpack.c.l.s4 1966171168
    %v621 = vunpack.c.0.s8 %v620
    %v622 = vlaneseq
    %v623 = vshrl.u32 %v622, 7
    %v624 = vsub.s32 %v621, %v623
    %v625 = vrot.slane %v611, %v624
    %s626 = scalar_lea.vmem %s4, 32
    %v627 = vld [vmem:[%s626] sm:$0xff]
    %v628 = vld [vmem:[%s626 + $0x8] sm:$0xff]
    %s629 = scalar_lea.vmem %s5, 32
    %v630 = vld [vmem:[%s629] sm:$0xff]
    %v631 = vld [vmem:[%s629 + $0x8] sm:$0xff]
    %632 = vmatprep.subr.mxu0 0.0
    %633 = vmatpush1.msra.mxu0 %v630
    %634 = vmatprep.subr.mxu0 0.0
    %635 = vmatpush1.msra.mxu0 %v631
    %636 = vmatprep.subr.mxu0 0.0
    %637 = vmatpush1.msra.mxu0 0.0
    %638 = vmatprep.subr.mxu0 0.0
    %639 = vmatpush1.msra.mxu0 0.0
    %640 = vmatprep.subr.mxu0 0.0
    %641 = vmatpush1.msra.mxu0 0.0
    %642 = vmatprep.subr.mxu0 0.0
    %643 = vmatpush1.msra.mxu0 0.0
    %644 = vmatprep.subr.mxu0 0.0
    %645 = vmatpush1.msra.mxu0 0.0
    %646 = vmatprep.subr.mxu0 0.0
    %647 = vmatpush1.msra.mxu0 0.0
    %648 = vmatprep.subr.mxu0 0.0
    %649 = vmatpush1.msra.mxu0 0.0
    %650 = vmatprep.subr.mxu0 0.0
    %651 = vmatpush1.msra.mxu0 0.0
    %652 = vmatprep.subr.mxu0 0.0
    %653 = vmatpush1.msra.mxu0 0.0
    %654 = vmatprep.subr.mxu0 0.0
    %655 = vmatpush1.msra.mxu0 0.0
    %656 = vmatprep.subr.mxu0 0.0
    %657 = vmatpush1.msra.mxu0 0.0
    %658 = vmatprep.subr.mxu0 0.0
    %659 = vmatpush1.msra.mxu0 0.0
    %660 = vmatprep.subr.mxu0 0.0
    %661 = vmatpush1.msra.mxu0 0.0
    %662 = vmatprep.subr.mxu0 0.0
    %663 = vmatpush1.msra.mxu0 0.0
    %664 = vmatprep.subr.mxu0 0.0
    %665 = vmatpush1.msra.mxu0 0.0
    %666 = vmatprep.subr.mxu0 0.0
    %667 = vmatpush1.msra.mxu0 0.0
    %668 = vmatprep.subr.mxu0 0.0
    %669 = vmatpush1.msra.mxu0 0.0
    %670 = vmatprep.subr.mxu0 0.0
    %671 = vmatpush1.msra.mxu0 0.0
    %672 = vmatprep.subr.mxu0 0.0
    %673 = vmatpush1.msra.mxu0 0.0
    %674 = vmatprep.subr.mxu0 0.0
    %675 = vmatpush1.msra.mxu0 0.0
    %676 = vmatprep.subr.mxu0 0.0
    %677 = vmatpush1.msra.mxu0 0.0
    %678 = vmatprep.subr.mxu0 0.0
    %679 = vmatpush1.msra.mxu0 0.0
    %680 = vmatprep.subr.mxu0 0.0
    %681 = vmatpush1.msra.mxu0 0.0
    %682 = vmatprep.subr.mxu0 0.0
    %683 = vmatpush1.msra.mxu0 0.0
    %684 = vmatprep.subr.mxu0 0.0
    %685 = vmatpush1.msra.mxu0 0.0
    %686 = vmatprep.subr.mxu0 0.0
    %687 = vmatpush1.msra.mxu0 0.0
    %688 = vmatprep.subr.mxu0 0.0
    %689 = vmatpush1.msra.mxu0 0.0
    %690 = vmatprep.subr.mxu0 0.0
    %691 = vmatpush1.msra.mxu0 0.0
    %692 = vmatprep.subr.mxu0 0.0
    %693 = vmatpush1.msra.mxu0 0.0
    %694 = vmatprep.subr.mxu0 0.0
    %695 = vmatpush1.msra.mxu0 0.0
    %696 = vmatprep.mubr.f32.mxu0 0.0
    %697 = vmatmul.mubr.f32.gmra.mrb[0].mxu0 %v270
    %v698 = vpop.f32.mrb[0].mxu0
    %v699 = vadd.f32 0.0, %v698
    %v700 = vpop.f32.mrb[0].mxu0
    %701 = vdwg.mxu0
    %702 = vmatprep.subr.mxu0 0.0
    %703 = vmatpush1.msra.mxu0 %v627
    %704 = vmatprep.subr.mxu0 0.0
    %705 = vmatpush1.msra.mxu0 %v628
    %706 = vmatprep.subr.mxu0 0.0
    %707 = vmatpush1.msra.mxu0 0.0
    %708 = vmatprep.subr.mxu0 0.0
    %709 = vmatpush1.msra.mxu0 0.0
    %710 = vmatprep.subr.mxu0 0.0
    %711 = vmatpush1.msra.mxu0 0.0
    %712 = vmatprep.subr.mxu0 0.0
    %713 = vmatpush1.msra.mxu0 0.0
    %714 = vmatprep.subr.mxu0 0.0
    %715 = vmatpush1.msra.mxu0 0.0
    %716 = vmatprep.subr.mxu0 0.0
    %717 = vmatpush1.msra.mxu0 0.0
    %718 = vmatprep.subr.mxu0 0.0
    %719 = vmatpush1.msra.mxu0 0.0
    %720 = vmatprep.subr.mxu0 0.0
    %721 = vmatpush1.msra.mxu0 0.0
    %722 = vmatprep.subr.mxu0 0.0
    %723 = vmatpush1.msra.mxu0 0.0
    %724 = vmatprep.subr.mxu0 0.0
    %725 = vmatpush1.msra.mxu0 0.0
    %726 = vmatprep.subr.mxu0 0.0
    %727 = vmatpush1.msra.mxu0 0.0
    %728 = vmatprep.subr.mxu0 0.0
    %729 = vmatpush1.msra.mxu0 0.0
    %730 = vmatprep.subr.mxu0 0.0
    %731 = vmatpush1.msra.mxu0 0.0
    %732 = vmatprep.subr.mxu0 0.0
    %733 = vmatpush1.msra.mxu0 0.0
    %734 = vmatprep.subr.mxu0 0.0
    %735 = vmatpush1.msra.mxu0 0.0
    %736 = vmatprep.subr.mxu0 0.0
    %737 = vmatpush1.msra.mxu0 0.0
    %738 = vmatprep.subr.mxu0 0.0
    %739 = vmatpush1.msra.mxu0 0.0
    %740 = vmatprep.subr.mxu0 0.0
    %741 = vmatpush1.msra.mxu0 0.0
    %742 = vmatprep.subr.mxu0 0.0
    %743 = vmatpush1.msra.mxu0 0.0
    %744 = vmatprep.subr.mxu0 0.0
    %745 = vmatpush1.msra.mxu0 0.0
    %746 = vmatprep.subr.mxu0 0.0
    %747 = vmatpush1.msra.mxu0 0.0
    %748 = vmatprep.subr.mxu0 0.0
    %749 = vmatpush1.msra.mxu0 0.0
    %750 = vmatprep.subr.mxu0 0.0
    %751 = vmatpush1.msra.mxu0 0.0
    %752 = vmatprep.subr.mxu0 0.0
    %753 = vmatpush1.msra.mxu0 0.0
    %754 = vmatprep.subr.mxu0 0.0
    %755 = vmatpush1.msra.mxu0 0.0
    %756 = vmatprep.subr.mxu0 0.0
    %757 = vmatpush1.msra.mxu0 0.0
    %758 = vmatprep.subr.mxu0 0.0
    %759 = vmatpush1.msra.mxu0 0.0
    %760 = vmatprep.subr.mxu0 0.0
    %761 = vmatpush1.msra.mxu0 0.0
    %762 = vmatprep.subr.mxu0 0.0
    %763 = vmatpush1.msra.mxu0 0.0
    %764 = vmatprep.subr.mxu0 0.0
    %765 = vmatpush1.msra.mxu0 0.0
    %766 = vmatprep.mubr.f32.mxu0 0.0
    %767 = vmatmul.mubr.f32.gmra.mrb[0].mxu0 %v343
    %v768 = vpop.f32.mrb[0].mxu0
    %v769 = vadd.f32 %v699, %v768
    %v770 = vpop.f32.mrb[0].mxu0
    %771 = vdwg.mxu0
    %s772 = scalar_lea.vmem [#allocation4], 2
    %v773 = vld [vmem:[%s772] sm:$0x1]
    %v775 = vlaneseq
    %v776 = vshrl.u32 %v775, 7
    %v777 = vsub.s32 0, %v776
    %v778 = vrot.slane %v773, %v777
    %v780 = vadd.f32 %v769, %v778
    %v783 = vunpack.c.l.s4 1966171168
    %v784 = vunpack.c.0.s8 %v783
    %v785 = vlaneseq
    %v786 = vshrl.u32 %v785, 7
    %v787 = vsub.s32 %v784, %v786
    %v788 = vrot.slane %v780, %v787
    %v789 = vcombine.high %v788, %v788
    %v791 = vunpack.c.l.s4 1966171168
    %v792 = vunpack.c.0.s8 %v791
    %v793 = vlaneseq
    %v794 = vshrl.u32 %v793, 7
    %v795 = vsub.s32 %v792, %v794
    %v796 = vrot.slane %v788, %v795
    %v798 = vunpack.c.l.s4 1966171168
    %v799 = vunpack.c.0.s8 %v798
    %v800 = vlaneseq
    %v801 = vshrl.u32 %v800, 7
    %v802 = vsub.s32 %v799, %v801
    %v803 = vrot.slane %v789, %v802
    %s804 = scalar_lea.vmem %s4, 48
    %v805 = vld [vmem:[%s804] sm:$0xff]
    %v806 = vld [vmem:[%s804 + $0x8] sm:$0xff]
    %s807 = scalar_lea.vmem %s5, 48
    %v808 = vld [vmem:[%s807] sm:$0xff]
    %v809 = vld [vmem:[%s807 + $0x8] sm:$0xff]
    %810 = vmatprep.subr.mxu0 0.0
    %811 = vmatpush1.msra.mxu0 %v808
    %812 = vmatprep.subr.mxu0 0.0
    %813 = vmatpush1.msra.mxu0 %v809
    %814 = vmatprep.subr.mxu0 0.0
    %815 = vmatpush1.msra.mxu0 0.0
    %816 = vmatprep.subr.mxu0 0.0
    %817 = vmatpush1.msra.mxu0 0.0
    %818 = vmatprep.subr.mxu0 0.0
    %819 = vmatpush1.msra.mxu0 0.0
    %820 = vmatprep.subr.mxu0 0.0
    %821 = vmatpush1.msra.mxu0 0.0
    %822 = vmatprep.subr.mxu0 0.0
    %823 = vmatpush1.msra.mxu0 0.0
    %824 = vmatprep.subr.mxu0 0.0
    %825 = vmatpush1.msra.mxu0 0.0
    %826 = vmatprep.subr.mxu0 0.0
    %827 = vmatpush1.msra.mxu0 0.0
    %828 = vmatprep.subr.mxu0 0.0
    %829 = vmatpush1.msra.mxu0 0.0
    %830 = vmatprep.subr.mxu0 0.0
    %831 = vmatpush1.msra.mxu0 0.0
    %832 = vmatprep.subr.mxu0 0.0
    %833 = vmatpush1.msra.mxu0 0.0
    %834 = vmatprep.subr.mxu0 0.0
    %835 = vmatpush1.msra.mxu0 0.0
    %836 = vmatprep.subr.mxu0 0.0
    %837 = vmatpush1.msra.mxu0 0.0
    %838 = vmatprep.subr.mxu0 0.0
    %839 = vmatpush1.msra.mxu0 0.0
    %840 = vmatprep.subr.mxu0 0.0
    %841 = vmatpush1.msra.mxu0 0.0
    %842 = vmatprep.subr.mxu0 0.0
    %843 = vmatpush1.msra.mxu0 0.0
    %844 = vmatprep.subr.mxu0 0.0
    %845 = vmatpush1.msra.mxu0 0.0
    %846 = vmatprep.subr.mxu0 0.0
    %847 = vmatpush1.msra.mxu0 0.0
    %848 = vmatprep.subr.mxu0 0.0
    %849 = vmatpush1.msra.mxu0 0.0
    %850 = vmatprep.subr.mxu0 0.0
    %851 = vmatpush1.msra.mxu0 0.0
    %852 = vmatprep.subr.mxu0 0.0
    %853 = vmatpush1.msra.mxu0 0.0
    %854 = vmatprep.subr.mxu0 0.0
    %855 = vmatpush1.msra.mxu0 0.0
    %856 = vmatprep.subr.mxu0 0.0
    %857 = vmatpush1.msra.mxu0 0.0
    %858 = vmatprep.subr.mxu0 0.0
    %859 = vmatpush1.msra.mxu0 0.0
    %860 = vmatprep.subr.mxu0 0.0
    %861 = vmatpush1.msra.mxu0 0.0
    %862 = vmatprep.subr.mxu0 0.0
    %863 = vmatpush1.msra.mxu0 0.0
    %864 = vmatprep.subr.mxu0 0.0
    %865 = vmatpush1.msra.mxu0 0.0
    %866 = vmatprep.subr.mxu0 0.0
    %867 = vmatpush1.msra.mxu0 0.0
    %868 = vmatprep.subr.mxu0 0.0
    %869 = vmatpush1.msra.mxu0 0.0
    %870 = vmatprep.subr.mxu0 0.0
    %871 = vmatpush1.msra.mxu0 0.0
    %872 = vmatprep.subr.mxu0 0.0
    %873 = vmatpush1.msra.mxu0 0.0
    %874 = vmatprep.mubr.f32.mxu0 0.0
    %875 = vmatmul.mubr.f32.gmra.mrb[0].mxu0 %v270
    %v876 = vpop.f32.mrb[0].mxu0
    %v877 = vadd.f32 0.0, %v876
    %v878 = vpop.f32.mrb[0].mxu0
    %879 = vdwg.mxu0
    %880 = vmatprep.subr.mxu0 0.0
    %881 = vmatpush1.msra.mxu0 %v805
    %882 = vmatprep.subr.mxu0 0.0
    %883 = vmatpush1.msra.mxu0 %v806
    %884 = vmatprep.subr.mxu0 0.0
    %885 = vmatpush1.msra.mxu0 0.0
    %886 = vmatprep.subr.mxu0 0.0
    %887 = vmatpush1.msra.mxu0 0.0
    %888 = vmatprep.subr.mxu0 0.0
    %889 = vmatpush1.msra.mxu0 0.0
    %890 = vmatprep.subr.mxu0 0.0
    %891 = vmatpush1.msra.mxu0 0.0
    %892 = vmatprep.subr.mxu0 0.0
    %893 = vmatpush1.msra.mxu0 0.0
    %894 = vmatprep.subr.mxu0 0.0
    %895 = vmatpush1.msra.mxu0 0.0
    %896 = vmatprep.subr.mxu0 0.0
    %897 = vmatpush1.msra.mxu0 0.0
    %898 = vmatprep.subr.mxu0 0.0
    %899 = vmatpush1.msra.mxu0 0.0
    %900 = vmatprep.subr.mxu0 0.0
    %901 = vmatpush1.msra.mxu0 0.0
    %902 = vmatprep.subr.mxu0 0.0
    %903 = vmatpush1.msra.mxu0 0.0
    %904 = vmatprep.subr.mxu0 0.0
    %905 = vmatpush1.msra.mxu0 0.0
    %906 = vmatprep.subr.mxu0 0.0
    %907 = vmatpush1.msra.mxu0 0.0
    %908 = vmatprep.subr.mxu0 0.0
    %909 = vmatpush1.msra.mxu0 0.0
    %910 = vmatprep.subr.mxu0 0.0
    %911 = vmatpush1.msra.mxu0 0.0
    %912 = vmatprep.subr.mxu0 0.0
    %913 = vmatpush1.msra.mxu0 0.0
    %914 = vmatprep.subr.mxu0 0.0
    %915 = vmatpush1.msra.mxu0 0.0
    %916 = vmatprep.subr.mxu0 0.0
    %917 = vmatpush1.msra.mxu0 0.0
    %918 = vmatprep.subr.mxu0 0.0
    %919 = vmatpush1.msra.mxu0 0.0
    %920 = vmatprep.subr.mxu0 0.0
    %921 = vmatpush1.msra.mxu0 0.0
    %922 = vmatprep.subr.mxu0 0.0
    %923 = vmatpush1.msra.mxu0 0.0
    %924 = vmatprep.subr.mxu0 0.0
    %925 = vmatpush1.msra.mxu0 0.0
    %926 = vmatprep.subr.mxu0 0.0
    %927 = vmatpush1.msra.mxu0 0.0
    %928 = vmatprep.subr.mxu0 0.0
    %929 = vmatpush1.msra.mxu0 0.0
    %930 = vmatprep.subr.mxu0 0.0
    %931 = vmatpush1.msra.mxu0 0.0
    %932 = vmatprep.subr.mxu0 0.0
    %933 = vmatpush1.msra.mxu0 0.0
    %934 = vmatprep.subr.mxu0 0.0
    %935 = vmatpush1.msra.mxu0 0.0
    %936 = vmatprep.subr.mxu0 0.0
    %937 = vmatpush1.msra.mxu0 0.0
    %938 = vmatprep.subr.mxu0 0.0
    %939 = vmatpush1.msra.mxu0 0.0
    %940 = vmatprep.subr.mxu0 0.0
    %941 = vmatpush1.msra.mxu0 0.0
    %942 = vmatprep.subr.mxu0 0.0
    %943 = vmatpush1.msra.mxu0 0.0
    %944 = vmatprep.mubr.f32.mxu0 0.0
    %945 = vmatmul.mubr.f32.gmra.mrb[0].mxu0 %v343
    %v946 = vpop.f32.mrb[0].mxu0
    %v947 = vadd.f32 %v877, %v946
    %v948 = vpop.f32.mrb[0].mxu0
    %949 = vdwg.mxu0
    %s950 = scalar_lea.vmem [#allocation4], 3
    %v951 = vld [vmem:[%s950] sm:$0x1]
    %v953 = vlaneseq
    %v954 = vshrl.u32 %v953, 7
    %v955 = vsub.s32 0, %v954
    %v956 = vrot.slane %v951, %v955
    %v958 = vadd.f32 %v947, %v956
    %v961 = vunpack.c.l.s4 1966171168
    %v962 = vunpack.c.0.s8 %v961
    %v963 = vlaneseq
    %v964 = vshrl.u32 %v963, 7
    %v965 = vsub.s32 %v962, %v964
    %v966 = vrot.slane %v958, %v965
    %v967 = vcombine.high %v966, %v966
    %v969 = vunpack.c.l.s4 1966171168
    %v970 = vunpack.c.0.s8 %v969
    %v971 = vlaneseq
    %v972 = vshrl.u32 %v971, 7
    %v973 = vsub.s32 %v970, %v972
    %v974 = vrot.slane %v966, %v973
    %v976 = vunpack.c.l.s4 1966171168
    %v977 = vunpack.c.0.s8 %v976
    %v978 = vlaneseq
    %v979 = vshrl.u32 %v978, 7
    %v980 = vsub.s32 %v977, %v979
    %v981 = vrot.slane %v967, %v980
    %s982 = scalar_lea.vmem %s4, 64
    %v983 = vld [vmem:[%s982] sm:$0xff]
    %v984 = vld [vmem:[%s982 + $0x8] sm:$0xff]
    %s985 = scalar_lea.vmem %s5, 64
    %v986 = vld [vmem:[%s985] sm:$0xff]
    %v987 = vld [vmem:[%s985 + $0x8] sm:$0xff]
    %988 = vmatprep.subr.mxu0 0.0
    %989 = vmatpush1.msra.mxu0 %v986
    %990 = vmatprep.subr.mxu0 0.0
    %991 = vmatpush1.msra.mxu0 %v987
    %992 = vmatprep.subr.mxu0 0.0
    %993 = vmatpush1.msra.mxu0 0.0
    %994 = vmatprep.subr.mxu0 0.0
    %995 = vmatpush1.msra.mxu0 0.0
    %996 = vmatprep.subr.mxu0 0.0
    %997 = vmatpush1.msra.mxu0 0.0
    %998 = vmatprep.subr.mxu0 0.0
    %999 = vmatpush1.msra.mxu0 0.0
    %1000 = vmatprep.subr.mxu0 0.0
    %1001 = vmatpush1.msra.mxu0 0.0
    %1002 = vmatprep.subr.mxu0 0.0
    %1003 = vmatpush1.msra.mxu0 0.0
    %1004 = vmatprep.subr.mxu0 0.0
    %1005 = vmatpush1.msra.mxu0 0.0
    %1006 = vmatprep.subr.mxu0 0.0
    %1007 = vmatpush1.msra.mxu0 0.0
    %1008 = vmatprep.subr.mxu0 0.0
    %1009 = vmatpush1.msra.mxu0 0.0
    %1010 = vmatprep.subr.mxu0 0.0
    %1011 = vmatpush1.msra.mxu0 0.0
    %1012 = vmatprep.subr.mxu0 0.0
    %1013 = vmatpush1.msra.mxu0 0.0
    %1014 = vmatprep.subr.mxu0 0.0
    %1015 = vmatpush1.msra.mxu0 0.0
    %1016 = vmatprep.subr.mxu0 0.0
    %1017 = vmatpush1.msra.mxu0 0.0
    %1018 = vmatprep.subr.mxu0 0.0
    %1019 = vmatpush1.msra.mxu0 0.0
    %1020 = vmatprep.subr.mxu0 0.0
    %1021 = vmatpush1.msra.mxu0 0.0
    %1022 = vmatprep.subr.mxu0 0.0
    %1023 = vmatpush1.msra.mxu0 0.0
    %1024 = vmatprep.subr.mxu0 0.0
    %1025 = vmatpush1.msra.mxu0 0.0
    %1026 = vmatprep.subr.mxu0 0.0
    %1027 = vmatpush1.msra.mxu0 0.0
    %1028 = vmatprep.subr.mxu0 0.0
    %1029 = vmatpush1.msra.mxu0 0.0
    %1030 = vmatprep.subr.mxu0 0.0
    %1031 = vmatpush1.msra.mxu0 0.0
    %1032 = vmatprep.subr.mxu0 0.0
    %1033 = vmatpush1.msra.mxu0 0.0
    %1034 = vmatprep.subr.mxu0 0.0
    %1035 = vmatpush1.msra.mxu0 0.0
    %1036 = vmatprep.subr.mxu0 0.0
    %1037 = vmatpush1.msra.mxu0 0.0
    %1038 = vmatprep.subr.mxu0 0.0
    %1039 = vmatpush1.msra.mxu0 0.0
    %1040 = vmatprep.subr.mxu0 0.0
    %1041 = vmatpush1.msra.mxu0 0.0
    %1042 = vmatprep.subr.mxu0 0.0
    %1043 = vmatpush1.msra.mxu0 0.0
    %1044 = vmatprep.subr.mxu0 0.0
    %1045 = vmatpush1.msra.mxu0 0.0
    %1046 = vmatprep.subr.mxu0 0.0
    %1047 = vmatpush1.msra.mxu0 0.0
    %1048 = vmatprep.subr.mxu0 0.0
    %1049 = vmatpush1.msra.mxu0 0.0
    %1050 = vmatprep.subr.mxu0 0.0
    %1051 = vmatpush1.msra.mxu0 0.0
    %1052 = vmatprep.mubr.f32.mxu0 0.0
    %1053 = vmatmul.mubr.f32.gmra.mrb[0].mxu0 %v270
    %v1054 = vpop.f32.mrb[0].mxu0
    %v1055 = vadd.f32 0.0, %v1054
    %v1056 = vpop.f32.mrb[0].mxu0
    %1057 = vdwg.mxu0
    %1058 = vmatprep.subr.mxu0 0.0
    %1059 = vmatpush1.msra.mxu0 %v983
    %1060 = vmatprep.subr.mxu0 0.0
    %1061 = vmatpush1.msra.mxu0 %v984
    %1062 = vmatprep.subr.mxu0 0.0
    %1063 = vmatpush1.msra.mxu0 0.0
    %1064 = vmatprep.subr.mxu0 0.0
    %1065 = vmatpush1.msra.mxu0 0.0
    %1066 = vmatprep.subr.mxu0 0.0
    %1067 = vmatpush1.msra.mxu0 0.0
    %1068 = vmatprep.subr.mxu0 0.0
    %1069 = vmatpush1.msra.mxu0 0.0
    %1070 = vmatprep.subr.mxu0 0.0
    %1071 = vmatpush1.msra.mxu0 0.0
    %1072 = vmatprep.subr.mxu0 0.0
    %1073 = vmatpush1.msra.mxu0 0.0
    %1074 = vmatprep.subr.mxu0 0.0
    %1075 = vmatpush1.msra.mxu0 0.0
    %1076 = vmatprep.subr.mxu0 0.0
    %1077 = vmatpush1.msra.mxu0 0.0
    %1078 = vmatprep.subr.mxu0 0.0
    %1079 = vmatpush1.msra.mxu0 0.0
    %1080 = vmatprep.subr.mxu0 0.0
    %1081 = vmatpush1.msra.mxu0 0.0
    %1082 = vmatprep.subr.mxu0 0.0
    %1083 = vmatpush1.msra.mxu0 0.0
    %1084 = vmatprep.subr.mxu0 0.0
    %1085 = vmatpush1.msra.mxu0 0.0
    %1086 = vmatprep.subr.mxu0 0.0
    %1087 = vmatpush1.msra.mxu0 0.0
    %1088 = vmatprep.subr.mxu0 0.0
    %1089 = vmatpush1.msra.mxu0 0.0
    %1090 = vmatprep.subr.mxu0 0.0
    %1091 = vmatpush1.msra.mxu0 0.0
    %1092 = vmatprep.subr.mxu0 0.0
    %1093 = vmatpush1.msra.mxu0 0.0
    %1094 = vmatprep.subr.mxu0 0.0
    %1095 = vmatpush1.msra.mxu0 0.0
    %1096 = vmatprep.subr.mxu0 0.0
    %1097 = vmatpush1.msra.mxu0 0.0
    %1098 = vmatprep.subr.mxu0 0.0
    %1099 = vmatpush1.msra.mxu0 0.0
    %1100 = vmatprep.subr.mxu0 0.0
    %1101 = vmatpush1.msra.mxu0 0.0
    %1102 = vmatprep.subr.mxu0 0.0
    %1103 = vmatpush1.msra.mxu0 0.0
    %1104 = vmatprep.subr.mxu0 0.0
    %1105 = vmatpush1.msra.mxu0 0.0
    %1106 = vmatprep.subr.mxu0 0.0
    %1107 = vmatpush1.msra.mxu0 0.0
    %1108 = vmatprep.subr.mxu0 0.0
    %1109 = vmatpush1.msra.mxu0 0.0
    %1110 = vmatprep.subr.mxu0 0.0
    %1111 = vmatpush1.msra.mxu0 0.0
    %1112 = vmatprep.subr.mxu0 0.0
    %1113 = vmatpush1.msra.mxu0 0.0
    %1114 = vmatprep.subr.mxu0 0.0
    %1115 = vmatpush1.msra.mxu0 0.0
    %1116 = vmatprep.subr.mxu0 0.0
    %1117 = vmatpush1.msra.mxu0 0.0
    %1118 = vmatprep.subr.mxu0 0.0
    %1119 = vmatpush1.msra.mxu0 0.0
    %1120 = vmatprep.subr.mxu0 0.0
    %1121 = vmatpush1.msra.mxu0 0.0
    %1122 = vmatprep.mubr.f32.mxu0 0.0
    %1123 = vmatmul.mubr.f32.gmra.mrb[0].mxu0 %v343
    %v1124 = vpop.f32.mrb[0].mxu0
    %v1125 = vadd.f32 %v1055, %v1124
    %v1126 = vpop.f32.mrb[0].mxu0
    %1127 = vdwg.mxu0
    %s1128 = scalar_lea.vmem [#allocation4], 4
    %v1129 = vld [vmem:[%s1128] sm:$0x1]
    %v1131 = vlaneseq
    %v1132 = vshrl.u32 %v1131, 7
    %v1133 = vsub.s32 0, %v1132
    %v1134 = vrot.slane %v1129, %v1133
    %v1136 = vadd.f32 %v1125, %v1134
    %v1139 = vunpack.c.l.s4 1966171168
    %v1140 = vunpack.c.0.s8 %v1139
    %v1141 = vlaneseq
    %v1142 = vshrl.u32 %v1141, 7
    %v1143 = vsub.s32 %v1140, %v1142
    %v1144 = vrot.slane %v1136, %v1143
    %v1145 = vcombine.high %v1144, %v1144
    %v1147 = vunpack.c.l.s4 1966171168
    %v1148 = vunpack.c.0.s8 %v1147
    %v1149 = vlaneseq
    %v1150 = vshrl.u32 %v1149, 7
    %v1151 = vsub.s32 %v1148, %v1150
    %v1152 = vrot.slane %v1144, %v1151
    %v1154 = vunpack.c.l.s4 1966171168
    %v1155 = vunpack.c.0.s8 %v1154
    %v1156 = vlaneseq
    %v1157 = vshrl.u32 %v1156, 7
    %v1158 = vsub.s32 %v1155, %v1157
    %v1159 = vrot.slane %v1145, %v1158
    %s1160 = scalar_lea.vmem %s4, 80
    %v1161 = vld [vmem:[%s1160] sm:$0xff]
    %v1162 = vld [vmem:[%s1160 + $0x8] sm:$0xff]
    %s1163 = scalar_lea.vmem %s5, 80
    %v1164 = vld [vmem:[%s1163] sm:$0xff]
    %v1165 = vld [vmem:[%s1163 + $0x8] sm:$0xff]
    %1166 = vmatprep.subr.mxu0 0.0
    %1167 = vmatpush1.msra.mxu0 %v1164
    %1168 = vmatprep.subr.mxu0 0.0
    %1169 = vmatpush1.msra.mxu0 %v1165
    %1170 = vmatprep.subr.mxu0 0.0
    %1171 = vmatpush1.msra.mxu0 0.0
    %1172 = vmatprep.subr.mxu0 0.0
    %1173 = vmatpush1.msra.mxu0 0.0
    %1174 = vmatprep.subr.mxu0 0.0
    %1175 = vmatpush1.msra.mxu0 0.0
    %1176 = vmatprep.subr.mxu0 0.0
    %1177 = vmatpush1.msra.mxu0 0.0
    %1178 = vmatprep.subr.mxu0 0.0
    %1179 = vmatpush1.msra.mxu0 0.0
    %1180 = vmatprep.subr.mxu0 0.0
    %1181 = vmatpush1.msra.mxu0 0.0
    %1182 = vmatprep.subr.mxu0 0.0
    %1183 = vmatpush1.msra.mxu0 0.0
    %1184 = vmatprep.subr.mxu0 0.0
    %1185 = vmatpush1.msra.mxu0 0.0
    %1186 = vmatprep.subr.mxu0 0.0
    %1187 = vmatpush1.msra.mxu0 0.0
    %1188 = vmatprep.subr.mxu0 0.0
    %1189 = vmatpush1.msra.mxu0 0.0
    %1190 = vmatprep.subr.mxu0 0.0
    %1191 = vmatpush1.msra.mxu0 0.0
    %1192 = vmatprep.subr.mxu0 0.0
    %1193 = vmatpush1.msra.mxu0 0.0
    %1194 = vmatprep.subr.mxu0 0.0
    %1195 = vmatpush1.msra.mxu0 0.0
    %1196 = vmatprep.subr.mxu0 0.0
    %1197 = vmatpush1.msra.mxu0 0.0
    %1198 = vmatprep.subr.mxu0 0.0
    %1199 = vmatpush1.msra.mxu0 0.0
    %1200 = vmatprep.subr.mxu0 0.0
    %1201 = vmatpush1.msra.mxu0 0.0
    %1202 = vmatprep.subr.mxu0 0.0
    %1203 = vmatpush1.msra.mxu0 0.0
    %1204 = vmatprep.subr.mxu0 0.0
    %1205 = vmatpush1.msra.mxu0 0.0
    %1206 = vmatprep.subr.mxu0 0.0
    %1207 = vmatpush1.msra.mxu0 0.0
    %1208 = vmatprep.subr.mxu0 0.0
    %1209 = vmatpush1.msra.mxu0 0.0
    %1210 = vmatprep.subr.mxu0 0.0
    %1211 = vmatpush1.msra.mxu0 0.0
    %1212 = vmatprep.subr.mxu0 0.0
    %1213 = vmatpush1.msra.mxu0 0.0
    %1214 = vmatprep.subr.mxu0 0.0
    %1215 = vmatpush1.msra.mxu0 0.0
    %1216 = vmatprep.subr.mxu0 0.0
    %1217 = vmatpush1.msra.mxu0 0.0
    %1218 = vmatprep.subr.mxu0 0.0
    %1219 = vmatpush1.msra.mxu0 0.0
    %1220 = vmatprep.subr.mxu0 0.0
    %1221 = vmatpush1.msra.mxu0 0.0
    %1222 = vmatprep.subr.mxu0 0.0
    %1223 = vmatpush1.msra.mxu0 0.0
    %1224 = vmatprep.subr.mxu0 0.0
    %1225 = vmatpush1.msra.mxu0 0.0
    %1226 = vmatprep.subr.mxu0 0.0
    %1227 = vmatpush1.msra.mxu0 0.0
    %1228 = vmatprep.subr.mxu0 0.0
    %1229 = vmatpush1.msra.mxu0 0.0
    %1230 = vmatprep.mubr.f32.mxu0 0.0
    %1231 = vmatmul.mubr.f32.gmra.mrb[0].mxu0 %v270
    %v1232 = vpop.f32.mrb[0].mxu0
    %v1233 = vadd.f32 0.0, %v1232
    %v1234 = vpop.f32.mrb[0].mxu0
    %1235 = vdwg.mxu0
    %1236 = vmatprep.subr.mxu0 0.0
    %1237 = vmatpush1.msra.mxu0 %v1161
    %1238 = vmatprep.subr.mxu0 0.0
    %1239 = vmatpush1.msra.mxu0 %v1162
    %1240 = vmatprep.subr.mxu0 0.0
    %1241 = vmatpush1.msra.mxu0 0.0
    %1242 = vmatprep.subr.mxu0 0.0
    %1243 = vmatpush1.msra.mxu0 0.0
    %1244 = vmatprep.subr.mxu0 0.0
    %1245 = vmatpush1.msra.mxu0 0.0
    %1246 = vmatprep.subr.mxu0 0.0
    %1247 = vmatpush1.msra.mxu0 0.0
    %1248 = vmatprep.subr.mxu0 0.0
    %1249 = vmatpush1.msra.mxu0 0.0
    %1250 = vmatprep.subr.mxu0 0.0
    %1251 = vmatpush1.msra.mxu0 0.0
    %1252 = vmatprep.subr.mxu0 0.0
    %1253 = vmatpush1.msra.mxu0 0.0
    %1254 = vmatprep.subr.mxu0 0.0
    %1255 = vmatpush1.msra.mxu0 0.0
    %1256 = vmatprep.subr.mxu0 0.0
    %1257 = vmatpush1.msra.mxu0 0.0
    %1258 = vmatprep.subr.mxu0 0.0
    %1259 = vmatpush1.msra.mxu0 0.0
    %1260 = vmatprep.subr.mxu0 0.0
    %1261 = vmatpush1.msra.mxu0 0.0
    %1262 = vmatprep.subr.mxu0 0.0
    %1263 = vmatpush1.msra.mxu0 0.0
    %1264 = vmatprep.subr.mxu0 0.0
    %1265 = vmatpush1.msra.mxu0 0.0
    %1266 = vmatprep.subr.mxu0 0.0
    %1267 = vmatpush1.msra.mxu0 0.0
    %1268 = vmatprep.subr.mxu0 0.0
    %1269 = vmatpush1.msra.mxu0 0.0
    %1270 = vmatprep.subr.mxu0 0.0
    %1271 = vmatpush1.msra.mxu0 0.0
    %1272 = vmatprep.subr.mxu0 0.0
    %1273 = vmatpush1.msra.mxu0 0.0
    %1274 = vmatprep.subr.mxu0 0.0
    %1275 = vmatpush1.msra.mxu0 0.0
    %1276 = vmatprep.subr.mxu0 0.0
    %1277 = vmatpush1.msra.mxu0 0.0
    %1278 = vmatprep.subr.mxu0 0.0
    %1279 = vmatpush1.msra.mxu0 0.0
    %1280 = vmatprep.subr.mxu0 0.0
    %1281 = vmatpush1.msra.mxu0 0.0
    %1282 = vmatprep.subr.mxu0 0.0
    %1283 = vmatpush1.msra.mxu0 0.0
    %1284 = vmatprep.subr.mxu0 0.0
    %1285 = vmatpush1.msra.mxu0 0.0
    %1286 = vmatprep.subr.mxu0 0.0
    %1287 = vmatpush1.msra.mxu0 0.0
    %1288 = vmatprep.subr.mxu0 0.0
    %1289 = vmatpush1.msra.mxu0 0.0
    %1290 = vmatprep.subr.mxu0 0.0
    %1291 = vmatpush1.msra.mxu0 0.0
    %1292 = vmatprep.subr.mxu0 0.0
    %1293 = vmatpush1.msra.mxu0 0.0
    %1294 = vmatprep.subr.mxu0 0.0
    %1295 = vmatpush1.msra.mxu0 0.0
    %1296 = vmatprep.subr.mxu0 0.0
    %1297 = vmatpush1.msra.mxu0 0.0
    %1298 = vmatprep.subr.mxu0 0.0
    %1299 = vmatpush1.msra.mxu0 0.0
    %1300 = vmatprep.mubr.f32.mxu0 0.0
    %1301 = vmatmul.mubr.f32.gmra.mrb[0].mxu0 %v343
    %v1302 = vpop.f32.mrb[0].mxu0
    %v1303 = vadd.f32 %v1233, %v1302
    %v1304 = vpop.f32.mrb[0].mxu0
    %1305 = vdwg.mxu0
    %s1306 = scalar_lea.vmem [#allocation4], 5
    %v1307 = vld [vmem:[%s1306] sm:$0x1]
    %v1309 = vlaneseq
    %v1310 = vshrl.u32 %v1309, 7
    %v1311 = vsub.s32 0, %v1310
    %v1312 = vrot.slane %v1307, %v1311
    %v1314 = vadd.f32 %v1303, %v1312
    %v1317 = vunpack.c.l.s4 1966171168
    %v1318 = vunpack.c.0.s8 %v1317
    %v1319 = vlaneseq
    %v1320 = vshrl.u32 %v1319, 7
    %v1321 = vsub.s32 %v1318, %v1320
    %v1322 = vrot.slane %v1314, %v1321
    %v1323 = vcombine.high %v1322, %v1322
    %v1325 = vunpack.c.l.s4 1966171168
    %v1326 = vunpack.c.0.s8 %v1325
    %v1327 = vlaneseq
    %v1328 = vshrl.u32 %v1327, 7
    %v1329 = vsub.s32 %v1326, %v1328
    %v1330 = vrot.slane %v1322, %v1329
    %v1332 = vunpack.c.l.s4 1966171168
    %v1333 = vunpack.c.0.s8 %v1332
    %v1334 = vlaneseq
    %v1335 = vshrl.u32 %v1334, 7
    %v1336 = vsub.s32 %v1333, %v1335
    %v1337 = vrot.slane %v1323, %v1336
    %s1338 = scalar_lea.vmem %s4, 96
    %v1339 = vld [vmem:[%s1338] sm:$0xff]
    %v1340 = vld [vmem:[%s1338 + $0x8] sm:$0xff]
    %s1341 = scalar_lea.vmem %s5, 96
    %v1342 = vld [vmem:[%s1341] sm:$0xff]
    %v1343 = vld [vmem:[%s1341 + $0x8] sm:$0xff]
    %1344 = vmatprep.subr.mxu0 0.0
    %1345 = vmatpush1.msra.mxu0 %v1342
    %1346 = vmatprep.subr.mxu0 0.0
    %1347 = vmatpush1.msra.mxu0 %v1343
    %1348 = vmatprep.subr.mxu0 0.0
    %1349 = vmatpush1.msra.mxu0 0.0
    %1350 = vmatprep.subr.mxu0 0.0
    %1351 = vmatpush1.msra.mxu0 0.0
    %1352 = vmatprep.subr.mxu0 0.0
    %1353 = vmatpush1.msra.mxu0 0.0
    %1354 = vmatprep.subr.mxu0 0.0
    %1355 = vmatpush1.msra.mxu0 0.0
    %1356 = vmatprep.subr.mxu0 0.0
    %1357 = vmatpush1.msra.mxu0 0.0
    %1358 = vmatprep.subr.mxu0 0.0
    %1359 = vmatpush1.msra.mxu0 0.0
    %1360 = vmatprep.subr.mxu0 0.0
    %1361 = vmatpush1.msra.mxu0 0.0
    %1362 = vmatprep.subr.mxu0 0.0
    %1363 = vmatpush1.msra.mxu0 0.0
    %1364 = vmatprep.subr.mxu0 0.0
    %1365 = vmatpush1.msra.mxu0 0.0
    %1366 = vmatprep.subr.mxu0 0.0
    %1367 = vmatpush1.msra.mxu0 0.0
    %1368 = vmatprep.subr.mxu0 0.0
    %1369 = vmatpush1.msra.mxu0 0.0
    %1370 = vmatprep.subr.mxu0 0.0
    %1371 = vmatpush1.msra.mxu0 0.0
    %1372 = vmatprep.subr.mxu0 0.0
    %1373 = vmatpush1.msra.mxu0 0.0
    %1374 = vmatprep.subr.mxu0 0.0
    %1375 = vmatpush1.msra.mxu0 0.0
    %1376 = vmatprep.subr.mxu0 0.0
    %1377 = vmatpush1.msra.mxu0 0.0
    %1378 = vmatprep.subr.mxu0 0.0
    %1379 = vmatpush1.msra.mxu0 0.0
    %1380 = vmatprep.subr.mxu0 0.0
    %1381 = vmatpush1.msra.mxu0 0.0
    %1382 = vmatprep.subr.mxu0 0.0
    %1383 = vmatpush1.msra.mxu0 0.0
    %1384 = vmatprep.subr.mxu0 0.0
    %1385 = vmatpush1.msra.mxu0 0.0
    %1386 = vmatprep.subr.mxu0 0.0
    %1387 = vmatpush1.msra.mxu0 0.0
    %1388 = vmatprep.subr.mxu0 0.0
    %1389 = vmatpush1.msra.mxu0 0.0
    %1390 = vmatprep.subr.mxu0 0.0
    %1391 = vmatpush1.msra.mxu0 0.0
    %1392 = vmatprep.subr.mxu0 0.0
    %1393 = vmatpush1.msra.mxu0 0.0
    %1394 = vmatprep.subr.mxu0 0.0
    %1395 = vmatpush1.msra.mxu0 0.0
    %1396 = vmatprep.subr.mxu0 0.0
    %1397 = vmatpush1.msra.mxu0 0.0
    %1398 = vmatprep.subr.mxu0 0.0
    %1399 = vmatpush1.msra.mxu0 0.0
    %1400 = vmatprep.subr.mxu0 0.0
    %1401 = vmatpush1.msra.mxu0 0.0
    %1402 = vmatprep.subr.mxu0 0.0
    %1403 = vmatpush1.msra.mxu0 0.0
    %1404 = vmatprep.subr.mxu0 0.0
    %1405 = vmatpush1.msra.mxu0 0.0
    %1406 = vmatprep.subr.mxu0 0.0
    %1407 = vmatpush1.msra.mxu0 0.0
    %1408 = vmatprep.mubr.f32.mxu0 0.0
    %1409 = vmatmul.mubr.f32.gmra.mrb[0].mxu0 %v270
    %v1410 = vpop.f32.mrb[0].mxu0
    %v1411 = vadd.f32 0.0, %v1410
    %v1412 = vpop.f32.mrb[0].mxu0
    %1413 = vdwg.mxu0
    %1414 = vmatprep.subr.mxu0 0.0
    %1415 = vmatpush1.msra.mxu0 %v1339
    %1416 = vmatprep.subr.mxu0 0.0
    %1417 = vmatpush1.msra.mxu0 %v1340
    %1418 = vmatprep.subr.mxu0 0.0
    %1419 = vmatpush1.msra.mxu0 0.0
    %1420 = vmatprep.subr.mxu0 0.0
    %1421 = vmatpush1.msra.mxu0 0.0
    %1422 = vmatprep.subr.mxu0 0.0
    %1423 = vmatpush1.msra.mxu0 0.0
    %1424 = vmatprep.subr.mxu0 0.0
    %1425 = vmatpush1.msra.mxu0 0.0
    %1426 = vmatprep.subr.mxu0 0.0
    %1427 = vmatpush1.msra.mxu0 0.0
    %1428 = vmatprep.subr.mxu0 0.0
    %1429 = vmatpush1.msra.mxu0 0.0
    %1430 = vmatprep.subr.mxu0 0.0
    %1431 = vmatpush1.msra.mxu0 0.0
    %1432 = vmatprep.subr.mxu0 0.0
    %1433 = vmatpush1.msra.mxu0 0.0
    %1434 = vmatprep.subr.mxu0 0.0
    %1435 = vmatpush1.msra.mxu0 0.0
    %1436 = vmatprep.subr.mxu0 0.0
    %1437 = vmatpush1.msra.mxu0 0.0
    %1438 = vmatprep.subr.mxu0 0.0
    %1439 = vmatpush1.msra.mxu0 0.0
    %1440 = vmatprep.subr.mxu0 0.0
    %1441 = vmatpush1.msra.mxu0 0.0
    %1442 = vmatprep.subr.mxu0 0.0
    %1443 = vmatpush1.msra.mxu0 0.0
    %1444 = vmatprep.subr.mxu0 0.0
    %1445 = vmatpush1.msra.mxu0 0.0
    %1446 = vmatprep.subr.mxu0 0.0
    %1447 = vmatpush1.msra.mxu0 0.0
    %1448 = vmatprep.subr.mxu0 0.0
    %1449 = vmatpush1.msra.mxu0 0.0
    %1450 = vmatprep.subr.mxu0 0.0
    %1451 = vmatpush1.msra.mxu0 0.0
    %1452 = vmatprep.subr.mxu0 0.0
    %1453 = vmatpush1.msra.mxu0 0.0
    %1454 = vmatprep.subr.mxu0 0.0
    %1455 = vmatpush1.msra.mxu0 0.0
    %1456 = vmatprep.subr.mxu0 0.0
    %1457 = vmatpush1.msra.mxu0 0.0
    %1458 = vmatprep.subr.mxu0 0.0
    %1459 = vmatpush1.msra.mxu0 0.0
    %1460 = vmatprep.subr.mxu0 0.0
    %1461 = vmatpush1.msra.mxu0 0.0
    %1462 = vmatprep.subr.mxu0 0.0
    %1463 = vmatpush1.msra.mxu0 0.0
    %1464 = vmatprep.subr.mxu0 0.0
    %1465 = vmatpush1.msra.mxu0 0.0
    %1466 = vmatprep.subr.mxu0 0.0
    %1467 = vmatpush1.msra.mxu0 0.0
    %1468 = vmatprep.subr.mxu0 0.0
    %1469 = vmatpush1.msra.mxu0 0.0
    %1470 = vmatprep.subr.mxu0 0.0
    %1471 = vmatpush1.msra.mxu0 0.0
    %1472 = vmatprep.subr.mxu0 0.0
    %1473 = vmatpush1.msra.mxu0 0.0
    %1474 = vmatprep.subr.mxu0 0.0
    %1475 = vmatpush1.msra.mxu0 0.0
    %1476 = vmatprep.subr.mxu0 0.0
    %1477 = vmatpush1.msra.mxu0 0.0
    %1478 = vmatprep.mubr.f32.mxu0 0.0
    %1479 = vmatmul.mubr.f32.gmra.mrb[0].mxu0 %v343
    %v1480 = vpop.f32.mrb[0].mxu0
    %v1481 = vadd.f32 %v1411, %v1480
    %v1482 = vpop.f32.mrb[0].mxu0
    %1483 = vdwg.mxu0
    %s1484 = scalar_lea.vmem [#allocation4], 6
    %v1485 = vld [vmem:[%s1484] sm:$0x1]
    %v1487 = vlaneseq
    %v1488 = vshrl.u32 %v1487, 7
    %v1489 = vsub.s32 0, %v1488
    %v1490 = vrot.slane %v1485, %v1489
    %v1492 = vadd.f32 %v1481, %v1490
    %v1495 = vunpack.c.l.s4 1966171168
    %v1496 = vunpack.c.0.s8 %v1495
    %v1497 = vlaneseq
    %v1498 = vshrl.u32 %v1497, 7
    %v1499 = vsub.s32 %v1496, %v1498
    %v1500 = vrot.slane %v1492, %v1499
    %v1501 = vcombine.high %v1500, %v1500
    %v1503 = vunpack.c.l.s4 1966171168
    %v1504 = vunpack.c.0.s8 %v1503
    %v1505 = vlaneseq
    %v1506 = vshrl.u32 %v1505, 7
    %v1507 = vsub.s32 %v1504, %v1506
    %v1508 = vrot.slane %v1500, %v1507
    %v1510 = vunpack.c.l.s4 1966171168
    %v1511 = vunpack.c.0.s8 %v1510
    %v1512 = vlaneseq
    %v1513 = vshrl.u32 %v1512, 7
    %v1514 = vsub.s32 %v1511, %v1513
    %v1515 = vrot.slane %v1501, %v1514
    %s1516 = scalar_lea.vmem %s4, 112
    %v1517 = vld [vmem:[%s1516] sm:$0xff]
    %v1518 = vld [vmem:[%s1516 + $0x8] sm:$0xff]
    %s1519 = scalar_lea.vmem %s5, 112
    %v1520 = vld [vmem:[%s1519] sm:$0xff]
    %v1521 = vld [vmem:[%s1519 + $0x8] sm:$0xff]
    %1522 = vmatprep.subr.mxu0 0.0
    %1523 = vmatpush1.msra.mxu0 %v1520
    %1524 = vmatprep.subr.mxu0 0.0
    %1525 = vmatpush1.msra.mxu0 %v1521
    %1526 = vmatprep.subr.mxu0 0.0
    %1527 = vmatpush1.msra.mxu0 0.0
    %1528 = vmatprep.subr.mxu0 0.0
    %1529 = vmatpush1.msra.mxu0 0.0
    %1530 = vmatprep.subr.mxu0 0.0
    %1531 = vmatpush1.msra.mxu0 0.0
    %1532 = vmatprep.subr.mxu0 0.0
    %1533 = vmatpush1.msra.mxu0 0.0
    %1534 = vmatprep.subr.mxu0 0.0
    %1535 = vmatpush1.msra.mxu0 0.0
    %1536 = vmatprep.subr.mxu0 0.0
    %1537 = vmatpush1.msra.mxu0 0.0
    %1538 = vmatprep.subr.mxu0 0.0
    %1539 = vmatpush1.msra.mxu0 0.0
    %1540 = vmatprep.subr.mxu0 0.0
    %1541 = vmatpush1.msra.mxu0 0.0
    %1542 = vmatprep.subr.mxu0 0.0
    %1543 = vmatpush1.msra.mxu0 0.0
    %1544 = vmatprep.subr.mxu0 0.0
    %1545 = vmatpush1.msra.mxu0 0.0
    %1546 = vmatprep.subr.mxu0 0.0
    %1547 = vmatpush1.msra.mxu0 0.0
    %1548 = vmatprep.subr.mxu0 0.0
    %1549 = vmatpush1.msra.mxu0 0.0
    %1550 = vmatprep.subr.mxu0 0.0
    %1551 = vmatpush1.msra.mxu0 0.0
    %1552 = vmatprep.subr.mxu0 0.0
    %1553 = vmatpush1.msra.mxu0 0.0
    %1554 = vmatprep.subr.mxu0 0.0
    %1555 = vmatpush1.msra.mxu0 0.0
    %1556 = vmatprep.subr.mxu0 0.0
    %1557 = vmatpush1.msra.mxu0 0.0
    %1558 = vmatprep.subr.mxu0 0.0
    %1559 = vmatpush1.msra.mxu0 0.0
    %1560 = vmatprep.subr.mxu0 0.0
    %1561 = vmatpush1.msra.mxu0 0.0
    %1562 = vmatprep.subr.mxu0 0.0
    %1563 = vmatpush1.msra.mxu0 0.0
    %1564 = vmatprep.subr.mxu0 0.0
    %1565 = vmatpush1.msra.mxu0 0.0
    %1566 = vmatprep.subr.mxu0 0.0
    %1567 = vmatpush1.msra.mxu0 0.0
    %1568 = vmatprep.subr.mxu0 0.0
    %1569 = vmatpush1.msra.mxu0 0.0
    %1570 = vmatprep.subr.mxu0 0.0
    %1571 = vmatpush1.msra.mxu0 0.0
    %1572 = vmatprep.subr.mxu0 0.0
    %1573 = vmatpush1.msra.mxu0 0.0
    %1574 = vmatprep.subr.mxu0 0.0
    %1575 = vmatpush1.msra.mxu0 0.0
    %1576 = vmatprep.subr.mxu0 0.0
    %1577 = vmatpush1.msra.mxu0 0.0
    %1578 = vmatprep.subr.mxu0 0.0
    %1579 = vmatpush1.msra.mxu0 0.0
    %1580 = vmatprep.subr.mxu0 0.0
    %1581 = vmatpush1.msra.mxu0 0.0
    %1582 = vmatprep.subr.mxu0 0.0
    %1583 = vmatpush1.msra.mxu0 0.0
    %1584 = vmatprep.subr.mxu0 0.0
    %1585 = vmatpush1.msra.mxu0 0.0
    %1586 = vmatprep.mubr.f32.mxu0 0.0
    %1587 = vmatmul.mubr.f32.gmra.mrb[0].mxu0 %v270
    %v1588 = vpop.f32.mrb[0].mxu0
    %v1589 = vadd.f32 0.0, %v1588
    %v1590 = vpop.f32.mrb[0].mxu0
    %1591 = vdwg.mxu0
    %1592 = vmatprep.subr.mxu0 0.0
    %1593 = vmatpush1.msra.mxu0 %v1517
    %1594 = vmatprep.subr.mxu0 0.0
    %1595 = vmatpush1.msra.mxu0 %v1518
    %1596 = vmatprep.subr.mxu0 0.0
    %1597 = vmatpush1.msra.mxu0 0.0
    %1598 = vmatprep.subr.mxu0 0.0
    %1599 = vmatpush1.msra.mxu0 0.0
    %1600 = vmatprep.subr.mxu0 0.0
    %1601 = vmatpush1.msra.mxu0 0.0
    %1602 = vmatprep.subr.mxu0 0.0
    %1603 = vmatpush1.msra.mxu0 0.0
    %1604 = vmatprep.subr.mxu0 0.0
    %1605 = vmatpush1.msra.mxu0 0.0
    %1606 = vmatprep.subr.mxu0 0.0
    %1607 = vmatpush1.msra.mxu0 0.0
    %1608 = vmatprep.subr.mxu0 0.0
    %1609 = vmatpush1.msra.mxu0 0.0
    %1610 = vmatprep.subr.mxu0 0.0
    %1611 = vmatpush1.msra.mxu0 0.0
    %1612 = vmatprep.subr.mxu0 0.0
    %1613 = vmatpush1.msra.mxu0 0.0
    %1614 = vmatprep.subr.mxu0 0.0
    %1615 = vmatpush1.msra.mxu0 0.0
    %1616 = vmatprep.subr.mxu0 0.0
    %1617 = vmatpush1.msra.mxu0 0.0
    %1618 = vmatprep.subr.mxu0 0.0
    %1619 = vmatpush1.msra.mxu0 0.0
    %1620 = vmatprep.subr.mxu0 0.0
    %1621 = vmatpush1.msra.mxu0 0.0
    %1622 = vmatprep.subr.mxu0 0.0
    %1623 = vmatpush1.msra.mxu0 0.0
    %1624 = vmatprep.subr.mxu0 0.0
    %1625 = vmatpush1.msra.mxu0 0.0
    %1626 = vmatprep.subr.mxu0 0.0
    %1627 = vmatpush1.msra.mxu0 0.0
    %1628 = vmatprep.subr.mxu0 0.0
    %1629 = vmatpush1.msra.mxu0 0.0
    %1630 = vmatprep.subr.mxu0 0.0
    %1631 = vmatpush1.msra.mxu0 0.0
    %1632 = vmatprep.subr.mxu0 0.0
    %1633 = vmatpush1.msra.mxu0 0.0
    %1634 = vmatprep.subr.mxu0 0.0
    %1635 = vmatpush1.msra.mxu0 0.0
    %1636 = vmatprep.subr.mxu0 0.0
    %1637 = vmatpush1.msra.mxu0 0.0
    %1638 = vmatprep.subr.mxu0 0.0
    %1639 = vmatpush1.msra.mxu0 0.0
    %1640 = vmatprep.subr.mxu0 0.0
    %1641 = vmatpush1.msra.mxu0 0.0
    %1642 = vmatprep.subr.mxu0 0.0
    %1643 = vmatpush1.msra.mxu0 0.0
    %1644 = vmatprep.subr.mxu0 0.0
    %1645 = vmatpush1.msra.mxu0 0.0
    %1646 = vmatprep.subr.mxu0 0.0
    %1647 = vmatpush1.msra.mxu0 0.0
    %1648 = vmatprep.subr.mxu0 0.0
    %1649 = vmatpush1.msra.mxu0 0.0
    %1650 = vmatprep.subr.mxu0 0.0
    %1651 = vmatpush1.msra.mxu0 0.0
    %1652 = vmatprep.subr.mxu0 0.0
    %1653 = vmatpush1.msra.mxu0 0.0
    %1654 = vmatprep.subr.mxu0 0.0
    %1655 = vmatpush1.msra.mxu0 0.0
    %1656 = vmatprep.mubr.f32.mxu0 0.0
    %1657 = vmatmul.mubr.f32.gmra.mrb[0].mxu0 %v343
    %v1658 = vpop.f32.mrb[0].mxu0
    %v1659 = vadd.f32 %v1589, %v1658
    %v1660 = vpop.f32.mrb[0].mxu0
    %1661 = vdwg.mxu0
    %s1662 = scalar_lea.vmem [#allocation4], 7
    %v1663 = vld [vmem:[%s1662] sm:$0x1]
    %v1665 = vlaneseq
    %v1666 = vshrl.u32 %v1665, 7
    %v1667 = vsub.s32 0, %v1666
    %v1668 = vrot.slane %v1663, %v1667
    %v1670 = vadd.f32 %v1659, %v1668
    %v1673 = vunpack.c.l.s4 1966171168
    %v1674 = vunpack.c.0.s8 %v1673
    %v1675 = vlaneseq
    %v1676 = vshrl.u32 %v1675, 7
    %v1677 = vsub.s32 %v1674, %v1676
    %v1678 = vrot.slane %v1670, %v1677
    %v1679 = vcombine.high %v1678, %v1678
    %v1681 = vunpack.c.l.s4 1966171168
    %v1682 = vunpack.c.0.s8 %v1681
    %v1683 = vlaneseq
    %v1684 = vshrl.u32 %v1683, 7
    %v1685 = vsub.s32 %v1682, %v1684
    %v1686 = vrot.slane %v1678, %v1685
    %v1688 = vunpack.c.l.s4 1966171168
    %v1689 = vunpack.c.0.s8 %v1688
    %v1690 = vlaneseq
    %v1691 = vshrl.u32 %v1690, 7
    %v1692 = vsub.s32 %v1689, %v1691
    %v1693 = vrot.slane %v1679, %v1692
    %v1694 = vlaneseq
    %v1695 = vshrl.u32 %v1694, 7
    %v1696 = vsub.s32 0, %v1695
    %v1697 = vrot.slane %v618, %v1696
    %v1698 = vlaneseq
    %v1699 = vshrl.u32 %v1698, 7
    %v1700 = vsub.s32 0, %v1699
    %v1701 = vrot.slane %v625, %v1700
    %v1704 = vlaneseq
    %v1705 = vshrl.u32 %v1704, 7
    %v1706 = vsub.s32 0, %v1705
    %v1707 = vrot.slane %v796, %v1706
    %v1708 = vlaneseq
    %v1709 = vshrl.u32 %v1708, 7
    %v1710 = vsub.s32 0, %v1709
    %v1711 = vrot.slane %v803, %v1710
    %v1714 = vlaneseq
    %v1715 = vshrl.u32 %v1714, 7
    %v1716 = vsub.s32 0, %v1715
    %v1717 = vrot.slane %v974, %v1716
    %v1718 = vlaneseq
    %v1719 = vshrl.u32 %v1718, 7
    %v1720 = vsub.s32 0, %v1719
    %v1721 = vrot.slane %v981, %v1720
    %v1724 = vlaneseq
    %v1725 = vshrl.u32 %v1724, 7
    %v1726 = vsub.s32 0, %v1725
    %v1727 = vrot.slane %v1152, %v1726
    %v1728 = vlaneseq
    %v1729 = vshrl.u32 %v1728, 7
    %v1730 = vsub.s32 0, %v1729
    %v1731 = vrot.slane %v1159, %v1730
    %v1734 = vlaneseq
    %v1735 = vshrl.u32 %v1734, 7
    %v1736 = vsub.s32 0, %v1735
    %v1737 = vrot.slane %v1330, %v1736
    %v1738 = vlaneseq
    %v1739 = vshrl.u32 %v1738, 7
    %v1740 = vsub.s32 0, %v1739
    %v1741 = vrot.slane %v1337, %v1740
    %v1744 = vlaneseq
    %v1745 = vshrl.u32 %v1744, 7
    %v1746 = vsub.s32 0, %v1745
    %v1747 = vrot.slane %v1508, %v1746
    %v1748 = vlaneseq
    %v1749 = vshrl.u32 %v1748, 7
    %v1750 = vsub.s32 0, %v1749
    %v1751 = vrot.slane %v1515, %v1750
    %v1754 = vlaneseq
    %v1755 = vshrl.u32 %v1754, 7
    %v1756 = vsub.s32 0, %v1755
    %v1757 = vrot.slane %v1686, %v1756
    %v1758 = vlaneseq
    %v1759 = vshrl.u32 %v1758, 7
    %v1760 = vsub.s32 0, %v1759
    %v1761 = vrot.slane %v1693, %v1760
    %vm1764 = vcmask 1040384
    %v1765 = vsel %vm1764, %v438, %v1697
    %v1766 = vsel %vm1764, %v445, %v1701
    %vm1767 = vcmask 1041408
    %v1768 = vsel %vm1767, %v1765, %v1707
    %v1769 = vsel %vm1767, %v1766, %v1711
    %vm1770 = vcmask 1042432
    %v1771 = vsel %vm1770, %v1768, %v1717
    %v1772 = vsel %vm1770, %v1769, %v1721
    %vm1773 = vcmask 1043456
    %v1774 = vsel %vm1773, %v1771, %v1727
    %v1775 = vsel %vm1773, %v1772, %v1731
    %vm1776 = vcmask 1044480
    %v1777 = vsel %vm1776, %v1774, %v1737
    %v1778 = vsel %vm1776, %v1775, %v1741
    %vm1779 = vcmask 1045504
    %v1780 = vsel %vm1779, %v1777, %v1747
    %v1781 = vsel %vm1779, %v1778, %v1751
    %vm1782 = vcmask 1046528
    %v1783 = vsel %vm1782, %v1780, %v1757
    %v1784 = vsel %vm1782, %v1781, %v1761
    %v1785 = vld [vmem:[#allocation6] sm:$0x1]
    %v1786 = vld [vmem:[#allocation7] sm:$0x1]
    %v1787 = vld [vmem:[#allocation9] sm:$0x1]
    %vm1788 = vcmask 261120
    %v1789 = vsel %vm1788, %v1783, 0.0
    %v1790 = vsel %vm1788, %v1784, 0.0
    %v1791 = vadd.f32 %v1789, %v1790
    %v1792 = vrot.slane %v1791, 4
    %v1793 = vadd.f32 %v1791, %v1792
    %v1794 = vrot.slane %v1793, 2
    %v1795 = vadd.f32 %v1793, %v1794
    %v1796 = vrot.slane %v1795, 1
    %v1797 = vadd.f32 %v1795, %v1796
    %v1798 = vrcp.pop 16.0
    %v1799 = vmul.f32 %v1797, %v1798
    %v1800 = vsub.f32 %v1783, %v1799
    %v1801 = vsub.f32 %v1784, %v1799
    %v1802 = vmul.f32 %v1800, %v1800
    %v1803 = vmul.f32 %v1801, %v1801
    %v1804 = vsel %vm1788, %v1802, 0.0
    %v1805 = vsel %vm1788, %v1803, 0.0
    %v1806 = vadd.f32 %v1804, %v1805
    %v1807 = vrot.slane %v1806, 4
    %v1808 = vadd.f32 %v1806, %v1807
    %v1809 = vrot.slane %v1808, 2
    %v1810 = vadd.f32 %v1808, %v1809
    %v1811 = vrot.slane %v1810, 1
    %v1812 = vadd.f32 %v1810, %v1811
    %v1813 = vmul.f32 %v1812, %v1798
    %v1814 = vadd.f32 %v1813, 1e-05
    %v1815 = vrsqrt.pop %v1814
    %v1816 = vmul.f32 %v1800, %v1815
    %v1817 = vmul.f32 %v1801, %v1815
    %v1819 = vlaneseq
    %v1820 = vshrl.u32 %v1819, 7
    %v1821 = vsub.s32 0, %v1820
    %v1822 = vrot.slane %v1785, %v1821
    %v1824 = vmul.f32 %v1816, %v1822
    %v1825 = vmul.f32 %v1817, %v1822
    %v1827 = vlaneseq
    %v1828 = vshrl.u32 %v1827, 7
    %v1829 = vsub.s32 0, %v1828
    %v1830 = vrot.slane %v1786, %v1829
    %v1832 = vadd.f32 %v1824, %v1830
    %v1833 = vadd.f32 %v1825, %v1830
    %vm1834 = vcmp.gt.f32.partialorder %v1832, 0.0
    %vm1835 = vcmp.gt.f32.partialorder %v1833, 0.0
    %v1836 = vmul.f32 %v1832, 0.2
    %v1837 = vmul.f32 %v1833, 0.2
    %v1838 = vsel %vm1834, %v1832, %v1836
    %v1839 = vsel %vm1835, %v1833, %v1837
    %v1840 = vld [vmem:[%s9] sm:$0xff]
    %v1841 = vld [vmem:[%s9 + $0x8] sm:$0xff]
    %v1842 = vld [vmem:[%s9 + $0x10] sm:$0xff]
    %v1843 = vld [vmem:[%s9 + $0x18] sm:$0xff]
    %v1845 = vsel %vm1788, %v1838, 0
    %v1848 = vsel %vm1788, %v1839, 0
    %1850 = vmatprep.subr.mxu0 0.0
    %1851 = vmatpush1.msra.mxu0 %v1840
    %1852 = vmatprep.subr.mxu0 0.0
    %1853 = vmatpush1.msra.mxu0 %v1841
    %1854 = vmatprep.subr.mxu0 0.0
    %1855 = vmatpush1.msra.mxu0 %v1842
    %1856 = vmatprep.subr.mxu0 0.0
    %1857 = vmatpush1.msra.mxu0 %v1843
    %1858 = vmatprep.subr.mxu0 0.0
    %1859 = vmatpush1.msra.mxu0 0.0
    %1860 = vmatprep.subr.mxu0 0.0
    %1861 = vmatpush1.msra.mxu0 0.0
    %1862 = vmatprep.subr.mxu0 0.0
    %1863 = vmatpush1.msra.mxu0 0.0
    %1864 = vmatprep.subr.mxu0 0.0
    %1865 = vmatpush1.msra.mxu0 0.0
    %1866 = vmatprep.subr.mxu0 0.0
    %1867 = vmatpush1.msra.mxu0 0.0
    %1868 = vmatprep.subr.mxu0 0.0
    %1869 = vmatpush1.msra.mxu0 0.0
    %1870 = vmatprep.subr.mxu0 0.0
    %1871 = vmatpush1.msra.mxu0 0.0
    %1872 = vmatprep.subr.mxu0 0.0
    %1873 = vmatpush1.msra.mxu0 0.0
    %1874 = vmatprep.subr.mxu0 0.0
    %1875 = vmatpush1.msra.mxu0 0.0
    %1876 = vmatprep.subr.mxu0 0.0
    %1877 = vmatpush1.msra.mxu0 0.0
    %1878 = vmatprep.subr.mxu0 0.0
    %1879 = vmatpush1.msra.mxu0 0.0
    %1880 = vmatprep.subr.mxu0 0.0
    %1881 = vmatpush1.msra.mxu0 0.0
    %1882 = vmatprep.subr.mxu0 0.0
    %1883 = vmatpush1.msra.mxu0 0.0
    %1884 = vmatprep.subr.mxu0 0.0
    %1885 = vmatpush1.msra.mxu0 0.0
    %1886 = vmatprep.subr.mxu0 0.0
    %1887 = vmatpush1.msra.mxu0 0.0
    %1888 = vmatprep.subr.mxu0 0.0
    %1889 = vmatpush1.msra.mxu0 0.0
    %1890 = vmatprep.subr.mxu0 0.0
    %1891 = vmatpush1.msra.mxu0 0.0
    %1892 = vmatprep.subr.mxu0 0.0
    %1893 = vmatpush1.msra.mxu0 0.0
    %1894 = vmatprep.subr.mxu0 0.0
    %1895 = vmatpush1.msra.mxu0 0.0
    %1896 = vmatprep.subr.mxu0 0.0
    %1897 = vmatpush1.msra.mxu0 0.0
    %1898 = vmatprep.subr.mxu0 0.0
    %1899 = vmatpush1.msra.mxu0 0.0
    %1900 = vmatprep.subr.mxu0 0.0
    %1901 = vmatpush1.msra.mxu0 0.0
    %1902 = vmatprep.subr.mxu0 0.0
    %1903 = vmatpush1.msra.mxu0 0.0
    %1904 = vmatprep.subr.mxu0 0.0
    %1905 = vmatpush1.msra.mxu0 0.0
    %1906 = vmatprep.subr.mxu0 0.0
    %1907 = vmatpush1.msra.mxu0 0.0
    %1908 = vmatprep.subr.mxu0 0.0
    %1909 = vmatpush1.msra.mxu0 0.0
    %1910 = vmatprep.subr.mxu0 0.0
    %1911 = vmatpush1.msra.mxu0 0.0
    %1912 = vmatprep.subr.mxu0 0.0
    %1913 = vmatpush1.msra.mxu0 0.0
    %1914 = vmatprep.mubr.f32.mxu0 0.0
    %1915 = vmatmul.mubr.f32.gmra.mrb[0].mxu0 %v1845
    %v1916 = vpop.f32.mrb[0].mxu0
    %v1917 = vadd.f32 0.0, %v1916
    %v1918 = vpop.f32.mrb[0].mxu0
    %1919 = vmatprep.mubr.f32.mxu0 0.0
    %1920 = vmatmul.mubr.f32.gmra.mrb[0].mxu0 %v1848
    %v1921 = vpop.f32.mrb[0].mxu0
    %v1922 = vadd.f32 0.0, %v1921
    %v1923 = vpop.f32.mrb[0].mxu0
    %1924 = vdwg.mxu0
    %s1925 = scalar_lea.vmem %s9, 32
    %v1926 = vld [vmem:[%s1925] sm:$0xff]
    %v1927 = vld [vmem:[%s1925 + $0x8] sm:$0xff]
    %v1928 = vld [vmem:[%s1925 + $0x10] sm:$0xff]
    %v1929 = vld [vmem:[%s1925 + $0x18] sm:$0xff]
    %1930 = vmatprep.subr.mxu0 0.0
    %1931 = vmatpush1.msra.mxu0 %v1926
    %1932 = vmatprep.subr.mxu0 0.0
    %1933 = vmatpush1.msra.mxu0 %v1927
    %1934 = vmatprep.subr.mxu0 0.0
    %1935 = vmatpush1.msra.mxu0 %v1928
    %1936 = vmatprep.subr.mxu0 0.0
    %1937 = vmatpush1.msra.mxu0 %v1929
    %1938 = vmatprep.subr.mxu0 0.0
    %1939 = vmatpush1.msra.mxu0 0.0
    %1940 = vmatprep.subr.mxu0 0.0
    %1941 = vmatpush1.msra.mxu0 0.0
    %1942 = vmatprep.subr.mxu0 0.0
    %1943 = vmatpush1.msra.mxu0 0.0
    %1944 = vmatprep.subr.mxu0 0.0
    %1945 = vmatpush1.msra.mxu0 0.0
    %1946 = vmatprep.subr.mxu0 0.0
    %1947 = vmatpush1.msra.mxu0 0.0
    %1948 = vmatprep.subr.mxu0 0.0
    %1949 = vmatpush1.msra.mxu0 0.0
    %1950 = vmatprep.subr.mxu0 0.0
    %1951 = vmatpush1.msra.mxu0 0.0
    %1952 = vmatprep.subr.mxu0 0.0
    %1953 = vmatpush1.msra.mxu0 0.0
    %1954 = vmatprep.subr.mxu0 0.0
    %1955 = vmatpush1.msra.mxu0 0.0
    %1956 = vmatprep.subr.mxu0 0.0
    %1957 = vmatpush1.msra.mxu0 0.0
    %1958 = vmatprep.subr.mxu0 0.0
    %1959 = vmatpush1.msra.mxu0 0.0
    %1960 = vmatprep.subr.mxu0 0.0
    %1961 = vmatpush1.msra.mxu0 0.0
    %1962 = vmatprep.subr.mxu0 0.0
    %1963 = vmatpush1.msra.mxu0 0.0
    %1964 = vmatprep.subr.mxu0 0.0
    %1965 = vmatpush1.msra.mxu0 0.0
    %1966 = vmatprep.subr.mxu0 0.0
    %1967 = vmatpush1.msra.mxu0 0.0
    %1968 = vmatprep.subr.mxu0 0.0
    %1969 = vmatpush1.msra.mxu0 0.0
    %1970 = vmatprep.subr.mxu0 0.0
    %1971 = vmatpush1.msra.mxu0 0.0
    %1972 = vmatprep.subr.mxu0 0.0
    %1973 = vmatpush1.msra.mxu0 0.0
    %1974 = vmatprep.subr.mxu0 0.0
    %1975 = vmatpush1.msra.mxu0 0.0
    %1976 = vmatprep.subr.mxu0 0.0
    %1977 = vmatpush1.msra.mxu0 0.0
    %1978 = vmatprep.subr.mxu0 0.0
    %1979 = vmatpush1.msra.mxu0 0.0
    %1980 = vmatprep.subr.mxu0 0.0
    %1981 = vmatpush1.msra.mxu0 0.0
    %1982 = vmatprep.subr.mxu0 0.0
    %1983 = vmatpush1.msra.mxu0 0.0
    %1984 = vmatprep.subr.mxu0 0.0
    %1985 = vmatpush1.msra.mxu0 0.0
    %1986 = vmatprep.subr.mxu0 0.0
    %1987 = vmatpush1.msra.mxu0 0.0
    %1988 = vmatprep.subr.mxu0 0.0
    %1989 = vmatpush1.msra.mxu0 0.0
    %1990 = vmatprep.subr.mxu0 0.0
    %1991 = vmatpush1.msra.mxu0 0.0
    %1992 = vmatprep.subr.mxu0 0.0
    %1993 = vmatpush1.msra.mxu0 0.0
    %1994 = vmatprep.mubr.f32.mxu0 0.0
    %1995 = vmatmul.mubr.f32.gmra.mrb[0].mxu0 %v1845
    %v1996 = vpop.f32.mrb[0].mxu0
    %v1997 = vadd.f32 0.0, %v1996
    %v1998 = vpop.f32.mrb[0].mxu0
    %1999 = vmatprep.mubr.f32.mxu0 0.0
    %2000 = vmatmul.mubr.f32.gmra.mrb[0].mxu0 %v1848
    %v2001 = vpop.f32.mrb[0].mxu0
    %v2002 = vadd.f32 0.0, %v2001
    %v2003 = vpop.f32.mrb[0].mxu0
    %2004 = vdwg.mxu0
    %s2005 = scalar_lea.vmem %s9, 64
    %v2006 = vld [vmem:[%s2005] sm:$0xff]
    %v2007 = vld [vmem:[%s2005 + $0x8] sm:$0xff]
    %v2008 = vld [vmem:[%s2005 + $0x10] sm:$0xff]
    %v2009 = vld [vmem:[%s2005 + $0x18] sm:$0xff]
    %2010 = vmatprep.subr.mxu0 0.0
    %2011 = vmatpush1.msra.mxu0 %v2006
    %2012 = vmatprep.subr.mxu0 0.0
    %2013 = vmatpush1.msra.mxu0 %v2007
    %2014 = vmatprep.subr.mxu0 0.0
    %2015 = vmatpush1.msra.mxu0 %v2008
    %2016 = vmatprep.subr.mxu0 0.0
    %2017 = vmatpush1.msra.mxu0 %v2009
    %2018 = vmatprep.subr.mxu0 0.0
    %2019 = vmatpush1.msra.mxu0 0.0
    %2020 = vmatprep.subr.mxu0 0.0
    %2021 = vmatpush1.msra.mxu0 0.0
    %2022 = vmatprep.subr.mxu0 0.0
    %2023 = vmatpush1.msra.mxu0 0.0
    %2024 = vmatprep.subr.mxu0 0.0
    %2025 = vmatpush1.msra.mxu0 0.0
    %2026 = vmatprep.subr.mxu0 0.0
    %2027 = vmatpush1.msra.mxu0 0.0
    %2028 = vmatprep.subr.mxu0 0.0
    %2029 = vmatpush1.msra.mxu0 0.0
    %2030 = vmatprep.subr.mxu0 0.0
    %2031 = vmatpush1.msra.mxu0 0.0
    %2032 = vmatprep.subr.mxu0 0.0
    %2033 = vmatpush1.msra.mxu0 0.0
    %2034 = vmatprep.subr.mxu0 0.0
    %2035 = vmatpush1.msra.mxu0 0.0
    %2036 = vmatprep.subr.mxu0 0.0
    %2037 = vmatpush1.msra.mxu0 0.0
    %2038 = vmatprep.subr.mxu0 0.0
    %2039 = vmatpush1.msra.mxu0 0.0
    %2040 = vmatprep.subr.mxu0 0.0
    %2041 = vmatpush1.msra.mxu0 0.0
    %2042 = vmatprep.subr.mxu0 0.0
    %2043 = vmatpush1.msra.mxu0 0.0
    %2044 = vmatprep.subr.mxu0 0.0
    %2045 = vmatpush1.msra.mxu0 0.0
    %2046 = vmatprep.subr.mxu0 0.0
    %2047 = vmatpush1.msra.mxu0 0.0
    %2048 = vmatprep.subr.mxu0 0.0
    %2049 = vmatpush1.msra.mxu0 0.0
    %2050 = vmatprep.subr.mxu0 0.0
    %2051 = vmatpush1.msra.mxu0 0.0
    %2052 = vmatprep.subr.mxu0 0.0
    %2053 = vmatpush1.msra.mxu0 0.0
    %2054 = vmatprep.subr.mxu0 0.0
    %2055 = vmatpush1.msra.mxu0 0.0
    %2056 = vmatprep.subr.mxu0 0.0
    %2057 = vmatpush1.msra.mxu0 0.0
    %2058 = vmatprep.subr.mxu0 0.0
    %2059 = vmatpush1.msra.mxu0 0.0
    %2060 = vmatprep.subr.mxu0 0.0
    %2061 = vmatpush1.msra.mxu0 0.0
    %2062 = vmatprep.subr.mxu0 0.0
    %2063 = vmatpush1.msra.mxu0 0.0
    %2064 = vmatprep.subr.mxu0 0.0
    %2065 = vmatpush1.msra.mxu0 0.0
    %2066 = vmatprep.subr.mxu0 0.0
    %2067 = vmatpush1.msra.mxu0 0.0
    %2068 = vmatprep.subr.mxu0 0.0
    %2069 = vmatpush1.msra.mxu0 0.0
    %2070 = vmatprep.subr.mxu0 0.0
    %2071 = vmatpush1.msra.mxu0 0.0
    %2072 = vmatprep.subr.mxu0 0.0
    %2073 = vmatpush1.msra.mxu0 0.0
    %2074 = vmatprep.mubr.f32.mxu0 0.0
    %2075 = vmatmul.mubr.f32.gmra.mrb[0].mxu0 %v1845
    %v2076 = vpop.f32.mrb[0].mxu0
    %v2077 = vadd.f32 0.0, %v2076
    %v2078 = vpop.f32.mrb[0].mxu0
    %2079 = vmatprep.mubr.f32.mxu0 0.0
    %2080 = vmatmul.mubr.f32.gmra.mrb[0].mxu0 %v1848
    %v2081 = vpop.f32.mrb[0].mxu0
    %v2082 = vadd.f32 0.0, %v2081
    %v2083 = vpop.f32.mrb[0].mxu0
    %2084 = vdwg.mxu0
    %s2085 = scalar_lea.vmem %s9, 96
    %v2086 = vld [vmem:[%s2085] sm:$0xff]
    %v2087 = vld [vmem:[%s2085 + $0x8] sm:$0xff]
    %v2088 = vld [vmem:[%s2085 + $0x10] sm:$0xff]
    %v2089 = vld [vmem:[%s2085 + $0x18] sm:$0xff]
    %2090 = vmatprep.subr.mxu0 0.0
    %2091 = vmatpush1.msra.mxu0 %v2086
    %2092 = vmatprep.subr.mxu0 0.0
    %2093 = vmatpush1.msra.mxu0 %v2087
    %2094 = vmatprep.subr.mxu0 0.0
    %2095 = vmatpush1.msra.mxu0 %v2088
    %2096 = vmatprep.subr.mxu0 0.0
    %2097 = vmatpush1.msra.mxu0 %v2089
    %2098 = vmatprep.subr.mxu0 0.0
    %2099 = vmatpush1.msra.mxu0 0.0
    %2100 = vmatprep.subr.mxu0 0.0
    %2101 = vmatpush1.msra.mxu0 0.0
    %2102 = vmatprep.subr.mxu0 0.0
    %2103 = vmatpush1.msra.mxu0 0.0
    %2104 = vmatprep.subr.mxu0 0.0
    %2105 = vmatpush1.msra.mxu0 0.0
    %2106 = vmatprep.subr.mxu0 0.0
    %2107 = vmatpush1.msra.mxu0 0.0
    %2108 = vmatprep.subr.mxu0 0.0
    %2109 = vmatpush1.msra.mxu0 0.0
    %2110 = vmatprep.subr.mxu0 0.0
    %2111 = vmatpush1.msra.mxu0 0.0
    %2112 = vmatprep.subr.mxu0 0.0
    %2113 = vmatpush1.msra.mxu0 0.0
    %2114 = vmatprep.subr.mxu0 0.0
    %2115 = vmatpush1.msra.mxu0 0.0
    %2116 = vmatprep.subr.mxu0 0.0
    %2117 = vmatpush1.msra.mxu0 0.0
    %2118 = vmatprep.subr.mxu0 0.0
    %2119 = vmatpush1.msra.mxu0 0.0
    %2120 = vmatprep.subr.mxu0 0.0
    %2121 = vmatpush1.msra.mxu0 0.0
    %2122 = vmatprep.subr.mxu0 0.0
    %2123 = vmatpush1.msra.mxu0 0.0
    %2124 = vmatprep.subr.mxu0 0.0
    %2125 = vmatpush1.msra.mxu0 0.0
    %2126 = vmatprep.subr.mxu0 0.0
    %2127 = vmatpush1.msra.mxu0 0.0
    %2128 = vmatprep.subr.mxu0 0.0
    %2129 = vmatpush1.msra.mxu0 0.0
    %2130 = vmatprep.subr.mxu0 0.0
    %2131 = vmatpush1.msra.mxu0 0.0
    %2132 = vmatprep.subr.mxu0 0.0
    %2133 = vmatpush1.msra.mxu0 0.0
    %2134 = vmatprep.subr.mxu0 0.0
    %2135 = vmatpush1.msra.mxu0 0.0
    %2136 = vmatprep.subr.mxu0 0.0
    %2137 = vmatpush1.msra.mxu0 0.0
    %2138 = vmatprep.subr.mxu0 0.0
    %2139 = vmatpush1.msra.mxu0 0.0
    %2140 = vmatprep.subr.mxu0 0.0
    %2141 = vmatpush1.msra.mxu0 0.0
    %2142 = vmatprep.subr.mxu0 0.0
    %2143 = vmatpush1.msra.mxu0 0.0
    %2144 = vmatprep.subr.mxu0 0.0
    %2145 = vmatpush1.msra.mxu0 0.0
    %2146 = vmatprep.subr.mxu0 0.0
    %2147 = vmatpush1.msra.mxu0 0.0
    %2148 = vmatprep.subr.mxu0 0.0
    %2149 = vmatpush1.msra.mxu0 0.0
    %2150 = vmatprep.subr.mxu0 0.0
    %2151 = vmatpush1.msra.mxu0 0.0
    %2152 = vmatprep.subr.mxu0 0.0
    %2153 = vmatpush1.msra.mxu0 0.0
    %2154 = vmatprep.mubr.f32.mxu0 0.0
    %2155 = vmatmul.mubr.f32.gmra.mrb[0].mxu0 %v1845
    %v2156 = vpop.f32.mrb[0].mxu0
    %v2157 = vadd.f32 0.0, %v2156
    %v2158 = vpop.f32.mrb[0].mxu0
    %2159 = vmatprep.mubr.f32.mxu0 0.0
    %2160 = vmatmul.mubr.f32.gmra.mrb[0].mxu0 %v1848
    %v2161 = vpop.f32.mrb[0].mxu0
    %v2162 = vadd.f32 0.0, %v2161
    %v2163 = vpop.f32.mrb[0].mxu0
    %2164 = vdwg.mxu0
    %v2167 = vrot.slane %v2157, 7
    %v2168 = vrot.slane %v2162, 7
    %v2171 = vsel %vm1764, 0.0, %v2167
    %v2172 = vsel %vm1764, 0.0, %v2168
    %v2175 = vrot.slane %v1917, 1
    %v2176 = vrot.slane %v1922, 1
    %v2179 = vsel %vm1782, %v2175, 0.0
    %v2180 = vsel %vm1782, %v2176, 0.0
    %v2181 = vadd.f32 %v1997, %v2171
    %v2182 = vadd.f32 %v2002, %v2172
    %v2184 = vlaneseq
    %v2185 = vshrl.u32 %v2184, 7
    %v2186 = vsub.s32 0, %v2185
    %v2187 = vrot.slane %v1787, %v2186
    %v2189 = vadd.f32 %v2181, %v2187
    %v2190 = vadd.f32 %v2182, %v2187
    %v2191 = vadd.f32 %v2179, %v2077
    %v2192 = vadd.f32 %v2180, %v2082
    %v2193 = vadd.f32 %v2191, %v2187
    %v2194 = vadd.f32 %v2192, %v2187
    %v2197 = vcombine.high %v2189, %v2189
    %v2199 = vunpack.c.l.s4 1966171168
    %v2200 = vunpack.c.0.s8 %v2199
    %v2201 = vlaneseq
    %v2202 = vshrl.u32 %v2201, 7
    %v2203 = vsub.s32 %v2200, %v2202
    %v2204 = vrot.slane %v2189, %v2203
    %v2206 = vunpack.c.l.s4 1966171168
    %v2207 = vunpack.c.0.s8 %v2206
    %v2208 = vlaneseq
    %v2209 = vshrl.u32 %v2208, 7
    %v2210 = vsub.s32 %v2207, %v2209
    %v2211 = vrot.slane %v2197, %v2210
    %v2212 = vcombine.high %v2204, %v2204
    %v2213 = vcombine.high %v2211, %v2211
    %v2215 = vunpack.c.l.s4 1966171168
    %v2216 = vunpack.c.0.s8 %v2215
    %v2217 = vlaneseq
    %v2218 = vshrl.u32 %v2217, 7
    %v2219 = vsub.s32 %v2216, %v2218
    %v2220 = vrot.slane %v2204, %v2219
    %v2222 = vunpack.c.l.s4 1966171168
    %v2223 = vunpack.c.0.s8 %v2222
    %v2224 = vlaneseq
    %v2225 = vshrl.u32 %v2224, 7
    %v2226 = vsub.s32 %v2223, %v2225
    %v2227 = vrot.slane %v2211, %v2226
    %v2229 = vunpack.c.l.s4 1966171168
    %v2230 = vunpack.c.0.s8 %v2229
    %v2231 = vlaneseq
    %v2232 = vshrl.u32 %v2231, 7
    %v2233 = vsub.s32 %v2230, %v2232
    %v2234 = vrot.slane %v2212, %v2233
    %v2236 = vunpack.c.l.s4 1966171168
    %v2237 = vunpack.c.0.s8 %v2236
    %v2238 = vlaneseq
    %v2239 = vshrl.u32 %v2238, 7
    %v2240 = vsub.s32 %v2237, %v2239
    %v2241 = vrot.slane %v2213, %v2240
    %v2242 = vcombine.high %v2220, %v2220
    %v2243 = vcombine.high %v2227, %v2227
    %v2244 = vcombine.high %v2234, %v2234
    %v2245 = vcombine.high %v2241, %v2241
    %v2246 = vcombine.high %v2190, %v2190
    %v2248 = vunpack.c.l.s4 1966171168
    %v2249 = vunpack.c.0.s8 %v2248
    %v2250 = vlaneseq
    %v2251 = vshrl.u32 %v2250, 7
    %v2252 = vsub.s32 %v2249, %v2251
    %v2253 = vrot.slane %v2190, %v2252
    %v2255 = vunpack.c.l.s4 1966171168
    %v2256 = vunpack.c.0.s8 %v2255
    %v2257 = vlaneseq
    %v2258 = vshrl.u32 %v2257, 7
    %v2259 = vsub.s32 %v2256, %v2258
    %v2260 = vrot.slane %v2246, %v2259
    %v2261 = vcombine.high %v2253, %v2253
    %v2262 = vcombine.high %v2260, %v2260
    %v2264 = vunpack.c.l.s4 1966171168
    %v2265 = vunpack.c.0.s8 %v2264
    %v2266 = vlaneseq
    %v2267 = vshrl.u32 %v2266, 7
    %v2268 = vsub.s32 %v2265, %v2267
    %v2269 = vrot.slane %v2253, %v2268
    %v2271 = vunpack.c.l.s4 1966171168
    %v2272 = vunpack.c.0.s8 %v2271
    %v2273 = vlaneseq
    %v2274 = vshrl.u32 %v2273, 7
    %v2275 = vsub.s32 %v2272, %v2274
    %v2276 = vrot.slane %v2260, %v2275
    %v2278 = vunpack.c.l.s4 1966171168
    %v2279 = vunpack.c.0.s8 %v2278
    %v2280 = vlaneseq
    %v2281 = vshrl.u32 %v2280, 7
    %v2282 = vsub.s32 %v2279, %v2281
    %v2283 = vrot.slane %v2261, %v2282
    %v2285 = vunpack.c.l.s4 1966171168
    %v2286 = vunpack.c.0.s8 %v2285
    %v2287 = vlaneseq
    %v2288 = vshrl.u32 %v2287, 7
    %v2289 = vsub.s32 %v2286, %v2288
    %v2290 = vrot.slane %v2262, %v2289
    %v2291 = vcombine.high %v2269, %v2269
    %v2292 = vcombine.high %v2276, %v2276
    %v2293 = vcombine.high %v2283, %v2283
    %v2294 = vcombine.high %v2290, %v2290
    %v2313 = vcombine.high %v2193, %v2193
    %v2315 = vunpack.c.l.s4 1966171168
    %v2316 = vunpack.c.0.s8 %v2315
    %v2317 = vlaneseq
    %v2318 = vshrl.u32 %v2317, 7
    %v2319 = vsub.s32 %v2316, %v2318
    %v2320 = vrot.slane %v2193, %v2319
    %v2322 = vunpack.c.l.s4 1966171168
    %v2323 = vunpack.c.0.s8 %v2322
    %v2324 = vlaneseq
    %v2325 = vshrl.u32 %v2324, 7
    %v2326 = vsub.s32 %v2323, %v2325
    %v2327 = vrot.slane %v2313, %v2326
    %v2328 = vcombine.high %v2320, %v2320
    %v2329 = vcombine.high %v2327, %v2327
    %v2331 = vunpack.c.l.s4 1966171168
    %v2332 = vunpack.c.0.s8 %v2331
    %v2333 = vlaneseq
    %v2334 = vshrl.u32 %v2333, 7
    %v2335 = vsub.s32 %v2332, %v2334
    %v2336 = vrot.slane %v2320, %v2335
    %v2338 = vunpack.c.l.s4 1966171168
    %v2339 = vunpack.c.0.s8 %v2338
    %v2340 = vlaneseq
    %v2341 = vshrl.u32 %v2340, 7
    %v2342 = vsub.s32 %v2339, %v2341
    %v2343 = vrot.slane %v2327, %v2342
    %v2345 = vunpack.c.l.s4 1966171168
    %v2346 = vunpack.c.0.s8 %v2345
    %v2347 = vlaneseq
    %v2348 = vshrl.u32 %v2347, 7
    %v2349 = vsub.s32 %v2346, %v2348
    %v2350 = vrot.slane %v2328, %v2349
    %v2352 = vunpack.c.l.s4 1966171168
    %v2353 = vunpack.c.0.s8 %v2352
    %v2354 = vlaneseq
    %v2355 = vshrl.u32 %v2354, 7
    %v2356 = vsub.s32 %v2353, %v2355
    %v2357 = vrot.slane %v2329, %v2356
    %v2358 = vcombine.high %v2336, %v2336
    %v2359 = vcombine.high %v2343, %v2343
    %v2360 = vcombine.high %v2350, %v2350
    %v2361 = vcombine.high %v2357, %v2357
    %v2362 = vcombine.high %v2194, %v2194
    %v2364 = vunpack.c.l.s4 1966171168
    %v2365 = vunpack.c.0.s8 %v2364
    %v2366 = vlaneseq
    %v2367 = vshrl.u32 %v2366, 7
    %v2368 = vsub.s32 %v2365, %v2367
    %v2369 = vrot.slane %v2194, %v2368
    %v2371 = vunpack.c.l.s4 1966171168
    %v2372 = vunpack.c.0.s8 %v2371
    %v2373 = vlaneseq
    %v2374 = vshrl.u32 %v2373, 7
    %v2375 = vsub.s32 %v2372, %v2374
    %v2376 = vrot.slane %v2362, %v2375
    %v2377 = vcombine.high %v2369, %v2369
    %v2378 = vcombine.high %v2376, %v2376
    %v2380 = vunpack.c.l.s4 1966171168
    %v2381 = vunpack.c.0.s8 %v2380
    %v2382 = vlaneseq
    %v2383 = vshrl.u32 %v2382, 7
    %v2384 = vsub.s32 %v2381, %v2383
    %v2385 = vrot.slane %v2369, %v2384
    %v2387 = vunpack.c.l.s4 1966171168
    %v2388 = vunpack.c.0.s8 %v2387
    %v2389 = vlaneseq
    %v2390 = vshrl.u32 %v2389, 7
    %v2391 = vsub.s32 %v2388, %v2390
    %v2392 = vrot.slane %v2376, %v2391
    %v2394 = vunpack.c.l.s4 1966171168
    %v2395 = vunpack.c.0.s8 %v2394
    %v2396 = vlaneseq
    %v2397 = vshrl.u32 %v2396, 7
    %v2398 = vsub.s32 %v2395, %v2397
    %v2399 = vrot.slane %v2377, %v2398
    %v2401 = vunpack.c.l.s4 1966171168
    %v2402 = vunpack.c.0.s8 %v2401
    %v2403 = vlaneseq
    %v2404 = vshrl.u32 %v2403, 7
    %v2405 = vsub.s32 %v2402, %v2404
    %v2406 = vrot.slane %v2378, %v2405
    %v2407 = vcombine.high %v2385, %v2385
    %v2408 = vcombine.high %v2392, %v2392
    %v2409 = vcombine.high %v2399, %v2399
    %v2410 = vcombine.high %v2406, %v2406
    %v2411 = vlaneseq
    %v2412 = vshrl.u32 %v2411, 7
    %v2413 = vsub.s32 0, %v2412
    %v2414 = vrot.slane %v2336, %v2413
    %v2415 = vlaneseq
    %v2416 = vshrl.u32 %v2415, 7
    %v2417 = vsub.s32 0, %v2416
    %v2418 = vrot.slane %v2350, %v2417
    %v2419 = vlaneseq
    %v2420 = vshrl.u32 %v2419, 7
    %v2421 = vsub.s32 0, %v2420
    %v2422 = vrot.slane %v2358, %v2421
    %v2423 = vlaneseq
    %v2424 = vshrl.u32 %v2423, 7
    %v2425 = vsub.s32 0, %v2424
    %v2426 = vrot.slane %v2360, %v2425
    %v2427 = vlaneseq
    %v2428 = vshrl.u32 %v2427, 7
    %v2429 = vsub.s32 0, %v2428
    %v2430 = vrot.slane %v2343, %v2429
    %v2431 = vlaneseq
    %v2432 = vshrl.u32 %v2431, 7
    %v2433 = vsub.s32 0, %v2432
    %v2434 = vrot.slane %v2357, %v2433
    %v2435 = vlaneseq
    %v2436 = vshrl.u32 %v2435, 7
    %v2437 = vsub.s32 0, %v2436
    %v2438 = vrot.slane %v2359, %v2437
    %v2439 = vlaneseq
    %v2440 = vshrl.u32 %v2439, 7
    %v2441 = vsub.s32 0, %v2440
    %v2442 = vrot.slane %v2361, %v2441
    %v2443 = vlaneseq
    %v2444 = vshrl.u32 %v2443, 7
    %v2445 = vsub.s32 0, %v2444
    %v2446 = vrot.slane %v2385, %v2445
    %v2447 = vlaneseq
    %v2448 = vshrl.u32 %v2447, 7
    %v2449 = vsub.s32 0, %v2448
    %v2450 = vrot.slane %v2399, %v2449
    %v2451 = vlaneseq
    %v2452 = vshrl.u32 %v2451, 7
    %v2453 = vsub.s32 0, %v2452
    %v2454 = vrot.slane %v2407, %v2453
    %v2455 = vlaneseq
    %v2456 = vshrl.u32 %v2455, 7
    %v2457 = vsub.s32 0, %v2456
    %v2458 = vrot.slane %v2409, %v2457
    %v2459 = vlaneseq
    %v2460 = vshrl.u32 %v2459, 7
    %v2461 = vsub.s32 0, %v2460
    %v2462 = vrot.slane %v2392, %v2461
    %v2463 = vlaneseq
    %v2464 = vshrl.u32 %v2463, 7
    %v2465 = vsub.s32 0, %v2464
    %v2466 = vrot.slane %v2406, %v2465
    %v2467 = vlaneseq
    %v2468 = vshrl.u32 %v2467, 7
    %v2469 = vsub.s32 0, %v2468
    %v2470 = vrot.slane %v2408, %v2469
    %v2471 = vlaneseq
    %v2472 = vshrl.u32 %v2471, 7
    %v2473 = vsub.s32 0, %v2472
    %v2474 = vrot.slane %v2410, %v2473
    %v2491 = vsel %vm1764, %v2220, %v2414
    %v2492 = vsel %vm1764, %v2234, %v2418
    %v2493 = vsel %vm1764, %v2242, %v2422
    %v2494 = vsel %vm1764, %v2244, %v2426
    %v2495 = vsel %vm1764, %v2227, %v2430
    %v2496 = vsel %vm1764, %v2241, %v2434
    %v2497 = vsel %vm1764, %v2243, %v2438
    %v2498 = vsel %vm1764, %v2245, %v2442
    %v2499 = vsel %vm1764, %v2269, %v2446
    %v2500 = vsel %vm1764, %v2283, %v2450
    %v2501 = vsel %vm1764, %v2291, %v2454
    %v2502 = vsel %vm1764, %v2293, %v2458
    %v2503 = vsel %vm1764, %v2276, %v2462
    %v2504 = vsel %vm1764, %v2290, %v2466
    %v2505 = vsel %vm1764, %v2292, %v2470
    %v2506 = vsel %vm1764, %v2294, %v2474
    %v2507 = vld [vmem:[#allocation10] sm:$0x1]
    %v2508 = vld [vmem:[#allocation12] sm:$0x1]
    %v2509 = vld [vmem:[#allocation13] sm:$0x1]
    %v2526 = vcombine.low %v2491, %v2492
    %v2527 = vcombine.low %v2493, %v2494
    %v2529 = vunpack.c.l.s4 1983009808
    %v2530 = vunpack.c.0.s8 %v2529
    %v2531 = vlaneseq
    %v2532 = vshrl.u32 %v2531, 7
    %v2533 = vsub.s32 %v2530, %v2532
    %v2534 = vrot.slane %v2526, %v2533
    %v2536 = vunpack.c.l.s4 1983009808
    %v2537 = vunpack.c.0.s8 %v2536
    %v2538 = vlaneseq
    %v2539 = vshrl.u32 %v2538, 7
    %v2540 = vsub.s32 %v2537, %v2539
    %v2541 = vrot.slane %v2527, %v2540
    %v2542 = vcombine.low %v2534, %v2541
    %v2543 = vcombine.low %v2495, %v2496
    %v2544 = vcombine.low %v2497, %v2498
    %v2546 = vunpack.c.l.s4 1983009808
    %v2547 = vunpack.c.0.s8 %v2546
    %v2548 = vlaneseq
    %v2549 = vshrl.u32 %v2548, 7
    %v2550 = vsub.s32 %v2547, %v2549
    %v2551 = vrot.slane %v2543, %v2550
    %v2553 = vunpack.c.l.s4 1983009808
    %v2554 = vunpack.c.0.s8 %v2553
    %v2555 = vlaneseq
    %v2556 = vshrl.u32 %v2555, 7
    %v2557 = vsub.s32 %v2554, %v2556
    %v2558 = vrot.slane %v2544, %v2557
    %v2559 = vcombine.low %v2551, %v2558
    %v2560 = vcombine.low %v2499, %v2500
    %v2561 = vcombine.low %v2501, %v2502
    %v2563 = vunpack.c.l.s4 1983009808
    %v2564 = vunpack.c.0.s8 %v2563
    %v2565 = vlaneseq
    %v2566 = vshrl.u32 %v2565, 7
    %v2567 = vsub.s32 %v2564, %v2566
    %v2568 = vrot.slane %v2560, %v2567
    %v2570 = vunpack.c.l.s4 1983009808
    %v2571 = vunpack.c.0.s8 %v2570
    %v2572 = vlaneseq
    %v2573 = vshrl.u32 %v2572, 7
    %v2574 = vsub.s32 %v2571, %v2573
    %v2575 = vrot.slane %v2561, %v2574
    %v2576 = vcombine.low %v2568, %v2575
    %v2577 = vcombine.low %v2503, %v2504
    %v2578 = vcombine.low %v2505, %v2506
    %v2580 = vunpack.c.l.s4 1983009808
    %v2581 = vunpack.c.0.s8 %v2580
    %v2582 = vlaneseq
    %v2583 = vshrl.u32 %v2582, 7
    %v2584 = vsub.s32 %v2581, %v2583
    %v2585 = vrot.slane %v2577, %v2584
    %v2587 = vunpack.c.l.s4 1983009808
    %v2588 = vunpack.c.0.s8 %v2587
    %v2589 = vlaneseq
    %v2590 = vshrl.u32 %v2589, 7
    %v2591 = vsub.s32 %v2588, %v2590
    %v2592 = vrot.slane %v2578, %v2591
    %v2593 = vcombine.low %v2585, %v2592
    %v2598 = vsel %vm268, %v2542, 0.0
    %v2599 = vsel %vm268, %v2559, 0.0
    %v2600 = vadd.f32 %v2598, %v2599
    %v2601 = vsel %vm268, %v2576, 0.0
    %v2602 = vadd.f32 %v2600, %v2601
    %v2603 = vsel %vm268, %v2593, 0.0
    %v2604 = vadd.f32 %v2602, %v2603
    %v2605 = vrot.slane %v2604, 4
    %v2606 = vadd.f32 %v2604, %v2605
    %v2607 = vrot.slane %v2606, 2
    %v2608 = vadd.f32 %v2606, %v2607
    %v2609 = vrot.slane %v2608, 1
    %v2610 = vadd.f32 %v2608, %v2609
    %v2611 = vrcp.pop 32.0
    %v2612 = vmul.f32 %v2610, %v2611
    %v2614 = vcombine.high %v2612, %v2612
    %v2616 = vunpack.c.l.s4 1983009808
    %v2617 = vunpack.c.0.s8 %v2616
    %v2618 = vlaneseq
    %v2619 = vshrl.u32 %v2618, 7
    %v2620 = vsub.s32 %v2617, %v2619
    %v2621 = vrot.slane %v2612, %v2620
    %v2623 = vunpack.c.l.s4 1983009808
    %v2624 = vunpack.c.0.s8 %v2623
    %v2625 = vlaneseq
    %v2626 = vshrl.u32 %v2625, 7
    %v2627 = vsub.s32 %v2624, %v2626
    %v2628 = vrot.slane %v2614, %v2627
    %v2629 = vcombine.high %v2621, %v2621
    %v2630 = vcombine.high %v2628, %v2628
    %v2635 = vsub.f32 %v2491, %v2621
    %v2636 = vsub.f32 %v2492, %v2629
    %v2637 = vsub.f32 %v2493, %v2628
    %v2638 = vsub.f32 %v2494, %v2630
    %v2639 = vsub.f32 %v2495, %v2621
    %v2640 = vsub.f32 %v2496, %v2629
    %v2641 = vsub.f32 %v2497, %v2628
    %v2642 = vsub.f32 %v2498, %v2630
    %v2643 = vsub.f32 %v2499, %v2621
    %v2644 = vsub.f32 %v2500, %v2629
    %v2645 = vsub.f32 %v2501, %v2628
    %v2646 = vsub.f32 %v2502, %v2630
    %v2647 = vsub.f32 %v2503, %v2621
    %v2648 = vsub.f32 %v2504, %v2629
    %v2649 = vsub.f32 %v2505, %v2628
    %v2650 = vsub.f32 %v2506, %v2630
    %v2651 = vmul.f32 %v2635, %v2635
    %v2652 = vmul.f32 %v2636, %v2636
    %v2653 = vmul.f32 %v2637, %v2637
    %v2654 = vmul.f32 %v2638, %v2638
    %v2655 = vmul.f32 %v2639, %v2639
    %v2656 = vmul.f32 %v2640, %v2640
    %v2657 = vmul.f32 %v2641, %v2641
    %v2658 = vmul.f32 %v2642, %v2642
    %v2659 = vmul.f32 %v2643, %v2643
    %v2660 = vmul.f32 %v2644, %v2644
    %v2661 = vmul.f32 %v2645, %v2645
    %v2662 = vmul.f32 %v2646, %v2646
    %v2663 = vmul.f32 %v2647, %v2647
    %v2664 = vmul.f32 %v2648, %v2648
    %v2665 = vmul.f32 %v2649, %v2649
    %v2666 = vmul.f32 %v2650, %v2650
    %v2683 = vcombine.low %v2651, %v2652
    %v2684 = vcombine.low %v2653, %v2654
    %v2686 = vunpack.c.l.s4 1983009808
    %v2687 = vunpack.c.0.s8 %v2686
    %v2688 = vlaneseq
    %v2689 = vshrl.u32 %v2688, 7
    %v2690 = vsub.s32 %v2687, %v2689
    %v2691 = vrot.slane %v2683, %v2690
    %v2693 = vunpack.c.l.s4 1983009808
    %v2694 = vunpack.c.0.s8 %v2693
    %v2695 = vlaneseq
    %v2696 = vshrl.u32 %v2695, 7
    %v2697 = vsub.s32 %v2694, %v2696
    %v2698 = vrot.slane %v2684, %v2697
    %v2699 = vcombine.low %v2691, %v2698
    %v2700 = vcombine.low %v2655, %v2656
    %v2701 = vcombine.low %v2657, %v2658
    %v2703 = vunpack.c.l.s4 1983009808
    %v2704 = vunpack.c.0.s8 %v2703
    %v2705 = vlaneseq
    %v2706 = vshrl.u32 %v2705, 7
    %v2707 = vsub.s32 %v2704, %v2706
    %v2708 = vrot.slane %v2700, %v2707
    %v2710 = vunpack.c.l.s4 1983009808
    %v2711 = vunpack.c.0.s8 %v2710
    %v2712 = vlaneseq
    %v2713 = vshrl.u32 %v2712, 7
    %v2714 = vsub.s32 %v2711, %v2713
    %v2715 = vrot.slane %v2701, %v2714
    %v2716 = vcombine.low %v2708, %v2715
    %v2717 = vcombine.low %v2659, %v2660
    %v2718 = vcombine.low %v2661, %v2662
    %v2720 = vunpack.c.l.s4 1983009808
    %v2721 = vunpack.c.0.s8 %v2720
    %v2722 = vlaneseq
    %v2723 = vshrl.u32 %v2722, 7
    %v2724 = vsub.s32 %v2721, %v2723
    %v2725 = vrot.slane %v2717, %v2724
    %v2727 = vunpack.c.l.s4 1983009808
    %v2728 = vunpack.c.0.s8 %v2727
    %v2729 = vlaneseq
    %v2730 = vshrl.u32 %v2729, 7
    %v2731 = vsub.s32 %v2728, %v2730
    %v2732 = vrot.slane %v2718, %v2731
    %v2733 = vcombine.low %v2725, %v2732
    %v2734 = vcombine.low %v2663, %v2664
    %v2735 = vcombine.low %v2665, %v2666
    %v2737 = vunpack.c.l.s4 1983009808
    %v2738 = vunpack.c.0.s8 %v2737
    %v2739 = vlaneseq
    %v2740 = vshrl.u32 %v2739, 7
    %v2741 = vsub.s32 %v2738, %v2740
    %v2742 = vrot.slane %v2734, %v2741
    %v2744 = vunpack.c.l.s4 1983009808
    %v2745 = vunpack.c.0.s8 %v2744
    %v2746 = vlaneseq
    %v2747 = vshrl.u32 %v2746, 7
    %v2748 = vsub.s32 %v2745, %v2747
    %v2749 = vrot.slane %v2735, %v2748
    %v2750 = vcombine.low %v2742, %v2749
    %v2755 = vsel %vm268, %v2699, 0.0
    %v2756 = vsel %vm268, %v2716, 0.0
    %v2757 = vadd.f32 %v2755, %v2756
    %v2758 = vsel %vm268, %v2733, 0.0
    %v2759 = vadd.f32 %v2757, %v2758
    %v2760 = vsel %vm268, %v2750, 0.0
    %v2761 = vadd.f32 %v2759, %v2760
    %v2762 = vrot.slane %v2761, 4
    %v2763 = vadd.f32 %v2761, %v2762
    %v2764 = vrot.slane %v2763, 2
    %v2765 = vadd.f32 %v2763, %v2764
    %v2766 = vrot.slane %v2765, 1
    %v2767 = vadd.f32 %v2765, %v2766
    %v2768 = vmul.f32 %v2767, %v2611
    %v2769 = vadd.f32 %v2768, 1e-05
    %v2770 = vrsqrt.pop %v2769
    %v2772 = vcombine.high %v2770, %v2770
    %v2774 = vunpack.c.l.s4 1983009808
    %v2775 = vunpack.c.0.s8 %v2774
    %v2776 = vlaneseq
    %v2777 = vshrl.u32 %v2776, 7
    %v2778 = vsub.s32 %v2775, %v2777
    %v2779 = vrot.slane %v2770, %v2778
    %v2781 = vunpack.c.l.s4 1983009808
    %v2782 = vunpack.c.0.s8 %v2781
    %v2783 = vlaneseq
    %v2784 = vshrl.u32 %v2783, 7
    %v2785 = vsub.s32 %v2782, %v2784
    %v2786 = vrot.slane %v2772, %v2785
    %v2787 = vcombine.high %v2779, %v2779
    %v2788 = vcombine.high %v2786, %v2786
    %v2793 = vmul.f32 %v2635, %v2779
    %v2794 = vmul.f32 %v2636, %v2787
    %v2795 = vmul.f32 %v2637, %v2786
    %v2796 = vmul.f32 %v2638, %v2788
    %v2797 = vmul.f32 %v2639, %v2779
    %v2798 = vmul.f32 %v2640, %v2787
    %v2799 = vmul.f32 %v2641, %v2786
    %v2800 = vmul.f32 %v2642, %v2788
    %v2801 = vmul.f32 %v2643, %v2779
    %v2802 = vmul.f32 %v2644, %v2787
    %v2803 = vmul.f32 %v2645, %v2786
    %v2804 = vmul.f32 %v2646, %v2788
    %v2805 = vmul.f32 %v2647, %v2779
    %v2806 = vmul.f32 %v2648, %v2787
    %v2807 = vmul.f32 %v2649, %v2786
    %v2808 = vmul.f32 %v2650, %v2788
    %v2810 = vlaneseq
    %v2811 = vshrl.u32 %v2810, 7
    %v2812 = vsub.s32 0, %v2811
    %v2813 = vrot.slane %v2507, %v2812
    %v2814 = vcombine.high %v2813, %v2813
    %v2816 = vunpack.c.l.s4 1983009808
    %v2817 = vunpack.c.0.s8 %v2816
    %v2818 = vlaneseq
    %v2819 = vshrl.u32 %v2818, 7
    %v2820 = vsub.s32 %v2817, %v2819
    %v2821 = vrot.slane %v2813, %v2820
    %v2823 = vunpack.c.l.s4 1983009808
    %v2824 = vunpack.c.0.s8 %v2823
    %v2825 = vlaneseq
    %v2826 = vshrl.u32 %v2825, 7
    %v2827 = vsub.s32 %v2824, %v2826
    %v2828 = vrot.slane %v2814, %v2827
    %v2829 = vcombine.high %v2821, %v2821
    %v2830 = vcombine.high %v2828, %v2828
    %v2835 = vmul.f32 %v2793, %v2821
    %v2836 = vmul.f32 %v2794, %v2829
    %v2837 = vmul.f32 %v2795, %v2828
    %v2838 = vmul.f32 %v2796, %v2830
    %v2839 = vmul.f32 %v2797, %v2821
    %v2840 = vmul.f32 %v2798, %v2829
    %v2841 = vmul.f32 %v2799, %v2828
    %v2842 = vmul.f32 %v2800, %v2830
    %v2843 = vmul.f32 %v2801, %v2821
    %v2844 = vmul.f32 %v2802, %v2829
    %v2845 = vmul.f32 %v2803, %v2828
    %v2846 = vmul.f32 %v2804, %v2830
    %v2847 = vmul.f32 %v2805, %v2821
    %v2848 = vmul.f32 %v2806, %v2829
    %v2849 = vmul.f32 %v2807, %v2828
    %v2850 = vmul.f32 %v2808, %v2830
    %v2852 = vlaneseq
    %v2853 = vshrl.u32 %v2852, 7
    %v2854 = vsub.s32 0, %v2853
    %v2855 = vrot.slane %v2508, %v2854
    %v2856 = vcombine.high %v2855, %v2855
    %v2858 = vunpack.c.l.s4 1983009808
    %v2859 = vunpack.c.0.s8 %v2858
    %v2860 = vlaneseq
    %v2861 = vshrl.u32 %v2860, 7
    %v2862 = vsub.s32 %v2859, %v2861
    %v2863 = vrot.slane %v2855, %v2862
    %v2865 = vunpack.c.l.s4 1983009808
    %v2866 = vunpack.c.0.s8 %v2865
    %v2867 = vlaneseq
    %v2868 = vshrl.u32 %v2867, 7
    %v2869 = vsub.s32 %v2866, %v2868
    %v2870 = vrot.slane %v2856, %v2869
    %v2871 = vcombine.high %v2863, %v2863
    %v2872 = vcombine.high %v2870, %v2870
    %v2877 = vadd.f32 %v2835, %v2863
    %v2878 = vadd.f32 %v2836, %v2871
    %v2879 = vadd.f32 %v2837, %v2870
    %v2880 = vadd.f32 %v2838, %v2872
    %v2881 = vadd.f32 %v2839, %v2863
    %v2882 = vadd.f32 %v2840, %v2871
    %v2883 = vadd.f32 %v2841, %v2870
    %v2884 = vadd.f32 %v2842, %v2872
    %v2885 = vadd.f32 %v2843, %v2863
    %v2886 = vadd.f32 %v2844, %v2871
    %v2887 = vadd.f32 %v2845, %v2870
    %v2888 = vadd.f32 %v2846, %v2872
    %v2889 = vadd.f32 %v2847, %v2863
    %v2890 = vadd.f32 %v2848, %v2871
    %v2891 = vadd.f32 %v2849, %v2870
    %v2892 = vadd.f32 %v2850, %v2872
    %vm2893 = vcmp.gt.f32.partialorder %v2877, 0.0
    %vm2894 = vcmp.gt.f32.partialorder %v2878, 0.0
    %vm2895 = vcmp.gt.f32.partialorder %v2879, 0.0
    %vm2896 = vcmp.gt.f32.partialorder %v2880, 0.0
    %vm2897 = vcmp.gt.f32.partialorder %v2881, 0.0
    %vm2898 = vcmp.gt.f32.partialorder %v2882, 0.0
    %vm2899 = vcmp.gt.f32.partialorder %v2883, 0.0
    %vm2900 = vcmp.gt.f32.partialorder %v2884, 0.0
    %vm2901 = vcmp.gt.f32.partialorder %v2885, 0.0
    %vm2902 = vcmp.gt.f32.partialorder %v2886, 0.0
    %vm2903 = vcmp.gt.f32.partialorder %v2887, 0.0
    %vm2904 = vcmp.gt.f32.partialorder %v2888, 0.0
    %vm2905 = vcmp.gt.f32.partialorder %v2889, 0.0
    %vm2906 = vcmp.gt.f32.partialorder %v2890, 0.0
    %vm2907 = vcmp.gt.f32.partialorder %v2891, 0.0
    %vm2908 = vcmp.gt.f32.partialorder %v2892, 0.0
    %v2909 = vmul.f32 %v2877, 0.2
    %v2910 = vmul.f32 %v2878, 0.2
    %v2911 = vmul.f32 %v2879, 0.2
    %v2912 = vmul.f32 %v2880, 0.2
    %v2913 = vmul.f32 %v2881, 0.2
    %v2914 = vmul.f32 %v2882, 0.2
    %v2915 = vmul.f32 %v2883, 0.2
    %v2916 = vmul.f32 %v2884, 0.2
    %v2917 = vmul.f32 %v2885, 0.2
    %v2918 = vmul.f32 %v2886, 0.2
    %v2919 = vmul.f32 %v2887, 0.2
    %v2920 = vmul.f32 %v2888, 0.2
    %v2921 = vmul.f32 %v2889, 0.2
    %v2922 = vmul.f32 %v2890, 0.2
    %v2923 = vmul.f32 %v2891, 0.2
    %v2924 = vmul.f32 %v2892, 0.2
    %v2925 = vsel %vm2893, %v2877, %v2909
    %v2926 = vsel %vm2894, %v2878, %v2910
    %v2927 = vsel %vm2895, %v2879, %v2911
    %v2928 = vsel %vm2896, %v2880, %v2912
    %v2929 = vsel %vm2897, %v2881, %v2913
    %v2930 = vsel %vm2898, %v2882, %v2914
    %v2931 = vsel %vm2899, %v2883, %v2915
    %v2932 = vsel %vm2900, %v2884, %v2916
    %v2933 = vsel %vm2901, %v2885, %v2917
    %v2934 = vsel %vm2902, %v2886, %v2918
    %v2935 = vsel %vm2903, %v2887, %v2919
    %v2936 = vsel %vm2904, %v2888, %v2920
    %v2937 = vsel %vm2905, %v2889, %v2921
    %v2938 = vsel %vm2906, %v2890, %v2922
    %v2939 = vsel %vm2907, %v2891, %v2923
    %v2940 = vsel %vm2908, %v2892, %v2924
    %v2941 = vld [vmem:[%s13] sm:$0xff]
    %v2942 = vld [vmem:[%s13 + $0x8] sm:$0xff]
    %v2959 = vcombine.low %v2925, %v2926
    %v2960 = vcombine.low %v2927, %v2928
    %v2962 = vunpack.c.l.s4 1983009808
    %v2963 = vunpack.c.0.s8 %v2962
    %v2964 = vlaneseq
    %v2965 = vshrl.u32 %v2964, 7
    %v2966 = vsub.s32 %v2963, %v2965
    %v2967 = vrot.slane %v2959, %v2966
    %v2969 = vunpack.c.l.s4 1983009808
    %v2970 = vunpack.c.0.s8 %v2969
    %v2971 = vlaneseq
    %v2972 = vshrl.u32 %v2971, 7
    %v2973 = vsub.s32 %v2970, %v2972
    %v2974 = vrot.slane %v2960, %v2973
    %v2975 = vcombine.low %v2967, %v2974
    %v2976 = vcombine.low %v2929, %v2930
    %v2977 = vcombine.low %v2931, %v2932
    %v2979 = vunpack.c.l.s4 1983009808
    %v2980 = vunpack.c.0.s8 %v2979
    %v2981 = vlaneseq
    %v2982 = vshrl.u32 %v2981, 7
    %v2983 = vsub.s32 %v2980, %v2982
    %v2984 = vrot.slane %v2976, %v2983
    %v2986 = vunpack.c.l.s4 1983009808
    %v2987 = vunpack.c.0.s8 %v2986
    %v2988 = vlaneseq
    %v2989 = vshrl.u32 %v2988, 7
    %v2990 = vsub.s32 %v2987, %v2989
    %v2991 = vrot.slane %v2977, %v2990
    %v2992 = vcombine.low %v2984, %v2991
    %v2993 = vcombine.low %v2933, %v2934
    %v2994 = vcombine.low %v2935, %v2936
    %v2996 = vunpack.c.l.s4 1983009808
    %v2997 = vunpack.c.0.s8 %v2996
    %v2998 = vlaneseq
    %v2999 = vshrl.u32 %v2998, 7
    %v3000 = vsub.s32 %v2997, %v2999
    %v3001 = vrot.slane %v2993, %v3000
    %v3003 = vunpack.c.l.s4 1983009808
    %v3004 = vunpack.c.0.s8 %v3003
    %v3005 = vlaneseq
    %v3006 = vshrl.u32 %v3005, 7
    %v3007 = vsub.s32 %v3004, %v3006
    %v3008 = vrot.slane %v2994, %v3007
    %v3009 = vcombine.low %v3001, %v3008
    %v3010 = vcombine.low %v2937, %v2938
    %v3011 = vcombine.low %v2939, %v2940
    %v3013 = vunpack.c.l.s4 1983009808
    %v3014 = vunpack.c.0.s8 %v3013
    %v3015 = vlaneseq
    %v3016 = vshrl.u32 %v3015, 7
    %v3017 = vsub.s32 %v3014, %v3016
    %v3018 = vrot.slane %v3010, %v3017
    %v3020 = vunpack.c.l.s4 1983009808
    %v3021 = vunpack.c.0.s8 %v3020
    %v3022 = vlaneseq
    %v3023 = vshrl.u32 %v3022, 7
    %v3024 = vsub.s32 %v3021, %v3023
    %v3025 = vrot.slane %v3011, %v3024
    %v3026 = vcombine.low %v3018, %v3025
    %v3027 = vsel %vm268, %v2975, 0
    %v3029 = vsel %vm268, %v2992, 0
    %v3031 = vsel %vm268, %v3009, 0
    %v3033 = vsel %vm268, %v3026, 0
    %3035 = vmatprep.subr.mxu0 0.0
    %3036 = vmatpush1.msra.mxu0 %v2941
    %3037 = vmatprep.subr.mxu0 0.0
    %3038 = vmatpush1.msra.mxu0 %v2942
    %3039 = vmatprep.subr.mxu0 0.0
    %3040 = vmatpush1.msra.mxu0 0.0
    %3041 = vmatprep.subr.mxu0 0.0
    %3042 = vmatpush1.msra.mxu0 0.0
    %3043 = vmatprep.subr.mxu0 0.0
    %3044 = vmatpush1.msra.mxu0 0.0
    %3045 = vmatprep.subr.mxu0 0.0
    %3046 = vmatpush1.msra.mxu0 0.0
    %3047 = vmatprep.subr.mxu0 0.0
    %3048 = vmatpush1.msra.mxu0 0.0
    %3049 = vmatprep.subr.mxu0 0.0
    %3050 = vmatpush1.msra.mxu0 0.0
    %3051 = vmatprep.subr.mxu0 0.0
    %3052 = vmatpush1.msra.mxu0 0.0
    %3053 = vmatprep.subr.mxu0 0.0
    %3054 = vmatpush1.msra.mxu0 0.0
    %3055 = vmatprep.subr.mxu0 0.0
    %3056 = vmatpush1.msra.mxu0 0.0
    %3057 = vmatprep.subr.mxu0 0.0
    %3058 = vmatpush1.msra.mxu0 0.0
    %3059 = vmatprep.subr.mxu0 0.0
    %3060 = vmatpush1.msra.mxu0 0.0
    %3061 = vmatprep.subr.mxu0 0.0
    %3062 = vmatpush1.msra.mxu0 0.0
    %3063 = vmatprep.subr.mxu0 0.0
    %3064 = vmatpush1.msra.mxu0 0.0
    %3065 = vmatprep.subr.mxu0 0.0
    %3066 = vmatpush1.msra.mxu0 0.0
    %3067 = vmatprep.subr.mxu0 0.0
    %3068 = vmatpush1.msra.mxu0 0.0
    %3069 = vmatprep.subr.mxu0 0.0
    %3070 = vmatpush1.msra.mxu0 0.0
    %3071 = vmatprep.subr.mxu0 0.0
    %3072 = vmatpush1.msra.mxu0 0.0
    %3073 = vmatprep.subr.mxu0 0.0
    %3074 = vmatpush1.msra.mxu0 0.0
    %3075 = vmatprep.subr.mxu0 0.0
    %3076 = vmatpush1.msra.mxu0 0.0
    %3077 = vmatprep.subr.mxu0 0.0
    %3078 = vmatpush1.msra.mxu0 0.0
    %3079 = vmatprep.subr.mxu0 0.0
    %3080 = vmatpush1.msra.mxu0 0.0
    %3081 = vmatprep.subr.mxu0 0.0
    %3082 = vmatpush1.msra.mxu0 0.0
    %3083 = vmatprep.subr.mxu0 0.0
    %3084 = vmatpush1.msra.mxu0 0.0
    %3085 = vmatprep.subr.mxu0 0.0
    %3086 = vmatpush1.msra.mxu0 0.0
    %3087 = vmatprep.subr.mxu0 0.0
    %3088 = vmatpush1.msra.mxu0 0.0
    %3089 = vmatprep.subr.mxu0 0.0
    %3090 = vmatpush1.msra.mxu0 0.0
    %3091 = vmatprep.subr.mxu0 0.0
    %3092 = vmatpush1.msra.mxu0 0.0
    %3093 = vmatprep.subr.mxu0 0.0
    %3094 = vmatpush1.msra.mxu0 0.0
    %3095 = vmatprep.subr.mxu0 0.0
    %3096 = vmatpush1.msra.mxu0 0.0
    %3097 = vmatprep.subr.mxu0 0.0
    %3098 = vmatpush1.msra.mxu0 0.0
    %3099 = vmatprep.mubr.f32.mxu0 0.0
    %3100 = vmatmul.mubr.f32.gmra.mrb[0].mxu0 %v3027
    %v3101 = vpop.f32.mrb[0].mxu0
    %v3102 = vadd.f32 0.0, %v3101
    %v3103 = vpop.f32.mrb[0].mxu0
    %3104 = vmatprep.mubr.f32.mxu0 0.0
    %3105 = vmatmul.mubr.f32.gmra.mrb[0].mxu0 %v3029
    %v3106 = vpop.f32.mrb[0].mxu0
    %v3107 = vadd.f32 0.0, %v3106
    %v3108 = vpop.f32.mrb[0].mxu0
    %3109 = vmatprep.mubr.f32.mxu0 0.0
    %3110 = vmatmul.mubr.f32.gmra.mrb[0].mxu0 %v3031
    %v3111 = vpop.f32.mrb[0].mxu0
    %v3112 = vadd.f32 0.0, %v3111
    %v3113 = vpop.f32.mrb[0].mxu0
    %3114 = vmatprep.mubr.f32.mxu0 0.0
    %3115 = vmatmul.mubr.f32.gmra.mrb[0].mxu0 %v3033
    %v3116 = vpop.f32.mrb[0].mxu0
    %v3117 = vadd.f32 0.0, %v3116
    %v3118 = vpop.f32.mrb[0].mxu0
    %3119 = vdwg.mxu0
    %s3120 = scalar_lea.vmem %s13, 16
    %v3121 = vld [vmem:[%s3120] sm:$0xff]
    %v3122 = vld [vmem:[%s3120 + $0x8] sm:$0xff]
    %3123 = vmatprep.subr.mxu0 0.0
    %3124 = vmatpush1.msra.mxu0 %v3121
    %3125 = vmatprep.subr.mxu0 0.0
    %3126 = vmatpush1.msra.mxu0 %v3122
    %3127 = vmatprep.subr.mxu0 0.0
    %3128 = vmatpush1.msra.mxu0 0.0
    %3129 = vmatprep.subr.mxu0 0.0
    %3130 = vmatpush1.msra.mxu0 0.0
    %3131 = vmatprep.subr.mxu0 0.0
    %3132 = vmatpush1.msra.mxu0 0.0
    %3133 = vmatprep.subr.mxu0 0.0
    %3134 = vmatpush1.msra.mxu0 0.0
    %3135 = vmatprep.subr.mxu0 0.0
    %3136 = vmatpush1.msra.mxu0 0.0
    %3137 = vmatprep.subr.mxu0 0.0
    %3138 = vmatpush1.msra.mxu0 0.0
    %3139 = vmatprep.subr.mxu0 0.0
    %3140 = vmatpush1.msra.mxu0 0.0
    %3141 = vmatprep.subr.mxu0 0.0
    %3142 = vmatpush1.msra.mxu0 0.0
    %3143 = vmatprep.subr.mxu0 0.0
    %3144 = vmatpush1.msra.mxu0 0.0
    %3145 = vmatprep.subr.mxu0 0.0
    %3146 = vmatpush1.msra.mxu0 0.0
    %3147 = vmatprep.subr.mxu0 0.0
    %3148 = vmatpush1.msra.mxu0 0.0
    %3149 = vmatprep.subr.mxu0 0.0
    %3150 = vmatpush1.msra.mxu0 0.0
    %3151 = vmatprep.subr.mxu0 0.0
    %3152 = vmatpush1.msra.mxu0 0.0
    %3153 = vmatprep.subr.mxu0 0.0
    %3154 = vmatpush1.msra.mxu0 0.0
    %3155 = vmatprep.subr.mxu0 0.0
    %3156 = vmatpush1.msra.mxu0 0.0
    %3157 = vmatprep.subr.mxu0 0.0
    %3158 = vmatpush1.msra.mxu0 0.0
    %3159 = vmatprep.subr.mxu0 0.0
    %3160 = vmatpush1.msra.mxu0 0.0
    %3161 = vmatprep.subr.mxu0 0.0
    %3162 = vmatpush1.msra.mxu0 0.0
    %3163 = vmatprep.subr.mxu0 0.0
    %3164 = vmatpush1.msra.mxu0 0.0
    %3165 = vmatprep.subr.mxu0 0.0
    %3166 = vmatpush1.msra.mxu0 0.0
    %3167 = vmatprep.subr.mxu0 0.0
    %3168 = vmatpush1.msra.mxu0 0.0
    %3169 = vmatprep.subr.mxu0 0.0
    %3170 = vmatpush1.msra.mxu0 0.0
    %3171 = vmatprep.subr.mxu0 0.0
    %3172 = vmatpush1.msra.mxu0 0.0
    %3173 = vmatprep.subr.mxu0 0.0
    %3174 = vmatpush1.msra.mxu0 0.0
    %3175 = vmatprep.subr.mxu0 0.0
    %3176 = vmatpush1.msra.mxu0 0.0
    %3177 = vmatprep.subr.mxu0 0.0
    %3178 = vmatpush1.msra.mxu0 0.0
    %3179 = vmatprep.subr.mxu0 0.0
    %3180 = vmatpush1.msra.mxu0 0.0
    %3181 = vmatprep.subr.mxu0 0.0
    %3182 = vmatpush1.msra.mxu0 0.0
    %3183 = vmatprep.subr.mxu0 0.0
    %3184 = vmatpush1.msra.mxu0 0.0
    %3185 = vmatprep.subr.mxu0 0.0
    %3186 = vmatpush1.msra.mxu0 0.0
    %3187 = vmatprep.mubr.f32.mxu0 0.0
    %3188 = vmatmul.mubr.f32.gmra.mrb[0].mxu0 %v3027
    %v3189 = vpop.f32.mrb[0].mxu0
    %v3190 = vadd.f32 0.0, %v3189
    %v3191 = vpop.f32.mrb[0].mxu0
    %3192 = vmatprep.mubr.f32.mxu0 0.0
    %3193 = vmatmul.mubr.f32.gmra.mrb[0].mxu0 %v3029
    %v3194 = vpop.f32.mrb[0].mxu0
    %v3195 = vadd.f32 0.0, %v3194
    %v3196 = vpop.f32.mrb[0].mxu0
    %3197 = vmatprep.mubr.f32.mxu0 0.0
    %3198 = vmatmul.mubr.f32.gmra.mrb[0].mxu0 %v3031
    %v3199 = vpop.f32.mrb[0].mxu0
    %v3200 = vadd.f32 0.0, %v3199
    %v3201 = vpop.f32.mrb[0].mxu0
    %3202 = vmatprep.mubr.f32.mxu0 0.0
    %3203 = vmatmul.mubr.f32.gmra.mrb[0].mxu0 %v3033
    %v3204 = vpop.f32.mrb[0].mxu0
    %v3205 = vadd.f32 0.0, %v3204
    %v3206 = vpop.f32.mrb[0].mxu0
    %3207 = vdwg.mxu0
    %s3208 = scalar_lea.vmem %s13, 32
    %v3209 = vld [vmem:[%s3208] sm:$0xff]
    %v3210 = vld [vmem:[%s3208 + $0x8] sm:$0xff]
    %3211 = vmatprep.subr.mxu0 0.0
    %3212 = vmatpush1.msra.mxu0 %v3209
    %3213 = vmatprep.subr.mxu0 0.0
    %3214 = vmatpush1.msra.mxu0 %v3210
    %3215 = vmatprep.subr.mxu0 0.0
    %3216 = vmatpush1.msra.mxu0 0.0
    %3217 = vmatprep.subr.mxu0 0.0
    %3218 = vmatpush1.msra.mxu0 0.0
    %3219 = vmatprep.subr.mxu0 0.0
    %3220 = vmatpush1.msra.mxu0 0.0
    %3221 = vmatprep.subr.mxu0 0.0
    %3222 = vmatpush1.msra.mxu0 0.0
    %3223 = vmatprep.subr.mxu0 0.0
    %3224 = vmatpush1.msra.mxu0 0.0
    %3225 = vmatprep.subr.mxu0 0.0
    %3226 = vmatpush1.msra.mxu0 0.0
    %3227 = vmatprep.subr.mxu0 0.0
    %3228 = vmatpush1.msra.mxu0 0.0
    %3229 = vmatprep.subr.mxu0 0.0
    %3230 = vmatpush1.msra.mxu0 0.0
    %3231 = vmatprep.subr.mxu0 0.0
    %3232 = vmatpush1.msra.mxu0 0.0
    %3233 = vmatprep.subr.mxu0 0.0
    %3234 = vmatpush1.msra.mxu0 0.0
    %3235 = vmatprep.subr.mxu0 0.0
    %3236 = vmatpush1.msra.mxu0 0.0
    %3237 = vmatprep.subr.mxu0 0.0
    %3238 = vmatpush1.msra.mxu0 0.0
    %3239 = vmatprep.subr.mxu0 0.0
    %3240 = vmatpush1.msra.mxu0 0.0
    %3241 = vmatprep.subr.mxu0 0.0
    %3242 = vmatpush1.msra.mxu0 0.0
    %3243 = vmatprep.subr.mxu0 0.0
    %3244 = vmatpush1.msra.mxu0 0.0
    %3245 = vmatprep.subr.mxu0 0.0
    %3246 = vmatpush1.msra.mxu0 0.0
    %3247 = vmatprep.subr.mxu0 0.0
    %3248 = vmatpush1.msra.mxu0 0.0
    %3249 = vmatprep.subr.mxu0 0.0
    %3250 = vmatpush1.msra.mxu0 0.0
    %3251 = vmatprep.subr.mxu0 0.0
    %3252 = vmatpush1.msra.mxu0 0.0
    %3253 = vmatprep.subr.mxu0 0.0
    %3254 = vmatpush1.msra.mxu0 0.0
    %3255 = vmatprep.subr.mxu0 0.0
    %3256 = vmatpush1.msra.mxu0 0.0
    %3257 = vmatprep.subr.mxu0 0.0
    %3258 = vmatpush1.msra.mxu0 0.0
    %3259 = vmatprep.subr.mxu0 0.0
    %3260 = vmatpush1.msra.mxu0 0.0
    %3261 = vmatprep.subr.mxu0 0.0
    %3262 = vmatpush1.msra.mxu0 0.0
    %3263 = vmatprep.subr.mxu0 0.0
    %3264 = vmatpush1.msra.mxu0 0.0
    %3265 = vmatprep.subr.mxu0 0.0
    %3266 = vmatpush1.msra.mxu0 0.0
    %3267 = vmatprep.subr.mxu0 0.0
    %3268 = vmatpush1.msra.mxu0 0.0
    %3269 = vmatprep.subr.mxu0 0.0
    %3270 = vmatpush1.msra.mxu0 0.0
    %3271 = vmatprep.subr.mxu0 0.0
    %3272 = vmatpush1.msra.mxu0 0.0
    %3273 = vmatprep.subr.mxu0 0.0
    %3274 = vmatpush1.msra.mxu0 0.0
    %3275 = vmatprep.mubr.f32.mxu0 0.0
    %3276 = vmatmul.mubr.f32.gmra.mrb[0].mxu0 %v3027
    %v3277 = vpop.f32.mrb[0].mxu0
    %v3278 = vadd.f32 0.0, %v3277
    %v3279 = vpop.f32.mrb[0].mxu0
    %3280 = vmatprep.mubr.f32.mxu0 0.0
    %3281 = vmatmul.mubr.f32.gmra.mrb[0].mxu0 %v3029
    %v3282 = vpop.f32.mrb[0].mxu0
    %v3283 = vadd.f32 0.0, %v3282
    %v3284 = vpop.f32.mrb[0].mxu0
    %3285 = vmatprep.mubr.f32.mxu0 0.0
    %3286 = vmatmul.mubr.f32.gmra.mrb[0].mxu0 %v3031
    %v3287 = vpop.f32.mrb[0].mxu0
    %v3288 = vadd.f32 0.0, %v3287
    %v3289 = vpop.f32.mrb[0].mxu0
    %3290 = vmatprep.mubr.f32.mxu0 0.0
    %3291 = vmatmul.mubr.f32.gmra.mrb[0].mxu0 %v3033
    %v3292 = vpop.f32.mrb[0].mxu0
    %v3293 = vadd.f32 0.0, %v3292
    %v3294 = vpop.f32.mrb[0].mxu0
    %3295 = vdwg.mxu0
    %s3296 = scalar_lea.vmem %s13, 48
    %v3297 = vld [vmem:[%s3296] sm:$0xff]
    %v3298 = vld [vmem:[%s3296 + $0x8] sm:$0xff]
    %3299 = vmatprep.subr.mxu0 0.0
    %3300 = vmatpush1.msra.mxu0 %v3297
    %3301 = vmatprep.subr.mxu0 0.0
    %3302 = vmatpush1.msra.mxu0 %v3298
    %3303 = vmatprep.subr.mxu0 0.0
    %3304 = vmatpush1.msra.mxu0 0.0
    %3305 = vmatprep.subr.mxu0 0.0
    %3306 = vmatpush1.msra.mxu0 0.0
    %3307 = vmatprep.subr.mxu0 0.0
    %3308 = vmatpush1.msra.mxu0 0.0
    %3309 = vmatprep.subr.mxu0 0.0
    %3310 = vmatpush1.msra.mxu0 0.0
    %3311 = vmatprep.subr.mxu0 0.0
    %3312 = vmatpush1.msra.mxu0 0.0
    %3313 = vmatprep.subr.mxu0 0.0
    %3314 = vmatpush1.msra.mxu0 0.0
    %3315 = vmatprep.subr.mxu0 0.0
    %3316 = vmatpush1.msra.mxu0 0.0
    %3317 = vmatprep.subr.mxu0 0.0
    %3318 = vmatpush1.msra.mxu0 0.0
    %3319 = vmatprep.subr.mxu0 0.0
    %3320 = vmatpush1.msra.mxu0 0.0
    %3321 = vmatprep.subr.mxu0 0.0
    %3322 = vmatpush1.msra.mxu0 0.0
    %3323 = vmatprep.subr.mxu0 0.0
    %3324 = vmatpush1.msra.mxu0 0.0
    %3325 = vmatprep.subr.mxu0 0.0
    %3326 = vmatpush1.msra.mxu0 0.0
    %3327 = vmatprep.subr.mxu0 0.0
    %3328 = vmatpush1.msra.mxu0 0.0
    %3329 = vmatprep.subr.mxu0 0.0
    %3330 = vmatpush1.msra.mxu0 0.0
    %3331 = vmatprep.subr.mxu0 0.0
    %3332 = vmatpush1.msra.mxu0 0.0
    %3333 = vmatprep.subr.mxu0 0.0
    %3334 = vmatpush1.msra.mxu0 0.0
    %3335 = vmatprep.subr.mxu0 0.0
    %3336 = vmatpush1.msra.mxu0 0.0
    %3337 = vmatprep.subr.mxu0 0.0
    %3338 = vmatpush1.msra.mxu0 0.0
    %3339 = vmatprep.subr.mxu0 0.0
    %3340 = vmatpush1.msra.mxu0 0.0
    %3341 = vmatprep.subr.mxu0 0.0
    %3342 = vmatpush1.msra.mxu0 0.0
    %3343 = vmatprep.subr.mxu0 0.0
    %3344 = vmatpush1.msra.mxu0 0.0
    %3345 = vmatprep.subr.mxu0 0.0
    %3346 = vmatpush1.msra.mxu0 0.0
    %3347 = vmatprep.subr.mxu0 0.0
    %3348 = vmatpush1.msra.mxu0 0.0
    %3349 = vmatprep.subr.mxu0 0.0
    %3350 = vmatpush1.msra.mxu0 0.0
    %3351 = vmatprep.subr.mxu0 0.0
    %3352 = vmatpush1.msra.mxu0 0.0
    %3353 = vmatprep.subr.mxu0 0.0
    %3354 = vmatpush1.msra.mxu0 0.0
    %3355 = vmatprep.subr.mxu0 0.0
    %3356 = vmatpush1.msra.mxu0 0.0
    %3357 = vmatprep.subr.mxu0 0.0
    %3358 = vmatpush1.msra.mxu0 0.0
    %3359 = vmatprep.subr.mxu0 0.0
    %3360 = vmatpush1.msra.mxu0 0.0
    %3361 = vmatprep.subr.mxu0 0.0
    %3362 = vmatpush1.msra.mxu0 0.0
    %3363 = vmatprep.mubr.f32.mxu0 0.0
    %3364 = vmatmul.mubr.f32.gmra.mrb[0].mxu0 %v3027
    %v3365 = vpop.f32.mrb[0].mxu0
    %v3366 = vadd.f32 0.0, %v3365
    %v3367 = vpop.f32.mrb[0].mxu0
    %3368 = vmatprep.mubr.f32.mxu0 0.0
    %3369 = vmatmul.mubr.f32.gmra.mrb[0].mxu0 %v3029
    %v3370 = vpop.f32.mrb[0].mxu0
    %v3371 = vadd.f32 0.0, %v3370
    %v3372 = vpop.f32.mrb[0].mxu0
    %3373 = vmatprep.mubr.f32.mxu0 0.0
    %3374 = vmatmul.mubr.f32.gmra.mrb[0].mxu0 %v3031
    %v3375 = vpop.f32.mrb[0].mxu0
    %v3376 = vadd.f32 0.0, %v3375
    %v3377 = vpop.f32.mrb[0].mxu0
    %3378 = vmatprep.mubr.f32.mxu0 0.0
    %3379 = vmatmul.mubr.f32.gmra.mrb[0].mxu0 %v3033
    %v3380 = vpop.f32.mrb[0].mxu0
    %v3381 = vadd.f32 0.0, %v3380
    %v3382 = vpop.f32.mrb[0].mxu0
    %3383 = vdwg.mxu0
    %v3388 = vrot.slane %v3366, 7
    %v3389 = vrot.slane %v3371, 7
    %v3390 = vsel %vm1764, %v3388, %v3389
    %v3391 = vrot.slane %v3376, 7
    %v3392 = vrot.slane %v3381, 7
    %v3393 = vsel %vm1764, %v3391, %v3392
    %v3398 = vsel %vm1764, 0.0, %v3388
    %v3399 = vsel %vm1764, 0.0, %v3391
    %v3404 = vrot.slane %v3102, 1
    %v3405 = vrot.slane %v3107, 1
    %v3406 = vsel %vm1782, %v3404, %v3405
    %v3407 = vrot.slane %v3112, 1
    %v3408 = vrot.slane %v3117, 1
    %v3409 = vsel %vm1782, %v3407, %v3408
    %v3414 = vsel %vm1782, %v3405, 0.0
    %v3415 = vsel %vm1782, %v3408, 0.0
    %v3416 = vadd.f32 %v3190, %v3398
    %v3417 = vadd.f32 %v3195, %v3390
    %v3418 = vadd.f32 %v3200, %v3399
    %v3419 = vadd.f32 %v3205, %v3393
    %v3421 = vlaneseq
    %v3422 = vshrl.u32 %v3421, 7
    %v3423 = vsub.s32 0, %v3422
    %v3424 = vrot.slane %v2509, %v3423
    %v3426 = vadd.f32 %v3416, %v3424
    %v3427 = vadd.f32 %v3417, %v3424
    %v3428 = vadd.f32 %v3418, %v3424
    %v3429 = vadd.f32 %v3419, %v3424
    %v3430 = vadd.f32 %v3406, %v3278
    %v3431 = vadd.f32 %v3414, %v3283
    %v3432 = vadd.f32 %v3409, %v3288
    %v3433 = vadd.f32 %v3415, %v3293
    %v3434 = vadd.f32 %v3430, %v3424
    %v3435 = vadd.f32 %v3431, %v3424
    %v3436 = vadd.f32 %v3432, %v3424
    %v3437 = vadd.f32 %v3433, %v3424
    %v3442 = vcombine.high %v3426, %v3426
    %v3444 = vunpack.c.l.s4 1966171168
    %v3445 = vunpack.c.0.s8 %v3444
    %v3446 = vlaneseq
    %v3447 = vshrl.u32 %v3446, 7
    %v3448 = vsub.s32 %v3445, %v3447
    %v3449 = vrot.slane %v3426, %v3448
    %v3451 = vunpack.c.l.s4 1966171168
    %v3452 = vunpack.c.0.s8 %v3451
    %v3453 = vlaneseq
    %v3454 = vshrl.u32 %v3453, 7
    %v3455 = vsub.s32 %v3452, %v3454
    %v3456 = vrot.slane %v3442, %v3455
    %v3457 = vcombine.high %v3449, %v3449
    %v3458 = vcombine.high %v3456, %v3456
    %v3460 = vunpack.c.l.s4 1966171168
    %v3461 = vunpack.c.0.s8 %v3460
    %v3462 = vlaneseq
    %v3463 = vshrl.u32 %v3462, 7
    %v3464 = vsub.s32 %v3461, %v3463
    %v3465 = vrot.slane %v3449, %v3464
    %v3467 = vunpack.c.l.s4 1966171168
    %v3468 = vunpack.c.0.s8 %v3467
    %v3469 = vlaneseq
    %v3470 = vshrl.u32 %v3469, 7
    %v3471 = vsub.s32 %v3468, %v3470
    %v3472 = vrot.slane %v3456, %v3471
    %v3474 = vunpack.c.l.s4 1966171168
    %v3475 = vunpack.c.0.s8 %v3474
    %v3476 = vlaneseq
    %v3477 = vshrl.u32 %v3476, 7
    %v3478 = vsub.s32 %v3475, %v3477
    %v3479 = vrot.slane %v3457, %v3478
    %v3481 = vunpack.c.l.s4 1966171168
    %v3482 = vunpack.c.0.s8 %v3481
    %v3483 = vlaneseq
    %v3484 = vshrl.u32 %v3483, 7
    %v3485 = vsub.s32 %v3482, %v3484
    %v3486 = vrot.slane %v3458, %v3485
    %v3487 = vcombine.high %v3465, %v3465
    %v3488 = vcombine.high %v3472, %v3472
    %v3489 = vcombine.high %v3479, %v3479
    %v3490 = vcombine.high %v3486, %v3486
    %v3491 = vcombine.high %v3427, %v3427
    %v3493 = vunpack.c.l.s4 1966171168
    %v3494 = vunpack.c.0.s8 %v3493
    %v3495 = vlaneseq
    %v3496 = vshrl.u32 %v3495, 7
    %v3497 = vsub.s32 %v3494, %v3496
    %v3498 = vrot.slane %v3427, %v3497
    %v3500 = vunpack.c.l.s4 1966171168
    %v3501 = vunpack.c.0.s8 %v3500
    %v3502 = vlaneseq
    %v3503 = vshrl.u32 %v3502, 7
    %v3504 = vsub.s32 %v3501, %v3503
    %v3505 = vrot.slane %v3491, %v3504
    %v3506 = vcombine.high %v3498, %v3498
    %v3507 = vcombine.high %v3505, %v3505
    %v3509 = vunpack.c.l.s4 1966171168
    %v3510 = vunpack.c.0.s8 %v3509
    %v3511 = vlaneseq
    %v3512 = vshrl.u32 %v3511, 7
    %v3513 = vsub.s32 %v3510, %v3512
    %v3514 = vrot.slane %v3498, %v3513
    %v3516 = vunpack.c.l.s4 1966171168
    %v3517 = vunpack.c.0.s8 %v3516
    %v3518 = vlaneseq
    %v3519 = vshrl.u32 %v3518, 7
    %v3520 = vsub.s32 %v3517, %v3519
    %v3521 = vrot.slane %v3505, %v3520
    %v3523 = vunpack.c.l.s4 1966171168
    %v3524 = vunpack.c.0.s8 %v3523
    %v3525 = vlaneseq
    %v3526 = vshrl.u32 %v3525, 7
    %v3527 = vsub.s32 %v3524, %v3526
    %v3528 = vrot.slane %v3506, %v3527
    %v3530 = vunpack.c.l.s4 1966171168
    %v3531 = vunpack.c.0.s8 %v3530
    %v3532 = vlaneseq
    %v3533 = vshrl.u32 %v3532, 7
    %v3534 = vsub.s32 %v3531, %v3533
    %v3535 = vrot.slane %v3507, %v3534
    %v3536 = vcombine.high %v3514, %v3514
    %v3537 = vcombine.high %v3521, %v3521
    %v3538 = vcombine.high %v3528, %v3528
    %v3539 = vcombine.high %v3535, %v3535
    %v3540 = vcombine.high %v3428, %v3428
    %v3542 = vunpack.c.l.s4 1966171168
    %v3543 = vunpack.c.0.s8 %v3542
    %v3544 = vlaneseq
    %v3545 = vshrl.u32 %v3544, 7
    %v3546 = vsub.s32 %v3543, %v3545
    %v3547 = vrot.slane %v3428, %v3546
    %v3549 = vunpack.c.l.s4 1966171168
    %v3550 = vunpack.c.0.s8 %v3549
    %v3551 = vlaneseq
    %v3552 = vshrl.u32 %v3551, 7
    %v3553 = vsub.s32 %v3550, %v3552
    %v3554 = vrot.slane %v3540, %v3553
    %v3555 = vcombine.high %v3547, %v3547
    %v3556 = vcombine.high %v3554, %v3554
    %v3558 = vunpack.c.l.s4 1966171168
    %v3559 = vunpack.c.0.s8 %v3558
    %v3560 = vlaneseq
    %v3561 = vshrl.u32 %v3560, 7
    %v3562 = vsub.s32 %v3559, %v3561
    %v3563 = vrot.slane %v3547, %v3562
    %v3565 = vunpack.c.l.s4 1966171168
    %v3566 = vunpack.c.0.s8 %v3565
    %v3567 = vlaneseq
    %v3568 = vshrl.u32 %v3567, 7
    %v3569 = vsub.s32 %v3566, %v3568
    %v3570 = vrot.slane %v3554, %v3569
    %v3572 = vunpack.c.l.s4 1966171168
    %v3573 = vunpack.c.0.s8 %v3572
    %v3574 = vlaneseq
    %v3575 = vshrl.u32 %v3574, 7
    %v3576 = vsub.s32 %v3573, %v3575
    %v3577 = vrot.slane %v3555, %v3576
    %v3579 = vunpack.c.l.s4 1966171168
    %v3580 = vunpack.c.0.s8 %v3579
    %v3581 = vlaneseq
    %v3582 = vshrl.u32 %v3581, 7
    %v3583 = vsub.s32 %v3580, %v3582
    %v3584 = vrot.slane %v3556, %v3583
    %v3585 = vcombine.high %v3563, %v3563
    %v3586 = vcombine.high %v3570, %v3570
    %v3587 = vcombine.high %v3577, %v3577
    %v3588 = vcombine.high %v3584, %v3584
    %v3589 = vcombine.high %v3429, %v3429
    %v3591 = vunpack.c.l.s4 1966171168
    %v3592 = vunpack.c.0.s8 %v3591
    %v3593 = vlaneseq
    %v3594 = vshrl.u32 %v3593, 7
    %v3595 = vsub.s32 %v3592, %v3594
    %v3596 = vrot.slane %v3429, %v3595
    %v3598 = vunpack.c.l.s4 1966171168
    %v3599 = vunpack.c.0.s8 %v3598
    %v3600 = vlaneseq
    %v3601 = vshrl.u32 %v3600, 7
    %v3602 = vsub.s32 %v3599, %v3601
    %v3603 = vrot.slane %v3589, %v3602
    %v3604 = vcombine.high %v3596, %v3596
    %v3605 = vcombine.high %v3603, %v3603
    %v3607 = vunpack.c.l.s4 1966171168
    %v3608 = vunpack.c.0.s8 %v3607
    %v3609 = vlaneseq
    %v3610 = vshrl.u32 %v3609, 7
    %v3611 = vsub.s32 %v3608, %v3610
    %v3612 = vrot.slane %v3596, %v3611
    %v3614 = vunpack.c.l.s4 1966171168
    %v3615 = vunpack.c.0.s8 %v3614
    %v3616 = vlaneseq
    %v3617 = vshrl.u32 %v3616, 7
    %v3618 = vsub.s32 %v3615, %v3617
    %v3619 = vrot.slane %v3603, %v3618
    %v3621 = vunpack.c.l.s4 1966171168
    %v3622 = vunpack.c.0.s8 %v3621
    %v3623 = vlaneseq
    %v3624 = vshrl.u32 %v3623, 7
    %v3625 = vsub.s32 %v3622, %v3624
    %v3626 = vrot.slane %v3604, %v3625
    %v3628 = vunpack.c.l.s4 1966171168
    %v3629 = vunpack.c.0.s8 %v3628
    %v3630 = vlaneseq
    %v3631 = vshrl.u32 %v3630, 7
    %v3632 = vsub.s32 %v3629, %v3631
    %v3633 = vrot.slane %v3605, %v3632
    %v3634 = vcombine.high %v3612, %v3612
    %v3635 = vcombine.high %v3619, %v3619
    %v3636 = vcombine.high %v3626, %v3626
    %v3637 = vcombine.high %v3633, %v3633
    %v3674 = vcombine.high %v3434, %v3434
    %v3676 = vunpack.c.l.s4 1966171168
    %v3677 = vunpack.c.0.s8 %v3676
    %v3678 = vlaneseq
    %v3679 = vshrl.u32 %v3678, 7
    %v3680 = vsub.s32 %v3677, %v3679
    %v3681 = vrot.slane %v3434, %v3680
    %v3683 = vunpack.c.l.s4 1966171168
    %v3684 = vunpack.c.0.s8 %v3683
    %v3685 = vlaneseq
    %v3686 = vshrl.u32 %v3685, 7
    %v3687 = vsub.s32 %v3684, %v3686
    %v3688 = vrot.slane %v3674, %v3687
    %v3689 = vcombine.high %v3681, %v3681
    %v3690 = vcombine.high %v3688, %v3688
    %v3692 = vunpack.c.l.s4 1966171168
    %v3693 = vunpack.c.0.s8 %v3692
    %v3694 = vlaneseq
    %v3695 = vshrl.u32 %v3694, 7
    %v3696 = vsub.s32 %v3693, %v3695
    %v3697 = vrot.slane %v3681, %v3696
    %v3699 = vunpack.c.l.s4 1966171168
    %v3700 = vunpack.c.0.s8 %v3699
    %v3701 = vlaneseq
    %v3702 = vshrl.u32 %v3701, 7
    %v3703 = vsub.s32 %v3700, %v3702
    %v3704 = vrot.slane %v3688, %v3703
    %v3706 = vunpack.c.l.s4 1966171168
    %v3707 = vunpack.c.0.s8 %v3706
    %v3708 = vlaneseq
    %v3709 = vshrl.u32 %v3708, 7
    %v3710 = vsub.s32 %v3707, %v3709
    %v3711 = vrot.slane %v3689, %v3710
    %v3713 = vunpack.c.l.s4 1966171168
    %v3714 = vunpack.c.0.s8 %v3713
    %v3715 = vlaneseq
    %v3716 = vshrl.u32 %v3715, 7
    %v3717 = vsub.s32 %v3714, %v3716
    %v3718 = vrot.slane %v3690, %v3717
    %v3719 = vcombine.high %v3697, %v3697
    %v3720 = vcombine.high %v3704, %v3704
    %v3721 = vcombine.high %v3711, %v3711
    %v3722 = vcombine.high %v3718, %v3718
    %v3723 = vcombine.high %v3435, %v3435
    %v3725 = vunpack.c.l.s4 1966171168
    %v3726 = vunpack.c.0.s8 %v3725
    %v3727 = vlaneseq
    %v3728 = vshrl.u32 %v3727, 7
    %v3729 = vsub.s32 %v3726, %v3728
    %v3730 = vrot.slane %v3435, %v3729
    %v3732 = vunpack.c.l.s4 1966171168
    %v3733 = vunpack.c.0.s8 %v3732
    %v3734 = vlaneseq
    %v3735 = vshrl.u32 %v3734, 7
    %v3736 = vsub.s32 %v3733, %v3735
    %v3737 = vrot.slane %v3723, %v3736
    %v3738 = vcombine.high %v3730, %v3730
    %v3739 = vcombine.high %v3737, %v3737
    %v3741 = vunpack.c.l.s4 1966171168
    %v3742 = vunpack.c.0.s8 %v3741
    %v3743 = vlaneseq
    %v3744 = vshrl.u32 %v3743, 7
    %v3745 = vsub.s32 %v3742, %v3744
    %v3746 = vrot.slane %v3730, %v3745
    %v3748 = vunpack.c.l.s4 1966171168
    %v3749 = vunpack.c.0.s8 %v3748
    %v3750 = vlaneseq
    %v3751 = vshrl.u32 %v3750, 7
    %v3752 = vsub.s32 %v3749, %v3751
    %v3753 = vrot.slane %v3737, %v3752
    %v3755 = vunpack.c.l.s4 1966171168
    %v3756 = vunpack.c.0.s8 %v3755
    %v3757 = vlaneseq
    %v3758 = vshrl.u32 %v3757, 7
    %v3759 = vsub.s32 %v3756, %v3758
    %v3760 = vrot.slane %v3738, %v3759
    %v3762 = vunpack.c.l.s4 1966171168
    %v3763 = vunpack.c.0.s8 %v3762
    %v3764 = vlaneseq
    %v3765 = vshrl.u32 %v3764, 7
    %v3766 = vsub.s32 %v3763, %v3765
    %v3767 = vrot.slane %v3739, %v3766
    %v3768 = vcombine.high %v3746, %v3746
    %v3769 = vcombine.high %v3753, %v3753
    %v3770 = vcombine.high %v3760, %v3760
    %v3771 = vcombine.high %v3767, %v3767
    %v3772 = vcombine.high %v3436, %v3436
    %v3774 = vunpack.c.l.s4 1966171168
    %v3775 = vunpack.c.0.s8 %v3774
    %v3776 = vlaneseq
    %v3777 = vshrl.u32 %v3776, 7
    %v3778 = vsub.s32 %v3775, %v3777
    %v3779 = vrot.slane %v3436, %v3778
    %v3781 = vunpack.c.l.s4 1966171168
    %v3782 = vunpack.c.0.s8 %v3781
    %v3783 = vlaneseq
    %v3784 = vshrl.u32 %v3783, 7
    %v3785 = vsub.s32 %v3782, %v3784
    %v3786 = vrot.slane %v3772, %v3785
    %v3787 = vcombine.high %v3779, %v3779
    %v3788 = vcombine.high %v3786, %v3786
    %v3790 = vunpack.c.l.s4 1966171168
    %v3791 = vunpack.c.0.s8 %v3790
    %v3792 = vlaneseq
    %v3793 = vshrl.u32 %v3792, 7
    %v3794 = vsub.s32 %v3791, %v3793
    %v3795 = vrot.slane %v3779, %v3794
    %v3797 = vunpack.c.l.s4 1966171168
    %v3798 = vunpack.c.0.s8 %v3797
    %v3799 = vlaneseq
    %v3800 = vshrl.u32 %v3799, 7
    %v3801 = vsub.s32 %v3798, %v3800
    %v3802 = vrot.slane %v3786, %v3801
    %v3804 = vunpack.c.l.s4 1966171168
    %v3805 = vunpack.c.0.s8 %v3804
    %v3806 = vlaneseq
    %v3807 = vshrl.u32 %v3806, 7
    %v3808 = vsub.s32 %v3805, %v3807
    %v3809 = vrot.slane %v3787, %v3808
    %v3811 = vunpack.c.l.s4 1966171168
    %v3812 = vunpack.c.0.s8 %v3811
    %v3813 = vlaneseq
    %v3814 = vshrl.u32 %v3813, 7
    %v3815 = vsub.s32 %v3812, %v3814
    %v3816 = vrot.slane %v3788, %v3815
    %v3817 = vcombine.high %v3795, %v3795
    %v3818 = vcombine.high %v3802, %v3802
    %v3819 = vcombine.high %v3809, %v3809
    %v3820 = vcombine.high %v3816, %v3816
    %v3821 = vcombine.high %v3437, %v3437
    %v3823 = vunpack.c.l.s4 1966171168
    %v3824 = vunpack.c.0.s8 %v3823
    %v3825 = vlaneseq
    %v3826 = vshrl.u32 %v3825, 7
    %v3827 = vsub.s32 %v3824, %v3826
    %v3828 = vrot.slane %v3437, %v3827
    %v3830 = vunpack.c.l.s4 1966171168
    %v3831 = vunpack.c.0.s8 %v3830
    %v3832 = vlaneseq
    %v3833 = vshrl.u32 %v3832, 7
    %v3834 = vsub.s32 %v3831, %v3833
    %v3835 = vrot.slane %v3821, %v3834
    %v3836 = vcombine.high %v3828, %v3828
    %v3837 = vcombine.high %v3835, %v3835
    %v3839 = vunpack.c.l.s4 1966171168
    %v3840 = vunpack.c.0.s8 %v3839
    %v3841 = vlaneseq
    %v3842 = vshrl.u32 %v3841, 7
    %v3843 = vsub.s32 %v3840, %v3842
    %v3844 = vrot.slane %v3828, %v3843
    %v3846 = vunpack.c.l.s4 1966171168
    %v3847 = vunpack.c.0.s8 %v3846
    %v3848 = vlaneseq
    %v3849 = vshrl.u32 %v3848, 7
    %v3850 = vsub.s32 %v3847, %v3849
    %v3851 = vrot.slane %v3835, %v3850
    %v3853 = vunpack.c.l.s4 1966171168
    %v3854 = vunpack.c.0.s8 %v3853
    %v3855 = vlaneseq
    %v3856 = vshrl.u32 %v3855, 7
    %v3857 = vsub.s32 %v3854, %v3856
    %v3858 = vrot.slane %v3836, %v3857
    %v3860 = vunpack.c.l.s4 1966171168
    %v3861 = vunpack.c.0.s8 %v3860
    %v3862 = vlaneseq
    %v3863 = vshrl.u32 %v3862, 7
    %v3864 = vsub.s32 %v3861, %v3863
    %v3865 = vrot.slane %v3837, %v3864
    %v3866 = vcombine.high %v3844, %v3844
    %v3867 = vcombine.high %v3851, %v3851
    %v3868 = vcombine.high %v3858, %v3858
    %v3869 = vcombine.high %v3865, %v3865
    %v3870 = vlaneseq
    %v3871 = vshrl.u32 %v3870, 7
    %v3872 = vsub.s32 0, %v3871
    %v3873 = vrot.slane %v3697, %v3872
    %v3874 = vlaneseq
    %v3875 = vshrl.u32 %v3874, 7
    %v3876 = vsub.s32 0, %v3875
    %v3877 = vrot.slane %v3711, %v3876
    %v3878 = vlaneseq
    %v3879 = vshrl.u32 %v3878, 7
    %v3880 = vsub.s32 0, %v3879
    %v3881 = vrot.slane %v3719, %v3880
    %v3882 = vlaneseq
    %v3883 = vshrl.u32 %v3882, 7
    %v3884 = vsub.s32 0, %v3883
    %v3885 = vrot.slane %v3721, %v3884
    %v3886 = vlaneseq
    %v3887 = vshrl.u32 %v3886, 7
    %v3888 = vsub.s32 0, %v3887
    %v3889 = vrot.slane %v3704, %v3888
    %v3890 = vlaneseq
    %v3891 = vshrl.u32 %v3890, 7
    %v3892 = vsub.s32 0, %v3891
    %v3893 = vrot.slane %v3718, %v3892
    %v3894 = vlaneseq
    %v3895 = vshrl.u32 %v3894, 7
    %v3896 = vsub.s32 0, %v3895
    %v3897 = vrot.slane %v3720, %v3896
    %v3898 = vlaneseq
    %v3899 = vshrl.u32 %v3898, 7
    %v3900 = vsub.s32 0, %v3899
    %v3901 = vrot.slane %v3722, %v3900
    %v3902 = vlaneseq
    %v3903 = vshrl.u32 %v3902, 7
    %v3904 = vsub.s32 0, %v3903
    %v3905 = vrot.slane %v3746, %v3904
    %v3906 = vlaneseq
    %v3907 = vshrl.u32 %v3906, 7
    %v3908 = vsub.s32 0, %v3907
    %v3909 = vrot.slane %v3760, %v3908
    %v3910 = vlaneseq
    %v3911 = vshrl.u32 %v3910, 7
    %v3912 = vsub.s32 0, %v3911
    %v3913 = vrot.slane %v3768, %v3912
    %v3914 = vlaneseq
    %v3915 = vshrl.u32 %v3914, 7
    %v3916 = vsub.s32 0, %v3915
    %v3917 = vrot.slane %v3770, %v3916
    %v3918 = vlaneseq
    %v3919 = vshrl.u32 %v3918, 7
    %v3920 = vsub.s32 0, %v3919
    %v3921 = vrot.slane %v3753, %v3920
    %v3922 = vlaneseq
    %v3923 = vshrl.u32 %v3922, 7
    %v3924 = vsub.s32 0, %v3923
    %v3925 = vrot.slane %v3767, %v3924
    %v3926 = vlaneseq
    %v3927 = vshrl.u32 %v3926, 7
    %v3928 = vsub.s32 0, %v3927
    %v3929 = vrot.slane %v3769, %v3928
    %v3930 = vlaneseq
    %v3931 = vshrl.u32 %v3930, 7
    %v3932 = vsub.s32 0, %v3931
    %v3933 = vrot.slane %v3771, %v3932
    %v3934 = vlaneseq
    %v3935 = vshrl.u32 %v3934, 7
    %v3936 = vsub.s32 0, %v3935
    %v3937 = vrot.slane %v3795, %v3936
    %v3938 = vlaneseq
    %v3939 = vshrl.u32 %v3938, 7
    %v3940 = vsub.s32 0, %v3939
    %v3941 = vrot.slane %v3809, %v3940
    %v3942 = vlaneseq
    %v3943 = vshrl.u32 %v3942, 7
    %v3944 = vsub.s32 0, %v3943
    %v3945 = vrot.slane %v3817, %v3944
    %v3946 = vlaneseq
    %v3947 = vshrl.u32 %v3946, 7
    %v3948 = vsub.s32 0, %v3947
    %v3949 = vrot.slane %v3819, %v3948
    %v3950 = vlaneseq
    %v3951 = vshrl.u32 %v3950, 7
    %v3952 = vsub.s32 0, %v3951
    %v3953 = vrot.slane %v3802, %v3952
    %v3954 = vlaneseq
    %v3955 = vshrl.u32 %v3954, 7
    %v3956 = vsub.s32 0, %v3955
    %v3957 = vrot.slane %v3816, %v3956
    %v3958 = vlaneseq
    %v3959 = vshrl.u32 %v3958, 7
    %v3960 = vsub.s32 0, %v3959
    %v3961 = vrot.slane %v3818, %v3960
    %v3962 = vlaneseq
    %v3963 = vshrl.u32 %v3962, 7
    %v3964 = vsub.s32 0, %v3963
    %v3965 = vrot.slane %v3820, %v3964
    %v3966 = vlaneseq
    %v3967 = vshrl.u32 %v3966, 7
    %v3968 = vsub.s32 0, %v3967
    %v3969 = vrot.slane %v3844, %v3968
    %v3970 = vlaneseq
    %v3971 = vshrl.u32 %v3970, 7
    %v3972 = vsub.s32 0, %v3971
    %v3973 = vrot.slane %v3858, %v3972
    %v3974 = vlaneseq
    %v3975 = vshrl.u32 %v3974, 7
    %v3976 = vsub.s32 0, %v3975
    %v3977 = vrot.slane %v3866, %v3976
    %v3978 = vlaneseq
    %v3979 = vshrl.u32 %v3978, 7
    %v3980 = vsub.s32 0, %v3979
    %v3981 = vrot.slane %v3868, %v3980
    %v3982 = vlaneseq
    %v3983 = vshrl.u32 %v3982, 7
    %v3984 = vsub.s32 0, %v3983
    %v3985 = vrot.slane %v3851, %v3984
    %v3986 = vlaneseq
    %v3987 = vshrl.u32 %v3986, 7
    %v3988 = vsub.s32 0, %v3987
    %v3989 = vrot.slane %v3865, %v3988
    %v3990 = vlaneseq
    %v3991 = vshrl.u32 %v3990, 7
    %v3992 = vsub.s32 0, %v3991
    %v3993 = vrot.slane %v3867, %v3992
    %v3994 = vlaneseq
    %v3995 = vshrl.u32 %v3994, 7
    %v3996 = vsub.s32 0, %v3995
    %v3997 = vrot.slane %v3869, %v3996
    %v4030 = vsel %vm1764, %v3465, %v3873
    %v4031 = vsel %vm1764, %v3479, %v3877
    %v4032 = vsel %vm1764, %v3487, %v3881
    %v4033 = vsel %vm1764, %v3489, %v3885
    %v4034 = vsel %vm1764, %v3472, %v3889
    %v4035 = vsel %vm1764, %v3486, %v3893
    %v4036 = vsel %vm1764, %v3488, %v3897
    %v4037 = vsel %vm1764, %v3490, %v3901
    %v4038 = vsel %vm1764, %v3514, %v3905
    %v4039 = vsel %vm1764, %v3528, %v3909
    %v4040 = vsel %vm1764, %v3536, %v3913
    %v4041 = vsel %vm1764, %v3538, %v3917
    %v4042 = vsel %vm1764, %v3521, %v3921
    %v4043 = vsel %vm1764, %v3535, %v3925
    %v4044 = vsel %vm1764, %v3537, %v3929
    %v4045 = vsel %vm1764, %v3539, %v3933
    %v4046 = vsel %vm1764, %v3563, %v3937
    %v4047 = vsel %vm1764, %v3577, %v3941
    %v4048 = vsel %vm1764, %v3585, %v3945
    %v4049 = vsel %vm1764, %v3587, %v3949
    %v4050 = vsel %vm1764, %v3570, %v3953
    %v4051 = vsel %vm1764, %v3584, %v3957
    %v4052 = vsel %vm1764, %v3586, %v3961
    %v4053 = vsel %vm1764, %v3588, %v3965
    %v4054 = vsel %vm1764, %v3612, %v3969
    %v4055 = vsel %vm1764, %v3626, %v3973
    %v4056 = vsel %vm1764, %v3634, %v3977
    %v4057 = vsel %vm1764, %v3636, %v3981
    %v4058 = vsel %vm1764, %v3619, %v3985
    %v4059 = vsel %vm1764, %v3633, %v3989
    %v4060 = vsel %vm1764, %v3635, %v3993
    %v4061 = vsel %vm1764, %v3637, %v3997
    %v4062 = vld [vmem:[%s15] sm:$0x1]
    %v4063 = vld [vmem:[#allocation15] sm:$0x1]
    %v4064 = vld [vmem:[#allocation16] sm:$0x1]
    %v4097 = vcombine.low %v4030, %v4031
    %v4098 = vcombine.low %v4032, %v4033
    %v4100 = vunpack.c.l.s4 1983009808
    %v4101 = vunpack.c.0.s8 %v4100
    %v4102 = vlaneseq
    %v4103 = vshrl.u32 %v4102, 7
    %v4104 = vsub.s32 %v4101, %v4103
    %v4105 = vrot.slane %v4097, %v4104
    %v4107 = vunpack.c.l.s4 1983009808
    %v4108 = vunpack.c.0.s8 %v4107
    %v4109 = vlaneseq
    %v4110 = vshrl.u32 %v4109, 7
    %v4111 = vsub.s32 %v4108, %v4110
    %v4112 = vrot.slane %v4098, %v4111
    %v4113 = vcombine.low %v4105, %v4112
    %v4114 = vcombine.low %v4034, %v4035
    %v4115 = vcombine.low %v4036, %v4037
    %v4117 = vunpack.c.l.s4 1983009808
    %v4118 = vunpack.c.0.s8 %v4117
    %v4119 = vlaneseq
    %v4120 = vshrl.u32 %v4119, 7
    %v4121 = vsub.s32 %v4118, %v4120
    %v4122 = vrot.slane %v4114, %v4121
    %v4124 = vunpack.c.l.s4 1983009808
    %v4125 = vunpack.c.0.s8 %v4124
    %v4126 = vlaneseq
    %v4127 = vshrl.u32 %v4126, 7
    %v4128 = vsub.s32 %v4125, %v4127
    %v4129 = vrot.slane %v4115, %v4128
    %v4130 = vcombine.low %v4122, %v4129
    %v4131 = vcombine.low %v4038, %v4039
    %v4132 = vcombine.low %v4040, %v4041
    %v4134 = vunpack.c.l.s4 1983009808
    %v4135 = vunpack.c.0.s8 %v4134
    %v4136 = vlaneseq
    %v4137 = vshrl.u32 %v4136, 7
    %v4138 = vsub.s32 %v4135, %v4137
    %v4139 = vrot.slane %v4131, %v4138
    %v4141 = vunpack.c.l.s4 1983009808
    %v4142 = vunpack.c.0.s8 %v4141
    %v4143 = vlaneseq
    %v4144 = vshrl.u32 %v4143, 7
    %v4145 = vsub.s32 %v4142, %v4144
    %v4146 = vrot.slane %v4132, %v4145
    %v4147 = vcombine.low %v4139, %v4146
    %v4148 = vcombine.low %v4042, %v4043
    %v4149 = vcombine.low %v4044, %v4045
    %v4151 = vunpack.c.l.s4 1983009808
    %v4152 = vunpack.c.0.s8 %v4151
    %v4153 = vlaneseq
    %v4154 = vshrl.u32 %v4153, 7
    %v4155 = vsub.s32 %v4152, %v4154
    %v4156 = vrot.slane %v4148, %v4155
    %v4158 = vunpack.c.l.s4 1983009808
    %v4159 = vunpack.c.0.s8 %v4158
    %v4160 = vlaneseq
    %v4161 = vshrl.u32 %v4160, 7
    %v4162 = vsub.s32 %v4159, %v4161
    %v4163 = vrot.slane %v4149, %v4162
    %v4164 = vcombine.low %v4156, %v4163
    %v4165 = vcombine.low %v4046, %v4047
    %v4166 = vcombine.low %v4048, %v4049
    %v4168 = vunpack.c.l.s4 1983009808
    %v4169 = vunpack.c.0.s8 %v4168
    %v4170 = vlaneseq
    %v4171 = vshrl.u32 %v4170, 7
    %v4172 = vsub.s32 %v4169, %v4171
    %v4173 = vrot.slane %v4165, %v4172
    %v4175 = vunpack.c.l.s4 1983009808
    %v4176 = vunpack.c.0.s8 %v4175
    %v4177 = vlaneseq
    %v4178 = vshrl.u32 %v4177, 7
    %v4179 = vsub.s32 %v4176, %v4178
    %v4180 = vrot.slane %v4166, %v4179
    %v4181 = vcombine.low %v4173, %v4180
    %v4182 = vcombine.low %v4050, %v4051
    %v4183 = vcombine.low %v4052, %v4053
    %v4185 = vunpack.c.l.s4 1983009808
    %v4186 = vunpack.c.0.s8 %v4185
    %v4187 = vlaneseq
    %v4188 = vshrl.u32 %v4187, 7
    %v4189 = vsub.s32 %v4186, %v4188
    %v4190 = vrot.slane %v4182, %v4189
    %v4192 = vunpack.c.l.s4 1983009808
    %v4193 = vunpack.c.0.s8 %v4192
    %v4194 = vlaneseq
    %v4195 = vshrl.u32 %v4194, 7
    %v4196 = vsub.s32 %v4193, %v4195
    %v4197 = vrot.slane %v4183, %v4196
    %v4198 = vcombine.low %v4190, %v4197
    %v4199 = vcombine.low %v4054, %v4055
    %v4200 = vcombine.low %v4056, %v4057
    %v4202 = vunpack.c.l.s4 1983009808
    %v4203 = vunpack.c.0.s8 %v4202
    %v4204 = vlaneseq
    %v4205 = vshrl.u32 %v4204, 7
    %v4206 = vsub.s32 %v4203, %v4205
    %v4207 = vrot.slane %v4199, %v4206
    %v4209 = vunpack.c.l.s4 1983009808
    %v4210 = vunpack.c.0.s8 %v4209
    %v4211 = vlaneseq
    %v4212 = vshrl.u32 %v4211, 7
    %v4213 = vsub.s32 %v4210, %v4212
    %v4214 = vrot.slane %v4200, %v4213
    %v4215 = vcombine.low %v4207, %v4214
    %v4216 = vcombine.low %v4058, %v4059
    %v4217 = vcombine.low %v4060, %v4061
    %v4219 = vunpack.c.l.s4 1983009808
    %v4220 = vunpack.c.0.s8 %v4219
    %v4221 = vlaneseq
    %v4222 = vshrl.u32 %v4221, 7
    %v4223 = vsub.s32 %v4220, %v4222
    %v4224 = vrot.slane %v4216, %v4223
    %v4226 = vunpack.c.l.s4 1983009808
    %v4227 = vunpack.c.0.s8 %v4226
    %v4228 = vlaneseq
    %v4229 = vshrl.u32 %v4228, 7
    %v4230 = vsub.s32 %v4227, %v4229
    %v4231 = vrot.slane %v4217, %v4230
    %v4232 = vcombine.low %v4224, %v4231
    %v4241 = vsel %vm190, %v4113, 0.0
    %v4242 = vsel %vm190, %v4130, 0.0
    %v4243 = vadd.f32 %v4241, %v4242
    %v4244 = vsel %vm190, %v4147, 0.0
    %v4245 = vadd.f32 %v4243, %v4244
    %v4246 = vsel %vm190, %v4164, 0.0
    %v4247 = vadd.f32 %v4245, %v4246
    %v4248 = vsel %vm190, %v4181, 0.0
    %v4249 = vadd.f32 %v4247, %v4248
    %v4250 = vsel %vm190, %v4198, 0.0
    %v4251 = vadd.f32 %v4249, %v4250
    %v4252 = vsel %vm190, %v4215, 0.0
    %v4253 = vadd.f32 %v4251, %v4252
    %v4254 = vsel %vm190, %v4232, 0.0
    %v4255 = vadd.f32 %v4253, %v4254
    %v4256 = vrot.slane %v4255, 4
    %v4257 = vadd.f32 %v4255, %v4256
    %v4258 = vrot.slane %v4257, 2
    %v4259 = vadd.f32 %v4257, %v4258
    %v4260 = vrot.slane %v4259, 1
    %v4261 = vadd.f32 %v4259, %v4260
    %v4262 = vrcp.pop 64.0
    %v4263 = vmul.f32 %v4261, %v4262
    %v4265 = vcombine.high %v4263, %v4263
    %v4267 = vunpack.c.l.s4 1983009808
    %v4268 = vunpack.c.0.s8 %v4267
    %v4269 = vlaneseq
    %v4270 = vshrl.u32 %v4269, 7
    %v4271 = vsub.s32 %v4268, %v4270
    %v4272 = vrot.slane %v4263, %v4271
    %v4274 = vunpack.c.l.s4 1983009808
    %v4275 = vunpack.c.0.s8 %v4274
    %v4276 = vlaneseq
    %v4277 = vshrl.u32 %v4276, 7
    %v4278 = vsub.s32 %v4275, %v4277
    %v4279 = vrot.slane %v4265, %v4278
    %v4280 = vcombine.high %v4272, %v4272
    %v4281 = vcombine.high %v4279, %v4279
    %v4286 = vsub.f32 %v4030, %v4272
    %v4287 = vsub.f32 %v4031, %v4280
    %v4288 = vsub.f32 %v4032, %v4279
    %v4289 = vsub.f32 %v4033, %v4281
    %v4290 = vsub.f32 %v4034, %v4272
    %v4291 = vsub.f32 %v4035, %v4280
    %v4292 = vsub.f32 %v4036, %v4279
    %v4293 = vsub.f32 %v4037, %v4281
    %v4294 = vsub.f32 %v4038, %v4272
    %v4295 = vsub.f32 %v4039, %v4280
    %v4296 = vsub.f32 %v4040, %v4279
    %v4297 = vsub.f32 %v4041, %v4281
    %v4298 = vsub.f32 %v4042, %v4272
    %v4299 = vsub.f32 %v4043, %v4280
    %v4300 = vsub.f32 %v4044, %v4279
    %v4301 = vsub.f32 %v4045, %v4281
    %v4302 = vsub.f32 %v4046, %v4272
    %v4303 = vsub.f32 %v4047, %v4280
    %v4304 = vsub.f32 %v4048, %v4279
    %v4305 = vsub.f32 %v4049, %v4281
    %v4306 = vsub.f32 %v4050, %v4272
    %v4307 = vsub.f32 %v4051, %v4280
    %v4308 = vsub.f32 %v4052, %v4279
    %v4309 = vsub.f32 %v4053, %v4281
    %v4310 = vsub.f32 %v4054, %v4272
    %v4311 = vsub.f32 %v4055, %v4280
    %v4312 = vsub.f32 %v4056, %v4279
    %v4313 = vsub.f32 %v4057, %v4281
    %v4314 = vsub.f32 %v4058, %v4272
    %v4315 = vsub.f32 %v4059, %v4280
    %v4316 = vsub.f32 %v4060, %v4279
    %v4317 = vsub.f32 %v4061, %v4281
    %v4318 = vmul.f32 %v4286, %v4286
    %v4319 = vmul.f32 %v4287, %v4287
    %v4320 = vmul.f32 %v4288, %v4288
    %v4321 = vmul.f32 %v4289, %v4289
    %v4322 = vmul.f32 %v4290, %v4290
    %v4323 = vmul.f32 %v4291, %v4291
    %v4324 = vmul.f32 %v4292, %v4292
    %v4325 = vmul.f32 %v4293, %v4293
    %v4326 = vmul.f32 %v4294, %v4294
    %v4327 = vmul.f32 %v4295, %v4295
    %v4328 = vmul.f32 %v4296, %v4296
    %v4329 = vmul.f32 %v4297, %v4297
    %v4330 = vmul.f32 %v4298, %v4298
    %v4331 = vmul.f32 %v4299, %v4299
    %v4332 = vmul.f32 %v4300, %v4300
    %v4333 = vmul.f32 %v4301, %v4301
    %v4334 = vmul.f32 %v4302, %v4302
    %v4335 = vmul.f32 %v4303, %v4303
    %v4336 = vmul.f32 %v4304, %v4304
    %v4337 = vmul.f32 %v4305, %v4305
    %v4338 = vmul.f32 %v4306, %v4306
    %v4339 = vmul.f32 %v4307, %v4307
    %v4340 = vmul.f32 %v4308, %v4308
    %v4341 = vmul.f32 %v4309, %v4309
    %v4342 = vmul.f32 %v4310, %v4310
    %v4343 = vmul.f32 %v4311, %v4311
    %v4344 = vmul.f32 %v4312, %v4312
    %v4345 = vmul.f32 %v4313, %v4313
    %v4346 = vmul.f32 %v4314, %v4314
    %v4347 = vmul.f32 %v4315, %v4315
    %v4348 = vmul.f32 %v4316, %v4316
    %v4349 = vmul.f32 %v4317, %v4317
    %v4382 = vcombine.low %v4318, %v4319
    %v4383 = vcombine.low %v4320, %v4321
    %v4385 = vunpack.c.l.s4 1983009808
    %v4386 = vunpack.c.0.s8 %v4385
    %v4387 = vlaneseq
    %v4388 = vshrl.u32 %v4387, 7
    %v4389 = vsub.s32 %v4386, %v4388
    %v4390 = vrot.slane %v4382, %v4389
    %v4392 = vunpack.c.l.s4 1983009808
    %v4393 = vunpack.c.0.s8 %v4392
    %v4394 = vlaneseq
    %v4395 = vshrl.u32 %v4394, 7
    %v4396 = vsub.s32 %v4393, %v4395
    %v4397 = vrot.slane %v4383, %v4396
    %v4398 = vcombine.low %v4390, %v4397
    %v4399 = vcombine.low %v4322, %v4323
    %v4400 = vcombine.low %v4324, %v4325
    %v4402 = vunpack.c.l.s4 1983009808
    %v4403 = vunpack.c.0.s8 %v4402
    %v4404 = vlaneseq
    %v4405 = vshrl.u32 %v4404, 7
    %v4406 = vsub.s32 %v4403, %v4405
    %v4407 = vrot.slane %v4399, %v4406
    %v4409 = vunpack.c.l.s4 1983009808
    %v4410 = vunpack.c.0.s8 %v4409
    %v4411 = vlaneseq
    %v4412 = vshrl.u32 %v4411, 7
    %v4413 = vsub.s32 %v4410, %v4412
    %v4414 = vrot.slane %v4400, %v4413
    %v4415 = vcombine.low %v4407, %v4414
    %v4416 = vcombine.low %v4326, %v4327
    %v4417 = vcombine.low %v4328, %v4329
    %v4419 = vunpack.c.l.s4 1983009808
    %v4420 = vunpack.c.0.s8 %v4419
    %v4421 = vlaneseq
    %v4422 = vshrl.u32 %v4421, 7
    %v4423 = vsub.s32 %v4420, %v4422
    %v4424 = vrot.slane %v4416, %v4423
    %v4426 = vunpack.c.l.s4 1983009808
    %v4427 = vunpack.c.0.s8 %v4426
    %v4428 = vlaneseq
    %v4429 = vshrl.u32 %v4428, 7
    %v4430 = vsub.s32 %v4427, %v4429
    %v4431 = vrot.slane %v4417, %v4430
    %v4432 = vcombine.low %v4424, %v4431
    %v4433 = vcombine.low %v4330, %v4331
    %v4434 = vcombine.low %v4332, %v4333
    %v4436 = vunpack.c.l.s4 1983009808
    %v4437 = vunpack.c.0.s8 %v4436
    %v4438 = vlaneseq
    %v4439 = vshrl.u32 %v4438, 7
    %v4440 = vsub.s32 %v4437, %v4439
    %v4441 = vrot.slane %v4433, %v4440
    %v4443 = vunpack.c.l.s4 1983009808
    %v4444 = vunpack.c.0.s8 %v4443
    %v4445 = vlaneseq
    %v4446 = vshrl.u32 %v4445, 7
    %v4447 = vsub.s32 %v4444, %v4446
    %v4448 = vrot.slane %v4434, %v4447
    %v4449 = vcombine.low %v4441, %v4448
    %v4450 = vcombine.low %v4334, %v4335
    %v4451 = vcombine.low %v4336, %v4337
    %v4453 = vunpack.c.l.s4 1983009808
    %v4454 = vunpack.c.0.s8 %v4453
    %v4455 = vlaneseq
    %v4456 = vshrl.u32 %v4455, 7
    %v4457 = vsub.s32 %v4454, %v4456
    %v4458 = vrot.slane %v4450, %v4457
    %v4460 = vunpack.c.l.s4 1983009808
    %v4461 = vunpack.c.0.s8 %v4460
    %v4462 = vlaneseq
    %v4463 = vshrl.u32 %v4462, 7
    %v4464 = vsub.s32 %v4461, %v4463
    %v4465 = vrot.slane %v4451, %v4464
    %v4466 = vcombine.low %v4458, %v4465
    %v4467 = vcombine.low %v4338, %v4339
    %v4468 = vcombine.low %v4340, %v4341
    %v4470 = vunpack.c.l.s4 1983009808
    %v4471 = vunpack.c.0.s8 %v4470
    %v4472 = vlaneseq
    %v4473 = vshrl.u32 %v4472, 7
    %v4474 = vsub.s32 %v4471, %v4473
    %v4475 = vrot.slane %v4467, %v4474
    %v4477 = vunpack.c.l.s4 1983009808
    %v4478 = vunpack.c.0.s8 %v4477
    %v4479 = vlaneseq
    %v4480 = vshrl.u32 %v4479, 7
    %v4481 = vsub.s32 %v4478, %v4480
    %v4482 = vrot.slane %v4468, %v4481
    %v4483 = vcombine.low %v4475, %v4482
    %v4484 = vcombine.low %v4342, %v4343
    %v4485 = vcombine.low %v4344, %v4345
    %v4487 = vunpack.c.l.s4 1983009808
    %v4488 = vunpack.c.0.s8 %v4487
    %v4489 = vlaneseq
    %v4490 = vshrl.u32 %v4489, 7
    %v4491 = vsub.s32 %v4488, %v4490
    %v4492 = vrot.slane %v4484, %v4491
    %v4494 = vunpack.c.l.s4 1983009808
    %v4495 = vunpack.c.0.s8 %v4494
    %v4496 = vlaneseq
    %v4497 = vshrl.u32 %v4496, 7
    %v4498 = vsub.s32 %v4495, %v4497
    %v4499 = vrot.slane %v4485, %v4498
    %v4500 = vcombine.low %v4492, %v4499
    %v4501 = vcombine.low %v4346, %v4347
    %v4502 = vcombine.low %v4348, %v4349
    %v4504 = vunpack.c.l.s4 1983009808
    %v4505 = vunpack.c.0.s8 %v4504
    %v4506 = vlaneseq
    %v4507 = vshrl.u32 %v4506, 7
    %v4508 = vsub.s32 %v4505, %v4507
    %v4509 = vrot.slane %v4501, %v4508
    %v4511 = vunpack.c.l.s4 1983009808
    %v4512 = vunpack.c.0.s8 %v4511
    %v4513 = vlaneseq
    %v4514 = vshrl.u32 %v4513, 7
    %v4515 = vsub.s32 %v4512, %v4514
    %v4516 = vrot.slane %v4502, %v4515
    %v4517 = vcombine.low %v4509, %v4516
    %v4526 = vsel %vm190, %v4398, 0.0
    %v4527 = vsel %vm190, %v4415, 0.0
    %v4528 = vadd.f32 %v4526, %v4527
    %v4529 = vsel %vm190, %v4432, 0.0
    %v4530 = vadd.f32 %v4528, %v4529
    %v4531 = vsel %vm190, %v4449, 0.0
    %v4532 = vadd.f32 %v4530, %v4531
    %v4533 = vsel %vm190, %v4466, 0.0
    %v4534 = vadd.f32 %v4532, %v4533
    %v4535 = vsel %vm190, %v4483, 0.0
    %v4536 = vadd.f32 %v4534, %v4535
    %v4537 = vsel %vm190, %v4500, 0.0
    %v4538 = vadd.f32 %v4536, %v4537
    %v4539 = vsel %vm190, %v4517, 0.0
    %v4540 = vadd.f32 %v4538, %v4539
    %v4541 = vrot.slane %v4540, 4
    %v4542 = vadd.f32 %v4540, %v4541
    %v4543 = vrot.slane %v4542, 2
    %v4544 = vadd.f32 %v4542, %v4543
    %v4545 = vrot.slane %v4544, 1
    %v4546 = vadd.f32 %v4544, %v4545
    %v4547 = vmul.f32 %v4546, %v4262
    %v4548 = vadd.f32 %v4547, 1e-05
    %v4549 = vrsqrt.pop %v4548
    %v4551 = vcombine.high %v4549, %v4549
    %v4553 = vunpack.c.l.s4 1983009808
    %v4554 = vunpack.c.0.s8 %v4553
    %v4555 = vlaneseq
    %v4556 = vshrl.u32 %v4555, 7
    %v4557 = vsub.s32 %v4554, %v4556
    %v4558 = vrot.slane %v4549, %v4557
    %v4560 = vunpack.c.l.s4 1983009808
    %v4561 = vunpack.c.0.s8 %v4560
    %v4562 = vlaneseq
    %v4563 = vshrl.u32 %v4562, 7
    %v4564 = vsub.s32 %v4561, %v4563
    %v4565 = vrot.slane %v4551, %v4564
    %v4566 = vcombine.high %v4558, %v4558
    %v4567 = vcombine.high %v4565, %v4565
    %v4572 = vmul.f32 %v4286, %v4558
    %v4573 = vmul.f32 %v4287, %v4566
    %v4574 = vmul.f32 %v4288, %v4565
    %v4575 = vmul.f32 %v4289, %v4567
    %v4576 = vmul.f32 %v4290, %v4558
    %v4577 = vmul.f32 %v4291, %v4566
    %v4578 = vmul.f32 %v4292, %v4565
    %v4579 = vmul.f32 %v4293, %v4567
    %v4580 = vmul.f32 %v4294, %v4558
    %v4581 = vmul.f32 %v4295, %v4566
    %v4582 = vmul.f32 %v4296, %v4565
    %v4583 = vmul.f32 %v4297, %v4567
    %v4584 = vmul.f32 %v4298, %v4558
    %v4585 = vmul.f32 %v4299, %v4566
    %v4586 = vmul.f32 %v4300, %v4565
    %v4587 = vmul.f32 %v4301, %v4567
    %v4588 = vmul.f32 %v4302, %v4558
    %v4589 = vmul.f32 %v4303, %v4566
    %v4590 = vmul.f32 %v4304, %v4565
    %v4591 = vmul.f32 %v4305, %v4567
    %v4592 = vmul.f32 %v4306, %v4558
    %v4593 = vmul.f32 %v4307, %v4566
    %v4594 = vmul.f32 %v4308, %v4565
    %v4595 = vmul.f32 %v4309, %v4567
    %v4596 = vmul.f32 %v4310, %v4558
    %v4597 = vmul.f32 %v4311, %v4566
    %v4598 = vmul.f32 %v4312, %v4565
    %v4599 = vmul.f32 %v4313, %v4567
    %v4600 = vmul.f32 %v4314, %v4558
    %v4601 = vmul.f32 %v4315, %v4566
    %v4602 = vmul.f32 %v4316, %v4565
    %v4603 = vmul.f32 %v4317, %v4567
    %v4605 = vlaneseq
    %v4606 = vshrl.u32 %v4605, 7
    %v4607 = vsub.s32 0, %v4606
    %v4608 = vrot.slane %v4062, %v4607
    %v4609 = vcombine.high %v4608, %v4608
    %v4611 = vunpack.c.l.s4 1983009808
    %v4612 = vunpack.c.0.s8 %v4611
    %v4613 = vlaneseq
    %v4614 = vshrl.u32 %v4613, 7
    %v4615 = vsub.s32 %v4612, %v4614
    %v4616 = vrot.slane %v4608, %v4615
    %v4618 = vunpack.c.l.s4 1983009808
    %v4619 = vunpack.c.0.s8 %v4618
    %v4620 = vlaneseq
    %v4621 = vshrl.u32 %v4620, 7
    %v4622 = vsub.s32 %v4619, %v4621
    %v4623 = vrot.slane %v4609, %v4622
    %v4624 = vcombine.high %v4616, %v4616
    %v4625 = vcombine.high %v4623, %v4623
    %v4630 = vmul.f32 %v4572, %v4616
    %v4631 = vmul.f32 %v4573, %v4624
    %v4632 = vmul.f32 %v4574, %v4623
    %v4633 = vmul.f32 %v4575, %v4625
    %v4634 = vmul.f32 %v4576, %v4616
    %v4635 = vmul.f32 %v4577, %v4624
    %v4636 = vmul.f32 %v4578, %v4623
    %v4637 = vmul.f32 %v4579, %v4625
    %v4638 = vmul.f32 %v4580, %v4616
    %v4639 = vmul.f32 %v4581, %v4624
    %v4640 = vmul.f32 %v4582, %v4623
    %v4641 = vmul.f32 %v4583, %v4625
    %v4642 = vmul.f32 %v4584, %v4616
    %v4643 = vmul.f32 %v4585, %v4624
    %v4644 = vmul.f32 %v4586, %v4623
    %v4645 = vmul.f32 %v4587, %v4625
    %v4646 = vmul.f32 %v4588, %v4616
    %v4647 = vmul.f32 %v4589, %v4624
    %v4648 = vmul.f32 %v4590, %v4623
    %v4649 = vmul.f32 %v4591, %v4625
    %v4650 = vmul.f32 %v4592, %v4616
    %v4651 = vmul.f32 %v4593, %v4624
    %v4652 = vmul.f32 %v4594, %v4623
    %v4653 = vmul.f32 %v4595, %v4625
    %v4654 = vmul.f32 %v4596, %v4616
    %v4655 = vmul.f32 %v4597, %v4624
    %v4656 = vmul.f32 %v4598, %v4623
    %v4657 = vmul.f32 %v4599, %v4625
    %v4658 = vmul.f32 %v4600, %v4616
    %v4659 = vmul.f32 %v4601, %v4624
    %v4660 = vmul.f32 %v4602, %v4623
    %v4661 = vmul.f32 %v4603, %v4625
    %v4663 = vlaneseq
    %v4664 = vshrl.u32 %v4663, 7
    %v4665 = vsub.s32 0, %v4664
    %v4666 = vrot.slane %v4063, %v4665
    %v4667 = vcombine.high %v4666, %v4666
    %v4669 = vunpack.c.l.s4 1983009808
    %v4670 = vunpack.c.0.s8 %v4669
    %v4671 = vlaneseq
    %v4672 = vshrl.u32 %v4671, 7
    %v4673 = vsub.s32 %v4670, %v4672
    %v4674 = vrot.slane %v4666, %v4673
    %v4676 = vunpack.c.l.s4 1983009808
    %v4677 = vunpack.c.0.s8 %v4676
    %v4678 = vlaneseq
    %v4679 = vshrl.u32 %v4678, 7
    %v4680 = vsub.s32 %v4677, %v4679
    %v4681 = vrot.slane %v4667, %v4680
    %v4682 = vcombine.high %v4674, %v4674
    %v4683 = vcombine.high %v4681, %v4681
    %v4688 = vadd.f32 %v4630, %v4674
    %v4689 = vadd.f32 %v4631, %v4682
    %v4690 = vadd.f32 %v4632, %v4681
    %v4691 = vadd.f32 %v4633, %v4683
    %v4692 = vadd.f32 %v4634, %v4674
    %v4693 = vadd.f32 %v4635, %v4682
    %v4694 = vadd.f32 %v4636, %v4681
    %v4695 = vadd.f32 %v4637, %v4683
    %v4696 = vadd.f32 %v4638, %v4674
    %v4697 = vadd.f32 %v4639, %v4682
    %v4698 = vadd.f32 %v4640, %v4681
    %v4699 = vadd.f32 %v4641, %v4683
    %v4700 = vadd.f32 %v4642, %v4674
    %v4701 = vadd.f32 %v4643, %v4682
    %v4702 = vadd.f32 %v4644, %v4681
    %v4703 = vadd.f32 %v4645, %v4683
    %v4704 = vadd.f32 %v4646, %v4674
    %v4705 = vadd.f32 %v4647, %v4682
    %v4706 = vadd.f32 %v4648, %v4681
    %v4707 = vadd.f32 %v4649, %v4683
    %v4708 = vadd.f32 %v4650, %v4674
    %v4709 = vadd.f32 %v4651, %v4682
    %v4710 = vadd.f32 %v4652, %v4681
    %v4711 = vadd.f32 %v4653, %v4683
    %v4712 = vadd.f32 %v4654, %v4674
    %v4713 = vadd.f32 %v4655, %v4682
    %v4714 = vadd.f32 %v4656, %v4681
    %v4715 = vadd.f32 %v4657, %v4683
    %v4716 = vadd.f32 %v4658, %v4674
    %v4717 = vadd.f32 %v4659, %v4682
    %v4718 = vadd.f32 %v4660, %v4681
    %v4719 = vadd.f32 %v4661, %v4683
    %vm4720 = vcmp.gt.f32.partialorder %v4688, 0.0
    %vm4721 = vcmp.gt.f32.partialorder %v4689, 0.0
    %vm4722 = vcmp.gt.f32.partialorder %v4690, 0.0
    %vm4723 = vcmp.gt.f32.partialorder %v4691, 0.0
    %vm4724 = vcmp.gt.f32.partialorder %v4692, 0.0
    %vm4725 = vcmp.gt.f32.partialorder %v4693, 0.0
    %vm4726 = vcmp.gt.f32.partialorder %v4694, 0.0
    %vm4727 = vcmp.gt.f32.partialorder %v4695, 0.0
    %vm4728 = vcmp.gt.f32.partialorder %v4696, 0.0
    %vm4729 = vcmp.gt.f32.partialorder %v4697, 0.0
    %vm4730 = vcmp.gt.f32.partialorder %v4698, 0.0
    %vm4731 = vcmp.gt.f32.partialorder %v4699, 0.0
    %vm4732 = vcmp.gt.f32.partialorder %v4700, 0.0
    %vm4733 = vcmp.gt.f32.partialorder %v4701, 0.0
    %vm4734 = vcmp.gt.f32.partialorder %v4702, 0.0
    %vm4735 = vcmp.gt.f32.partialorder %v4703, 0.0
    %vm4736 = vcmp.gt.f32.partialorder %v4704, 0.0
    %vm4737 = vcmp.gt.f32.partialorder %v4705, 0.0
    %vm4738 = vcmp.gt.f32.partialorder %v4706, 0.0
    %vm4739 = vcmp.gt.f32.partialorder %v4707, 0.0
    %vm4740 = vcmp.gt.f32.partialorder %v4708, 0.0
    %vm4741 = vcmp.gt.f32.partialorder %v4709, 0.0
    %vm4742 = vcmp.gt.f32.partialorder %v4710, 0.0
    %vm4743 = vcmp.gt.f32.partialorder %v4711, 0.0
    %vm4744 = vcmp.gt.f32.partialorder %v4712, 0.0
    %vm4745 = vcmp.gt.f32.partialorder %v4713, 0.0
    %vm4746 = vcmp.gt.f32.partialorder %v4714, 0.0
    %vm4747 = vcmp.gt.f32.partialorder %v4715, 0.0
    %vm4748 = vcmp.gt.f32.partialorder %v4716, 0.0
    %vm4749 = vcmp.gt.f32.partialorder %v4717, 0.0
    %vm4750 = vcmp.gt.f32.partialorder %v4718, 0.0
    %vm4751 = vcmp.gt.f32.partialorder %v4719, 0.0
    %v4752 = vmul.f32 %v4688, 0.2
    %v4753 = vmul.f32 %v4689, 0.2
    %v4754 = vmul.f32 %v4690, 0.2
    %v4755 = vmul.f32 %v4691, 0.2
    %v4756 = vmul.f32 %v4692, 0.2
    %v4757 = vmul.f32 %v4693, 0.2
    %v4758 = vmul.f32 %v4694, 0.2
    %v4759 = vmul.f32 %v4695, 0.2
    %v4760 = vmul.f32 %v4696, 0.2
    %v4761 = vmul.f32 %v4697, 0.2
    %v4762 = vmul.f32 %v4698, 0.2
    %v4763 = vmul.f32 %v4699, 0.2
    %v4764 = vmul.f32 %v4700, 0.2
    %v4765 = vmul.f32 %v4701, 0.2
    %v4766 = vmul.f32 %v4702, 0.2
    %v4767 = vmul.f32 %v4703, 0.2
    %v4768 = vmul.f32 %v4704, 0.2
    %v4769 = vmul.f32 %v4705, 0.2
    %v4770 = vmul.f32 %v4706, 0.2
    %v4771 = vmul.f32 %v4707, 0.2
    %v4772 = vmul.f32 %v4708, 0.2
    %v4773 = vmul.f32 %v4709, 0.2
    %v4774 = vmul.f32 %v4710, 0.2
    %v4775 = vmul.f32 %v4711, 0.2
    %v4776 = vmul.f32 %v4712, 0.2
    %v4777 = vmul.f32 %v4713, 0.2
    %v4778 = vmul.f32 %v4714, 0.2
    %v4779 = vmul.f32 %v4715, 0.2
    %v4780 = vmul.f32 %v4716, 0.2
    %v4781 = vmul.f32 %v4717, 0.2
    %v4782 = vmul.f32 %v4718, 0.2
    %v4783 = vmul.f32 %v4719, 0.2
    %v4784 = vsel %vm4720, %v4688, %v4752
    %v4785 = vsel %vm4721, %v4689, %v4753
    %v4786 = vsel %vm4722, %v4690, %v4754
    %v4787 = vsel %vm4723, %v4691, %v4755
    %v4788 = vsel %vm4724, %v4692, %v4756
    %v4789 = vsel %vm4725, %v4693, %v4757
    %v4790 = vsel %vm4726, %v4694, %v4758
    %v4791 = vsel %vm4727, %v4695, %v4759
    %v4792 = vsel %vm4728, %v4696, %v4760
    %v4793 = vsel %vm4729, %v4697, %v4761
    %v4794 = vsel %vm4730, %v4698, %v4762
    %v4795 = vsel %vm4731, %v4699, %v4763
    %v4796 = vsel %vm4732, %v4700, %v4764
    %v4797 = vsel %vm4733, %v4701, %v4765
    %v4798 = vsel %vm4734, %v4702, %v4766
    %v4799 = vsel %vm4735, %v4703, %v4767
    %v4800 = vsel %vm4736, %v4704, %v4768
    %v4801 = vsel %vm4737, %v4705, %v4769
    %v4802 = vsel %vm4738, %v4706, %v4770
    %v4803 = vsel %vm4739, %v4707, %v4771
    %v4804 = vsel %vm4740, %v4708, %v4772
    %v4805 = vsel %vm4741, %v4709, %v4773
    %v4806 = vsel %vm4742, %v4710, %v4774
    %v4807 = vsel %vm4743, %v4711, %v4775
    %v4808 = vsel %vm4744, %v4712, %v4776
    %v4809 = vsel %vm4745, %v4713, %v4777
    %v4810 = vsel %vm4746, %v4714, %v4778
    %v4811 = vsel %vm4747, %v4715, %v4779
    %v4812 = vsel %vm4748, %v4716, %v4780
    %v4813 = vsel %vm4749, %v4717, %v4781
    %v4814 = vsel %vm4750, %v4718, %v4782
    %v4815 = vsel %vm4751, %v4719, %v4783
    %v4816 = vld [vmem:[%s17] sm:$0xff]
    %v4849 = vcombine.low %v4784, %v4785
    %v4850 = vcombine.low %v4786, %v4787
    %v4852 = vunpack.c.l.s4 1983009808
    %v4853 = vunpack.c.0.s8 %v4852
    %v4854 = vlaneseq
    %v4855 = vshrl.u32 %v4854, 7
    %v4856 = vsub.s32 %v4853, %v4855
    %v4857 = vrot.slane %v4849, %v4856
    %v4859 = vunpack.c.l.s4 1983009808
    %v4860 = vunpack.c.0.s8 %v4859
    %v4861 = vlaneseq
    %v4862 = vshrl.u32 %v4861, 7
    %v4863 = vsub.s32 %v4860, %v4862
    %v4864 = vrot.slane %v4850, %v4863
    %v4865 = vcombine.low %v4857, %v4864
    %v4866 = vcombine.low %v4788, %v4789
    %v4867 = vcombine.low %v4790, %v4791
    %v4869 = vunpack.c.l.s4 1983009808
    %v4870 = vunpack.c.0.s8 %v4869
    %v4871 = vlaneseq
    %v4872 = vshrl.u32 %v4871, 7
    %v4873 = vsub.s32 %v4870, %v4872
    %v4874 = vrot.slane %v4866, %v4873
    %v4876 = vunpack.c.l.s4 1983009808
    %v4877 = vunpack.c.0.s8 %v4876
    %v4878 = vlaneseq
    %v4879 = vshrl.u32 %v4878, 7
    %v4880 = vsub.s32 %v4877, %v4879
    %v4881 = vrot.slane %v4867, %v4880
    %v4882 = vcombine.low %v4874, %v4881
    %v4883 = vcombine.low %v4792, %v4793
    %v4884 = vcombine.low %v4794, %v4795
    %v4886 = vunpack.c.l.s4 1983009808
    %v4887 = vunpack.c.0.s8 %v4886
    %v4888 = vlaneseq
    %v4889 = vshrl.u32 %v4888, 7
    %v4890 = vsub.s32 %v4887, %v4889
    %v4891 = vrot.slane %v4883, %v4890
    %v4893 = vunpack.c.l.s4 1983009808
    %v4894 = vunpack.c.0.s8 %v4893
    %v4895 = vlaneseq
    %v4896 = vshrl.u32 %v4895, 7
    %v4897 = vsub.s32 %v4894, %v4896
    %v4898 = vrot.slane %v4884, %v4897
    %v4899 = vcombine.low %v4891, %v4898
    %v4900 = vcombine.low %v4796, %v4797
    %v4901 = vcombine.low %v4798, %v4799
    %v4903 = vunpack.c.l.s4 1983009808
    %v4904 = vunpack.c.0.s8 %v4903
    %v4905 = vlaneseq
    %v4906 = vshrl.u32 %v4905, 7
    %v4907 = vsub.s32 %v4904, %v4906
    %v4908 = vrot.slane %v4900, %v4907
    %v4910 = vunpack.c.l.s4 1983009808
    %v4911 = vunpack.c.0.s8 %v4910
    %v4912 = vlaneseq
    %v4913 = vshrl.u32 %v4912, 7
    %v4914 = vsub.s32 %v4911, %v4913
    %v4915 = vrot.slane %v4901, %v4914
    %v4916 = vcombine.low %v4908, %v4915
    %v4917 = vcombine.low %v4800, %v4801
    %v4918 = vcombine.low %v4802, %v4803
    %v4920 = vunpack.c.l.s4 1983009808
    %v4921 = vunpack.c.0.s8 %v4920
    %v4922 = vlaneseq
    %v4923 = vshrl.u32 %v4922, 7
    %v4924 = vsub.s32 %v4921, %v4923
    %v4925 = vrot.slane %v4917, %v4924
    %v4927 = vunpack.c.l.s4 1983009808
    %v4928 = vunpack.c.0.s8 %v4927
    %v4929 = vlaneseq
    %v4930 = vshrl.u32 %v4929, 7
    %v4931 = vsub.s32 %v4928, %v4930
    %v4932 = vrot.slane %v4918, %v4931
    %v4933 = vcombine.low %v4925, %v4932
    %v4934 = vcombine.low %v4804, %v4805
    %v4935 = vcombine.low %v4806, %v4807
    %v4937 = vunpack.c.l.s4 1983009808
    %v4938 = vunpack.c.0.s8 %v4937
    %v4939 = vlaneseq
    %v4940 = vshrl.u32 %v4939, 7
    %v4941 = vsub.s32 %v4938, %v4940
    %v4942 = vrot.slane %v4934, %v4941
    %v4944 = vunpack.c.l.s4 1983009808
    %v4945 = vunpack.c.0.s8 %v4944
    %v4946 = vlaneseq
    %v4947 = vshrl.u32 %v4946, 7
    %v4948 = vsub.s32 %v4945, %v4947
    %v4949 = vrot.slane %v4935, %v4948
    %v4950 = vcombine.low %v4942, %v4949
    %v4951 = vcombine.low %v4808, %v4809
    %v4952 = vcombine.low %v4810, %v4811
    %v4954 = vunpack.c.l.s4 1983009808
    %v4955 = vunpack.c.0.s8 %v4954
    %v4956 = vlaneseq
    %v4957 = vshrl.u32 %v4956, 7
    %v4958 = vsub.s32 %v4955, %v4957
    %v4959 = vrot.slane %v4951, %v4958
    %v4961 = vunpack.c.l.s4 1983009808
    %v4962 = vunpack.c.0.s8 %v4961
    %v4963 = vlaneseq
    %v4964 = vshrl.u32 %v4963, 7
    %v4965 = vsub.s32 %v4962, %v4964
    %v4966 = vrot.slane %v4952, %v4965
    %v4967 = vcombine.low %v4959, %v4966
    %v4968 = vcombine.low %v4812, %v4813
    %v4969 = vcombine.low %v4814, %v4815
    %v4971 = vunpack.c.l.s4 1983009808
    %v4972 = vunpack.c.0.s8 %v4971
    %v4973 = vlaneseq
    %v4974 = vshrl.u32 %v4973, 7
    %v4975 = vsub.s32 %v4972, %v4974
    %v4976 = vrot.slane %v4968, %v4975
    %v4978 = vunpack.c.l.s4 1983009808
    %v4979 = vunpack.c.0.s8 %v4978
    %v4980 = vlaneseq
    %v4981 = vshrl.u32 %v4980, 7
    %v4982 = vsub.s32 %v4979, %v4981
    %v4983 = vrot.slane %v4969, %v4982
    %v4984 = vcombine.low %v4976, %v4983
    %v4985 = vsel %vm190, %v4865, 0
    %v4987 = vsel %vm190, %v4882, 0
    %v4989 = vsel %vm190, %v4899, 0
    %v4991 = vsel %vm190, %v4916, 0
    %v4993 = vsel %vm190, %v4933, 0
    %v4995 = vsel %vm190, %v4950, 0
    %v4997 = vsel %vm190, %v4967, 0
    %v4999 = vsel %vm190, %v4984, 0
    %5001 = vmatprep.subr.mxu0 0.0
    %5002 = vmatpush1.msra.mxu0 %v4816
    %5003 = vmatprep.subr.mxu0 0.0
    %5004 = vmatpush1.msra.mxu0 0.0
    %5005 = vmatprep.subr.mxu0 0.0
    %5006 = vmatpush1.msra.mxu0 0.0
    %5007 = vmatprep.subr.mxu0 0.0
    %5008 = vmatpush1.msra.mxu0 0.0
    %5009 = vmatprep.subr.mxu0 0.0
    %5010 = vmatpush1.msra.mxu0 0.0
    %5011 = vmatprep.subr.mxu0 0.0
    %5012 = vmatpush1.msra.mxu0 0.0
    %5013 = vmatprep.subr.mxu0 0.0
    %5014 = vmatpush1.msra.mxu0 0.0
    %5015 = vmatprep.subr.mxu0 0.0
    %5016 = vmatpush1.msra.mxu0 0.0
    %5017 = vmatprep.subr.mxu0 0.0
    %5018 = vmatpush1.msra.mxu0 0.0
    %5019 = vmatprep.subr.mxu0 0.0
    %5020 = vmatpush1.msra.mxu0 0.0
    %5021 = vmatprep.subr.mxu0 0.0
    %5022 = vmatpush1.msra.mxu0 0.0
    %5023 = vmatprep.subr.mxu0 0.0
    %5024 = vmatpush1.msra.mxu0 0.0
    %5025 = vmatprep.subr.mxu0 0.0
    %5026 = vmatpush1.msra.mxu0 0.0
    %5027 = vmatprep.subr.mxu0 0.0
    %5028 = vmatpush1.msra.mxu0 0.0
    %5029 = vmatprep.subr.mxu0 0.0
    %5030 = vmatpush1.msra.mxu0 0.0
    %5031 = vmatprep.subr.mxu0 0.0
    %5032 = vmatpush1.msra.mxu0 0.0
    %5033 = vmatprep.subr.mxu0 0.0
    %5034 = vmatpush1.msra.mxu0 0.0
    %5035 = vmatprep.subr.mxu0 0.0
    %5036 = vmatpush1.msra.mxu0 0.0
    %5037 = vmatprep.subr.mxu0 0.0
    %5038 = vmatpush1.msra.mxu0 0.0
    %5039 = vmatprep.subr.mxu0 0.0
    %5040 = vmatpush1.msra.mxu0 0.0
    %5041 = vmatprep.subr.mxu0 0.0
    %5042 = vmatpush1.msra.mxu0 0.0
    %5043 = vmatprep.subr.mxu0 0.0
    %5044 = vmatpush1.msra.mxu0 0.0
    %5045 = vmatprep.subr.mxu0 0.0
    %5046 = vmatpush1.msra.mxu0 0.0
    %5047 = vmatprep.subr.mxu0 0.0
    %5048 = vmatpush1.msra.mxu0 0.0
    %5049 = vmatprep.subr.mxu0 0.0
    %5050 = vmatpush1.msra.mxu0 0.0
    %5051 = vmatprep.subr.mxu0 0.0
    %5052 = vmatpush1.msra.mxu0 0.0
    %5053 = vmatprep.subr.mxu0 0.0
    %5054 = vmatpush1.msra.mxu0 0.0
    %5055 = vmatprep.subr.mxu0 0.0
    %5056 = vmatpush1.msra.mxu0 0.0
    %5057 = vmatprep.subr.mxu0 0.0
    %5058 = vmatpush1.msra.mxu0 0.0
    %5059 = vmatprep.subr.mxu0 0.0
    %5060 = vmatpush1.msra.mxu0 0.0
    %5061 = vmatprep.subr.mxu0 0.0
    %5062 = vmatpush1.msra.mxu0 0.0
    %5063 = vmatprep.subr.mxu0 0.0
    %5064 = vmatpush1.msra.mxu0 0.0
    %5065 = vmatprep.mubr.f32.mxu0 0.0
    %5066 = vmatmul.mubr.f32.gmra.mrb[0].mxu0 %v4985
    %v5067 = vpop.f32.mrb[0].mxu0
    %v5068 = vadd.f32 0.0, %v5067
    %v5069 = vpop.f32.mrb[0].mxu0
    %5070 = vmatprep.mubr.f32.mxu0 0.0
    %5071 = vmatmul.mubr.f32.gmra.mrb[0].mxu0 %v4987
    %v5072 = vpop.f32.mrb[0].mxu0
    %v5073 = vadd.f32 0.0, %v5072
    %v5074 = vpop.f32.mrb[0].mxu0
    %5075 = vmatprep.mubr.f32.mxu0 0.0
    %5076 = vmatmul.mubr.f32.gmra.mrb[0].mxu0 %v4989
    %v5077 = vpop.f32.mrb[0].mxu0
    %v5078 = vadd.f32 0.0, %v5077
    %v5079 = vpop.f32.mrb[0].mxu0
    %5080 = vmatprep.mubr.f32.mxu0 0.0
    %5081 = vmatmul.mubr.f32.gmra.mrb[0].mxu0 %v4991
    %v5082 = vpop.f32.mrb[0].mxu0
    %v5083 = vadd.f32 0.0, %v5082
    %v5084 = vpop.f32.mrb[0].mxu0
    %5085 = vmatprep.mubr.f32.mxu0 0.0
    %5086 = vmatmul.mubr.f32.gmra.mrb[0].mxu0 %v4993
    %v5087 = vpop.f32.mrb[0].mxu0
    %v5088 = vadd.f32 0.0, %v5087
    %v5089 = vpop.f32.mrb[0].mxu0
    %5090 = vmatprep.mubr.f32.mxu0 0.0
    %5091 = vmatmul.mubr.f32.gmra.mrb[0].mxu0 %v4995
    %v5092 = vpop.f32.mrb[0].mxu0
    %v5093 = vadd.f32 0.0, %v5092
    %v5094 = vpop.f32.mrb[0].mxu0
    %5095 = vmatprep.mubr.f32.mxu0 0.0
    %5096 = vmatmul.mubr.f32.gmra.mrb[0].mxu0 %v4997
    %v5097 = vpop.f32.mrb[0].mxu0
    %v5098 = vadd.f32 0.0, %v5097
    %v5099 = vpop.f32.mrb[0].mxu0
    %5100 = vmatprep.mubr.f32.mxu0 0.0
    %5101 = vmatmul.mubr.f32.gmra.mrb[0].mxu0 %v4999
    %v5102 = vpop.f32.mrb[0].mxu0
    %v5103 = vadd.f32 0.0, %v5102
    %v5104 = vpop.f32.mrb[0].mxu0
    %5105 = vdwg.mxu0
    %s5106 = scalar_lea.vmem %s17, 8
    %v5107 = vld [vmem:[%s5106] sm:$0xff]
    %5108 = vmatprep.subr.mxu0 0.0
    %5109 = vmatpush1.msra.mxu0 %v5107
    %5110 = vmatprep.subr.mxu0 0.0
    %5111 = vmatpush1.msra.mxu0 0.0
    %5112 = vmatprep.subr.mxu0 0.0
    %5113 = vmatpush1.msra.mxu0 0.0
    %5114 = vmatprep.subr.mxu0 0.0
    %5115 = vmatpush1.msra.mxu0 0.0
    %5116 = vmatprep.subr.mxu0 0.0
    %5117 = vmatpush1.msra.mxu0 0.0
    %5118 = vmatprep.subr.mxu0 0.0
    %5119 = vmatpush1.msra.mxu0 0.0
    %5120 = vmatprep.subr.mxu0 0.0
    %5121 = vmatpush1.msra.mxu0 0.0
    %5122 = vmatprep.subr.mxu0 0.0
    %5123 = vmatpush1.msra.mxu0 0.0
    %5124 = vmatprep.subr.mxu0 0.0
    %5125 = vmatpush1.msra.mxu0 0.0
    %5126 = vmatprep.subr.mxu0 0.0
    %5127 = vmatpush1.msra.mxu0 0.0
    %5128 = vmatprep.subr.mxu0 0.0
    %5129 = vmatpush1.msra.mxu0 0.0
    %5130 = vmatprep.subr.mxu0 0.0
    %5131 = vmatpush1.msra.mxu0 0.0
    %5132 = vmatprep.subr.mxu0 0.0
    %5133 = vmatpush1.msra.mxu0 0.0
    %5134 = vmatprep.subr.mxu0 0.0
    %5135 = vmatpush1.msra.mxu0 0.0
    %5136 = vmatprep.subr.mxu0 0.0
    %5137 = vmatpush1.msra.mxu0 0.0
    %5138 = vmatprep.subr.mxu0 0.0
    %5139 = vmatpush1.msra.mxu0 0.0
    %5140 = vmatprep.subr.mxu0 0.0
    %5141 = vmatpush1.msra.mxu0 0.0
    %5142 = vmatprep.subr.mxu0 0.0
    %5143 = vmatpush1.msra.mxu0 0.0
    %5144 = vmatprep.subr.mxu0 0.0
    %5145 = vmatpush1.msra.mxu0 0.0
    %5146 = vmatprep.subr.mxu0 0.0
    %5147 = vmatpush1.msra.mxu0 0.0
    %5148 = vmatprep.subr.mxu0 0.0
    %5149 = vmatpush1.msra.mxu0 0.0
    %5150 = vmatprep.subr.mxu0 0.0
    %5151 = vmatpush1.msra.mxu0 0.0
    %5152 = vmatprep.subr.mxu0 0.0
    %5153 = vmatpush1.msra.mxu0 0.0
    %5154 = vmatprep.subr.mxu0 0.0
    %5155 = vmatpush1.msra.mxu0 0.0
    %5156 = vmatprep.subr.mxu0 0.0
    %5157 = vmatpush1.msra.mxu0 0.0
    %5158 = vmatprep.subr.mxu0 0.0
    %5159 = vmatpush1.msra.mxu0 0.0
    %5160 = vmatprep.subr.mxu0 0.0
    %5161 = vmatpush1.msra.mxu0 0.0
    %5162 = vmatprep.subr.mxu0 0.0
    %5163 = vmatpush1.msra.mxu0 0.0
    %5164 = vmatprep.subr.mxu0 0.0
    %5165 = vmatpush1.msra.mxu0 0.0
    %5166 = vmatprep.subr.mxu0 0.0
    %5167 = vmatpush1.msra.mxu0 0.0
    %5168 = vmatprep.subr.mxu0 0.0
    %5169 = vmatpush1.msra.mxu0 0.0
    %5170 = vmatprep.subr.mxu0 0.0
    %5171 = vmatpush1.msra.mxu0 0.0
    %5172 = vmatprep.mubr.f32.mxu0 0.0
    %5173 = vmatmul.mubr.f32.gmra.mrb[0].mxu0 %v4985
    %v5174 = vpop.f32.mrb[0].mxu0
    %v5175 = vadd.f32 0.0, %v5174
    %v5176 = vpop.f32.mrb[0].mxu0
    %5177 = vmatprep.mubr.f32.mxu0 0.0
    %5178 = vmatmul.mubr.f32.gmra.mrb[0].mxu0 %v4987
    %v5179 = vpop.f32.mrb[0].mxu0
    %v5180 = vadd.f32 0.0, %v5179
    %v5181 = vpop.f32.mrb[0].mxu0
    %5182 = vmatprep.mubr.f32.mxu0 0.0
    %5183 = vmatmul.mubr.f32.gmra.mrb[0].mxu0 %v4989
    %v5184 = vpop.f32.mrb[0].mxu0
    %v5185 = vadd.f32 0.0, %v5184
    %v5186 = vpop.f32.mrb[0].mxu0
    %5187 = vmatprep.mubr.f32.mxu0 0.0
    %5188 = vmatmul.mubr.f32.gmra.mrb[0].mxu0 %v4991
    %v5189 = vpop.f32.mrb[0].mxu0
    %v5190 = vadd.f32 0.0, %v5189
    %v5191 = vpop.f32.mrb[0].mxu0
    %5192 = vmatprep.mubr.f32.mxu0 0.0
    %5193 = vmatmul.mubr.f32.gmra.mrb[0].mxu0 %v4993
    %v5194 = vpop.f32.mrb[0].mxu0
    %v5195 = vadd.f32 0.0, %v5194
    %v5196 = vpop.f32.mrb[0].mxu0
    %5197 = vmatprep.mubr.f32.mxu0 0.0
    %5198 = vmatmul.mubr.f32.gmra.mrb[0].mxu0 %v4995
    %v5199 = vpop.f32.mrb[0].mxu0
    %v5200 = vadd.f32 0.0, %v5199
    %v5201 = vpop.f32.mrb[0].mxu0
    %5202 = vmatprep.mubr.f32.mxu0 0.0
    %5203 = vmatmul.mubr.f32.gmra.mrb[0].mxu0 %v4997
    %v5204 = vpop.f32.mrb[0].mxu0
    %v5205 = vadd.f32 0.0, %v5204
    %v5206 = vpop.f32.mrb[0].mxu0
    %5207 = vmatprep.mubr.f32.mxu0 0.0
    %5208 = vmatmul.mubr.f32.gmra.mrb[0].mxu0 %v4999
    %v5209 = vpop.f32.mrb[0].mxu0
    %v5210 = vadd.f32 0.0, %v5209
    %v5211 = vpop.f32.mrb[0].mxu0
    %5212 = vdwg.mxu0
    %s5213 = scalar_lea.vmem %s17, 16
    %v5214 = vld [vmem:[%s5213] sm:$0xff]
    %5215 = vmatprep.subr.mxu0 0.0
    %5216 = vmatpush1.msra.mxu0 %v5214
    %5217 = vmatprep.subr.mxu0 0.0
    %5218 = vmatpush1.msra.mxu0 0.0
    %5219 = vmatprep.subr.mxu0 0.0
    %5220 = vmatpush1.msra.mxu0 0.0
    %5221 = vmatprep.subr.mxu0 0.0
    %5222 = vmatpush1.msra.mxu0 0.0
    %5223 = vmatprep.subr.mxu0 0.0
    %5224 = vmatpush1.msra.mxu0 0.0
    %5225 = vmatprep.subr.mxu0 0.0
    %5226 = vmatpush1.msra.mxu0 0.0
    %5227 = vmatprep.subr.mxu0 0.0
    %5228 = vmatpush1.msra.mxu0 0.0
    %5229 = vmatprep.subr.mxu0 0.0
    %5230 = vmatpush1.msra.mxu0 0.0
    %5231 = vmatprep.subr.mxu0 0.0
    %5232 = vmatpush1.msra.mxu0 0.0
    %5233 = vmatprep.subr.mxu0 0.0
    %5234 = vmatpush1.msra.mxu0 0.0
    %5235 = vmatprep.subr.mxu0 0.0
    %5236 = vmatpush1.msra.mxu0 0.0
    %5237 = vmatprep.subr.mxu0 0.0
    %5238 = vmatpush1.msra.mxu0 0.0
    %5239 = vmatprep.subr.mxu0 0.0
    %5240 = vmatpush1.msra.mxu0 0.0
    %5241 = vmatprep.subr.mxu0 0.0
    %5242 = vmatpush1.msra.mxu0 0.0
    %5243 = vmatprep.subr.mxu0 0.0
    %5244 = vmatpush1.msra.mxu0 0.0
    %5245 = vmatprep.subr.mxu0 0.0
    %5246 = vmatpush1.msra.mxu0 0.0
    %5247 = vmatprep.subr.mxu0 0.0
    %5248 = vmatpush1.msra.mxu0 0.0
    %5249 = vmatprep.subr.mxu0 0.0
    %5250 = vmatpush1.msra.mxu0 0.0
    %5251 = vmatprep.subr.mxu0 0.0
    %5252 = vmatpush1.msra.mxu0 0.0
    %5253 = vmatprep.subr.mxu0 0.0
    %5254 = vmatpush1.msra.mxu0 0.0
    %5255 = vmatprep.subr.mxu0 0.0
    %5256 = vmatpush1.msra.mxu0 0.0
    %5257 = vmatprep.subr.mxu0 0.0
    %5258 = vmatpush1.msra.mxu0 0.0
    %5259 = vmatprep.subr.mxu0 0.0
    %5260 = vmatpush1.msra.mxu0 0.0
    %5261 = vmatprep.subr.mxu0 0.0
    %5262 = vmatpush1.msra.mxu0 0.0
    %5263 = vmatprep.subr.mxu0 0.0
    %5264 = vmatpush1.msra.mxu0 0.0
    %5265 = vmatprep.subr.mxu0 0.0
    %5266 = vmatpush1.msra.mxu0 0.0
    %5267 = vmatprep.subr.mxu0 0.0
    %5268 = vmatpush1.msra.mxu0 0.0
    %5269 = vmatprep.subr.mxu0 0.0
    %5270 = vmatpush1.msra.mxu0 0.0
    %5271 = vmatprep.subr.mxu0 0.0
    %5272 = vmatpush1.msra.mxu0 0.0
    %5273 = vmatprep.subr.mxu0 0.0
    %5274 = vmatpush1.msra.mxu0 0.0
    %5275 = vmatprep.subr.mxu0 0.0
    %5276 = vmatpush1.msra.mxu0 0.0
    %5277 = vmatprep.subr.mxu0 0.0
    %5278 = vmatpush1.msra.mxu0 0.0
    %5279 = vmatprep.mubr.f32.mxu0 0.0
    %5280 = vmatmul.mubr.f32.gmra.mrb[0].mxu0 %v4985
    %v5281 = vpop.f32.mrb[0].mxu0
    %v5282 = vadd.f32 0.0, %v5281
    %v5283 = vpop.f32.mrb[0].mxu0
    %5284 = vmatprep.mubr.f32.mxu0 0.0
    %5285 = vmatmul.mubr.f32.gmra.mrb[0].mxu0 %v4987
    %v5286 = vpop.f32.mrb[0].mxu0
    %v5287 = vadd.f32 0.0, %v5286
    %v5288 = vpop.f32.mrb[0].mxu0
    %5289 = vmatprep.mubr.f32.mxu0 0.0
    %5290 = vmatmul.mubr.f32.gmra.mrb[0].mxu0 %v4989
    %v5291 = vpop.f32.mrb[0].mxu0
    %v5292 = vadd.f32 0.0, %v5291
    %v5293 = vpop.f32.mrb[0].mxu0
    %5294 = vmatprep.mubr.f32.mxu0 0.0
    %5295 = vmatmul.mubr.f32.gmra.mrb[0].mxu0 %v4991
    %v5296 = vpop.f32.mrb[0].mxu0
    %v5297 = vadd.f32 0.0, %v5296
    %v5298 = vpop.f32.mrb[0].mxu0
    %5299 = vmatprep.mubr.f32.mxu0 0.0
    %5300 = vmatmul.mubr.f32.gmra.mrb[0].mxu0 %v4993
    %v5301 = vpop.f32.mrb[0].mxu0
    %v5302 = vadd.f32 0.0, %v5301
    %v5303 = vpop.f32.mrb[0].mxu0
    %5304 = vmatprep.mubr.f32.mxu0 0.0
    %5305 = vmatmul.mubr.f32.gmra.mrb[0].mxu0 %v4995
    %v5306 = vpop.f32.mrb[0].mxu0
    %v5307 = vadd.f32 0.0, %v5306
    %v5308 = vpop.f32.mrb[0].mxu0
    %5309 = vmatprep.mubr.f32.mxu0 0.0
    %5310 = vmatmul.mubr.f32.gmra.mrb[0].mxu0 %v4997
    %v5311 = vpop.f32.mrb[0].mxu0
    %v5312 = vadd.f32 0.0, %v5311
    %v5313 = vpop.f32.mrb[0].mxu0
    %5314 = vmatprep.mubr.f32.mxu0 0.0
    %5315 = vmatmul.mubr.f32.gmra.mrb[0].mxu0 %v4999
    %v5316 = vpop.f32.mrb[0].mxu0
    %v5317 = vadd.f32 0.0, %v5316
    %v5318 = vpop.f32.mrb[0].mxu0
    %5319 = vdwg.mxu0
    %s5320 = scalar_lea.vmem %s17, 24
    %v5321 = vld [vmem:[%s5320] sm:$0xff]
    %5322 = vmatprep.subr.mxu0 0.0
    %5323 = vmatpush1.msra.mxu0 %v5321
    %5324 = vmatprep.subr.mxu0 0.0
    %5325 = vmatpush1.msra.mxu0 0.0
    %5326 = vmatprep.subr.mxu0 0.0
    %5327 = vmatpush1.msra.mxu0 0.0
    %5328 = vmatprep.subr.mxu0 0.0
    %5329 = vmatpush1.msra.mxu0 0.0
    %5330 = vmatprep.subr.mxu0 0.0
    %5331 = vmatpush1.msra.mxu0 0.0
    %5332 = vmatprep.subr.mxu0 0.0
    %5333 = vmatpush1.msra.mxu0 0.0
    %5334 = vmatprep.subr.mxu0 0.0
    %5335 = vmatpush1.msra.mxu0 0.0
    %5336 = vmatprep.subr.mxu0 0.0
    %5337 = vmatpush1.msra.mxu0 0.0
    %5338 = vmatprep.subr.mxu0 0.0
    %5339 = vmatpush1.msra.mxu0 0.0
    %5340 = vmatprep.subr.mxu0 0.0
    %5341 = vmatpush1.msra.mxu0 0.0
    %5342 = vmatprep.subr.mxu0 0.0
    %5343 = vmatpush1.msra.mxu0 0.0
    %5344 = vmatprep.subr.mxu0 0.0
    %5345 = vmatpush1.msra.mxu0 0.0
    %5346 = vmatprep.subr.mxu0 0.0
    %5347 = vmatpush1.msra.mxu0 0.0
    %5348 = vmatprep.subr.mxu0 0.0
    %5349 = vmatpush1.msra.mxu0 0.0
    %5350 = vmatprep.subr.mxu0 0.0
    %5351 = vmatpush1.msra.mxu0 0.0
    %5352 = vmatprep.subr.mxu0 0.0
    %5353 = vmatpush1.msra.mxu0 0.0
    %5354 = vmatprep.subr.mxu0 0.0
    %5355 = vmatpush1.msra.mxu0 0.0
    %5356 = vmatprep.subr.mxu0 0.0
    %5357 = vmatpush1.msra.mxu0 0.0
    %5358 = vmatprep.subr.mxu0 0.0
    %5359 = vmatpush1.msra.mxu0 0.0
    %5360 = vmatprep.subr.mxu0 0.0
    %5361 = vmatpush1.msra.mxu0 0.0
    %5362 = vmatprep.subr.mxu0 0.0
    %5363 = vmatpush1.msra.mxu0 0.0
    %5364 = vmatprep.subr.mxu0 0.0
    %5365 = vmatpush1.msra.mxu0 0.0
    %5366 = vmatprep.subr.mxu0 0.0
    %5367 = vmatpush1.msra.mxu0 0.0
    %5368 = vmatprep.subr.mxu0 0.0
    %5369 = vmatpush1.msra.mxu0 0.0
    %5370 = vmatprep.subr.mxu0 0.0
    %5371 = vmatpush1.msra.mxu0 0.0
    %5372 = vmatprep.subr.mxu0 0.0
    %5373 = vmatpush1.msra.mxu0 0.0
    %5374 = vmatprep.subr.mxu0 0.0
    %5375 = vmatpush1.msra.mxu0 0.0
    %5376 = vmatprep.subr.mxu0 0.0
    %5377 = vmatpush1.msra.mxu0 0.0
    %5378 = vmatprep.subr.mxu0 0.0
    %5379 = vmatpush1.msra.mxu0 0.0
    %5380 = vmatprep.subr.mxu0 0.0
    %5381 = vmatpush1.msra.mxu0 0.0
    %5382 = vmatprep.subr.mxu0 0.0
    %5383 = vmatpush1.msra.mxu0 0.0
    %5384 = vmatprep.subr.mxu0 0.0
    %5385 = vmatpush1.msra.mxu0 0.0
    %5386 = vmatprep.mubr.f32.mxu0 0.0
    %5387 = vmatmul.mubr.f32.gmra.mrb[0].mxu0 %v4985
    %v5388 = vpop.f32.mrb[0].mxu0
    %v5389 = vadd.f32 0.0, %v5388
    %v5390 = vpop.f32.mrb[0].mxu0
    %5391 = vmatprep.mubr.f32.mxu0 0.0
    %5392 = vmatmul.mubr.f32.gmra.mrb[0].mxu0 %v4987
    %v5393 = vpop.f32.mrb[0].mxu0
    %v5394 = vadd.f32 0.0, %v5393
    %v5395 = vpop.f32.mrb[0].mxu0
    %5396 = vmatprep.mubr.f32.mxu0 0.0
    %5397 = vmatmul.mubr.f32.gmra.mrb[0].mxu0 %v4989
    %v5398 = vpop.f32.mrb[0].mxu0
    %v5399 = vadd.f32 0.0, %v5398
    %v5400 = vpop.f32.mrb[0].mxu0
    %5401 = vmatprep.mubr.f32.mxu0 0.0
    %5402 = vmatmul.mubr.f32.gmra.mrb[0].mxu0 %v4991
    %v5403 = vpop.f32.mrb[0].mxu0
    %v5404 = vadd.f32 0.0, %v5403
    %v5405 = vpop.f32.mrb[0].mxu0
    %5406 = vmatprep.mubr.f32.mxu0 0.0
    %5407 = vmatmul.mubr.f32.gmra.mrb[0].mxu0 %v4993
    %v5408 = vpop.f32.mrb[0].mxu0
    %v5409 = vadd.f32 0.0, %v5408
    %v5410 = vpop.f32.mrb[0].mxu0
    %5411 = vmatprep.mubr.f32.mxu0 0.0
    %5412 = vmatmul.mubr.f32.gmra.mrb[0].mxu0 %v4995
    %v5413 = vpop.f32.mrb[0].mxu0
    %v5414 = vadd.f32 0.0, %v5413
    %v5415 = vpop.f32.mrb[0].mxu0
    %5416 = vmatprep.mubr.f32.mxu0 0.0
    %5417 = vmatmul.mubr.f32.gmra.mrb[0].mxu0 %v4997
    %v5418 = vpop.f32.mrb[0].mxu0
    %v5419 = vadd.f32 0.0, %v5418
    %v5420 = vpop.f32.mrb[0].mxu0
    %5421 = vmatprep.mubr.f32.mxu0 0.0
    %5422 = vmatmul.mubr.f32.gmra.mrb[0].mxu0 %v4999
    %v5423 = vpop.f32.mrb[0].mxu0
    %v5424 = vadd.f32 0.0, %v5423
    %v5425 = vpop.f32.mrb[0].mxu0
    %5426 = vdwg.mxu0
    %v5435 = vrot.slane %v5389, 7
    %v5436 = vrot.slane %v5394, 7
    %v5437 = vsel %vm1764, %v5435, %v5436
    %v5438 = vrot.slane %v5399, 7
    %v5439 = vsel %vm1764, %v5436, %v5438
    %v5440 = vrot.slane %v5404, 7
    %v5441 = vsel %vm1764, %v5438, %v5440
    %v5442 = vrot.slane %v5409, 7
    %v5443 = vrot.slane %v5414, 7
    %v5444 = vsel %vm1764, %v5442, %v5443
    %v5445 = vrot.slane %v5419, 7
    %v5446 = vsel %vm1764, %v5443, %v5445
    %v5447 = vrot.slane %v5424, 7
    %v5448 = vsel %vm1764, %v5445, %v5447
    %v5457 = vsel %vm1764, 0.0, %v5435
    %v5458 = vsel %vm1764, 0.0, %v5442
    %v5467 = vrot.slane %v5068, 1
    %v5468 = vrot.slane %v5073, 1
    %v5469 = vsel %vm1782, %v5467, %v5468
    %v5470 = vrot.slane %v5078, 1
    %v5471 = vsel %vm1782, %v5468, %v5470
    %v5472 = vrot.slane %v5083, 1
    %v5473 = vsel %vm1782, %v5470, %v5472
    %v5474 = vrot.slane %v5088, 1
    %v5475 = vrot.slane %v5093, 1
    %v5476 = vsel %vm1782, %v5474, %v5475
    %v5477 = vrot.slane %v5098, 1
    %v5478 = vsel %vm1782, %v5475, %v5477
    %v5479 = vrot.slane %v5103, 1
    %v5480 = vsel %vm1782, %v5477, %v5479
    %v5489 = vsel %vm1782, %v5472, 0.0
    %v5490 = vsel %vm1782, %v5479, 0.0
    %v5491 = vadd.f32 %v5175, %v5457
    %v5492 = vadd.f32 %v5180, %v5437
    %v5493 = vadd.f32 %v5185, %v5439
    %v5494 = vadd.f32 %v5190, %v5441
    %v5495 = vadd.f32 %v5195, %v5458
    %v5496 = vadd.f32 %v5200, %v5444
    %v5497 = vadd.f32 %v5205, %v5446
    %v5498 = vadd.f32 %v5210, %v5448
    %v5500 = vlaneseq
    %v5501 = vshrl.u32 %v5500, 7
    %v5502 = vsub.s32 0, %v5501
    %v5503 = vrot.slane %v4064, %v5502
    %v5505 = vadd.f32 %v5491, %v5503
    %v5506 = vadd.f32 %v5492, %v5503
    %v5507 = vadd.f32 %v5493, %v5503
    %v5508 = vadd.f32 %v5494, %v5503
    %v5509 = vadd.f32 %v5495, %v5503
    %v5510 = vadd.f32 %v5496, %v5503
    %v5511 = vadd.f32 %v5497, %v5503
    %v5512 = vadd.f32 %v5498, %v5503
    %v5513 = vadd.f32 %v5469, %v5282
    %v5514 = vadd.f32 %v5471, %v5287
    %v5515 = vadd.f32 %v5473, %v5292
    %v5516 = vadd.f32 %v5489, %v5297
    %v5517 = vadd.f32 %v5476, %v5302
    %v5518 = vadd.f32 %v5478, %v5307
    %v5519 = vadd.f32 %v5480, %v5312
    %v5520 = vadd.f32 %v5490, %v5317
    %v5521 = vadd.f32 %v5513, %v5503
    %v5522 = vadd.f32 %v5514, %v5503
    %v5523 = vadd.f32 %v5515, %v5503
    %v5524 = vadd.f32 %v5516, %v5503
    %v5525 = vadd.f32 %v5517, %v5503
    %v5526 = vadd.f32 %v5518, %v5503
    %v5527 = vadd.f32 %v5519, %v5503
    %v5528 = vadd.f32 %v5520, %v5503
    %v5529 = vxor.u32 %v5505, 2147483648
    %v5530 = vxor.u32 %v5506, 2147483648
    %v5531 = vxor.u32 %v5507, 2147483648
    %v5532 = vxor.u32 %v5508, 2147483648
    %v5533 = vxor.u32 %v5509, 2147483648
    %v5534 = vxor.u32 %v5510, 2147483648
    %v5535 = vxor.u32 %v5511, 2147483648
    %v5536 = vxor.u32 %v5512, 2147483648
    %v5537 = vmul.f32 %v5529, 1.442695
    %v5538 = vpow.pop %v5537
    %v5539 = vmul.f32 %v5530, 1.442695
    %v5540 = vpow.pop %v5539
    %v5541 = vmul.f32 %v5531, 1.442695
    %v5542 = vpow.pop %v5541
    %v5543 = vmul.f32 %v5532, 1.442695
    %v5544 = vpow.pop %v5543
    %v5545 = vmul.f32 %v5533, 1.442695
    %v5546 = vpow.pop %v5545
    %v5547 = vmul.f32 %v5534, 1.442695
    %v5548 = vpow.pop %v5547
    %v5549 = vmul.f32 %v5535, 1.442695
    %v5550 = vpow.pop %v5549
    %v5551 = vmul.f32 %v5536, 1.442695
    %v5552 = vpow.pop %v5551
    %v5553 = vadd.f32 %v5538, 1.0
    %v5554 = vadd.f32 %v5540, 1.0
    %v5555 = vadd.f32 %v5542, 1.0
    %v5556 = vadd.f32 %v5544, 1.0
    %v5557 = vadd.f32 %v5546, 1.0
    %v5558 = vadd.f32 %v5548, 1.0
    %v5559 = vadd.f32 %v5550, 1.0
    %v5560 = vadd.f32 %v5552, 1.0
    %v5561 = vrcp.pop %v5553
    %v5562 = vmul.f32 1.0, %v5561
    %v5563 = vrcp.pop %v5554
    %v5564 = vmul.f32 1.0, %v5563
    %v5565 = vrcp.pop %v5555
    %v5566 = vmul.f32 1.0, %v5565
    %v5567 = vrcp.pop %v5556
    %v5568 = vmul.f32 1.0, %v5567
    %v5569 = vrcp.pop %v5557
    %v5570 = vmul.f32 1.0, %v5569
    %v5571 = vrcp.pop %v5558
    %v5572 = vmul.f32 1.0, %v5571
    %v5573 = vrcp.pop %v5559
    %v5574 = vmul.f32 1.0, %v5573
    %v5575 = vrcp.pop %v5560
    %v5576 = vmul.f32 1.0, %v5575
    %v5577 = vxor.u32 %v5521, 2147483648
    %v5578 = vxor.u32 %v5522, 2147483648
    %v5579 = vxor.u32 %v5523, 2147483648
    %v5580 = vxor.u32 %v5524, 2147483648
    %v5581 = vxor.u32 %v5525, 2147483648
    %v5582 = vxor.u32 %v5526, 2147483648
    %v5583 = vxor.u32 %v5527, 2147483648
    %v5584 = vxor.u32 %v5528, 2147483648
    %v5585 = vmul.f32 %v5577, 1.442695
    %v5586 = vpow.pop %v5585
    %v5587 = vmul.f32 %v5578, 1.442695
    %v5588 = vpow.pop %v5587
    %v5589 = vmul.f32 %v5579, 1.442695
    %v5590 = vpow.pop %v5589
    %v5591 = vmul.f32 %v5580, 1.442695
    %v5592 = vpow.pop %v5591
    %v5593 = vmul.f32 %v5581, 1.442695
    %v5594 = vpow.pop %v5593
    %v5595 = vmul.f32 %v5582, 1.442695
    %v5596 = vpow.pop %v5595
    %v5597 = vmul.f32 %v5583, 1.442695
    %v5598 = vpow.pop %v5597
    %v5599 = vmul.f32 %v5584, 1.442695
    %v5600 = vpow.pop %v5599
    %v5601 = vadd.f32 %v5586, 1.0
    %v5602 = vadd.f32 %v5588, 1.0
    %v5603 = vadd.f32 %v5590, 1.0
    %v5604 = vadd.f32 %v5592, 1.0
    %v5605 = vadd.f32 %v5594, 1.0
    %v5606 = vadd.f32 %v5596, 1.0
    %v5607 = vadd.f32 %v5598, 1.0
    %v5608 = vadd.f32 %v5600, 1.0
    %v5609 = vrcp.pop %v5601
    %v5610 = vmul.f32 1.0, %v5609
    %v5611 = vrcp.pop %v5602
    %v5612 = vmul.f32 1.0, %v5611
    %v5613 = vrcp.pop %v5603
    %v5614 = vmul.f32 1.0, %v5613
    %v5615 = vrcp.pop %v5604
    %v5616 = vmul.f32 1.0, %v5615
    %v5617 = vrcp.pop %v5605
    %v5618 = vmul.f32 1.0, %v5617
    %v5619 = vrcp.pop %v5606
    %v5620 = vmul.f32 1.0, %v5619
    %v5621 = vrcp.pop %v5607
    %v5622 = vmul.f32 1.0, %v5621
    %v5623 = vrcp.pop %v5608
    %v5624 = vmul.f32 1.0, %v5623
    %v5633 = vcombine.high %v5562, %v5562
    %v5635 = vunpack.c.l.s4 1966171168
    %v5636 = vunpack.c.0.s8 %v5635
    %v5637 = vlaneseq
    %v5638 = vshrl.u32 %v5637, 7
    %v5639 = vsub.s32 %v5636, %v5638
    %v5640 = vrot.slane %v5562, %v5639
    %v5642 = vunpack.c.l.s4 1966171168
    %v5643 = vunpack.c.0.s8 %v5642
    %v5644 = vlaneseq
    %v5645 = vshrl.u32 %v5644, 7
    %v5646 = vsub.s32 %v5643, %v5645
    %v5647 = vrot.slane %v5633, %v5646
    %v5648 = vcombine.high %v5640, %v5640
    %v5649 = vcombine.high %v5647, %v5647
    %v5651 = vunpack.c.l.s4 1966171168
    %v5652 = vunpack.c.0.s8 %v5651
    %v5653 = vlaneseq
    %v5654 = vshrl.u32 %v5653, 7
    %v5655 = vsub.s32 %v5652, %v5654
    %v5656 = vrot.slane %v5640, %v5655
    %v5658 = vunpack.c.l.s4 1966171168
    %v5659 = vunpack.c.0.s8 %v5658
    %v5660 = vlaneseq
    %v5661 = vshrl.u32 %v5660, 7
    %v5662 = vsub.s32 %v5659, %v5661
    %v5663 = vrot.slane %v5647, %v5662
    %v5665 = vunpack.c.l.s4 1966171168
    %v5666 = vunpack.c.0.s8 %v5665
    %v5667 = vlaneseq
    %v5668 = vshrl.u32 %v5667, 7
    %v5669 = vsub.s32 %v5666, %v5668
    %v5670 = vrot.slane %v5648, %v5669
    %v5672 = vunpack.c.l.s4 1966171168
    %v5673 = vunpack.c.0.s8 %v5672
    %v5674 = vlaneseq
    %v5675 = vshrl.u32 %v5674, 7
    %v5676 = vsub.s32 %v5673, %v5675
    %v5677 = vrot.slane %v5649, %v5676
    %v5678 = vcombine.high %v5656, %v5656
    %v5679 = vcombine.high %v5663, %v5663
    %v5680 = vcombine.high %v5670, %v5670
    %v5681 = vcombine.high %v5677, %v5677
    %v5682 = vcombine.high %v5564, %v5564
    %v5684 = vunpack.c.l.s4 1966171168
    %v5685 = vunpack.c.0.s8 %v5684
    %v5686 = vlaneseq
    %v5687 = vshrl.u32 %v5686, 7
    %v5688 = vsub.s32 %v5685, %v5687
    %v5689 = vrot.slane %v5564, %v5688
    %v5691 = vunpack.c.l.s4 1966171168
    %v5692 = vunpack.c.0.s8 %v5691
    %v5693 = vlaneseq
    %v5694 = vshrl.u32 %v5693, 7
    %v5695 = vsub.s32 %v5692, %v5694
    %v5696 = vrot.slane %v5682, %v5695
    %v5697 = vcombine.high %v5689, %v5689
    %v5698 = vcombine.high %v5696, %v5696
    %v5700 = vunpack.c.l.s4 1966171168
    %v5701 = vunpack.c.0.s8 %v5700
    %v5702 = vlaneseq
    %v5703 = vshrl.u32 %v5702, 7
    %v5704 = vsub.s32 %v5701, %v5703
    %v5705 = vrot.slane %v5689, %v5704
    %v5707 = vunpack.c.l.s4 1966171168
    %v5708 = vunpack.c.0.s8 %v5707
    %v5709 = vlaneseq
    %v5710 = vshrl.u32 %v5709, 7
    %v5711 = vsub.s32 %v5708, %v5710
    %v5712 = vrot.slane %v5696, %v5711
    %v5714 = vunpack.c.l.s4 1966171168
    %v5715 = vunpack.c.0.s8 %v5714
    %v5716 = vlaneseq
    %v5717 = vshrl.u32 %v5716, 7
    %v5718 = vsub.s32 %v5715, %v5717
    %v5719 = vrot.slane %v5697, %v5718
    %v5721 = vunpack.c.l.s4 1966171168
    %v5722 = vunpack.c.0.s8 %v5721
    %v5723 = vlaneseq
    %v5724 = vshrl.u32 %v5723, 7
    %v5725 = vsub.s32 %v5722, %v5724
    %v5726 = vrot.slane %v5698, %v5725
    %v5727 = vcombine.high %v5705, %v5705
    %v5728 = vcombine.high %v5712, %v5712
    %v5729 = vcombine.high %v5719, %v5719
    %v5730 = vcombine.high %v5726, %v5726
    %v5731 = vcombine.high %v5566, %v5566
    %v5733 = vunpack.c.l.s4 1966171168
    %v5734 = vunpack.c.0.s8 %v5733
    %v5735 = vlaneseq
    %v5736 = vshrl.u32 %v5735, 7
    %v5737 = vsub.s32 %v5734, %v5736
    %v5738 = vrot.slane %v5566, %v5737
    %v5740 = vunpack.c.l.s4 1966171168
    %v5741 = vunpack.c.0.s8 %v5740
    %v5742 = vlaneseq
    %v5743 = vshrl.u32 %v5742, 7
    %v5744 = vsub.s32 %v5741, %v5743
    %v5745 = vrot.slane %v5731, %v5744
    %v5746 = vcombine.high %v5738, %v5738
    %v5747 = vcombine.high %v5745, %v5745
    %v5749 = vunpack.c.l.s4 1966171168
    %v5750 = vunpack.c.0.s8 %v5749
    %v5751 = vlaneseq
    %v5752 = vshrl.u32 %v5751, 7
    %v5753 = vsub.s32 %v5750, %v5752
    %v5754 = vrot.slane %v5738, %v5753
    %v5756 = vunpack.c.l.s4 1966171168
    %v5757 = vunpack.c.0.s8 %v5756
    %v5758 = vlaneseq
    %v5759 = vshrl.u32 %v5758, 7
    %v5760 = vsub.s32 %v5757, %v5759
    %v5761 = vrot.slane %v5745, %v5760
    %v5763 = vunpack.c.l.s4 1966171168
    %v5764 = vunpack.c.0.s8 %v5763
    %v5765 = vlaneseq
    %v5766 = vshrl.u32 %v5765, 7
    %v5767 = vsub.s32 %v5764, %v5766
    %v5768 = vrot.slane %v5746, %v5767
    %v5770 = vunpack.c.l.s4 1966171168
    %v5771 = vunpack.c.0.s8 %v5770
    %v5772 = vlaneseq
    %v5773 = vshrl.u32 %v5772, 7
    %v5774 = vsub.s32 %v5771, %v5773
    %v5775 = vrot.slane %v5747, %v5774
    %v5776 = vcombine.high %v5754, %v5754
    %v5777 = vcombine.high %v5761, %v5761
    %v5778 = vcombine.high %v5768, %v5768
    %v5779 = vcombine.high %v5775, %v5775
    %v5780 = vcombine.high %v5568, %v5568
    %v5782 = vunpack.c.l.s4 1966171168
    %v5783 = vunpack.c.0.s8 %v5782
    %v5784 = vlaneseq
    %v5785 = vshrl.u32 %v5784, 7
    %v5786 = vsub.s32 %v5783, %v5785
    %v5787 = vrot.slane %v5568, %v5786
    %v5789 = vunpack.c.l.s4 1966171168
    %v5790 = vunpack.c.0.s8 %v5789
    %v5791 = vlaneseq
    %v5792 = vshrl.u32 %v5791, 7
    %v5793 = vsub.s32 %v5790, %v5792
    %v5794 = vrot.slane %v5780, %v5793
    %v5795 = vcombine.high %v5787, %v5787
    %v5796 = vcombine.high %v5794, %v5794
    %v5798 = vunpack.c.l.s4 1966171168
    %v5799 = vunpack.c.0.s8 %v5798
    %v5800 = vlaneseq
    %v5801 = vshrl.u32 %v5800, 7
    %v5802 = vsub.s32 %v5799, %v5801
    %v5803 = vrot.slane %v5787, %v5802
    %v5805 = vunpack.c.l.s4 1966171168
    %v5806 = vunpack.c.0.s8 %v5805
    %v5807 = vlaneseq
    %v5808 = vshrl.u32 %v5807, 7
    %v5809 = vsub.s32 %v5806, %v5808
    %v5810 = vrot.slane %v5794, %v5809
    %v5812 = vunpack.c.l.s4 1966171168
    %v5813 = vunpack.c.0.s8 %v5812
    %v5814 = vlaneseq
    %v5815 = vshrl.u32 %v5814, 7
    %v5816 = vsub.s32 %v5813, %v5815
    %v5817 = vrot.slane %v5795, %v5816
    %v5819 = vunpack.c.l.s4 1966171168
    %v5820 = vunpack.c.0.s8 %v5819
    %v5821 = vlaneseq
    %v5822 = vshrl.u32 %v5821, 7
    %v5823 = vsub.s32 %v5820, %v5822
    %v5824 = vrot.slane %v5796, %v5823
    %v5825 = vcombine.high %v5803, %v5803
    %v5826 = vcombine.high %v5810, %v5810
    %v5827 = vcombine.high %v5817, %v5817
    %v5828 = vcombine.high %v5824, %v5824
    %v5829 = vcombine.high %v5570, %v5570
    %v5831 = vunpack.c.l.s4 1966171168
    %v5832 = vunpack.c.0.s8 %v5831
    %v5833 = vlaneseq
    %v5834 = vshrl.u32 %v5833, 7
    %v5835 = vsub.s32 %v5832, %v5834
    %v5836 = vrot.slane %v5570, %v5835
    %v5838 = vunpack.c.l.s4 1966171168
    %v5839 = vunpack.c.0.s8 %v5838
    %v5840 = vlaneseq
    %v5841 = vshrl.u32 %v5840, 7
    %v5842 = vsub.s32 %v5839, %v5841
    %v5843 = vrot.slane %v5829, %v5842
    %v5844 = vcombine.high %v5836, %v5836
    %v5845 = vcombine.high %v5843, %v5843
    %v5847 = vunpack.c.l.s4 1966171168
    %v5848 = vunpack.c.0.s8 %v5847
    %v5849 = vlaneseq
    %v5850 = vshrl.u32 %v5849, 7
    %v5851 = vsub.s32 %v5848, %v5850
    %v5852 = vrot.slane %v5836, %v5851
    %v5854 = vunpack.c.l.s4 1966171168
    %v5855 = vunpack.c.0.s8 %v5854
    %v5856 = vlaneseq
    %v5857 = vshrl.u32 %v5856, 7
    %v5858 = vsub.s32 %v5855, %v5857
    %v5859 = vrot.slane %v5843, %v5858
    %v5861 = vunpack.c.l.s4 1966171168
    %v5862 = vunpack.c.0.s8 %v5861
    %v5863 = vlaneseq
    %v5864 = vshrl.u32 %v5863, 7
    %v5865 = vsub.s32 %v5862, %v5864
    %v5866 = vrot.slane %v5844, %v5865
    %v5868 = vunpack.c.l.s4 1966171168
    %v5869 = vunpack.c.0.s8 %v5868
    %v5870 = vlaneseq
    %v5871 = vshrl.u32 %v5870, 7
    %v5872 = vsub.s32 %v5869, %v5871
    %v5873 = vrot.slane %v5845, %v5872
    %v5874 = vcombine.high %v5852, %v5852
    %v5875 = vcombine.high %v5859, %v5859
    %v5876 = vcombine.high %v5866, %v5866
    %v5877 = vcombine.high %v5873, %v5873
    %v5878 = vcombine.high %v5572, %v5572
    %v5880 = vunpack.c.l.s4 1966171168
    %v5881 = vunpack.c.0.s8 %v5880
    %v5882 = vlaneseq
    %v5883 = vshrl.u32 %v5882, 7
    %v5884 = vsub.s32 %v5881, %v5883
    %v5885 = vrot.slane %v5572, %v5884
    %v5887 = vunpack.c.l.s4 1966171168
    %v5888 = vunpack.c.0.s8 %v5887
    %v5889 = vlaneseq
    %v5890 = vshrl.u32 %v5889, 7
    %v5891 = vsub.s32 %v5888, %v5890
    %v5892 = vrot.slane %v5878, %v5891
    %v5893 = vcombine.high %v5885, %v5885
    %v5894 = vcombine.high %v5892, %v5892
    %v5896 = vunpack.c.l.s4 1966171168
    %v5897 = vunpack.c.0.s8 %v5896
    %v5898 = vlaneseq
    %v5899 = vshrl.u32 %v5898, 7
    %v5900 = vsub.s32 %v5897, %v5899
    %v5901 = vrot.slane %v5885, %v5900
    %v5903 = vunpack.c.l.s4 1966171168
    %v5904 = vunpack.c.0.s8 %v5903
    %v5905 = vlaneseq
    %v5906 = vshrl.u32 %v5905, 7
    %v5907 = vsub.s32 %v5904, %v5906
    %v5908 = vrot.slane %v5892, %v5907
    %v5910 = vunpack.c.l.s4 1966171168
    %v5911 = vunpack.c.0.s8 %v5910
    %v5912 = vlaneseq
    %v5913 = vshrl.u32 %v5912, 7
    %v5914 = vsub.s32 %v5911, %v5913
    %v5915 = vrot.slane %v5893, %v5914
    %v5917 = vunpack.c.l.s4 1966171168
    %v5918 = vunpack.c.0.s8 %v5917
    %v5919 = vlaneseq
    %v5920 = vshrl.u32 %v5919, 7
    %v5921 = vsub.s32 %v5918, %v5920
    %v5922 = vrot.slane %v5894, %v5921
    %v5923 = vcombine.high %v5901, %v5901
    %v5924 = vcombine.high %v5908, %v5908
    %v5925 = vcombine.high %v5915, %v5915
    %v5926 = vcombine.high %v5922, %v5922
    %v5927 = vcombine.high %v5574, %v5574
    %v5929 = vunpack.c.l.s4 1966171168
    %v5930 = vunpack.c.0.s8 %v5929
    %v5931 = vlaneseq
    %v5932 = vshrl.u32 %v5931, 7
    %v5933 = vsub.s32 %v5930, %v5932
    %v5934 = vrot.slane %v5574, %v5933
    %v5936 = vunpack.c.l.s4 1966171168
    %v5937 = vunpack.c.0.s8 %v5936
    %v5938 = vlaneseq
    %v5939 = vshrl.u32 %v5938, 7
    %v5940 = vsub.s32 %v5937, %v5939
    %v5941 = vrot.slane %v5927, %v5940
    %v5942 = vcombine.high %v5934, %v5934
    %v5943 = vcombine.high %v5941, %v5941
    %v5945 = vunpack.c.l.s4 1966171168
    %v5946 = vunpack.c.0.s8 %v5945
    %v5947 = vlaneseq
    %v5948 = vshrl.u32 %v5947, 7
    %v5949 = vsub.s32 %v5946, %v5948
    %v5950 = vrot.slane %v5934, %v5949
    %v5952 = vunpack.c.l.s4 1966171168
    %v5953 = vunpack.c.0.s8 %v5952
    %v5954 = vlaneseq
    %v5955 = vshrl.u32 %v5954, 7
    %v5956 = vsub.s32 %v5953, %v5955
    %v5957 = vrot.slane %v5941, %v5956
    %v5959 = vunpack.c.l.s4 1966171168
    %v5960 = vunpack.c.0.s8 %v5959
    %v5961 = vlaneseq
    %v5962 = vshrl.u32 %v5961, 7
    %v5963 = vsub.s32 %v5960, %v5962
    %v5964 = vrot.slane %v5942, %v5963
    %v5966 = vunpack.c.l.s4 1966171168
    %v5967 = vunpack.c.0.s8 %v5966
    %v5968 = vlaneseq
    %v5969 = vshrl.u32 %v5968, 7
    %v5970 = vsub.s32 %v5967, %v5969
    %v5971 = vrot.slane %v5943, %v5970
    %v5972 = vcombine.high %v5950, %v5950
    %v5973 = vcombine.high %v5957, %v5957
    %v5974 = vcombine.high %v5964, %v5964
    %v5975 = vcombine.high %v5971, %v5971
    %v5976 = vcombine.high %v5576, %v5576
    %v5978 = vunpack.c.l.s4 1966171168
    %v5979 = vunpack.c.0.s8 %v5978
    %v5980 = vlaneseq
    %v5981 = vshrl.u32 %v5980, 7
    %v5982 = vsub.s32 %v5979, %v5981
    %v5983 = vrot.slane %v5576, %v5982
    %v5985 = vunpack.c.l.s4 1966171168
    %v5986 = vunpack.c.0.s8 %v5985
    %v5987 = vlaneseq
    %v5988 = vshrl.u32 %v5987, 7
    %v5989 = vsub.s32 %v5986, %v5988
    %v5990 = vrot.slane %v5976, %v5989
    %v5991 = vcombine.high %v5983, %v5983
    %v5992 = vcombine.high %v5990, %v5990
    %v5994 = vunpack.c.l.s4 1966171168
    %v5995 = vunpack.c.0.s8 %v5994
    %v5996 = vlaneseq
    %v5997 = vshrl.u32 %v5996, 7
    %v5998 = vsub.s32 %v5995, %v5997
    %v5999 = vrot.slane %v5983, %v5998
    %v6001 = vunpack.c.l.s4 1966171168
    %v6002 = vunpack.c.0.s8 %v6001
    %v6003 = vlaneseq
    %v6004 = vshrl.u32 %v6003, 7
    %v6005 = vsub.s32 %v6002, %v6004
    %v6006 = vrot.slane %v5990, %v6005
    %v6008 = vunpack.c.l.s4 1966171168
    %v6009 = vunpack.c.0.s8 %v6008
    %v6010 = vlaneseq
    %v6011 = vshrl.u32 %v6010, 7
    %v6012 = vsub.s32 %v6009, %v6011
    %v6013 = vrot.slane %v5991, %v6012
    %v6015 = vunpack.c.l.s4 1966171168
    %v6016 = vunpack.c.0.s8 %v6015
    %v6017 = vlaneseq
    %v6018 = vshrl.u32 %v6017, 7
    %v6019 = vsub.s32 %v6016, %v6018
    %v6020 = vrot.slane %v5992, %v6019
    %v6021 = vcombine.high %v5999, %v5999
    %v6022 = vcombine.high %v6006, %v6006
    %v6023 = vcombine.high %v6013, %v6013
    %v6024 = vcombine.high %v6020, %v6020
    %v6097 = vcombine.high %v5610, %v5610
    %v6099 = vunpack.c.l.s4 1966171168
    %v6100 = vunpack.c.0.s8 %v6099
    %v6101 = vlaneseq
    %v6102 = vshrl.u32 %v6101, 7
    %v6103 = vsub.s32 %v6100, %v6102
    %v6104 = vrot.slane %v5610, %v6103
    %v6106 = vunpack.c.l.s4 1966171168
    %v6107 = vunpack.c.0.s8 %v6106
    %v6108 = vlaneseq
    %v6109 = vshrl.u32 %v6108, 7
    %v6110 = vsub.s32 %v6107, %v6109
    %v6111 = vrot.slane %v6097, %v6110
    %v6112 = vcombine.high %v6104, %v6104
    %v6113 = vcombine.high %v6111, %v6111
    %v6115 = vunpack.c.l.s4 1966171168
    %v6116 = vunpack.c.0.s8 %v6115
    %v6117 = vlaneseq
    %v6118 = vshrl.u32 %v6117, 7
    %v6119 = vsub.s32 %v6116, %v6118
    %v6120 = vrot.slane %v6104, %v6119
    %v6122 = vunpack.c.l.s4 1966171168
    %v6123 = vunpack.c.0.s8 %v6122
    %v6124 = vlaneseq
    %v6125 = vshrl.u32 %v6124, 7
    %v6126 = vsub.s32 %v6123, %v6125
    %v6127 = vrot.slane %v6111, %v6126
    %v6129 = vunpack.c.l.s4 1966171168
    %v6130 = vunpack.c.0.s8 %v6129
    %v6131 = vlaneseq
    %v6132 = vshrl.u32 %v6131, 7
    %v6133 = vsub.s32 %v6130, %v6132
    %v6134 = vrot.slane %v6112, %v6133
    %v6136 = vunpack.c.l.s4 1966171168
    %v6137 = vunpack.c.0.s8 %v6136
    %v6138 = vlaneseq
    %v6139 = vshrl.u32 %v6138, 7
    %v6140 = vsub.s32 %v6137, %v6139
    %v6141 = vrot.slane %v6113, %v6140
    %v6142 = vcombine.high %v6120, %v6120
    %v6143 = vcombine.high %v6127, %v6127
    %v6144 = vcombine.high %v6134, %v6134
    %v6145 = vcombine.high %v6141, %v6141
    %v6146 = vcombine.high %v5612, %v5612
    %v6148 = vunpack.c.l.s4 1966171168
    %v6149 = vunpack.c.0.s8 %v6148
    %v6150 = vlaneseq
    %v6151 = vshrl.u32 %v6150, 7
    %v6152 = vsub.s32 %v6149, %v6151
    %v6153 = vrot.slane %v5612, %v6152
    %v6155 = vunpack.c.l.s4 1966171168
    %v6156 = vunpack.c.0.s8 %v6155
    %v6157 = vlaneseq
    %v6158 = vshrl.u32 %v6157, 7
    %v6159 = vsub.s32 %v6156, %v6158
    %v6160 = vrot.slane %v6146, %v6159
    %v6161 = vcombine.high %v6153, %v6153
    %v6162 = vcombine.high %v6160, %v6160
    %v6164 = vunpack.c.l.s4 1966171168
    %v6165 = vunpack.c.0.s8 %v6164
    %v6166 = vlaneseq
    %v6167 = vshrl.u32 %v6166, 7
    %v6168 = vsub.s32 %v6165, %v6167
    %v6169 = vrot.slane %v6153, %v6168
    %v6171 = vunpack.c.l.s4 1966171168
    %v6172 = vunpack.c.0.s8 %v6171
    %v6173 = vlaneseq
    %v6174 = vshrl.u32 %v6173, 7
    %v6175 = vsub.s32 %v6172, %v6174
    %v6176 = vrot.slane %v6160, %v6175
    %v6178 = vunpack.c.l.s4 1966171168
    %v6179 = vunpack.c.0.s8 %v6178
    %v6180 = vlaneseq
    %v6181 = vshrl.u32 %v6180, 7
    %v6182 = vsub.s32 %v6179, %v6181
    %v6183 = vrot.slane %v6161, %v6182
    %v6185 = vunpack.c.l.s4 1966171168
    %v6186 = vunpack.c.0.s8 %v6185
    %v6187 = vlaneseq
    %v6188 = vshrl.u32 %v6187, 7
    %v6189 = vsub.s32 %v6186, %v6188
    %v6190 = vrot.slane %v6162, %v6189
    %v6191 = vcombine.high %v6169, %v6169
    %v6192 = vcombine.high %v6176, %v6176
    %v6193 = vcombine.high %v6183, %v6183
    %v6194 = vcombine.high %v6190, %v6190
    %v6195 = vcombine.high %v5614, %v5614
    %v6197 = vunpack.c.l.s4 1966171168
    %v6198 = vunpack.c.0.s8 %v6197
    %v6199 = vlaneseq
    %v6200 = vshrl.u32 %v6199, 7
    %v6201 = vsub.s32 %v6198, %v6200
    %v6202 = vrot.slane %v5614, %v6201
    %v6204 = vunpack.c.l.s4 1966171168
    %v6205 = vunpack.c.0.s8 %v6204
    %v6206 = vlaneseq
    %v6207 = vshrl.u32 %v6206, 7
    %v6208 = vsub.s32 %v6205, %v6207
    %v6209 = vrot.slane %v6195, %v6208
    %v6210 = vcombine.high %v6202, %v6202
    %v6211 = vcombine.high %v6209, %v6209
    %v6213 = vunpack.c.l.s4 1966171168
    %v6214 = vunpack.c.0.s8 %v6213
    %v6215 = vlaneseq
    %v6216 = vshrl.u32 %v6215, 7
    %v6217 = vsub.s32 %v6214, %v6216
    %v6218 = vrot.slane %v6202, %v6217
    %v6220 = vunpack.c.l.s4 1966171168
    %v6221 = vunpack.c.0.s8 %v6220
    %v6222 = vlaneseq
    %v6223 = vshrl.u32 %v6222, 7
    %v6224 = vsub.s32 %v6221, %v6223
    %v6225 = vrot.slane %v6209, %v6224
    %v6227 = vunpack.c.l.s4 1966171168
    %v6228 = vunpack.c.0.s8 %v6227
    %v6229 = vlaneseq
    %v6230 = vshrl.u32 %v6229, 7
    %v6231 = vsub.s32 %v6228, %v6230
    %v6232 = vrot.slane %v6210, %v6231
    %v6234 = vunpack.c.l.s4 1966171168
    %v6235 = vunpack.c.0.s8 %v6234
    %v6236 = vlaneseq
    %v6237 = vshrl.u32 %v6236, 7
    %v6238 = vsub.s32 %v6235, %v6237
    %v6239 = vrot.slane %v6211, %v6238
    %v6240 = vcombine.high %v6218, %v6218
    %v6241 = vcombine.high %v6225, %v6225
    %v6242 = vcombine.high %v6232, %v6232
    %v6243 = vcombine.high %v6239, %v6239
    %v6244 = vcombine.high %v5616, %v5616
    %v6246 = vunpack.c.l.s4 1966171168
    %v6247 = vunpack.c.0.s8 %v6246
    %v6248 = vlaneseq
    %v6249 = vshrl.u32 %v6248, 7
    %v6250 = vsub.s32 %v6247, %v6249
    %v6251 = vrot.slane %v5616, %v6250
    %v6253 = vunpack.c.l.s4 1966171168
    %v6254 = vunpack.c.0.s8 %v6253
    %v6255 = vlaneseq
    %v6256 = vshrl.u32 %v6255, 7
    %v6257 = vsub.s32 %v6254, %v6256
    %v6258 = vrot.slane %v6244, %v6257
    %v6259 = vcombine.high %v6251, %v6251
    %v6260 = vcombine.high %v6258, %v6258
    %v6262 = vunpack.c.l.s4 1966171168
    %v6263 = vunpack.c.0.s8 %v6262
    %v6264 = vlaneseq
    %v6265 = vshrl.u32 %v6264, 7
    %v6266 = vsub.s32 %v6263, %v6265
    %v6267 = vrot.slane %v6251, %v6266
    %v6269 = vunpack.c.l.s4 1966171168
    %v6270 = vunpack.c.0.s8 %v6269
    %v6271 = vlaneseq
    %v6272 = vshrl.u32 %v6271, 7
    %v6273 = vsub.s32 %v6270, %v6272
    %v6274 = vrot.slane %v6258, %v6273
    %v6276 = vunpack.c.l.s4 1966171168
    %v6277 = vunpack.c.0.s8 %v6276
    %v6278 = vlaneseq
    %v6279 = vshrl.u32 %v6278, 7
    %v6280 = vsub.s32 %v6277, %v6279
    %v6281 = vrot.slane %v6259, %v6280
    %v6283 = vunpack.c.l.s4 1966171168
    %v6284 = vunpack.c.0.s8 %v6283
    %v6285 = vlaneseq
    %v6286 = vshrl.u32 %v6285, 7
    %v6287 = vsub.s32 %v6284, %v6286
    %v6288 = vrot.slane %v6260, %v6287
    %v6289 = vcombine.high %v6267, %v6267
    %v6290 = vcombine.high %v6274, %v6274
    %v6291 = vcombine.high %v6281, %v6281
    %v6292 = vcombine.high %v6288, %v6288
    %v6293 = vcombine.high %v5618, %v5618
    %v6295 = vunpack.c.l.s4 1966171168
    %v6296 = vunpack.c.0.s8 %v6295
    %v6297 = vlaneseq
    %v6298 = vshrl.u32 %v6297, 7
    %v6299 = vsub.s32 %v6296, %v6298
    %v6300 = vrot.slane %v5618, %v6299
    %v6302 = vunpack.c.l.s4 1966171168
    %v6303 = vunpack.c.0.s8 %v6302
    %v6304 = vlaneseq
    %v6305 = vshrl.u32 %v6304, 7
    %v6306 = vsub.s32 %v6303, %v6305
    %v6307 = vrot.slane %v6293, %v6306
    %v6308 = vcombine.high %v6300, %v6300
    %v6309 = vcombine.high %v6307, %v6307
    %v6311 = vunpack.c.l.s4 1966171168
    %v6312 = vunpack.c.0.s8 %v6311
    %v6313 = vlaneseq
    %v6314 = vshrl.u32 %v6313, 7
    %v6315 = vsub.s32 %v6312, %v6314
    %v6316 = vrot.slane %v6300, %v6315
    %v6318 = vunpack.c.l.s4 1966171168
    %v6319 = vunpack.c.0.s8 %v6318
    %v6320 = vlaneseq
    %v6321 = vshrl.u32 %v6320, 7
    %v6322 = vsub.s32 %v6319, %v6321
    %v6323 = vrot.slane %v6307, %v6322
    %v6325 = vunpack.c.l.s4 1966171168
    %v6326 = vunpack.c.0.s8 %v6325
    %v6327 = vlaneseq
    %v6328 = vshrl.u32 %v6327, 7
    %v6329 = vsub.s32 %v6326, %v6328
    %v6330 = vrot.slane %v6308, %v6329
    %v6332 = vunpack.c.l.s4 1966171168
    %v6333 = vunpack.c.0.s8 %v6332
    %v6334 = vlaneseq
    %v6335 = vshrl.u32 %v6334, 7
    %v6336 = vsub.s32 %v6333, %v6335
    %v6337 = vrot.slane %v6309, %v6336
    %v6338 = vcombine.high %v6316, %v6316
    %v6339 = vcombine.high %v6323, %v6323
    %v6340 = vcombine.high %v6330, %v6330
    %v6341 = vcombine.high %v6337, %v6337
    %v6342 = vcombine.high %v5620, %v5620
    %v6344 = vunpack.c.l.s4 1966171168
    %v6345 = vunpack.c.0.s8 %v6344
    %v6346 = vlaneseq
    %v6347 = vshrl.u32 %v6346, 7
    %v6348 = vsub.s32 %v6345, %v6347
    %v6349 = vrot.slane %v5620, %v6348
    %v6351 = vunpack.c.l.s4 1966171168
    %v6352 = vunpack.c.0.s8 %v6351
    %v6353 = vlaneseq
    %v6354 = vshrl.u32 %v6353, 7
    %v6355 = vsub.s32 %v6352, %v6354
    %v6356 = vrot.slane %v6342, %v6355
    %v6357 = vcombine.high %v6349, %v6349
    %v6358 = vcombine.high %v6356, %v6356
    %v6360 = vunpack.c.l.s4 1966171168
    %v6361 = vunpack.c.0.s8 %v6360
    %v6362 = vlaneseq
    %v6363 = vshrl.u32 %v6362, 7
    %v6364 = vsub.s32 %v6361, %v6363
    %v6365 = vrot.slane %v6349, %v6364
    %v6367 = vunpack.c.l.s4 1966171168
    %v6368 = vunpack.c.0.s8 %v6367
    %v6369 = vlaneseq
    %v6370 = vshrl.u32 %v6369, 7
    %v6371 = vsub.s32 %v6368, %v6370
    %v6372 = vrot.slane %v6356, %v6371
    %v6374 = vunpack.c.l.s4 1966171168
    %v6375 = vunpack.c.0.s8 %v6374
    %v6376 = vlaneseq
    %v6377 = vshrl.u32 %v6376, 7
    %v6378 = vsub.s32 %v6375, %v6377
    %v6379 = vrot.slane %v6357, %v6378
    %v6381 = vunpack.c.l.s4 1966171168
    %v6382 = vunpack.c.0.s8 %v6381
    %v6383 = vlaneseq
    %v6384 = vshrl.u32 %v6383, 7
    %v6385 = vsub.s32 %v6382, %v6384
    %v6386 = vrot.slane %v6358, %v6385
    %v6387 = vcombine.high %v6365, %v6365
    %v6388 = vcombine.high %v6372, %v6372
    %v6389 = vcombine.high %v6379, %v6379
    %v6390 = vcombine.high %v6386, %v6386
    %v6391 = vcombine.high %v5622, %v5622
    %v6393 = vunpack.c.l.s4 1966171168
    %v6394 = vunpack.c.0.s8 %v6393
    %v6395 = vlaneseq
    %v6396 = vshrl.u32 %v6395, 7
    %v6397 = vsub.s32 %v6394, %v6396
    %v6398 = vrot.slane %v5622, %v6397
    %v6400 = vunpack.c.l.s4 1966171168
    %v6401 = vunpack.c.0.s8 %v6400
    %v6402 = vlaneseq
    %v6403 = vshrl.u32 %v6402, 7
    %v6404 = vsub.s32 %v6401, %v6403
    %v6405 = vrot.slane %v6391, %v6404
    %v6406 = vcombine.high %v6398, %v6398
    %v6407 = vcombine.high %v6405, %v6405
    %v6409 = vunpack.c.l.s4 1966171168
    %v6410 = vunpack.c.0.s8 %v6409
    %v6411 = vlaneseq
    %v6412 = vshrl.u32 %v6411, 7
    %v6413 = vsub.s32 %v6410, %v6412
    %v6414 = vrot.slane %v6398, %v6413
    %v6416 = vunpack.c.l.s4 1966171168
    %v6417 = vunpack.c.0.s8 %v6416
    %v6418 = vlaneseq
    %v6419 = vshrl.u32 %v6418, 7
    %v6420 = vsub.s32 %v6417, %v6419
    %v6421 = vrot.slane %v6405, %v6420
    %v6423 = vunpack.c.l.s4 1966171168
    %v6424 = vunpack.c.0.s8 %v6423
    %v6425 = vlaneseq
    %v6426 = vshrl.u32 %v6425, 7
    %v6427 = vsub.s32 %v6424, %v6426
    %v6428 = vrot.slane %v6406, %v6427
    %v6430 = vunpack.c.l.s4 1966171168
    %v6431 = vunpack.c.0.s8 %v6430
    %v6432 = vlaneseq
    %v6433 = vshrl.u32 %v6432, 7
    %v6434 = vsub.s32 %v6431, %v6433
    %v6435 = vrot.slane %v6407, %v6434
    %v6436 = vcombine.high %v6414, %v6414
    %v6437 = vcombine.high %v6421, %v6421
    %v6438 = vcombine.high %v6428, %v6428
    %v6439 = vcombine.high %v6435, %v6435
    %v6440 = vcombine.high %v5624, %v5624
    %v6442 = vunpack.c.l.s4 1966171168
    %v6443 = vunpack.c.0.s8 %v6442
    %v6444 = vlaneseq
    %v6445 = vshrl.u32 %v6444, 7
    %v6446 = vsub.s32 %v6443, %v6445
    %v6447 = vrot.slane %v5624, %v6446
    %v6449 = vunpack.c.l.s4 1966171168
    %v6450 = vunpack.c.0.s8 %v6449
    %v6451 = vlaneseq
    %v6452 = vshrl.u32 %v6451, 7
    %v6453 = vsub.s32 %v6450, %v6452
    %v6454 = vrot.slane %v6440, %v6453
    %v6455 = vcombine.high %v6447, %v6447
    %v6456 = vcombine.high %v6454, %v6454
    %v6458 = vunpack.c.l.s4 1966171168
    %v6459 = vunpack.c.0.s8 %v6458
    %v6460 = vlaneseq
    %v6461 = vshrl.u32 %v6460, 7
    %v6462 = vsub.s32 %v6459, %v6461
    %v6463 = vrot.slane %v6447, %v6462
    %v6465 = vunpack.c.l.s4 1966171168
    %v6466 = vunpack.c.0.s8 %v6465
    %v6467 = vlaneseq
    %v6468 = vshrl.u32 %v6467, 7
    %v6469 = vsub.s32 %v6466, %v6468
    %v6470 = vrot.slane %v6454, %v6469
    %v6472 = vunpack.c.l.s4 1966171168
    %v6473 = vunpack.c.0.s8 %v6472
    %v6474 = vlaneseq
    %v6475 = vshrl.u32 %v6474, 7
    %v6476 = vsub.s32 %v6473, %v6475
    %v6477 = vrot.slane %v6455, %v6476
    %v6479 = vunpack.c.l.s4 1966171168
    %v6480 = vunpack.c.0.s8 %v6479
    %v6481 = vlaneseq
    %v6482 = vshrl.u32 %v6481, 7
    %v6483 = vsub.s32 %v6480, %v6482
    %v6484 = vrot.slane %v6456, %v6483
    %v6485 = vcombine.high %v6463, %v6463
    %v6486 = vcombine.high %v6470, %v6470
    %v6487 = vcombine.high %v6477, %v6477
    %v6488 = vcombine.high %v6484, %v6484
    %v6489 = vlaneseq
    %v6490 = vshrl.u32 %v6489, 7
    %v6491 = vsub.s32 0, %v6490
    %v6492 = vrot.slane %v6120, %v6491
    %v6493 = vlaneseq
    %v6494 = vshrl.u32 %v6493, 7
    %v6495 = vsub.s32 0, %v6494
    %v6496 = vrot.slane %v6134, %v6495
    %v6497 = vlaneseq
    %v6498 = vshrl.u32 %v6497, 7
    %v6499 = vsub.s32 0, %v6498
    %v6500 = vrot.slane %v6142, %v6499
    %v6501 = vlaneseq
    %v6502 = vshrl.u32 %v6501, 7
    %v6503 = vsub.s32 0, %v6502
    %v6504 = vrot.slane %v6144, %v6503
    %v6505 = vlaneseq
    %v6506 = vshrl.u32 %v6505, 7
    %v6507 = vsub.s32 0, %v6506
    %v6508 = vrot.slane %v6127, %v6507
    %v6509 = vlaneseq
    %v6510 = vshrl.u32 %v6509, 7
    %v6511 = vsub.s32 0, %v6510
    %v6512 = vrot.slane %v6141, %v6511
    %v6513 = vlaneseq
    %v6514 = vshrl.u32 %v6513, 7
    %v6515 = vsub.s32 0, %v6514
    %v6516 = vrot.slane %v6143, %v6515
    %v6517 = vlaneseq
    %v6518 = vshrl.u32 %v6517, 7
    %v6519 = vsub.s32 0, %v6518
    %v6520 = vrot.slane %v6145, %v6519
    %v6521 = vlaneseq
    %v6522 = vshrl.u32 %v6521, 7
    %v6523 = vsub.s32 0, %v6522
    %v6524 = vrot.slane %v6169, %v6523
    %v6525 = vlaneseq
    %v6526 = vshrl.u32 %v6525, 7
    %v6527 = vsub.s32 0, %v6526
    %v6528 = vrot.slane %v6183, %v6527
    %v6529 = vlaneseq
    %v6530 = vshrl.u32 %v6529, 7
    %v6531 = vsub.s32 0, %v6530
    %v6532 = vrot.slane %v6191, %v6531
    %v6533 = vlaneseq
    %v6534 = vshrl.u32 %v6533, 7
    %v6535 = vsub.s32 0, %v6534
    %v6536 = vrot.slane %v6193, %v6535
    %v6537 = vlaneseq
    %v6538 = vshrl.u32 %v6537, 7
    %v6539 = vsub.s32 0, %v6538
    %v6540 = vrot.slane %v6176, %v6539
    %v6541 = vlaneseq
    %v6542 = vshrl.u32 %v6541, 7
    %v6543 = vsub.s32 0, %v6542
    %v6544 = vrot.slane %v6190, %v6543
    %v6545 = vlaneseq
    %v6546 = vshrl.u32 %v6545, 7
    %v6547 = vsub.s32 0, %v6546
    %v6548 = vrot.slane %v6192, %v6547
    %v6549 = vlaneseq
    %v6550 = vshrl.u32 %v6549, 7
    %v6551 = vsub.s32 0, %v6550
    %v6552 = vrot.slane %v6194, %v6551
    %v6553 = vlaneseq
    %v6554 = vshrl.u32 %v6553, 7
    %v6555 = vsub.s32 0, %v6554
    %v6556 = vrot.slane %v6218, %v6555
    %v6557 = vlaneseq
    %v6558 = vshrl.u32 %v6557, 7
    %v6559 = vsub.s32 0, %v6558
    %v6560 = vrot.slane %v6232, %v6559
    %v6561 = vlaneseq
    %v6562 = vshrl.u32 %v6561, 7
    %v6563 = vsub.s32 0, %v6562
    %v6564 = vrot.slane %v6240, %v6563
    %v6565 = vlaneseq
    %v6566 = vshrl.u32 %v6565, 7
    %v6567 = vsub.s32 0, %v6566
    %v6568 = vrot.slane %v6242, %v6567
    %v6569 = vlaneseq
    %v6570 = vshrl.u32 %v6569, 7
    %v6571 = vsub.s32 0, %v6570
    %v6572 = vrot.slane %v6225, %v6571
    %v6573 = vlaneseq
    %v6574 = vshrl.u32 %v6573, 7
    %v6575 = vsub.s32 0, %v6574
    %v6576 = vrot.slane %v6239, %v6575
    %v6577 = vlaneseq
    %v6578 = vshrl.u32 %v6577, 7
    %v6579 = vsub.s32 0, %v6578
    %v6580 = vrot.slane %v6241, %v6579
    %v6581 = vlaneseq
    %v6582 = vshrl.u32 %v6581, 7
    %v6583 = vsub.s32 0, %v6582
    %v6584 = vrot.slane %v6243, %v6583
    %v6585 = vlaneseq
    %v6586 = vshrl.u32 %v6585, 7
    %v6587 = vsub.s32 0, %v6586
    %v6588 = vrot.slane %v6267, %v6587
    %v6589 = vlaneseq
    %v6590 = vshrl.u32 %v6589, 7
    %v6591 = vsub.s32 0, %v6590
    %v6592 = vrot.slane %v6281, %v6591
    %v6593 = vlaneseq
    %v6594 = vshrl.u32 %v6593, 7
    %v6595 = vsub.s32 0, %v6594
    %v6596 = vrot.slane %v6289, %v6595
    %v6597 = vlaneseq
    %v6598 = vshrl.u32 %v6597, 7
    %v6599 = vsub.s32 0, %v6598
    %v6600 = vrot.slane %v6291, %v6599
    %v6601 = vlaneseq
    %v6602 = vshrl.u32 %v6601, 7
    %v6603 = vsub.s32 0, %v6602
    %v6604 = vrot.slane %v6274, %v6603
    %v6605 = vlaneseq
    %v6606 = vshrl.u32 %v6605, 7
    %v6607 = vsub.s32 0, %v6606
    %v6608 = vrot.slane %v6288, %v6607
    %v6609 = vlaneseq
    %v6610 = vshrl.u32 %v6609, 7
    %v6611 = vsub.s32 0, %v6610
    %v6612 = vrot.slane %v6290, %v6611
    %v6613 = vlaneseq
    %v6614 = vshrl.u32 %v6613, 7
    %v6615 = vsub.s32 0, %v6614
    %v6616 = vrot.slane %v6292, %v6615
    %v6617 = vlaneseq
    %v6618 = vshrl.u32 %v6617, 7
    %v6619 = vsub.s32 0, %v6618
    %v6620 = vrot.slane %v6316, %v6619
    %v6621 = vlaneseq
    %v6622 = vshrl.u32 %v6621, 7
    %v6623 = vsub.s32 0, %v6622
    %v6624 = vrot.slane %v6330, %v6623
    %v6625 = vlaneseq
    %v6626 = vshrl.u32 %v6625, 7
    %v6627 = vsub.s32 0, %v6626
    %v6628 = vrot.slane %v6338, %v6627
    %v6629 = vlaneseq
    %v6630 = vshrl.u32 %v6629, 7
    %v6631 = vsub.s32 0, %v6630
    %v6632 = vrot.slane %v6340, %v6631
    %v6633 = vlaneseq
    %v6634 = vshrl.u32 %v6633, 7
    %v6635 = vsub.s32 0, %v6634
    %v6636 = vrot.slane %v6323, %v6635
    %v6637 = vlaneseq
    %v6638 = vshrl.u32 %v6637, 7
    %v6639 = vsub.s32 0, %v6638
    %v6640 = vrot.slane %v6337, %v6639
    %v6641 = vlaneseq
    %v6642 = vshrl.u32 %v6641, 7
    %v6643 = vsub.s32 0, %v6642
    %v6644 = vrot.slane %v6339, %v6643
    %v6645 = vlaneseq
    %v6646 = vshrl.u32 %v6645, 7
    %v6647 = vsub.s32 0, %v6646
    %v6648 = vrot.slane %v6341, %v6647
    %v6649 = vlaneseq
    %v6650 = vshrl.u32 %v6649, 7
    %v6651 = vsub.s32 0, %v6650
    %v6652 = vrot.slane %v6365, %v6651
    %v6653 = vlaneseq
    %v6654 = vshrl.u32 %v6653, 7
    %v6655 = vsub.s32 0, %v6654
    %v6656 = vrot.slane %v6379, %v6655
    %v6657 = vlaneseq
    %v6658 = vshrl.u32 %v6657, 7
    %v6659 = vsub.s32 0, %v6658
    %v6660 = vrot.slane %v6387, %v6659
    %v6661 = vlaneseq
    %v6662 = vshrl.u32 %v6661, 7
    %v6663 = vsub.s32 0, %v6662
    %v6664 = vrot.slane %v6389, %v6663
    %v6665 = vlaneseq
    %v6666 = vshrl.u32 %v6665, 7
    %v6667 = vsub.s32 0, %v6666
    %v6668 = vrot.slane %v6372, %v6667
    %v6669 = vlaneseq
    %v6670 = vshrl.u32 %v6669, 7
    %v6671 = vsub.s32 0, %v6670
    %v6672 = vrot.slane %v6386, %v6671
    %v6673 = vlaneseq
    %v6674 = vshrl.u32 %v6673, 7
    %v6675 = vsub.s32 0, %v6674
    %v6676 = vrot.slane %v6388, %v6675
    %v6677 = vlaneseq
    %v6678 = vshrl.u32 %v6677, 7
    %v6679 = vsub.s32 0, %v6678
    %v6680 = vrot.slane %v6390, %v6679
    %v6681 = vlaneseq
    %v6682 = vshrl.u32 %v6681, 7
    %v6683 = vsub.s32 0, %v6682
    %v6684 = vrot.slane %v6414, %v6683
    %v6685 = vlaneseq
    %v6686 = vshrl.u32 %v6685, 7
    %v6687 = vsub.s32 0, %v6686
    %v6688 = vrot.slane %v6428, %v6687
    %v6689 = vlaneseq
    %v6690 = vshrl.u32 %v6689, 7
    %v6691 = vsub.s32 0, %v6690
    %v6692 = vrot.slane %v6436, %v6691
    %v6693 = vlaneseq
    %v6694 = vshrl.u32 %v6693, 7
    %v6695 = vsub.s32 0, %v6694
    %v6696 = vrot.slane %v6438, %v6695
    %v6697 = vlaneseq
    %v6698 = vshrl.u32 %v6697, 7
    %v6699 = vsub.s32 0, %v6698
    %v6700 = vrot.slane %v6421, %v6699
    %v6701 = vlaneseq
    %v6702 = vshrl.u32 %v6701, 7
    %v6703 = vsub.s32 0, %v6702
    %v6704 = vrot.slane %v6435, %v6703
    %v6705 = vlaneseq
    %v6706 = vshrl.u32 %v6705, 7
    %v6707 = vsub.s32 0, %v6706
    %v6708 = vrot.slane %v6437, %v6707
    %v6709 = vlaneseq
    %v6710 = vshrl.u32 %v6709, 7
    %v6711 = vsub.s32 0, %v6710
    %v6712 = vrot.slane %v6439, %v6711
    %v6713 = vlaneseq
    %v6714 = vshrl.u32 %v6713, 7
    %v6715 = vsub.s32 0, %v6714
    %v6716 = vrot.slane %v6463, %v6715
    %v6717 = vlaneseq
    %v6718 = vshrl.u32 %v6717, 7
    %v6719 = vsub.s32 0, %v6718
    %v6720 = vrot.slane %v6477, %v6719
    %v6721 = vlaneseq
    %v6722 = vshrl.u32 %v6721, 7
    %v6723 = vsub.s32 0, %v6722
    %v6724 = vrot.slane %v6485, %v6723
    %v6725 = vlaneseq
    %v6726 = vshrl.u32 %v6725, 7
    %v6727 = vsub.s32 0, %v6726
    %v6728 = vrot.slane %v6487, %v6727
    %v6729 = vlaneseq
    %v6730 = vshrl.u32 %v6729, 7
    %v6731 = vsub.s32 0, %v6730
    %v6732 = vrot.slane %v6470, %v6731
    %v6733 = vlaneseq
    %v6734 = vshrl.u32 %v6733, 7
    %v6735 = vsub.s32 0, %v6734
    %v6736 = vrot.slane %v6484, %v6735
    %v6737 = vlaneseq
    %v6738 = vshrl.u32 %v6737, 7
    %v6739 = vsub.s32 0, %v6738
    %v6740 = vrot.slane %v6486, %v6739
    %v6741 = vlaneseq
    %v6742 = vshrl.u32 %v6741, 7
    %v6743 = vsub.s32 0, %v6742
    %v6744 = vrot.slane %v6488, %v6743
    %v6809 = vsel %vm1764, %v5656, %v6492
    %v6810 = vsel %vm1764, %v5670, %v6496
    %v6811 = vsel %vm1764, %v5678, %v6500
    %v6812 = vsel %vm1764, %v5680, %v6504
    %v6813 = vsel %vm1764, %v5663, %v6508
    %v6814 = vsel %vm1764, %v5677, %v6512
    %v6815 = vsel %vm1764, %v5679, %v6516
    %v6816 = vsel %vm1764, %v5681, %v6520
    %v6817 = vsel %vm1764, %v5705, %v6524
    %v6818 = vsel %vm1764, %v5719, %v6528
    %v6819 = vsel %vm1764, %v5727, %v6532
    %v6820 = vsel %vm1764, %v5729, %v6536
    %v6821 = vsel %vm1764, %v5712, %v6540
    %v6822 = vsel %vm1764, %v5726, %v6544
    %v6823 = vsel %vm1764, %v5728, %v6548
    %v6824 = vsel %vm1764, %v5730, %v6552
    %v6825 = vsel %vm1764, %v5754, %v6556
    %v6826 = vsel %vm1764, %v5768, %v6560
    %v6827 = vsel %vm1764, %v5776, %v6564
    %v6828 = vsel %vm1764, %v5778, %v6568
    %v6829 = vsel %vm1764, %v5761, %v6572
    %v6830 = vsel %vm1764, %v5775, %v6576
    %v6831 = vsel %vm1764, %v5777, %v6580
    %v6832 = vsel %vm1764, %v5779, %v6584
    %v6833 = vsel %vm1764, %v5803, %v6588
    %v6834 = vsel %vm1764, %v5817, %v6592
    %v6835 = vsel %vm1764, %v5825, %v6596
    %v6836 = vsel %vm1764, %v5827, %v6600
    %v6837 = vsel %vm1764, %v5810, %v6604
    %v6838 = vsel %vm1764, %v5824, %v6608
    %v6839 = vsel %vm1764, %v5826, %v6612
    %v6840 = vsel %vm1764, %v5828, %v6616
    %v6841 = vsel %vm1764, %v5852, %v6620
    %v6842 = vsel %vm1764, %v5866, %v6624
    %v6843 = vsel %vm1764, %v5874, %v6628
    %v6844 = vsel %vm1764, %v5876, %v6632
    %v6845 = vsel %vm1764, %v5859, %v6636
    %v6846 = vsel %vm1764, %v5873, %v6640
    %v6847 = vsel %vm1764, %v5875, %v6644
    %v6848 = vsel %vm1764, %v5877, %v6648
    %v6849 = vsel %vm1764, %v5901, %v6652
    %v6850 = vsel %vm1764, %v5915, %v6656
    %v6851 = vsel %vm1764, %v5923, %v6660
    %v6852 = vsel %vm1764, %v5925, %v6664
    %v6853 = vsel %vm1764, %v5908, %v6668
    %v6854 = vsel %vm1764, %v5922, %v6672
    %v6855 = vsel %vm1764, %v5924, %v6676
    %v6856 = vsel %vm1764, %v5926, %v6680
    %v6857 = vsel %vm1764, %v5950, %v6684
    %v6858 = vsel %vm1764, %v5964, %v6688
    %v6859 = vsel %vm1764, %v5972, %v6692
    %v6860 = vsel %vm1764, %v5974, %v6696
    %v6861 = vsel %vm1764, %v5957, %v6700
    %v6862 = vsel %vm1764, %v5971, %v6704
    %v6863 = vsel %vm1764, %v5973, %v6708
    %v6864 = vsel %vm1764, %v5975, %v6712
    %v6865 = vsel %vm1764, %v5999, %v6716
    %v6866 = vsel %vm1764, %v6013, %v6720
    %v6867 = vsel %vm1764, %v6021, %v6724
    %v6868 = vsel %vm1764, %v6023, %v6728
    %v6869 = vsel %vm1764, %v6006, %v6732
    %v6870 = vsel %vm1764, %v6020, %v6736
    %v6871 = vsel %vm1764, %v6022, %v6740
    %v6872 = vsel %vm1764, %v6024, %v6744
    %v6937 = vcombine.low %v6809, %v6810
    %v6938 = vcombine.low %v6811, %v6812
    %v6940 = vunpack.c.l.s4 1983009808
    %v6941 = vunpack.c.0.s8 %v6940
    %v6942 = vlaneseq
    %v6943 = vshrl.u32 %v6942, 7
    %v6944 = vsub.s32 %v6941, %v6943
    %v6945 = vrot.slane %v6937, %v6944
    %v6947 = vunpack.c.l.s4 1983009808
    %v6948 = vunpack.c.0.s8 %v6947
    %v6949 = vlaneseq
    %v6950 = vshrl.u32 %v6949, 7
    %v6951 = vsub.s32 %v6948, %v6950
    %v6952 = vrot.slane %v6938, %v6951
    %v6953 = vcombine.low %v6945, %v6952
    %v6954 = vcombine.low %v6813, %v6814
    %v6955 = vcombine.low %v6815, %v6816
    %v6957 = vunpack.c.l.s4 1983009808
    %v6958 = vunpack.c.0.s8 %v6957
    %v6959 = vlaneseq
    %v6960 = vshrl.u32 %v6959, 7
    %v6961 = vsub.s32 %v6958, %v6960
    %v6962 = vrot.slane %v6954, %v6961
    %v6964 = vunpack.c.l.s4 1983009808
    %v6965 = vunpack.c.0.s8 %v6964
    %v6966 = vlaneseq
    %v6967 = vshrl.u32 %v6966, 7
    %v6968 = vsub.s32 %v6965, %v6967
    %v6969 = vrot.slane %v6955, %v6968
    %v6970 = vcombine.low %v6962, %v6969
    %v6971 = vcombine.low %v6817, %v6818
    %v6972 = vcombine.low %v6819, %v6820
    %v6974 = vunpack.c.l.s4 1983009808
    %v6975 = vunpack.c.0.s8 %v6974
    %v6976 = vlaneseq
    %v6977 = vshrl.u32 %v6976, 7
    %v6978 = vsub.s32 %v6975, %v6977
    %v6979 = vrot.slane %v6971, %v6978
    %v6981 = vunpack.c.l.s4 1983009808
    %v6982 = vunpack.c.0.s8 %v6981
    %v6983 = vlaneseq
    %v6984 = vshrl.u32 %v6983, 7
    %v6985 = vsub.s32 %v6982, %v6984
    %v6986 = vrot.slane %v6972, %v6985
    %v6987 = vcombine.low %v6979, %v6986
    %v6988 = vcombine.low %v6821, %v6822
    %v6989 = vcombine.low %v6823, %v6824
    %v6991 = vunpack.c.l.s4 1983009808
    %v6992 = vunpack.c.0.s8 %v6991
    %v6993 = vlaneseq
    %v6994 = vshrl.u32 %v6993, 7
    %v6995 = vsub.s32 %v6992, %v6994
    %v6996 = vrot.slane %v6988, %v6995
    %v6998 = vunpack.c.l.s4 1983009808
    %v6999 = vunpack.c.0.s8 %v6998
    %v7000 = vlaneseq
    %v7001 = vshrl.u32 %v7000, 7
    %v7002 = vsub.s32 %v6999, %v7001
    %v7003 = vrot.slane %v6989, %v7002
    %v7004 = vcombine.low %v6996, %v7003
    %v7005 = vcombine.low %v6825, %v6826
    %v7006 = vcombine.low %v6827, %v6828
    %v7008 = vunpack.c.l.s4 1983009808
    %v7009 = vunpack.c.0.s8 %v7008
    %v7010 = vlaneseq
    %v7011 = vshrl.u32 %v7010, 7
    %v7012 = vsub.s32 %v7009, %v7011
    %v7013 = vrot.slane %v7005, %v7012
    %v7015 = vunpack.c.l.s4 1983009808
    %v7016 = vunpack.c.0.s8 %v7015
    %v7017 = vlaneseq
    %v7018 = vshrl.u32 %v7017, 7
    %v7019 = vsub.s32 %v7016, %v7018
    %v7020 = vrot.slane %v7006, %v7019
    %v7021 = vcombine.low %v7013, %v7020
    %v7022 = vcombine.low %v6829, %v6830
    %v7023 = vcombine.low %v6831, %v6832
    %v7025 = vunpack.c.l.s4 1983009808
    %v7026 = vunpack.c.0.s8 %v7025
    %v7027 = vlaneseq
    %v7028 = vshrl.u32 %v7027, 7
    %v7029 = vsub.s32 %v7026, %v7028
    %v7030 = vrot.slane %v7022, %v7029
    %v7032 = vunpack.c.l.s4 1983009808
    %v7033 = vunpack.c.0.s8 %v7032
    %v7034 = vlaneseq
    %v7035 = vshrl.u32 %v7034, 7
    %v7036 = vsub.s32 %v7033, %v7035
    %v7037 = vrot.slane %v7023, %v7036
    %v7038 = vcombine.low %v7030, %v7037
    %v7039 = vcombine.low %v6833, %v6834
    %v7040 = vcombine.low %v6835, %v6836
    %v7042 = vunpack.c.l.s4 1983009808
    %v7043 = vunpack.c.0.s8 %v7042
    %v7044 = vlaneseq
    %v7045 = vshrl.u32 %v7044, 7
    %v7046 = vsub.s32 %v7043, %v7045
    %v7047 = vrot.slane %v7039, %v7046
    %v7049 = vunpack.c.l.s4 1983009808
    %v7050 = vunpack.c.0.s8 %v7049
    %v7051 = vlaneseq
    %v7052 = vshrl.u32 %v7051, 7
    %v7053 = vsub.s32 %v7050, %v7052
    %v7054 = vrot.slane %v7040, %v7053
    %v7055 = vcombine.low %v7047, %v7054
    %v7056 = vcombine.low %v6837, %v6838
    %v7057 = vcombine.low %v6839, %v6840
    %v7059 = vunpack.c.l.s4 1983009808
    %v7060 = vunpack.c.0.s8 %v7059
    %v7061 = vlaneseq
    %v7062 = vshrl.u32 %v7061, 7
    %v7063 = vsub.s32 %v7060, %v7062
    %v7064 = vrot.slane %v7056, %v7063
    %v7066 = vunpack.c.l.s4 1983009808
    %v7067 = vunpack.c.0.s8 %v7066
    %v7068 = vlaneseq
    %v7069 = vshrl.u32 %v7068, 7
    %v7070 = vsub.s32 %v7067, %v7069
    %v7071 = vrot.slane %v7057, %v7070
    %v7072 = vcombine.low %v7064, %v7071
    %v7073 = vcombine.low %v6841, %v6842
    %v7074 = vcombine.low %v6843, %v6844
    %v7076 = vunpack.c.l.s4 1983009808
    %v7077 = vunpack.c.0.s8 %v7076
    %v7078 = vlaneseq
    %v7079 = vshrl.u32 %v7078, 7
    %v7080 = vsub.s32 %v7077, %v7079
    %v7081 = vrot.slane %v7073, %v7080
    %v7083 = vunpack.c.l.s4 1983009808
    %v7084 = vunpack.c.0.s8 %v7083
    %v7085 = vlaneseq
    %v7086 = vshrl.u32 %v7085, 7
    %v7087 = vsub.s32 %v7084, %v7086
    %v7088 = vrot.slane %v7074, %v7087
    %v7089 = vcombine.low %v7081, %v7088
    %v7090 = vcombine.low %v6845, %v6846
    %v7091 = vcombine.low %v6847, %v6848
    %v7093 = vunpack.c.l.s4 1983009808
    %v7094 = vunpack.c.0.s8 %v7093
    %v7095 = vlaneseq
    %v7096 = vshrl.u32 %v7095, 7
    %v7097 = vsub.s32 %v7094, %v7096
    %v7098 = vrot.slane %v7090, %v7097
    %v7100 = vunpack.c.l.s4 1983009808
    %v7101 = vunpack.c.0.s8 %v7100
    %v7102 = vlaneseq
    %v7103 = vshrl.u32 %v7102, 7
    %v7104 = vsub.s32 %v7101, %v7103
    %v7105 = vrot.slane %v7091, %v7104
    %v7106 = vcombine.low %v7098, %v7105
    %v7107 = vcombine.low %v6849, %v6850
    %v7108 = vcombine.low %v6851, %v6852
    %v7110 = vunpack.c.l.s4 1983009808
    %v7111 = vunpack.c.0.s8 %v7110
    %v7112 = vlaneseq
    %v7113 = vshrl.u32 %v7112, 7
    %v7114 = vsub.s32 %v7111, %v7113
    %v7115 = vrot.slane %v7107, %v7114
    %v7117 = vunpack.c.l.s4 1983009808
    %v7118 = vunpack.c.0.s8 %v7117
    %v7119 = vlaneseq
    %v7120 = vshrl.u32 %v7119, 7
    %v7121 = vsub.s32 %v7118, %v7120
    %v7122 = vrot.slane %v7108, %v7121
    %v7123 = vcombine.low %v7115, %v7122
    %v7124 = vcombine.low %v6853, %v6854
    %v7125 = vcombine.low %v6855, %v6856
    %v7127 = vunpack.c.l.s4 1983009808
    %v7128 = vunpack.c.0.s8 %v7127
    %v7129 = vlaneseq
    %v7130 = vshrl.u32 %v7129, 7
    %v7131 = vsub.s32 %v7128, %v7130
    %v7132 = vrot.slane %v7124, %v7131
    %v7134 = vunpack.c.l.s4 1983009808
    %v7135 = vunpack.c.0.s8 %v7134
    %v7136 = vlaneseq
    %v7137 = vshrl.u32 %v7136, 7
    %v7138 = vsub.s32 %v7135, %v7137
    %v7139 = vrot.slane %v7125, %v7138
    %v7140 = vcombine.low %v7132, %v7139
    %v7141 = vcombine.low %v6857, %v6858
    %v7142 = vcombine.low %v6859, %v6860
    %v7144 = vunpack.c.l.s4 1983009808
    %v7145 = vunpack.c.0.s8 %v7144
    %v7146 = vlaneseq
    %v7147 = vshrl.u32 %v7146, 7
    %v7148 = vsub.s32 %v7145, %v7147
    %v7149 = vrot.slane %v7141, %v7148
    %v7151 = vunpack.c.l.s4 1983009808
    %v7152 = vunpack.c.0.s8 %v7151
    %v7153 = vlaneseq
    %v7154 = vshrl.u32 %v7153, 7
    %v7155 = vsub.s32 %v7152, %v7154
    %v7156 = vrot.slane %v7142, %v7155
    %v7157 = vcombine.low %v7149, %v7156
    %v7158 = vcombine.low %v6861, %v6862
    %v7159 = vcombine.low %v6863, %v6864
    %v7161 = vunpack.c.l.s4 1983009808
    %v7162 = vunpack.c.0.s8 %v7161
    %v7163 = vlaneseq
    %v7164 = vshrl.u32 %v7163, 7
    %v7165 = vsub.s32 %v7162, %v7164
    %v7166 = vrot.slane %v7158, %v7165
    %v7168 = vunpack.c.l.s4 1983009808
    %v7169 = vunpack.c.0.s8 %v7168
    %v7170 = vlaneseq
    %v7171 = vshrl.u32 %v7170, 7
    %v7172 = vsub.s32 %v7169, %v7171
    %v7173 = vrot.slane %v7159, %v7172
    %v7174 = vcombine.low %v7166, %v7173
    %v7175 = vcombine.low %v6865, %v6866
    %v7176 = vcombine.low %v6867, %v6868
    %v7178 = vunpack.c.l.s4 1983009808
    %v7179 = vunpack.c.0.s8 %v7178
    %v7180 = vlaneseq
    %v7181 = vshrl.u32 %v7180, 7
    %v7182 = vsub.s32 %v7179, %v7181
    %v7183 = vrot.slane %v7175, %v7182
    %v7185 = vunpack.c.l.s4 1983009808
    %v7186 = vunpack.c.0.s8 %v7185
    %v7187 = vlaneseq
    %v7188 = vshrl.u32 %v7187, 7
    %v7189 = vsub.s32 %v7186, %v7188
    %v7190 = vrot.slane %v7176, %v7189
    %v7191 = vcombine.low %v7183, %v7190
    %v7192 = vcombine.low %v6869, %v6870
    %v7193 = vcombine.low %v6871, %v6872
    %v7195 = vunpack.c.l.s4 1983009808
    %v7196 = vunpack.c.0.s8 %v7195
    %v7197 = vlaneseq
    %v7198 = vshrl.u32 %v7197, 7
    %v7199 = vsub.s32 %v7196, %v7198
    %v7200 = vrot.slane %v7192, %v7199
    %v7202 = vunpack.c.l.s4 1983009808
    %v7203 = vunpack.c.0.s8 %v7202
    %v7204 = vlaneseq
    %v7205 = vshrl.u32 %v7204, 7
    %v7206 = vsub.s32 %v7203, %v7205
    %v7207 = vrot.slane %v7193, %v7206
    %v7208 = vcombine.low %v7200, %v7207
    %vm7225 = vcmask 31744
    %7226 = vst.msk [vmem:[%s19] sm:$0xff] %vm7225, %v6953
    %7227 = vst.msk [vmem:[%s19 + $0x8] sm:$0xff] %vm7225, %v6970
    %7228 = vst.msk [vmem:[%s19 + $0x10] sm:$0xff] %vm7225, %v6987
    %7229 = vst.msk [vmem:[%s19 + $0x18] sm:$0xff] %vm7225, %v7004
    %7230 = vst.msk [vmem:[%s19 + $0x20] sm:$0xff] %vm7225, %v7021
    %7231 = vst.msk [vmem:[%s19 + $0x28] sm:$0xff] %vm7225, %v7038
    %7232 = vst.msk [vmem:[%s19 + $0x30] sm:$0xff] %vm7225, %v7055
    %7233 = vst.msk [vmem:[%s19 + $0x38] sm:$0xff] %vm7225, %v7072
    %7234 = vst.msk [vmem:[%s19 + $0x40] sm:$0xff] %vm7225, %v7089
    %7235 = vst.msk [vmem:[%s19 + $0x48] sm:$0xff] %vm7225, %v7106
    %7236 = vst.msk [vmem:[%s19 + $0x50] sm:$0xff] %vm7225, %v7123
    %7237 = vst.msk [vmem:[%s19 + $0x58] sm:$0xff] %vm7225, %v7140
    %7238 = vst.msk [vmem:[%s19 + $0x60] sm:$0xff] %vm7225, %v7157
    %7239 = vst.msk [vmem:[%s19 + $0x68] sm:$0xff] %vm7225, %v7174
    %7240 = vst.msk [vmem:[%s19 + $0x70] sm:$0xff] %vm7225, %v7191
    %7241 = vst.msk [vmem:[%s19 + $0x78] sm:$0xff] %vm7225, %v7208
    // Predicated region
    $region118: #{generator_pallas.1} parent=1 // pred_check
      _
    $region119: #{generator_pallas.1} parent=1 // pred_check_branch
      %7243 = sbr.rel (0) target = $region121
    $region120: #{generator_pallas.1} parent=1 // pred_region
      _
    $region121: #{generator_pallas.1} parent=1 // pred_fallthru
      _
    // Predicated region
    $region122: #{generator_pallas.1} parent=1 // pred_check
      _
    $region123: #{generator_pallas.1} parent=1 // pred_check_branch
      %7245 = sbr.rel (0) target = $region125
    $region124: #{generator_pallas.1} parent=1 // pred_region
      _
    $region125: #{generator_pallas.1} parent=1 // pred_fallthru
      _
    %7246 = vsyncpa [#allocation3], 1
    %7247 = vsyncpa [#allocation5], 1
    %7248 = vsyncpa [#allocation8], 1
    %7249 = vsyncpa [#allocation11], 1
    %7250 = vsyncpa [#allocation14], 1
    %7251 = vsyncpa [#allocation17], 1

</llo_original>
